<compile_context>
chip_gen: v7x
topology: tpu7x:2x2x1
jax: 0.10.0
libtpu: 0.0.40
codegen_flags: <defaults>
</compile_context>

<pallas_src>
import math
import functools
import numpy as np
import jax
import jax.numpy as jnp
from jax.experimental import pallas as pl
from jax.experimental.pallas import tpu as pltpu

# ---- model hyper-parameters (FlowformerModel defaults) ----
INPUT_DIM = 6      # d_model
HIDDEN_DIM = 72    # dim_feedforward
NUM_HEADS = 6      # nhead -> head_dim == 1
NUM_LAYERS = 3
SRC_LEN = 4        # 4 input time steps (the transformer "batch" after permute)
OUT_STEPS = 2
LN_EPS = 1e-5

LANE = 128
SUBLANE = 8

assert INPUT_DIM % NUM_HEADS == 0 and INPUT_DIM // NUM_HEADS == 1, \
    "kernel attention path assumes head_dim == 1 (as in FlowformerModel)"


def _align8(n):
    return -(-n // SUBLANE) * SUBLANE


# ----------------------------- parameter packing ------------------------------

class _SlabPacker:
    """Packs many small f32 parameters into one [rows, width] slab.

    Every parameter gets an 8-row-aligned, 8-lane-aligned rectangle (so each in-kernel
    slice stays inside (8,128) tile boundaries); 16 lane bins of width 8 keep the slab
    lane-dense instead of burning a 4 KiB (8,128) tile per tiny parameter."""

    def __init__(self, width=LANE, bin_width=SUBLANE):
        self.width = width
        self.bin_width = bin_width
        self.n_bins = width // bin_width
        self.bin_rows = [0] * self.n_bins
        self.entries = []                    # (array, bin_idx, row_off)
        self.index = {}                      # name -> (row_off, col_off, rows, cols)

    def add(self, name, arr):
        arr = np.asarray(arr, dtype=np.float32)
        if arr.ndim == 1:
            arr = arr[:, None]               # biases / LN vectors become [out, 1] columns
        r, c = arr.shape
        assert c <= self.bin_width, (name, arr.shape)
        b = int(np.argmin(self.bin_rows))    # greedy: place in the currently shortest bin
        row = self.bin_rows[b]
        self.bin_rows[b] = row + _align8(r)
        self.index[name] = (row, b * self.bin_width, r, c)
        self.entries.append((arr, b, row))

    def finalize(self):
        rows = max(_align8(max(self.bin_rows)), SUBLANE)
        slab = np.zeros((rows, self.width), np.float32)
        for arr, b, row in self.entries:
            r, c = arr.shape
            slab[row:row + r, b * self.bin_width:b * self.bin_width + c] = arr
        return jnp.asarray(slab)


def pack_kernel_args(params):
    """Pack all model parameters into two lane-dense f32 slabs (3 input DMAs total).

    Slab A ([R, 128]): every weight with input dim 6 (PyTorch [out, in] layout) and every
    bias / LayerNorm vector (as a [out, 1] column).
    Slab B ([R, 72]): the six [6, 72] second-FFN weights (MXU path).
    Returns ((slab_a, slab_b), (idx_a, idx_b)) where the indices hold static offsets."""
    E = INPUT_DIM
    a = _SlabPacker(width=LANE, bin_width=SUBLANE)
    b = _SlabPacker(width=HIDDEN_DIM, bin_width=HIDDEN_DIM)

    def add_common(pre, p):
        a.add(pre + 'sa_in_w', p['sa_in_w']); a.add(pre + 'sa_in_b', p['sa_in_b'])
        a.add(pre + 'sa_out_w', p['sa_out_w']); a.add(pre + 'sa_out_b', p['sa_out_b'])
        a.add(pre + 'l1_w', p['l1_w']); a.add(pre + 'l1_b', p['l1_b'])
        b.add(pre + 'l2_w', p['l2_w']); a.add(pre + 'l2_b', p['l2_b'])
        a.add(pre + 'n1_w', p['n1_w']); a.add(pre + 'n1_b', p['n1_b'])
        a.add(pre + 'n2_w', p['n2_w']); a.add(pre + 'n2_b', p['n2_b'])

    for l, p in enumerate(params['enc']):
        add_common(f'e{l}_', p)
    a.add('enc_fn_w', params['enc_norm_w']); a.add('enc_fn_b', params['enc_norm_b'])

    for l, p in enumerate(params['dec']):
        pre = f'd{l}_'
        add_common(pre, p)
        # cross-attention in_proj split into Q / K / V so every slice stays 8-aligned;
        # the old fused-KV-matmul trick is dropped: on the VPU path each projection is
        # just 6 madds, there is no MXU fill cost left to amortize.
        a.add(pre + 'ca_q_w', p['ca_in_w'][:E]);      a.add(pre + 'ca_q_b', p['ca_in_b'][:E])
        a.add(pre + 'ca_k_w', p['ca_in_w'][E:2 * E]); a.add(pre + 'ca_k_b', p['ca_in_b'][E:2 * E])
        a.add(pre + 'ca_v_w', p['ca_in_w'][2 * E:]);  a.add(pre + 'ca_v_b', p['ca_in_b'][2 * E:])
        a.add(pre + 'ca_out_w', p['ca_out_w']);       a.add(pre + 'ca_out_b', p['ca_out_b'])
        a.add(pre + 'n3_w', p['n3_w']); a.add(pre + 'n3_b', p['n3_b'])
    a.add('dec_fn_w', params['dec_norm_w']); a.add('dec_fn_b', params['dec_norm_b'])
    a.add('fc_w', params['fc_w']); a.add('fc_b', params['fc_b'])

    return (a.finalize(), b.finalize()), (a.index, b.index)


# --------------------------------- the kernel --------------------------------

def flowformer_kernel(x_ref, pa_ref, pb_ref, out_ref, *,
                      idx_a, idx_b, e, nlayers, seq):
    # All parameter accesses are static slices of the two slab refs (no whole-slab load,
    # so nothing close to the 64-vreg budget is ever live at once).
    def pa(name):
        r0, c0, r, c = idx_a[name]
        return pa_ref[r0:r0 + r, c0:c0 + c]

    def pb(name):
        r0, c0, r, c = idx_b[name]
        return pb_ref[r0:r0 + r, c0:c0 + c]

    def linear6(wname, bname, inp):
        # y = W @ x + b with W:[out, 6], x:[6, N], b:[out, 1] as 6 broadcast VPU
        # multiply-adds -- no MXU fill/drain latency for a K=6 contraction.
        w = pa(wname)
        acc = pa(bname) + w[:, 0:1] * inp[0:1, :]
        for i in range(1, w.shape[1]):
            acc = acc + w[:, i:i + 1] * inp[i:i + 1, :]
        return acc

    def layer_norm(v, wname, bname):
        # normalize over the 6 features (sublanes); biased variance (PyTorch).
        mu = jnp.mean(v, axis=0, keepdims=True)
        vc = v - mu
        var = jnp.mean(vc * vc, axis=0, keepdims=True)
        return vc * jax.lax.rsqrt(var + LN_EPS) * pa(wname) + pa(bname)

    def recip(v):
        # EUP approx reciprocal + one Newton step: ~2^-24 relative error (keeps the
        # 1e-4 parity test) while avoiding the full serial f32 divide.
        r = pl.reciprocal(v, approx=True)
        return r * (2.0 - v * r)

    def attention(q, k_full, v_full):
        # head_dim == 1 -> per-head scores are outer products; scale 1/sqrt(1) skipped.
        # Score layout [E, Sk, Sq]: queries stay on lanes end-to-end, softmax reduces
        # over sublanes.  Keys/values are sliced to the TRUE sequence length, so padded
        # lanes never enter the softmax (no mask needed) and the score tensor is
        # O(S * S_pad), not O(S_pad^2).
        k = k_full[:, :seq]
        v = v_full[:, :seq]
        s = k[:, :, None] * q[:, None, :]              # [E, S, S_pad]
        m = jnp.max(s, axis=1, keepdims=True)          # [E, 1, S_pad]
        p = jnp.exp(s - m)
        den = jnp.sum(p, axis=1)                       # [E, S_pad]
        num = jnp.sum(p * v[:, :, None], axis=1)       # [E, S_pad]
        return num * recip(den)

    def self_attn(h, pre):
        qkv = linear6(pre + 'sa_in_w', pre + 'sa_in_b', h)     # fused Q/K/V: [3E, S_pad]
        a = attention(qkv[0:e], qkv[e:2 * e], qkv[2 * e:3 * e])
        return linear6(pre + 'sa_out_w', pre + 'sa_out_b', a)

    def ffn(h, pre):
        hid = jnp.maximum(linear6(pre + 'l1_w', pre + 'l1_b', h), 0.0)   # [72, S_pad]
        # K == 72: keep the second FFN matmul on the MXU (jnp.dot).
        return (jnp.dot(pb(pre + 'l2_w'), hid, preferred_element_type=jnp.float32)
                + pa(pre + 'l2_b'))

    x = x_ref[...]                                     # [E, S_pad], lane-dense

    # ----------------- encoder (post-norm layers + final norm) ----------------
    h = x
    for l in range(nlayers):
        pre = f'e{l}_'
        h = layer_norm(h + self_attn(h, pre), pre + 'n1_w', pre + 'n1_b')
        h = layer_norm(h + ffn(h, pre), pre + 'n2_w', pre + 'n2_b')
    memory = layer_norm(h, 'enc_fn_w', 'enc_fn_b')

    # ----------------- decoder (self-attn, cross-attn, ffn) -------------------
    y = x
    for l in range(nlayers):
        pre = f'd{l}_'
        y = layer_norm(y + self_attn(y, pre), pre + 'n1_w', pre + 'n1_b')
        q = linear6(pre + 'ca_q_w', pre + 'ca_q_b', y)
        k = linear6(pre + 'ca_k_w', pre + 'ca_k_b', memory)
        v = linear6(pre + 'ca_v_w', pre + 'ca_v_b', memory)
        ca = linear6(pre + 'ca_out_w', pre + 'ca_out_b', attention(q, k, v))
        y = layer_norm(y + ca, pre + 'n2_w', pre + 'n2_b')
        y = layer_norm(y + ffn(y, pre), pre + 'n3_w', pre + 'n3_b')
    y = layer_norm(y, 'dec_fn_w', 'dec_fn_b')

    # fc_out over the (only computed) last time-step block; lane-dense [2E, S_pad]
    # -> unmasked vector stores.
    out_ref[...] = linear6('fc_w', 'fc_b', y)


# ------------------------------ wrapper (glue) --------------------------------

def build_flowformer(params):
    (slab_a, slab_b), (idx_a, idx_b) = pack_kernel_args(params)

    def forward(x):
        B = x.shape[0]
        assert x.shape == (B, SRC_LEN, INPUT_DIM)
        n_pad = -(-B // LANE) * LANE                    # lane-dense padding
        # After x.permute(1,0,2) the 4 time steps are the transformer *batch*; only the
        # last block reaches transformer_out[-1], so only it is fed to the kernel,
        # transposed to [E, S] (S = original batch B on vector lanes) and lane-padded.
        xT = jnp.transpose(x[:, -1, :]).astype(jnp.float32)        # [E, B]
        xT = jnp.pad(xT, ((0, 0), (0, n_pad - B)))                 # [E, S_pad]

        kernel = functools.partial(
            flowformer_kernel, idx_a=idx_a, idx_b=idx_b,
            e=INPUT_DIM, nlayers=NUM_LAYERS, seq=B)

        # NOTE(vmem): in-kernel live set ~ a few score tensors of E*S*S_pad f32
        # (~0.4 MiB at B=128, ~25 MiB at B~1000).  Fine under every chip's default
        # scoped VMEM at demo sizes; for B beyond ~500 (v5e, 16 MiB scoped) / ~700
        # (v7x, 32 MiB scoped of 64 MiB physical) raise vmem_limit_bytes via
        # pltpu.CompilerParams or block attention over keys / split the call (see TODO).
        out = pl.pallas_call(
            kernel,
            out_shape=jax.ShapeDtypeStruct((2 * INPUT_DIM, n_pad), jnp.float32),
            in_specs=[pl.BlockSpec(memory_space=pltpu.MemorySpace.VMEM)] * 3,
            out_specs=pl.BlockSpec(memory_space=pltpu.MemorySpace.VMEM),
        )(xT, slab_a, slab_b)

        # [2E, S_pad] -> [B, 2E] -> [B, 2, 6]   (== output.view(B, 2, 6))
        return jnp.transpose(out[:, :B]).reshape(B, OUT_STEPS, INPUT_DIM)

    return forward


# --------------------------- parameters (synthetic) ---------------------------

def init_params(key):
    """PyTorch-convention shapes (Linear weight = [out, in]); deterministic."""
    E, F, L = INPUT_DIM, HIDDEN_DIM, NUM_LAYERS
    ks = iter(jax.random.split(key, 256))

    def rnd(shape, scale=0.2):
        return scale * jax.random.normal(next(ks), shape, dtype=jnp.float32)

    def layer(cross):
        p = {
            'sa_in_w': rnd((3 * E, E)), 'sa_in_b': rnd((3 * E,)),
            'sa_out_w': rnd((E, E)), 'sa_out_b': rnd((E,)),
            'l1_w': rnd((F, E)), 'l1_b': rnd((F,)),
            'l2_w': rnd((E, F)), 'l2_b': rnd((E,)),
            'n1_w': jnp.ones((E,), jnp.float32) + rnd((E,), 0.05), 'n1_b': rnd((E,), 0.05),
            'n2_w': jnp.ones((E,), jnp.float32) + rnd((E,), 0.05), 'n2_b': rnd((E,), 0.05),
        }
        if cross:
            p.update({
                'ca_in_w': rnd((3 * E, E)), 'ca_in_b': rnd((3 * E,)),
                'ca_out_w': rnd((E, E)), 'ca_out_b': rnd((E,)),
                'n3_w': jnp.ones((E,), jnp.float32) + rnd((E,), 0.05), 'n3_b': rnd((E,), 0.05),
            })
        return p

    return {
        'enc': [layer(False) for _ in range(L)],
        'enc_norm_w': jnp.ones((E,), jnp.float32), 'enc_norm_b': jnp.zeros((E,), jnp.float32),
        'dec': [layer(True) for _ in range(L)],
        'dec_norm_w': jnp.ones((E,), jnp.float32), 'dec_norm_b': jnp.zeros((E,), jnp.float32),
        'fc_w': rnd((2 * E, E)), 'fc_b': rnd((2 * E,)),
    }


# --------------------------- pure-JAX reference --------------------------------
# Full model (all 4 time-step blocks), matching PyTorch nn.Transformer semantics
# (batch_first=True, post-norm, final encoder/decoder LayerNorms, ReLU FFN, eval mode);
# used to validate that the kernel's last-block-only shortcut is exact.

def reference_forward(x, params):
    E, H = INPUT_DIM, NUM_HEADS
    hd = E // H
    xp = jnp.transpose(x, (1, 0, 2)).astype(jnp.float32)   # [Tb, S, E]

    def ln(v, w, b):
        mu = jnp.mean(v, axis=-1, keepdims=True)
        var = jnp.mean((v - mu) ** 2, axis=-1, keepdims=True)
        return (v - mu) / jnp.sqrt(var + LN_EPS) * w + b

    def mha(q_in, kv_in, in_w, in_b, out_w, out_b):
        q = q_in @ in_w[:E].T + in_b[:E]
        k = kv_in @ in_w[E:2 * E].T + in_b[E:2 * E]
        v = kv_in @ in_w[2 * E:].T + in_b[2 * E:]
        Tb, Sq, _ = q.shape
        Sk = k.shape[1]
        qh = q.reshape(Tb, Sq, H, hd)
        kh = k.reshape(Tb, Sk, H, hd)
        vh = v.reshape(Tb, Sk, H, hd)
        sc = jnp.einsum('tqhd,tkhd->thqk', qh, kh) / math.sqrt(hd)
        p = jax.nn.softmax(sc, axis=-1)
        o = jnp.einsum('thqk,tkhd->tqhd', p, vh).reshape(Tb, Sq, E)
        return o @ out_w.T + out_b

    h = xp
    for p in params['enc']:
        h = ln(h + mha(h, h, p['sa_in_w'], p['sa_in_b'], p['sa_out_w'], p['sa_out_b']),
               p['n1_w'], p['n1_b'])
        ff = jax.nn.relu(h @ p['l1_w'].T + p['l1_b']) @ p['l2_w'].T + p['l2_b']
        h = ln(h + ff, p['n2_w'], p['n2_b'])
    mem = ln(h, params['enc_norm_w'], params['enc_norm_b'])

    y = xp
    for p in params['dec']:
        y = ln(y + mha(y, y, p['sa_in_w'], p['sa_in_b'], p['sa_out_w'], p['sa_out_b']),
               p['n1_w'], p['n1_b'])
        y = ln(y + mha(y, mem, p['ca_in_w'], p['ca_in_b'], p['ca_out_w'], p['ca_out_b']),
               p['n2_w'], p['n2_b'])
        ff = jax.nn.relu(y @ p['l1_w'].T + p['l1_b']) @ p['l2_w'].T + p['l2_b']
        y = ln(y + ff, p['n3_w'], p['n3_b'])
    y = ln(y, params['dec_norm_w'], params['dec_norm_b'])

    last = y[-1]                                           # [S, E]
    out = last @ params['fc_w'].T + params['fc_b']
    return out.reshape(x.shape[0], OUT_STEPS, INPUT_DIM)


# ----------------------------------- main --------------------------------------

if __name__ == "__main__":
    B = 2
    key = jax.random.PRNGKey(0)
    kx, kp = jax.random.split(key)
    x = jax.random.normal(kx, (B, SRC_LEN, INPUT_DIM), dtype=jnp.float32)
    params = init_params(kp)

    forward = build_flowformer(params)
    out = jax.block_until_ready(forward(x))
    assert out.shape == (B, OUT_STEPS, INPUT_DIM)

    ref = reference_forward(x, params)
    np.testing.assert_allclose(np.asarray(out), np.asarray(ref), rtol=1e-4, atol=1e-4)

    print("KERNEL_OK")
</pallas_src>

<mosaic_0001>
module attributes {stable_mosaic.version = 11 : i64} {
  func.func @flowformer_kernel(%arg0: memref<6x128xf32, #tpu.memory_space<vmem>>, %arg1: memref<152x128xf32, #tpu.memory_space<vmem>>, %arg2: memref<48x72xf32, #tpu.memory_space<vmem>>, %arg3: memref<12x128xf32, #tpu.memory_space<vmem>>) attributes {dimension_semantics = [], scalar_prefetch = 0 : i64, scratch_operands = 0 : i64, tpu.core_type = #tpu.core_type<tc>} {
    %c0 = arith.constant 0 : index
    %c0_0 = arith.constant 0 : index
    %0 = vector.load %arg0[%c0, %c0_0] : memref<6x128xf32, #tpu.memory_space<vmem>>, vector<6x128xf32>
    %c0_1 = arith.constant 0 : index
    %c0_2 = arith.constant 0 : index
    %1 = vector.load %arg1[%c0_1, %c0_2] : memref<152x128xf32, #tpu.memory_space<vmem>>, vector<18x6xf32>
    %c0_3 = arith.constant 0 : index
    %c8 = arith.constant 8 : index
    %2 = vector.load %arg1[%c0_3, %c8] : memref<152x128xf32, #tpu.memory_space<vmem>>, vector<18x1xf32>
    %3 = vector.extract_strided_slice %1 {offsets = [0, 0], sizes = [18, 1], strides = [1, 1]} : vector<18x6xf32> to vector<18x1xf32>
    %4 = vector.extract_strided_slice %0 {offsets = [0, 0], sizes = [1, 128], strides = [1, 1]} : vector<6x128xf32> to vector<1x128xf32>
    %5 = vector.broadcast %3 : vector<18x1xf32> to vector<18x128xf32>
    %6 = vector.broadcast %4 : vector<1x128xf32> to vector<18x128xf32>
    %7 = arith.mulf %5, %6 : vector<18x128xf32>
    %8 = vector.broadcast %2 : vector<18x1xf32> to vector<18x128xf32>
    %9 = arith.addf %8, %7 : vector<18x128xf32>
    %10 = vector.extract_strided_slice %1 {offsets = [0, 1], sizes = [18, 1], strides = [1, 1]} : vector<18x6xf32> to vector<18x1xf32>
    %11 = vector.extract_strided_slice %0 {offsets = [1, 0], sizes = [1, 128], strides = [1, 1]} : vector<6x128xf32> to vector<1x128xf32>
    %12 = vector.broadcast %10 : vector<18x1xf32> to vector<18x128xf32>
    %13 = vector.broadcast %11 : vector<1x128xf32> to vector<18x128xf32>
    %14 = arith.mulf %12, %13 : vector<18x128xf32>
    %15 = arith.addf %9, %14 : vector<18x128xf32>
    %16 = vector.extract_strided_slice %1 {offsets = [0, 2], sizes = [18, 1], strides = [1, 1]} : vector<18x6xf32> to vector<18x1xf32>
    %17 = vector.extract_strided_slice %0 {offsets = [2, 0], sizes = [1, 128], strides = [1, 1]} : vector<6x128xf32> to vector<1x128xf32>
    %18 = vector.broadcast %16 : vector<18x1xf32> to vector<18x128xf32>
    %19 = vector.broadcast %17 : vector<1x128xf32> to vector<18x128xf32>
    %20 = arith.mulf %18, %19 : vector<18x128xf32>
    %21 = arith.addf %15, %20 : vector<18x128xf32>
    %22 = vector.extract_strided_slice %1 {offsets = [0, 3], sizes = [18, 1], strides = [1, 1]} : vector<18x6xf32> to vector<18x1xf32>
    %23 = vector.extract_strided_slice %0 {offsets = [3, 0], sizes = [1, 128], strides = [1, 1]} : vector<6x128xf32> to vector<1x128xf32>
    %24 = vector.broadcast %22 : vector<18x1xf32> to vector<18x128xf32>
    %25 = vector.broadcast %23 : vector<1x128xf32> to vector<18x128xf32>
    %26 = arith.mulf %24, %25 : vector<18x128xf32>
    %27 = arith.addf %21, %26 : vector<18x128xf32>
    %28 = vector.extract_strided_slice %1 {offsets = [0, 4], sizes = [18, 1], strides = [1, 1]} : vector<18x6xf32> to vector<18x1xf32>
    %29 = vector.extract_strided_slice %0 {offsets = [4, 0], sizes = [1, 128], strides = [1, 1]} : vector<6x128xf32> to vector<1x128xf32>
    %30 = vector.broadcast %28 : vector<18x1xf32> to vector<18x128xf32>
    %31 = vector.broadcast %29 : vector<1x128xf32> to vector<18x128xf32>
    %32 = arith.mulf %30, %31 : vector<18x128xf32>
    %33 = arith.addf %27, %32 : vector<18x128xf32>
    %34 = vector.extract_strided_slice %1 {offsets = [0, 5], sizes = [18, 1], strides = [1, 1]} : vector<18x6xf32> to vector<18x1xf32>
    %35 = vector.extract_strided_slice %0 {offsets = [5, 0], sizes = [1, 128], strides = [1, 1]} : vector<6x128xf32> to vector<1x128xf32>
    %36 = vector.broadcast %34 : vector<18x1xf32> to vector<18x128xf32>
    %37 = vector.broadcast %35 : vector<1x128xf32> to vector<18x128xf32>
    %38 = arith.mulf %36, %37 : vector<18x128xf32>
    %39 = arith.addf %33, %38 : vector<18x128xf32>
    %40 = vector.extract_strided_slice %39 {offsets = [0, 0], sizes = [6, 128], strides = [1, 1]} : vector<18x128xf32> to vector<6x128xf32>
    %41 = vector.extract_strided_slice %39 {offsets = [6, 0], sizes = [6, 128], strides = [1, 1]} : vector<18x128xf32> to vector<6x128xf32>
    %42 = vector.extract_strided_slice %39 {offsets = [12, 0], sizes = [6, 128], strides = [1, 1]} : vector<18x128xf32> to vector<6x128xf32>
    %43 = vector.extract_strided_slice %41 {offsets = [0, 0], sizes = [6, 2], strides = [1, 1]} : vector<6x128xf32> to vector<6x2xf32>
    %44 = vector.extract_strided_slice %42 {offsets = [0, 0], sizes = [6, 2], strides = [1, 1]} : vector<6x128xf32> to vector<6x2xf32>
    %45 = vector.shape_cast %43 : vector<6x2xf32> to vector<6x2x1xf32>
    %46 = vector.shape_cast %40 : vector<6x128xf32> to vector<6x1x128xf32>
    %47 = vector.broadcast %45 : vector<6x2x1xf32> to vector<6x2x128xf32>
    %48 = vector.broadcast %46 : vector<6x1x128xf32> to vector<6x2x128xf32>
    %49 = arith.mulf %47, %48 : vector<6x2x128xf32>
    %cst = arith.constant dense<0xFF800000> : vector<6x128xf32>
    %50 = vector.multi_reduction <maximumf>, %49, %cst [1] : vector<6x2x128xf32> to vector<6x128xf32>
    %51 = vector.shape_cast %50 : vector<6x128xf32> to vector<6x1x128xf32>
    %52 = vector.broadcast %51 : vector<6x1x128xf32> to vector<6x2x128xf32>
    %53 = arith.subf %49, %52 : vector<6x2x128xf32>
    %54 = math.exp %53 : vector<6x2x128xf32>
    %cst_4 = arith.constant dense<0.000000e+00> : vector<6x128xf32>
    %55 = vector.multi_reduction <add>, %54, %cst_4 [1] : vector<6x2x128xf32> to vector<6x128xf32>
    %56 = vector.shape_cast %44 : vector<6x2xf32> to vector<6x2x1xf32>
    %57 = vector.broadcast %56 : vector<6x2x1xf32> to vector<6x2x128xf32>
    %58 = arith.mulf %54, %57 : vector<6x2x128xf32>
    %cst_5 = arith.constant dense<0.000000e+00> : vector<6x128xf32>
    %59 = vector.multi_reduction <add>, %58, %cst_5 [1] : vector<6x2x128xf32> to vector<6x128xf32>
    %60 = tpu.reciprocal %55 {approx = true} : vector<6x128xf32> -> vector<6x128xf32>
    %61 = arith.mulf %55, %60 : vector<6x128xf32>
    %cst_6 = arith.constant 2.000000e+00 : f32
    %62 = vector.broadcast %cst_6 : f32 to vector<6x128xf32>
    %63 = arith.subf %62, %61 : vector<6x128xf32>
    %64 = arith.mulf %60, %63 : vector<6x128xf32>
    %65 = arith.mulf %59, %64 : vector<6x128xf32>
    %c0_7 = arith.constant 0 : index
    %c16 = arith.constant 16 : index
    %66 = vector.load %arg1[%c0_7, %c16] : memref<152x128xf32, #tpu.memory_space<vmem>>, vector<6x6xf32>
    %c0_8 = arith.constant 0 : index
    %c24 = arith.constant 24 : index
    %67 = vector.load %arg1[%c0_8, %c24] : memref<152x128xf32, #tpu.memory_space<vmem>>, vector<6x1xf32>
    %68 = vector.extract_strided_slice %66 {offsets = [0, 0], sizes = [6, 1], strides = [1, 1]} : vector<6x6xf32> to vector<6x1xf32>
    %69 = vector.extract_strided_slice %65 {offsets = [0, 0], sizes = [1, 128], strides = [1, 1]} : vector<6x128xf32> to vector<1x128xf32>
    %70 = vector.broadcast %68 : vector<6x1xf32> to vector<6x128xf32>
    %71 = vector.broadcast %69 : vector<1x128xf32> to vector<6x128xf32>
    %72 = arith.mulf %70, %71 : vector<6x128xf32>
    %73 = vector.broadcast %67 : vector<6x1xf32> to vector<6x128xf32>
    %74 = arith.addf %73, %72 : vector<6x128xf32>
    %75 = vector.extract_strided_slice %66 {offsets = [0, 1], sizes = [6, 1], strides = [1, 1]} : vector<6x6xf32> to vector<6x1xf32>
    %76 = vector.extract_strided_slice %65 {offsets = [1, 0], sizes = [1, 128], strides = [1, 1]} : vector<6x128xf32> to vector<1x128xf32>
    %77 = vector.broadcast %75 : vector<6x1xf32> to vector<6x128xf32>
    %78 = vector.broadcast %76 : vector<1x128xf32> to vector<6x128xf32>
    %79 = arith.mulf %77, %78 : vector<6x128xf32>
    %80 = arith.addf %74, %79 : vector<6x128xf32>
    %81 = vector.extract_strided_slice %66 {offsets = [0, 2], sizes = [6, 1], strides = [1, 1]} : vector<6x6xf32> to vector<6x1xf32>
    %82 = vector.extract_strided_slice %65 {offsets = [2, 0], sizes = [1, 128], strides = [1, 1]} : vector<6x128xf32> to vector<1x128xf32>
    %83 = vector.broadcast %81 : vector<6x1xf32> to vector<6x128xf32>
    %84 = vector.broadcast %82 : vector<1x128xf32> to vector<6x128xf32>
    %85 = arith.mulf %83, %84 : vector<6x128xf32>
    %86 = arith.addf %80, %85 : vector<6x128xf32>
    %87 = vector.extract_strided_slice %66 {offsets = [0, 3], sizes = [6, 1], strides = [1, 1]} : vector<6x6xf32> to vector<6x1xf32>
    %88 = vector.extract_strided_slice %65 {offsets = [3, 0], sizes = [1, 128], strides = [1, 1]} : vector<6x128xf32> to vector<1x128xf32>
    %89 = vector.broadcast %87 : vector<6x1xf32> to vector<6x128xf32>
    %90 = vector.broadcast %88 : vector<1x128xf32> to vector<6x128xf32>
    %91 = arith.mulf %89, %90 : vector<6x128xf32>
    %92 = arith.addf %86, %91 : vector<6x128xf32>
    %93 = vector.extract_strided_slice %66 {offsets = [0, 4], sizes = [6, 1], strides = [1, 1]} : vector<6x6xf32> to vector<6x1xf32>
    %94 = vector.extract_strided_slice %65 {offsets = [4, 0], sizes = [1, 128], strides = [1, 1]} : vector<6x128xf32> to vector<1x128xf32>
    %95 = vector.broadcast %93 : vector<6x1xf32> to vector<6x128xf32>
    %96 = vector.broadcast %94 : vector<1x128xf32> to vector<6x128xf32>
    %97 = arith.mulf %95, %96 : vector<6x128xf32>
    %98 = arith.addf %92, %97 : vector<6x128xf32>
    %99 = vector.extract_strided_slice %66 {offsets = [0, 5], sizes = [6, 1], strides = [1, 1]} : vector<6x6xf32> to vector<6x1xf32>
    %100 = vector.extract_strided_slice %65 {offsets = [5, 0], sizes = [1, 128], strides = [1, 1]} : vector<6x128xf32> to vector<1x128xf32>
    %101 = vector.broadcast %99 : vector<6x1xf32> to vector<6x128xf32>
    %102 = vector.broadcast %100 : vector<1x128xf32> to vector<6x128xf32>
    %103 = arith.mulf %101, %102 : vector<6x128xf32>
    %104 = arith.addf %98, %103 : vector<6x128xf32>
    %105 = arith.addf %0, %104 : vector<6x128xf32>
    %cst_9 = arith.constant dense<0.000000e+00> : vector<128xf32>
    %106 = vector.multi_reduction <add>, %105, %cst_9 [0] : vector<6x128xf32> to vector<128xf32>
    %107 = vector.shape_cast %106 : vector<128xf32> to vector<1x128xf32>
    %cst_10 = arith.constant 6.000000e+00 : f32
    %108 = vector.broadcast %cst_10 : f32 to vector<1x128xf32>
    %109 = arith.divf %107, %108 : vector<1x128xf32>
    %110 = vector.broadcast %109 : vector<1x128xf32> to vector<6x128xf32>
    %111 = arith.subf %105, %110 : vector<6x128xf32>
    %112 = arith.mulf %111, %111 : vector<6x128xf32>
    %cst_11 = arith.constant dense<0.000000e+00> : vector<128xf32>
    %113 = vector.multi_reduction <add>, %112, %cst_11 [0] : vector<6x128xf32> to vector<128xf32>
    %114 = vector.shape_cast %113 : vector<128xf32> to vector<1x128xf32>
    %cst_12 = arith.constant 6.000000e+00 : f32
    %115 = vector.broadcast %cst_12 : f32 to vector<1x128xf32>
    %116 = arith.divf %114, %115 : vector<1x128xf32>
    %cst_13 = arith.constant 9.99999974E-6 : f32
    %117 = vector.broadcast %cst_13 : f32 to vector<1x128xf32>
    %118 = arith.addf %116, %117 : vector<1x128xf32>
    %119 = math.rsqrt %118 : vector<1x128xf32>
    %120 = vector.broadcast %119 : vector<1x128xf32> to vector<6x128xf32>
    %121 = arith.mulf %111, %120 : vector<6x128xf32>
    %c0_14 = arith.constant 0 : index
    %c56 = arith.constant 56 : index
    %122 = vector.load %arg1[%c0_14, %c56] : memref<152x128xf32, #tpu.memory_space<vmem>>, vector<6x1xf32>
    %123 = vector.broadcast %122 : vector<6x1xf32> to vector<6x128xf32>
    %124 = arith.mulf %121, %123 : vector<6x128xf32>
    %c0_15 = arith.constant 0 : index
    %c64 = arith.constant 64 : index
    %125 = vector.load %arg1[%c0_15, %c64] : memref<152x128xf32, #tpu.memory_space<vmem>>, vector<6x1xf32>
    %126 = vector.broadcast %125 : vector<6x1xf32> to vector<6x128xf32>
    %127 = arith.addf %124, %126 : vector<6x128xf32>
    %c0_16 = arith.constant 0 : index
    %c32 = arith.constant 32 : index
    %128 = vector.load %arg1[%c0_16, %c32] : memref<152x128xf32, #tpu.memory_space<vmem>>, vector<72x6xf32>
    %c0_17 = arith.constant 0 : index
    %c40 = arith.constant 40 : index
    %129 = vector.load %arg1[%c0_17, %c40] : memref<152x128xf32, #tpu.memory_space<vmem>>, vector<72x1xf32>
    %130 = vector.extract_strided_slice %128 {offsets = [0, 0], sizes = [72, 1], strides = [1, 1]} : vector<72x6xf32> to vector<72x1xf32>
    %131 = vector.extract_strided_slice %127 {offsets = [0, 0], sizes = [1, 128], strides = [1, 1]} : vector<6x128xf32> to vector<1x128xf32>
    %132 = vector.broadcast %130 : vector<72x1xf32> to vector<72x128xf32>
    %133 = vector.broadcast %131 : vector<1x128xf32> to vector<72x128xf32>
    %134 = arith.mulf %132, %133 : vector<72x128xf32>
    %135 = vector.broadcast %129 : vector<72x1xf32> to vector<72x128xf32>
    %136 = arith.addf %135, %134 : vector<72x128xf32>
    %137 = vector.extract_strided_slice %128 {offsets = [0, 1], sizes = [72, 1], strides = [1, 1]} : vector<72x6xf32> to vector<72x1xf32>
    %138 = vector.extract_strided_slice %127 {offsets = [1, 0], sizes = [1, 128], strides = [1, 1]} : vector<6x128xf32> to vector<1x128xf32>
    %139 = vector.broadcast %137 : vector<72x1xf32> to vector<72x128xf32>
    %140 = vector.broadcast %138 : vector<1x128xf32> to vector<72x128xf32>
    %141 = arith.mulf %139, %140 : vector<72x128xf32>
    %142 = arith.addf %136, %141 : vector<72x128xf32>
    %143 = vector.extract_strided_slice %128 {offsets = [0, 2], sizes = [72, 1], strides = [1, 1]} : vector<72x6xf32> to vector<72x1xf32>
    %144 = vector.extract_strided_slice %127 {offsets = [2, 0], sizes = [1, 128], strides = [1, 1]} : vector<6x128xf32> to vector<1x128xf32>
    %145 = vector.broadcast %143 : vector<72x1xf32> to vector<72x128xf32>
    %146 = vector.broadcast %144 : vector<1x128xf32> to vector<72x128xf32>
    %147 = arith.mulf %145, %146 : vector<72x128xf32>
    %148 = arith.addf %142, %147 : vector<72x128xf32>
    %149 = vector.extract_strided_slice %128 {offsets = [0, 3], sizes = [72, 1], strides = [1, 1]} : vector<72x6xf32> to vector<72x1xf32>
    %150 = vector.extract_strided_slice %127 {offsets = [3, 0], sizes = [1, 128], strides = [1, 1]} : vector<6x128xf32> to vector<1x128xf32>
    %151 = vector.broadcast %149 : vector<72x1xf32> to vector<72x128xf32>
    %152 = vector.broadcast %150 : vector<1x128xf32> to vector<72x128xf32>
    %153 = arith.mulf %151, %152 : vector<72x128xf32>
    %154 = arith.addf %148, %153 : vector<72x128xf32>
    %155 = vector.extract_strided_slice %128 {offsets = [0, 4], sizes = [72, 1], strides = [1, 1]} : vector<72x6xf32> to vector<72x1xf32>
    %156 = vector.extract_strided_slice %127 {offsets = [4, 0], sizes = [1, 128], strides = [1, 1]} : vector<6x128xf32> to vector<1x128xf32>
    %157 = vector.broadcast %155 : vector<72x1xf32> to vector<72x128xf32>
    %158 = vector.broadcast %156 : vector<1x128xf32> to vector<72x128xf32>
    %159 = arith.mulf %157, %158 : vector<72x128xf32>
    %160 = arith.addf %154, %159 : vector<72x128xf32>
    %161 = vector.extract_strided_slice %128 {offsets = [0, 5], sizes = [72, 1], strides = [1, 1]} : vector<72x6xf32> to vector<72x1xf32>
    %162 = vector.extract_strided_slice %127 {offsets = [5, 0], sizes = [1, 128], strides = [1, 1]} : vector<6x128xf32> to vector<1x128xf32>
    %163 = vector.broadcast %161 : vector<72x1xf32> to vector<72x128xf32>
    %164 = vector.broadcast %162 : vector<1x128xf32> to vector<72x128xf32>
    %165 = arith.mulf %163, %164 : vector<72x128xf32>
    %166 = arith.addf %160, %165 : vector<72x128xf32>
    %cst_18 = arith.constant 0.000000e+00 : f32
    %167 = vector.broadcast %cst_18 : f32 to vector<72x128xf32>
    %168 = arith.maximumf %166, %167 : vector<72x128xf32>
    %c0_19 = arith.constant 0 : index
    %c0_20 = arith.constant 0 : index
    %169 = vector.load %arg2[%c0_19, %c0_20] : memref<48x72xf32, #tpu.memory_space<vmem>>, vector<6x72xf32>
    %cst_21 = arith.constant dense<0.000000e+00> : vector<6x128xf32>
    %170 = tpu.matmul %169, %168, %cst_21 {dimension_numbers = #tpu.dot_dimension_numbers<[1], [0], [0], [1], [0, 0, 1, 1], [], []>} : vector<6x72xf32>, vector<72x128xf32>, vector<6x128xf32> -> vector<6x128xf32>
    %c0_22 = arith.constant 0 : index
    %c48 = arith.constant 48 : index
    %171 = vector.load %arg1[%c0_22, %c48] : memref<152x128xf32, #tpu.memory_space<vmem>>, vector<6x1xf32>
    %172 = vector.broadcast %171 : vector<6x1xf32> to vector<6x128xf32>
    %173 = arith.addf %170, %172 : vector<6x128xf32>
    %174 = arith.addf %127, %173 : vector<6x128xf32>
    %cst_23 = arith.constant dense<0.000000e+00> : vector<128xf32>
    %175 = vector.multi_reduction <add>, %174, %cst_23 [0] : vector<6x128xf32> to vector<128xf32>
    %176 = vector.shape_cast %175 : vector<128xf32> to vector<1x128xf32>
    %cst_24 = arith.constant 6.000000e+00 : f32
    %177 = vector.broadcast %cst_24 : f32 to vector<1x128xf32>
    %178 = arith.divf %176, %177 : vector<1x128xf32>
    %179 = vector.broadcast %178 : vector<1x128xf32> to vector<6x128xf32>
    %180 = arith.subf %174, %179 : vector<6x128xf32>
    %181 = arith.mulf %180, %180 : vector<6x128xf32>
    %cst_25 = arith.constant dense<0.000000e+00> : vector<128xf32>
    %182 = vector.multi_reduction <add>, %181, %cst_25 [0] : vector<6x128xf32> to vector<128xf32>
    %183 = vector.shape_cast %182 : vector<128xf32> to vector<1x128xf32>
    %cst_26 = arith.constant 6.000000e+00 : f32
    %184 = vector.broadcast %cst_26 : f32 to vector<1x128xf32>
    %185 = arith.divf %183, %184 : vector<1x128xf32>
    %cst_27 = arith.constant 9.99999974E-6 : f32
    %186 = vector.broadcast %cst_27 : f32 to vector<1x128xf32>
    %187 = arith.addf %185, %186 : vector<1x128xf32>
    %188 = math.rsqrt %187 : vector<1x128xf32>
    %189 = vector.broadcast %188 : vector<1x128xf32> to vector<6x128xf32>
    %190 = arith.mulf %180, %189 : vector<6x128xf32>
    %c0_28 = arith.constant 0 : index
    %c72 = arith.constant 72 : index
    %191 = vector.load %arg1[%c0_28, %c72] : memref<152x128xf32, #tpu.memory_space<vmem>>, vector<6x1xf32>
    %192 = vector.broadcast %191 : vector<6x1xf32> to vector<6x128xf32>
    %193 = arith.mulf %190, %192 : vector<6x128xf32>
    %c0_29 = arith.constant 0 : index
    %c80 = arith.constant 80 : index
    %194 = vector.load %arg1[%c0_29, %c80] : memref<152x128xf32, #tpu.memory_space<vmem>>, vector<6x1xf32>
    %195 = vector.broadcast %194 : vector<6x1xf32> to vector<6x128xf32>
    %196 = arith.addf %193, %195 : vector<6x128xf32>
    %c0_30 = arith.constant 0 : index
    %c88 = arith.constant 88 : index
    %197 = vector.load %arg1[%c0_30, %c88] : memref<152x128xf32, #tpu.memory_space<vmem>>, vector<18x6xf32>
    %c0_31 = arith.constant 0 : index
    %c96 = arith.constant 96 : index
    %198 = vector.load %arg1[%c0_31, %c96] : memref<152x128xf32, #tpu.memory_space<vmem>>, vector<18x1xf32>
    %199 = vector.extract_strided_slice %197 {offsets = [0, 0], sizes = [18, 1], strides = [1, 1]} : vector<18x6xf32> to vector<18x1xf32>
    %200 = vector.extract_strided_slice %196 {offsets = [0, 0], sizes = [1, 128], strides = [1, 1]} : vector<6x128xf32> to vector<1x128xf32>
    %201 = vector.broadcast %199 : vector<18x1xf32> to vector<18x128xf32>
    %202 = vector.broadcast %200 : vector<1x128xf32> to vector<18x128xf32>
    %203 = arith.mulf %201, %202 : vector<18x128xf32>
    %204 = vector.broadcast %198 : vector<18x1xf32> to vector<18x128xf32>
    %205 = arith.addf %204, %203 : vector<18x128xf32>
    %206 = vector.extract_strided_slice %197 {offsets = [0, 1], sizes = [18, 1], strides = [1, 1]} : vector<18x6xf32> to vector<18x1xf32>
    %207 = vector.extract_strided_slice %196 {offsets = [1, 0], sizes = [1, 128], strides = [1, 1]} : vector<6x128xf32> to vector<1x128xf32>
    %208 = vector.broadcast %206 : vector<18x1xf32> to vector<18x128xf32>
    %209 = vector.broadcast %207 : vector<1x128xf32> to vector<18x128xf32>
    %210 = arith.mulf %208, %209 : vector<18x128xf32>
    %211 = arith.addf %205, %210 : vector<18x128xf32>
    %212 = vector.extract_strided_slice %197 {offsets = [0, 2], sizes = [18, 1], strides = [1, 1]} : vector<18x6xf32> to vector<18x1xf32>
    %213 = vector.extract_strided_slice %196 {offsets = [2, 0], sizes = [1, 128], strides = [1, 1]} : vector<6x128xf32> to vector<1x128xf32>
    %214 = vector.broadcast %212 : vector<18x1xf32> to vector<18x128xf32>
    %215 = vector.broadcast %213 : vector<1x128xf32> to vector<18x128xf32>
    %216 = arith.mulf %214, %215 : vector<18x128xf32>
    %217 = arith.addf %211, %216 : vector<18x128xf32>
    %218 = vector.extract_strided_slice %197 {offsets = [0, 3], sizes = [18, 1], strides = [1, 1]} : vector<18x6xf32> to vector<18x1xf32>
    %219 = vector.extract_strided_slice %196 {offsets = [3, 0], sizes = [1, 128], strides = [1, 1]} : vector<6x128xf32> to vector<1x128xf32>
    %220 = vector.broadcast %218 : vector<18x1xf32> to vector<18x128xf32>
    %221 = vector.broadcast %219 : vector<1x128xf32> to vector<18x128xf32>
    %222 = arith.mulf %220, %221 : vector<18x128xf32>
    %223 = arith.addf %217, %222 : vector<18x128xf32>
    %224 = vector.extract_strided_slice %197 {offsets = [0, 4], sizes = [18, 1], strides = [1, 1]} : vector<18x6xf32> to vector<18x1xf32>
    %225 = vector.extract_strided_slice %196 {offsets = [4, 0], sizes = [1, 128], strides = [1, 1]} : vector<6x128xf32> to vector<1x128xf32>
    %226 = vector.broadcast %224 : vector<18x1xf32> to vector<18x128xf32>
    %227 = vector.broadcast %225 : vector<1x128xf32> to vector<18x128xf32>
    %228 = arith.mulf %226, %227 : vector<18x128xf32>
    %229 = arith.addf %223, %228 : vector<18x128xf32>
    %230 = vector.extract_strided_slice %197 {offsets = [0, 5], sizes = [18, 1], strides = [1, 1]} : vector<18x6xf32> to vector<18x1xf32>
    %231 = vector.extract_strided_slice %196 {offsets = [5, 0], sizes = [1, 128], strides = [1, 1]} : vector<6x128xf32> to vector<1x128xf32>
    %232 = vector.broadcast %230 : vector<18x1xf32> to vector<18x128xf32>
    %233 = vector.broadcast %231 : vector<1x128xf32> to vector<18x128xf32>
    %234 = arith.mulf %232, %233 : vector<18x128xf32>
    %235 = arith.addf %229, %234 : vector<18x128xf32>
    %236 = vector.extract_strided_slice %235 {offsets = [0, 0], sizes = [6, 128], strides = [1, 1]} : vector<18x128xf32> to vector<6x128xf32>
    %237 = vector.extract_strided_slice %235 {offsets = [6, 0], sizes = [6, 128], strides = [1, 1]} : vector<18x128xf32> to vector<6x128xf32>
    %238 = vector.extract_strided_slice %235 {offsets = [12, 0], sizes = [6, 128], strides = [1, 1]} : vector<18x128xf32> to vector<6x128xf32>
    %239 = vector.extract_strided_slice %237 {offsets = [0, 0], sizes = [6, 2], strides = [1, 1]} : vector<6x128xf32> to vector<6x2xf32>
    %240 = vector.extract_strided_slice %238 {offsets = [0, 0], sizes = [6, 2], strides = [1, 1]} : vector<6x128xf32> to vector<6x2xf32>
    %241 = vector.shape_cast %239 : vector<6x2xf32> to vector<6x2x1xf32>
    %242 = vector.shape_cast %236 : vector<6x128xf32> to vector<6x1x128xf32>
    %243 = vector.broadcast %241 : vector<6x2x1xf32> to vector<6x2x128xf32>
    %244 = vector.broadcast %242 : vector<6x1x128xf32> to vector<6x2x128xf32>
    %245 = arith.mulf %243, %244 : vector<6x2x128xf32>
    %cst_32 = arith.constant dense<0xFF800000> : vector<6x128xf32>
    %246 = vector.multi_reduction <maximumf>, %245, %cst_32 [1] : vector<6x2x128xf32> to vector<6x128xf32>
    %247 = vector.shape_cast %246 : vector<6x128xf32> to vector<6x1x128xf32>
    %248 = vector.broadcast %247 : vector<6x1x128xf32> to vector<6x2x128xf32>
    %249 = arith.subf %245, %248 : vector<6x2x128xf32>
    %250 = math.exp %249 : vector<6x2x128xf32>
    %cst_33 = arith.constant dense<0.000000e+00> : vector<6x128xf32>
    %251 = vector.multi_reduction <add>, %250, %cst_33 [1] : vector<6x2x128xf32> to vector<6x128xf32>
    %252 = vector.shape_cast %240 : vector<6x2xf32> to vector<6x2x1xf32>
    %253 = vector.broadcast %252 : vector<6x2x1xf32> to vector<6x2x128xf32>
    %254 = arith.mulf %250, %253 : vector<6x2x128xf32>
    %cst_34 = arith.constant dense<0.000000e+00> : vector<6x128xf32>
    %255 = vector.multi_reduction <add>, %254, %cst_34 [1] : vector<6x2x128xf32> to vector<6x128xf32>
    %256 = tpu.reciprocal %251 {approx = true} : vector<6x128xf32> -> vector<6x128xf32>
    %257 = arith.mulf %251, %256 : vector<6x128xf32>
    %cst_35 = arith.constant 2.000000e+00 : f32
    %258 = vector.broadcast %cst_35 : f32 to vector<6x128xf32>
    %259 = arith.subf %258, %257 : vector<6x128xf32>
    %260 = arith.mulf %256, %259 : vector<6x128xf32>
    %261 = arith.mulf %255, %260 : vector<6x128xf32>
    %c0_36 = arith.constant 0 : index
    %c104 = arith.constant 104 : index
    %262 = vector.load %arg1[%c0_36, %c104] : memref<152x128xf32, #tpu.memory_space<vmem>>, vector<6x6xf32>
    %c0_37 = arith.constant 0 : index
    %c112 = arith.constant 112 : index
    %263 = vector.load %arg1[%c0_37, %c112] : memref<152x128xf32, #tpu.memory_space<vmem>>, vector<6x1xf32>
    %264 = vector.extract_strided_slice %262 {offsets = [0, 0], sizes = [6, 1], strides = [1, 1]} : vector<6x6xf32> to vector<6x1xf32>
    %265 = vector.extract_strided_slice %261 {offsets = [0, 0], sizes = [1, 128], strides = [1, 1]} : vector<6x128xf32> to vector<1x128xf32>
    %266 = vector.broadcast %264 : vector<6x1xf32> to vector<6x128xf32>
    %267 = vector.broadcast %265 : vector<1x128xf32> to vector<6x128xf32>
    %268 = arith.mulf %266, %267 : vector<6x128xf32>
    %269 = vector.broadcast %263 : vector<6x1xf32> to vector<6x128xf32>
    %270 = arith.addf %269, %268 : vector<6x128xf32>
    %271 = vector.extract_strided_slice %262 {offsets = [0, 1], sizes = [6, 1], strides = [1, 1]} : vector<6x6xf32> to vector<6x1xf32>
    %272 = vector.extract_strided_slice %261 {offsets = [1, 0], sizes = [1, 128], strides = [1, 1]} : vector<6x128xf32> to vector<1x128xf32>
    %273 = vector.broadcast %271 : vector<6x1xf32> to vector<6x128xf32>
    %274 = vector.broadcast %272 : vector<1x128xf32> to vector<6x128xf32>
    %275 = arith.mulf %273, %274 : vector<6x128xf32>
    %276 = arith.addf %270, %275 : vector<6x128xf32>
    %277 = vector.extract_strided_slice %262 {offsets = [0, 2], sizes = [6, 1], strides = [1, 1]} : vector<6x6xf32> to vector<6x1xf32>
    %278 = vector.extract_strided_slice %261 {offsets = [2, 0], sizes = [1, 128], strides = [1, 1]} : vector<6x128xf32> to vector<1x128xf32>
    %279 = vector.broadcast %277 : vector<6x1xf32> to vector<6x128xf32>
    %280 = vector.broadcast %278 : vector<1x128xf32> to vector<6x128xf32>
    %281 = arith.mulf %279, %280 : vector<6x128xf32>
    %282 = arith.addf %276, %281 : vector<6x128xf32>
    %283 = vector.extract_strided_slice %262 {offsets = [0, 3], sizes = [6, 1], strides = [1, 1]} : vector<6x6xf32> to vector<6x1xf32>
    %284 = vector.extract_strided_slice %261 {offsets = [3, 0], sizes = [1, 128], strides = [1, 1]} : vector<6x128xf32> to vector<1x128xf32>
    %285 = vector.broadcast %283 : vector<6x1xf32> to vector<6x128xf32>
    %286 = vector.broadcast %284 : vector<1x128xf32> to vector<6x128xf32>
    %287 = arith.mulf %285, %286 : vector<6x128xf32>
    %288 = arith.addf %282, %287 : vector<6x128xf32>
    %289 = vector.extract_strided_slice %262 {offsets = [0, 4], sizes = [6, 1], strides = [1, 1]} : vector<6x6xf32> to vector<6x1xf32>
    %290 = vector.extract_strided_slice %261 {offsets = [4, 0], sizes = [1, 128], strides = [1, 1]} : vector<6x128xf32> to vector<1x128xf32>
    %291 = vector.broadcast %289 : vector<6x1xf32> to vector<6x128xf32>
    %292 = vector.broadcast %290 : vector<1x128xf32> to vector<6x128xf32>
    %293 = arith.mulf %291, %292 : vector<6x128xf32>
    %294 = arith.addf %288, %293 : vector<6x128xf32>
    %295 = vector.extract_strided_slice %262 {offsets = [0, 5], sizes = [6, 1], strides = [1, 1]} : vector<6x6xf32> to vector<6x1xf32>
    %296 = vector.extract_strided_slice %261 {offsets = [5, 0], sizes = [1, 128], strides = [1, 1]} : vector<6x128xf32> to vector<1x128xf32>
    %297 = vector.broadcast %295 : vector<6x1xf32> to vector<6x128xf32>
    %298 = vector.broadcast %296 : vector<1x128xf32> to vector<6x128xf32>
    %299 = arith.mulf %297, %298 : vector<6x128xf32>
    %300 = arith.addf %294, %299 : vector<6x128xf32>
    %301 = arith.addf %196, %300 : vector<6x128xf32>
    %cst_38 = arith.constant dense<0.000000e+00> : vector<128xf32>
    %302 = vector.multi_reduction <add>, %301, %cst_38 [0] : vector<6x128xf32> to vector<128xf32>
    %303 = vector.shape_cast %302 : vector<128xf32> to vector<1x128xf32>
    %cst_39 = arith.constant 6.000000e+00 : f32
    %304 = vector.broadcast %cst_39 : f32 to vector<1x128xf32>
    %305 = arith.divf %303, %304 : vector<1x128xf32>
    %306 = vector.broadcast %305 : vector<1x128xf32> to vector<6x128xf32>
    %307 = arith.subf %301, %306 : vector<6x128xf32>
    %308 = arith.mulf %307, %307 : vector<6x128xf32>
    %cst_40 = arith.constant dense<0.000000e+00> : vector<128xf32>
    %309 = vector.multi_reduction <add>, %308, %cst_40 [0] : vector<6x128xf32> to vector<128xf32>
    %310 = vector.shape_cast %309 : vector<128xf32> to vector<1x128xf32>
    %cst_41 = arith.constant 6.000000e+00 : f32
    %311 = vector.broadcast %cst_41 : f32 to vector<1x128xf32>
    %312 = arith.divf %310, %311 : vector<1x128xf32>
    %cst_42 = arith.constant 9.99999974E-6 : f32
    %313 = vector.broadcast %cst_42 : f32 to vector<1x128xf32>
    %314 = arith.addf %312, %313 : vector<1x128xf32>
    %315 = math.rsqrt %314 : vector<1x128xf32>
    %316 = vector.broadcast %315 : vector<1x128xf32> to vector<6x128xf32>
    %317 = arith.mulf %307, %316 : vector<6x128xf32>
    %c8_43 = arith.constant 8 : index
    %c48_44 = arith.constant 48 : index
    %318 = vector.load %arg1[%c8_43, %c48_44] : memref<152x128xf32, #tpu.memory_space<vmem>>, vector<6x1xf32>
    %319 = vector.broadcast %318 : vector<6x1xf32> to vector<6x128xf32>
    %320 = arith.mulf %317, %319 : vector<6x128xf32>
    %c8_45 = arith.constant 8 : index
    %c56_46 = arith.constant 56 : index
    %321 = vector.load %arg1[%c8_45, %c56_46] : memref<152x128xf32, #tpu.memory_space<vmem>>, vector<6x1xf32>
    %322 = vector.broadcast %321 : vector<6x1xf32> to vector<6x128xf32>
    %323 = arith.addf %320, %322 : vector<6x128xf32>
    %c0_47 = arith.constant 0 : index
    %c120 = arith.constant 120 : index
    %324 = vector.load %arg1[%c0_47, %c120] : memref<152x128xf32, #tpu.memory_space<vmem>>, vector<72x6xf32>
    %c8_48 = arith.constant 8 : index
    %c16_49 = arith.constant 16 : index
    %325 = vector.load %arg1[%c8_48, %c16_49] : memref<152x128xf32, #tpu.memory_space<vmem>>, vector<72x1xf32>
    %326 = vector.extract_strided_slice %324 {offsets = [0, 0], sizes = [72, 1], strides = [1, 1]} : vector<72x6xf32> to vector<72x1xf32>
    %327 = vector.extract_strided_slice %323 {offsets = [0, 0], sizes = [1, 128], strides = [1, 1]} : vector<6x128xf32> to vector<1x128xf32>
    %328 = vector.broadcast %326 : vector<72x1xf32> to vector<72x128xf32>
    %329 = vector.broadcast %327 : vector<1x128xf32> to vector<72x128xf32>
    %330 = arith.mulf %328, %329 : vector<72x128xf32>
    %331 = vector.broadcast %325 : vector<72x1xf32> to vector<72x128xf32>
    %332 = arith.addf %331, %330 : vector<72x128xf32>
    %333 = vector.extract_strided_slice %324 {offsets = [0, 1], sizes = [72, 1], strides = [1, 1]} : vector<72x6xf32> to vector<72x1xf32>
    %334 = vector.extract_strided_slice %323 {offsets = [1, 0], sizes = [1, 128], strides = [1, 1]} : vector<6x128xf32> to vector<1x128xf32>
    %335 = vector.broadcast %333 : vector<72x1xf32> to vector<72x128xf32>
    %336 = vector.broadcast %334 : vector<1x128xf32> to vector<72x128xf32>
    %337 = arith.mulf %335, %336 : vector<72x128xf32>
    %338 = arith.addf %332, %337 : vector<72x128xf32>
    %339 = vector.extract_strided_slice %324 {offsets = [0, 2], sizes = [72, 1], strides = [1, 1]} : vector<72x6xf32> to vector<72x1xf32>
    %340 = vector.extract_strided_slice %323 {offsets = [2, 0], sizes = [1, 128], strides = [1, 1]} : vector<6x128xf32> to vector<1x128xf32>
    %341 = vector.broadcast %339 : vector<72x1xf32> to vector<72x128xf32>
    %342 = vector.broadcast %340 : vector<1x128xf32> to vector<72x128xf32>
    %343 = arith.mulf %341, %342 : vector<72x128xf32>
    %344 = arith.addf %338, %343 : vector<72x128xf32>
    %345 = vector.extract_strided_slice %324 {offsets = [0, 3], sizes = [72, 1], strides = [1, 1]} : vector<72x6xf32> to vector<72x1xf32>
    %346 = vector.extract_strided_slice %323 {offsets = [3, 0], sizes = [1, 128], strides = [1, 1]} : vector<6x128xf32> to vector<1x128xf32>
    %347 = vector.broadcast %345 : vector<72x1xf32> to vector<72x128xf32>
    %348 = vector.broadcast %346 : vector<1x128xf32> to vector<72x128xf32>
    %349 = arith.mulf %347, %348 : vector<72x128xf32>
    %350 = arith.addf %344, %349 : vector<72x128xf32>
    %351 = vector.extract_strided_slice %324 {offsets = [0, 4], sizes = [72, 1], strides = [1, 1]} : vector<72x6xf32> to vector<72x1xf32>
    %352 = vector.extract_strided_slice %323 {offsets = [4, 0], sizes = [1, 128], strides = [1, 1]} : vector<6x128xf32> to vector<1x128xf32>
    %353 = vector.broadcast %351 : vector<72x1xf32> to vector<72x128xf32>
    %354 = vector.broadcast %352 : vector<1x128xf32> to vector<72x128xf32>
    %355 = arith.mulf %353, %354 : vector<72x128xf32>
    %356 = arith.addf %350, %355 : vector<72x128xf32>
    %357 = vector.extract_strided_slice %324 {offsets = [0, 5], sizes = [72, 1], strides = [1, 1]} : vector<72x6xf32> to vector<72x1xf32>
    %358 = vector.extract_strided_slice %323 {offsets = [5, 0], sizes = [1, 128], strides = [1, 1]} : vector<6x128xf32> to vector<1x128xf32>
    %359 = vector.broadcast %357 : vector<72x1xf32> to vector<72x128xf32>
    %360 = vector.broadcast %358 : vector<1x128xf32> to vector<72x128xf32>
    %361 = arith.mulf %359, %360 : vector<72x128xf32>
    %362 = arith.addf %356, %361 : vector<72x128xf32>
    %cst_50 = arith.constant 0.000000e+00 : f32
    %363 = vector.broadcast %cst_50 : f32 to vector<72x128xf32>
    %364 = arith.maximumf %362, %363 : vector<72x128xf32>
    %c8_51 = arith.constant 8 : index
    %c0_52 = arith.constant 0 : index
    %365 = vector.load %arg2[%c8_51, %c0_52] : memref<48x72xf32, #tpu.memory_space<vmem>>, vector<6x72xf32>
    %cst_53 = arith.constant dense<0.000000e+00> : vector<6x128xf32>
    %366 = tpu.matmul %365, %364, %cst_53 {dimension_numbers = #tpu.dot_dimension_numbers<[1], [0], [0], [1], [0, 0, 1, 1], [], []>} : vector<6x72xf32>, vector<72x128xf32>, vector<6x128xf32> -> vector<6x128xf32>
    %c8_54 = arith.constant 8 : index
    %c24_55 = arith.constant 24 : index
    %367 = vector.load %arg1[%c8_54, %c24_55] : memref<152x128xf32, #tpu.memory_space<vmem>>, vector<6x1xf32>
    %368 = vector.broadcast %367 : vector<6x1xf32> to vector<6x128xf32>
    %369 = arith.addf %366, %368 : vector<6x128xf32>
    %370 = arith.addf %323, %369 : vector<6x128xf32>
    %cst_56 = arith.constant dense<0.000000e+00> : vector<128xf32>
    %371 = vector.multi_reduction <add>, %370, %cst_56 [0] : vector<6x128xf32> to vector<128xf32>
    %372 = vector.shape_cast %371 : vector<128xf32> to vector<1x128xf32>
    %cst_57 = arith.constant 6.000000e+00 : f32
    %373 = vector.broadcast %cst_57 : f32 to vector<1x128xf32>
    %374 = arith.divf %372, %373 : vector<1x128xf32>
    %375 = vector.broadcast %374 : vector<1x128xf32> to vector<6x128xf32>
    %376 = arith.subf %370, %375 : vector<6x128xf32>
    %377 = arith.mulf %376, %376 : vector<6x128xf32>
    %cst_58 = arith.constant dense<0.000000e+00> : vector<128xf32>
    %378 = vector.multi_reduction <add>, %377, %cst_58 [0] : vector<6x128xf32> to vector<128xf32>
    %379 = vector.shape_cast %378 : vector<128xf32> to vector<1x128xf32>
    %cst_59 = arith.constant 6.000000e+00 : f32
    %380 = vector.broadcast %cst_59 : f32 to vector<1x128xf32>
    %381 = arith.divf %379, %380 : vector<1x128xf32>
    %cst_60 = arith.constant 9.99999974E-6 : f32
    %382 = vector.broadcast %cst_60 : f32 to vector<1x128xf32>
    %383 = arith.addf %381, %382 : vector<1x128xf32>
    %384 = math.rsqrt %383 : vector<1x128xf32>
    %385 = vector.broadcast %384 : vector<1x128xf32> to vector<6x128xf32>
    %386 = arith.mulf %376, %385 : vector<6x128xf32>
    %c8_61 = arith.constant 8 : index
    %c64_62 = arith.constant 64 : index
    %387 = vector.load %arg1[%c8_61, %c64_62] : memref<152x128xf32, #tpu.memory_space<vmem>>, vector<6x1xf32>
    %388 = vector.broadcast %387 : vector<6x1xf32> to vector<6x128xf32>
    %389 = arith.mulf %386, %388 : vector<6x128xf32>
    %c8_63 = arith.constant 8 : index
    %c72_64 = arith.constant 72 : index
    %390 = vector.load %arg1[%c8_63, %c72_64] : memref<152x128xf32, #tpu.memory_space<vmem>>, vector<6x1xf32>
    %391 = vector.broadcast %390 : vector<6x1xf32> to vector<6x128xf32>
    %392 = arith.addf %389, %391 : vector<6x128xf32>
    %c8_65 = arith.constant 8 : index
    %c80_66 = arith.constant 80 : index
    %393 = vector.load %arg1[%c8_65, %c80_66] : memref<152x128xf32, #tpu.memory_space<vmem>>, vector<18x6xf32>
    %c8_67 = arith.constant 8 : index
    %c104_68 = arith.constant 104 : index
    %394 = vector.load %arg1[%c8_67, %c104_68] : memref<152x128xf32, #tpu.memory_space<vmem>>, vector<18x1xf32>
    %395 = vector.extract_strided_slice %393 {offsets = [0, 0], sizes = [18, 1], strides = [1, 1]} : vector<18x6xf32> to vector<18x1xf32>
    %396 = vector.extract_strided_slice %392 {offsets = [0, 0], sizes = [1, 128], strides = [1, 1]} : vector<6x128xf32> to vector<1x128xf32>
    %397 = vector.broadcast %395 : vector<18x1xf32> to vector<18x128xf32>
    %398 = vector.broadcast %396 : vector<1x128xf32> to vector<18x128xf32>
    %399 = arith.mulf %397, %398 : vector<18x128xf32>
    %400 = vector.broadcast %394 : vector<18x1xf32> to vector<18x128xf32>
    %401 = arith.addf %400, %399 : vector<18x128xf32>
    %402 = vector.extract_strided_slice %393 {offsets = [0, 1], sizes = [18, 1], strides = [1, 1]} : vector<18x6xf32> to vector<18x1xf32>
    %403 = vector.extract_strided_slice %392 {offsets = [1, 0], sizes = [1, 128], strides = [1, 1]} : vector<6x128xf32> to vector<1x128xf32>
    %404 = vector.broadcast %402 : vector<18x1xf32> to vector<18x128xf32>
    %405 = vector.broadcast %403 : vector<1x128xf32> to vector<18x128xf32>
    %406 = arith.mulf %404, %405 : vector<18x128xf32>
    %407 = arith.addf %401, %406 : vector<18x128xf32>
    %408 = vector.extract_strided_slice %393 {offsets = [0, 2], sizes = [18, 1], strides = [1, 1]} : vector<18x6xf32> to vector<18x1xf32>
    %409 = vector.extract_strided_slice %392 {offsets = [2, 0], sizes = [1, 128], strides = [1, 1]} : vector<6x128xf32> to vector<1x128xf32>
    %410 = vector.broadcast %408 : vector<18x1xf32> to vector<18x128xf32>
    %411 = vector.broadcast %409 : vector<1x128xf32> to vector<18x128xf32>
    %412 = arith.mulf %410, %411 : vector<18x128xf32>
    %413 = arith.addf %407, %412 : vector<18x128xf32>
    %414 = vector.extract_strided_slice %393 {offsets = [0, 3], sizes = [18, 1], strides = [1, 1]} : vector<18x6xf32> to vector<18x1xf32>
    %415 = vector.extract_strided_slice %392 {offsets = [3, 0], sizes = [1, 128], strides = [1, 1]} : vector<6x128xf32> to vector<1x128xf32>
    %416 = vector.broadcast %414 : vector<18x1xf32> to vector<18x128xf32>
    %417 = vector.broadcast %415 : vector<1x128xf32> to vector<18x128xf32>
    %418 = arith.mulf %416, %417 : vector<18x128xf32>
    %419 = arith.addf %413, %418 : vector<18x128xf32>
    %420 = vector.extract_strided_slice %393 {offsets = [0, 4], sizes = [18, 1], strides = [1, 1]} : vector<18x6xf32> to vector<18x1xf32>
    %421 = vector.extract_strided_slice %392 {offsets = [4, 0], sizes = [1, 128], strides = [1, 1]} : vector<6x128xf32> to vector<1x128xf32>
    %422 = vector.broadcast %420 : vector<18x1xf32> to vector<18x128xf32>
    %423 = vector.broadcast %421 : vector<1x128xf32> to vector<18x128xf32>
    %424 = arith.mulf %422, %423 : vector<18x128xf32>
    %425 = arith.addf %419, %424 : vector<18x128xf32>
    %426 = vector.extract_strided_slice %393 {offsets = [0, 5], sizes = [18, 1], strides = [1, 1]} : vector<18x6xf32> to vector<18x1xf32>
    %427 = vector.extract_strided_slice %392 {offsets = [5, 0], sizes = [1, 128], strides = [1, 1]} : vector<6x128xf32> to vector<1x128xf32>
    %428 = vector.broadcast %426 : vector<18x1xf32> to vector<18x128xf32>
    %429 = vector.broadcast %427 : vector<1x128xf32> to vector<18x128xf32>
    %430 = arith.mulf %428, %429 : vector<18x128xf32>
    %431 = arith.addf %425, %430 : vector<18x128xf32>
    %432 = vector.extract_strided_slice %431 {offsets = [0, 0], sizes = [6, 128], strides = [1, 1]} : vector<18x128xf32> to vector<6x128xf32>
    %433 = vector.extract_strided_slice %431 {offsets = [6, 0], sizes = [6, 128], strides = [1, 1]} : vector<18x128xf32> to vector<6x128xf32>
    %434 = vector.extract_strided_slice %431 {offsets = [12, 0], sizes = [6, 128], strides = [1, 1]} : vector<18x128xf32> to vector<6x128xf32>
    %435 = vector.extract_strided_slice %433 {offsets = [0, 0], sizes = [6, 2], strides = [1, 1]} : vector<6x128xf32> to vector<6x2xf32>
    %436 = vector.extract_strided_slice %434 {offsets = [0, 0], sizes = [6, 2], strides = [1, 1]} : vector<6x128xf32> to vector<6x2xf32>
    %437 = vector.shape_cast %435 : vector<6x2xf32> to vector<6x2x1xf32>
    %438 = vector.shape_cast %432 : vector<6x128xf32> to vector<6x1x128xf32>
    %439 = vector.broadcast %437 : vector<6x2x1xf32> to vector<6x2x128xf32>
    %440 = vector.broadcast %438 : vector<6x1x128xf32> to vector<6x2x128xf32>
    %441 = arith.mulf %439, %440 : vector<6x2x128xf32>
    %cst_69 = arith.constant dense<0xFF800000> : vector<6x128xf32>
    %442 = vector.multi_reduction <maximumf>, %441, %cst_69 [1] : vector<6x2x128xf32> to vector<6x128xf32>
    %443 = vector.shape_cast %442 : vector<6x128xf32> to vector<6x1x128xf32>
    %444 = vector.broadcast %443 : vector<6x1x128xf32> to vector<6x2x128xf32>
    %445 = arith.subf %441, %444 : vector<6x2x128xf32>
    %446 = math.exp %445 : vector<6x2x128xf32>
    %cst_70 = arith.constant dense<0.000000e+00> : vector<6x128xf32>
    %447 = vector.multi_reduction <add>, %446, %cst_70 [1] : vector<6x2x128xf32> to vector<6x128xf32>
    %448 = vector.shape_cast %436 : vector<6x2xf32> to vector<6x2x1xf32>
    %449 = vector.broadcast %448 : vector<6x2x1xf32> to vector<6x2x128xf32>
    %450 = arith.mulf %446, %449 : vector<6x2x128xf32>
    %cst_71 = arith.constant dense<0.000000e+00> : vector<6x128xf32>
    %451 = vector.multi_reduction <add>, %450, %cst_71 [1] : vector<6x2x128xf32> to vector<6x128xf32>
    %452 = tpu.reciprocal %447 {approx = true} : vector<6x128xf32> -> vector<6x128xf32>
    %453 = arith.mulf %447, %452 : vector<6x128xf32>
    %cst_72 = arith.constant 2.000000e+00 : f32
    %454 = vector.broadcast %cst_72 : f32 to vector<6x128xf32>
    %455 = arith.subf %454, %453 : vector<6x128xf32>
    %456 = arith.mulf %452, %455 : vector<6x128xf32>
    %457 = arith.mulf %451, %456 : vector<6x128xf32>
    %c8_73 = arith.constant 8 : index
    %c112_74 = arith.constant 112 : index
    %458 = vector.load %arg1[%c8_73, %c112_74] : memref<152x128xf32, #tpu.memory_space<vmem>>, vector<6x6xf32>
    %c16_75 = arith.constant 16 : index
    %c24_76 = arith.constant 24 : index
    %459 = vector.load %arg1[%c16_75, %c24_76] : memref<152x128xf32, #tpu.memory_space<vmem>>, vector<6x1xf32>
    %460 = vector.extract_strided_slice %458 {offsets = [0, 0], sizes = [6, 1], strides = [1, 1]} : vector<6x6xf32> to vector<6x1xf32>
    %461 = vector.extract_strided_slice %457 {offsets = [0, 0], sizes = [1, 128], strides = [1, 1]} : vector<6x128xf32> to vector<1x128xf32>
    %462 = vector.broadcast %460 : vector<6x1xf32> to vector<6x128xf32>
    %463 = vector.broadcast %461 : vector<1x128xf32> to vector<6x128xf32>
    %464 = arith.mulf %462, %463 : vector<6x128xf32>
    %465 = vector.broadcast %459 : vector<6x1xf32> to vector<6x128xf32>
    %466 = arith.addf %465, %464 : vector<6x128xf32>
    %467 = vector.extract_strided_slice %458 {offsets = [0, 1], sizes = [6, 1], strides = [1, 1]} : vector<6x6xf32> to vector<6x1xf32>
    %468 = vector.extract_strided_slice %457 {offsets = [1, 0], sizes = [1, 128], strides = [1, 1]} : vector<6x128xf32> to vector<1x128xf32>
    %469 = vector.broadcast %467 : vector<6x1xf32> to vector<6x128xf32>
    %470 = vector.broadcast %468 : vector<1x128xf32> to vector<6x128xf32>
    %471 = arith.mulf %469, %470 : vector<6x128xf32>
    %472 = arith.addf %466, %471 : vector<6x128xf32>
    %473 = vector.extract_strided_slice %458 {offsets = [0, 2], sizes = [6, 1], strides = [1, 1]} : vector<6x6xf32> to vector<6x1xf32>
    %474 = vector.extract_strided_slice %457 {offsets = [2, 0], sizes = [1, 128], strides = [1, 1]} : vector<6x128xf32> to vector<1x128xf32>
    %475 = vector.broadcast %473 : vector<6x1xf32> to vector<6x128xf32>
    %476 = vector.broadcast %474 : vector<1x128xf32> to vector<6x128xf32>
    %477 = arith.mulf %475, %476 : vector<6x128xf32>
    %478 = arith.addf %472, %477 : vector<6x128xf32>
    %479 = vector.extract_strided_slice %458 {offsets = [0, 3], sizes = [6, 1], strides = [1, 1]} : vector<6x6xf32> to vector<6x1xf32>
    %480 = vector.extract_strided_slice %457 {offsets = [3, 0], sizes = [1, 128], strides = [1, 1]} : vector<6x128xf32> to vector<1x128xf32>
    %481 = vector.broadcast %479 : vector<6x1xf32> to vector<6x128xf32>
    %482 = vector.broadcast %480 : vector<1x128xf32> to vector<6x128xf32>
    %483 = arith.mulf %481, %482 : vector<6x128xf32>
    %484 = arith.addf %478, %483 : vector<6x128xf32>
    %485 = vector.extract_strided_slice %458 {offsets = [0, 4], sizes = [6, 1], strides = [1, 1]} : vector<6x6xf32> to vector<6x1xf32>
    %486 = vector.extract_strided_slice %457 {offsets = [4, 0], sizes = [1, 128], strides = [1, 1]} : vector<6x128xf32> to vector<1x128xf32>
    %487 = vector.broadcast %485 : vector<6x1xf32> to vector<6x128xf32>
    %488 = vector.broadcast %486 : vector<1x128xf32> to vector<6x128xf32>
    %489 = arith.mulf %487, %488 : vector<6x128xf32>
    %490 = arith.addf %484, %489 : vector<6x128xf32>
    %491 = vector.extract_strided_slice %458 {offsets = [0, 5], sizes = [6, 1], strides = [1, 1]} : vector<6x6xf32> to vector<6x1xf32>
    %492 = vector.extract_strided_slice %457 {offsets = [5, 0], sizes = [1, 128], strides = [1, 1]} : vector<6x128xf32> to vector<1x128xf32>
    %493 = vector.broadcast %491 : vector<6x1xf32> to vector<6x128xf32>
    %494 = vector.broadcast %492 : vector<1x128xf32> to vector<6x128xf32>
    %495 = arith.mulf %493, %494 : vector<6x128xf32>
    %496 = arith.addf %490, %495 : vector<6x128xf32>
    %497 = arith.addf %392, %496 : vector<6x128xf32>
    %cst_77 = arith.constant dense<0.000000e+00> : vector<128xf32>
    %498 = vector.multi_reduction <add>, %497, %cst_77 [0] : vector<6x128xf32> to vector<128xf32>
    %499 = vector.shape_cast %498 : vector<128xf32> to vector<1x128xf32>
    %cst_78 = arith.constant 6.000000e+00 : f32
    %500 = vector.broadcast %cst_78 : f32 to vector<1x128xf32>
    %501 = arith.divf %499, %500 : vector<1x128xf32>
    %502 = vector.broadcast %501 : vector<1x128xf32> to vector<6x128xf32>
    %503 = arith.subf %497, %502 : vector<6x128xf32>
    %504 = arith.mulf %503, %503 : vector<6x128xf32>
    %cst_79 = arith.constant dense<0.000000e+00> : vector<128xf32>
    %505 = vector.multi_reduction <add>, %504, %cst_79 [0] : vector<6x128xf32> to vector<128xf32>
    %506 = vector.shape_cast %505 : vector<128xf32> to vector<1x128xf32>
    %cst_80 = arith.constant 6.000000e+00 : f32
    %507 = vector.broadcast %cst_80 : f32 to vector<1x128xf32>
    %508 = arith.divf %506, %507 : vector<1x128xf32>
    %cst_81 = arith.constant 9.99999974E-6 : f32
    %509 = vector.broadcast %cst_81 : f32 to vector<1x128xf32>
    %510 = arith.addf %508, %509 : vector<1x128xf32>
    %511 = math.rsqrt %510 : vector<1x128xf32>
    %512 = vector.broadcast %511 : vector<1x128xf32> to vector<6x128xf32>
    %513 = arith.mulf %503, %512 : vector<6x128xf32>
    %c16_82 = arith.constant 16 : index
    %c72_83 = arith.constant 72 : index
    %514 = vector.load %arg1[%c16_82, %c72_83] : memref<152x128xf32, #tpu.memory_space<vmem>>, vector<6x1xf32>
    %515 = vector.broadcast %514 : vector<6x1xf32> to vector<6x128xf32>
    %516 = arith.mulf %513, %515 : vector<6x128xf32>
    %c16_84 = arith.constant 16 : index
    %c112_85 = arith.constant 112 : index
    %517 = vector.load %arg1[%c16_84, %c112_85] : memref<152x128xf32, #tpu.memory_space<vmem>>, vector<6x1xf32>
    %518 = vector.broadcast %517 : vector<6x1xf32> to vector<6x128xf32>
    %519 = arith.addf %516, %518 : vector<6x128xf32>
    %c16_86 = arith.constant 16 : index
    %c48_87 = arith.constant 48 : index
    %520 = vector.load %arg1[%c16_86, %c48_87] : memref<152x128xf32, #tpu.memory_space<vmem>>, vector<72x6xf32>
    %c16_88 = arith.constant 16 : index
    %c56_89 = arith.constant 56 : index
    %521 = vector.load %arg1[%c16_88, %c56_89] : memref<152x128xf32, #tpu.memory_space<vmem>>, vector<72x1xf32>
    %522 = vector.extract_strided_slice %520 {offsets = [0, 0], sizes = [72, 1], strides = [1, 1]} : vector<72x6xf32> to vector<72x1xf32>
    %523 = vector.extract_strided_slice %519 {offsets = [0, 0], sizes = [1, 128], strides = [1, 1]} : vector<6x128xf32> to vector<1x128xf32>
    %524 = vector.broadcast %522 : vector<72x1xf32> to vector<72x128xf32>
    %525 = vector.broadcast %523 : vector<1x128xf32> to vector<72x128xf32>
    %526 = arith.mulf %524, %525 : vector<72x128xf32>
    %527 = vector.broadcast %521 : vector<72x1xf32> to vector<72x128xf32>
    %528 = arith.addf %527, %526 : vector<72x128xf32>
    %529 = vector.extract_strided_slice %520 {offsets = [0, 1], sizes = [72, 1], strides = [1, 1]} : vector<72x6xf32> to vector<72x1xf32>
    %530 = vector.extract_strided_slice %519 {offsets = [1, 0], sizes = [1, 128], strides = [1, 1]} : vector<6x128xf32> to vector<1x128xf32>
    %531 = vector.broadcast %529 : vector<72x1xf32> to vector<72x128xf32>
    %532 = vector.broadcast %530 : vector<1x128xf32> to vector<72x128xf32>
    %533 = arith.mulf %531, %532 : vector<72x128xf32>
    %534 = arith.addf %528, %533 : vector<72x128xf32>
    %535 = vector.extract_strided_slice %520 {offsets = [0, 2], sizes = [72, 1], strides = [1, 1]} : vector<72x6xf32> to vector<72x1xf32>
    %536 = vector.extract_strided_slice %519 {offsets = [2, 0], sizes = [1, 128], strides = [1, 1]} : vector<6x128xf32> to vector<1x128xf32>
    %537 = vector.broadcast %535 : vector<72x1xf32> to vector<72x128xf32>
    %538 = vector.broadcast %536 : vector<1x128xf32> to vector<72x128xf32>
    %539 = arith.mulf %537, %538 : vector<72x128xf32>
    %540 = arith.addf %534, %539 : vector<72x128xf32>
    %541 = vector.extract_strided_slice %520 {offsets = [0, 3], sizes = [72, 1], strides = [1, 1]} : vector<72x6xf32> to vector<72x1xf32>
    %542 = vector.extract_strided_slice %519 {offsets = [3, 0], sizes = [1, 128], strides = [1, 1]} : vector<6x128xf32> to vector<1x128xf32>
    %543 = vector.broadcast %541 : vector<72x1xf32> to vector<72x128xf32>
    %544 = vector.broadcast %542 : vector<1x128xf32> to vector<72x128xf32>
    %545 = arith.mulf %543, %544 : vector<72x128xf32>
    %546 = arith.addf %540, %545 : vector<72x128xf32>
    %547 = vector.extract_strided_slice %520 {offsets = [0, 4], sizes = [72, 1], strides = [1, 1]} : vector<72x6xf32> to vector<72x1xf32>
    %548 = vector.extract_strided_slice %519 {offsets = [4, 0], sizes = [1, 128], strides = [1, 1]} : vector<6x128xf32> to vector<1x128xf32>
    %549 = vector.broadcast %547 : vector<72x1xf32> to vector<72x128xf32>
    %550 = vector.broadcast %548 : vector<1x128xf32> to vector<72x128xf32>
    %551 = arith.mulf %549, %550 : vector<72x128xf32>
    %552 = arith.addf %546, %551 : vector<72x128xf32>
    %553 = vector.extract_strided_slice %520 {offsets = [0, 5], sizes = [72, 1], strides = [1, 1]} : vector<72x6xf32> to vector<72x1xf32>
    %554 = vector.extract_strided_slice %519 {offsets = [5, 0], sizes = [1, 128], strides = [1, 1]} : vector<6x128xf32> to vector<1x128xf32>
    %555 = vector.broadcast %553 : vector<72x1xf32> to vector<72x128xf32>
    %556 = vector.broadcast %554 : vector<1x128xf32> to vector<72x128xf32>
    %557 = arith.mulf %555, %556 : vector<72x128xf32>
    %558 = arith.addf %552, %557 : vector<72x128xf32>
    %cst_90 = arith.constant 0.000000e+00 : f32
    %559 = vector.broadcast %cst_90 : f32 to vector<72x128xf32>
    %560 = arith.maximumf %558, %559 : vector<72x128xf32>
    %c16_91 = arith.constant 16 : index
    %c0_92 = arith.constant 0 : index
    %561 = vector.load %arg2[%c16_91, %c0_92] : memref<48x72xf32, #tpu.memory_space<vmem>>, vector<6x72xf32>
    %cst_93 = arith.constant dense<0.000000e+00> : vector<6x128xf32>
    %562 = tpu.matmul %561, %560, %cst_93 {dimension_numbers = #tpu.dot_dimension_numbers<[1], [0], [0], [1], [0, 0, 1, 1], [], []>} : vector<6x72xf32>, vector<72x128xf32>, vector<6x128xf32> -> vector<6x128xf32>
    %c16_94 = arith.constant 16 : index
    %c64_95 = arith.constant 64 : index
    %563 = vector.load %arg1[%c16_94, %c64_95] : memref<152x128xf32, #tpu.memory_space<vmem>>, vector<6x1xf32>
    %564 = vector.broadcast %563 : vector<6x1xf32> to vector<6x128xf32>
    %565 = arith.addf %562, %564 : vector<6x128xf32>
    %566 = arith.addf %519, %565 : vector<6x128xf32>
    %cst_96 = arith.constant dense<0.000000e+00> : vector<128xf32>
    %567 = vector.multi_reduction <add>, %566, %cst_96 [0] : vector<6x128xf32> to vector<128xf32>
    %568 = vector.shape_cast %567 : vector<128xf32> to vector<1x128xf32>
    %cst_97 = arith.constant 6.000000e+00 : f32
    %569 = vector.broadcast %cst_97 : f32 to vector<1x128xf32>
    %570 = arith.divf %568, %569 : vector<1x128xf32>
    %571 = vector.broadcast %570 : vector<1x128xf32> to vector<6x128xf32>
    %572 = arith.subf %566, %571 : vector<6x128xf32>
    %573 = arith.mulf %572, %572 : vector<6x128xf32>
    %cst_98 = arith.constant dense<0.000000e+00> : vector<128xf32>
    %574 = vector.multi_reduction <add>, %573, %cst_98 [0] : vector<6x128xf32> to vector<128xf32>
    %575 = vector.shape_cast %574 : vector<128xf32> to vector<1x128xf32>
    %cst_99 = arith.constant 6.000000e+00 : f32
    %576 = vector.broadcast %cst_99 : f32 to vector<1x128xf32>
    %577 = arith.divf %575, %576 : vector<1x128xf32>
    %cst_100 = arith.constant 9.99999974E-6 : f32
    %578 = vector.broadcast %cst_100 : f32 to vector<1x128xf32>
    %579 = arith.addf %577, %578 : vector<1x128xf32>
    %580 = math.rsqrt %579 : vector<1x128xf32>
    %581 = vector.broadcast %580 : vector<1x128xf32> to vector<6x128xf32>
    %582 = arith.mulf %572, %581 : vector<6x128xf32>
    %c24_101 = arith.constant 24 : index
    %c0_102 = arith.constant 0 : index
    %583 = vector.load %arg1[%c24_101, %c0_102] : memref<152x128xf32, #tpu.memory_space<vmem>>, vector<6x1xf32>
    %584 = vector.broadcast %583 : vector<6x1xf32> to vector<6x128xf32>
    %585 = arith.mulf %582, %584 : vector<6x128xf32>
    %c24_103 = arith.constant 24 : index
    %c8_104 = arith.constant 8 : index
    %586 = vector.load %arg1[%c24_103, %c8_104] : memref<152x128xf32, #tpu.memory_space<vmem>>, vector<6x1xf32>
    %587 = vector.broadcast %586 : vector<6x1xf32> to vector<6x128xf32>
    %588 = arith.addf %585, %587 : vector<6x128xf32>
    %cst_105 = arith.constant dense<0.000000e+00> : vector<128xf32>
    %589 = vector.multi_reduction <add>, %588, %cst_105 [0] : vector<6x128xf32> to vector<128xf32>
    %590 = vector.shape_cast %589 : vector<128xf32> to vector<1x128xf32>
    %cst_106 = arith.constant 6.000000e+00 : f32
    %591 = vector.broadcast %cst_106 : f32 to vector<1x128xf32>
    %592 = arith.divf %590, %591 : vector<1x128xf32>
    %593 = vector.broadcast %592 : vector<1x128xf32> to vector<6x128xf32>
    %594 = arith.subf %588, %593 : vector<6x128xf32>
    %595 = arith.mulf %594, %594 : vector<6x128xf32>
    %cst_107 = arith.constant dense<0.000000e+00> : vector<128xf32>
    %596 = vector.multi_reduction <add>, %595, %cst_107 [0] : vector<6x128xf32> to vector<128xf32>
    %597 = vector.shape_cast %596 : vector<128xf32> to vector<1x128xf32>
    %cst_108 = arith.constant 6.000000e+00 : f32
    %598 = vector.broadcast %cst_108 : f32 to vector<1x128xf32>
    %599 = arith.divf %597, %598 : vector<1x128xf32>
    %cst_109 = arith.constant 9.99999974E-6 : f32
    %600 = vector.broadcast %cst_109 : f32 to vector<1x128xf32>
    %601 = arith.addf %599, %600 : vector<1x128xf32>
    %602 = math.rsqrt %601 : vector<1x128xf32>
    %603 = vector.broadcast %602 : vector<1x128xf32> to vector<6x128xf32>
    %604 = arith.mulf %594, %603 : vector<6x128xf32>
    %c24_110 = arith.constant 24 : index
    %c24_111 = arith.constant 24 : index
    %605 = vector.load %arg1[%c24_110, %c24_111] : memref<152x128xf32, #tpu.memory_space<vmem>>, vector<6x1xf32>
    %606 = vector.broadcast %605 : vector<6x1xf32> to vector<6x128xf32>
    %607 = arith.mulf %604, %606 : vector<6x128xf32>
    %c24_112 = arith.constant 24 : index
    %c64_113 = arith.constant 64 : index
    %608 = vector.load %arg1[%c24_112, %c64_113] : memref<152x128xf32, #tpu.memory_space<vmem>>, vector<6x1xf32>
    %609 = vector.broadcast %608 : vector<6x1xf32> to vector<6x128xf32>
    %610 = arith.addf %607, %609 : vector<6x128xf32>
    %c24_114 = arith.constant 24 : index
    %c72_115 = arith.constant 72 : index
    %611 = vector.load %arg1[%c24_114, %c72_115] : memref<152x128xf32, #tpu.memory_space<vmem>>, vector<18x6xf32>
    %c24_116 = arith.constant 24 : index
    %c88_117 = arith.constant 88 : index
    %612 = vector.load %arg1[%c24_116, %c88_117] : memref<152x128xf32, #tpu.memory_space<vmem>>, vector<18x1xf32>
    %613 = vector.extract_strided_slice %611 {offsets = [0, 0], sizes = [18, 1], strides = [1, 1]} : vector<18x6xf32> to vector<18x1xf32>
    %614 = vector.extract_strided_slice %0 {offsets = [0, 0], sizes = [1, 128], strides = [1, 1]} : vector<6x128xf32> to vector<1x128xf32>
    %615 = vector.broadcast %613 : vector<18x1xf32> to vector<18x128xf32>
    %616 = vector.broadcast %614 : vector<1x128xf32> to vector<18x128xf32>
    %617 = arith.mulf %615, %616 : vector<18x128xf32>
    %618 = vector.broadcast %612 : vector<18x1xf32> to vector<18x128xf32>
    %619 = arith.addf %618, %617 : vector<18x128xf32>
    %620 = vector.extract_strided_slice %611 {offsets = [0, 1], sizes = [18, 1], strides = [1, 1]} : vector<18x6xf32> to vector<18x1xf32>
    %621 = vector.extract_strided_slice %0 {offsets = [1, 0], sizes = [1, 128], strides = [1, 1]} : vector<6x128xf32> to vector<1x128xf32>
    %622 = vector.broadcast %620 : vector<18x1xf32> to vector<18x128xf32>
    %623 = vector.broadcast %621 : vector<1x128xf32> to vector<18x128xf32>
    %624 = arith.mulf %622, %623 : vector<18x128xf32>
    %625 = arith.addf %619, %624 : vector<18x128xf32>
    %626 = vector.extract_strided_slice %611 {offsets = [0, 2], sizes = [18, 1], strides = [1, 1]} : vector<18x6xf32> to vector<18x1xf32>
    %627 = vector.extract_strided_slice %0 {offsets = [2, 0], sizes = [1, 128], strides = [1, 1]} : vector<6x128xf32> to vector<1x128xf32>
    %628 = vector.broadcast %626 : vector<18x1xf32> to vector<18x128xf32>
    %629 = vector.broadcast %627 : vector<1x128xf32> to vector<18x128xf32>
    %630 = arith.mulf %628, %629 : vector<18x128xf32>
    %631 = arith.addf %625, %630 : vector<18x128xf32>
    %632 = vector.extract_strided_slice %611 {offsets = [0, 3], sizes = [18, 1], strides = [1, 1]} : vector<18x6xf32> to vector<18x1xf32>
    %633 = vector.extract_strided_slice %0 {offsets = [3, 0], sizes = [1, 128], strides = [1, 1]} : vector<6x128xf32> to vector<1x128xf32>
    %634 = vector.broadcast %632 : vector<18x1xf32> to vector<18x128xf32>
    %635 = vector.broadcast %633 : vector<1x128xf32> to vector<18x128xf32>
    %636 = arith.mulf %634, %635 : vector<18x128xf32>
    %637 = arith.addf %631, %636 : vector<18x128xf32>
    %638 = vector.extract_strided_slice %611 {offsets = [0, 4], sizes = [18, 1], strides = [1, 1]} : vector<18x6xf32> to vector<18x1xf32>
    %639 = vector.extract_strided_slice %0 {offsets = [4, 0], sizes = [1, 128], strides = [1, 1]} : vector<6x128xf32> to vector<1x128xf32>
    %640 = vector.broadcast %638 : vector<18x1xf32> to vector<18x128xf32>
    %641 = vector.broadcast %639 : vector<1x128xf32> to vector<18x128xf32>
    %642 = arith.mulf %640, %641 : vector<18x128xf32>
    %643 = arith.addf %637, %642 : vector<18x128xf32>
    %644 = vector.extract_strided_slice %611 {offsets = [0, 5], sizes = [18, 1], strides = [1, 1]} : vector<18x6xf32> to vector<18x1xf32>
    %645 = vector.extract_strided_slice %0 {offsets = [5, 0], sizes = [1, 128], strides = [1, 1]} : vector<6x128xf32> to vector<1x128xf32>
    %646 = vector.broadcast %644 : vector<18x1xf32> to vector<18x128xf32>
    %647 = vector.broadcast %645 : vector<1x128xf32> to vector<18x128xf32>
    %648 = arith.mulf %646, %647 : vector<18x128xf32>
    %649 = arith.addf %643, %648 : vector<18x128xf32>
    %650 = vector.extract_strided_slice %649 {offsets = [0, 0], sizes = [6, 128], strides = [1, 1]} : vector<18x128xf32> to vector<6x128xf32>
    %651 = vector.extract_strided_slice %649 {offsets = [6, 0], sizes = [6, 128], strides = [1, 1]} : vector<18x128xf32> to vector<6x128xf32>
    %652 = vector.extract_strided_slice %649 {offsets = [12, 0], sizes = [6, 128], strides = [1, 1]} : vector<18x128xf32> to vector<6x128xf32>
    %653 = vector.extract_strided_slice %651 {offsets = [0, 0], sizes = [6, 2], strides = [1, 1]} : vector<6x128xf32> to vector<6x2xf32>
    %654 = vector.extract_strided_slice %652 {offsets = [0, 0], sizes = [6, 2], strides = [1, 1]} : vector<6x128xf32> to vector<6x2xf32>
    %655 = vector.shape_cast %653 : vector<6x2xf32> to vector<6x2x1xf32>
    %656 = vector.shape_cast %650 : vector<6x128xf32> to vector<6x1x128xf32>
    %657 = vector.broadcast %655 : vector<6x2x1xf32> to vector<6x2x128xf32>
    %658 = vector.broadcast %656 : vector<6x1x128xf32> to vector<6x2x128xf32>
    %659 = arith.mulf %657, %658 : vector<6x2x128xf32>
    %cst_118 = arith.constant dense<0xFF800000> : vector<6x128xf32>
    %660 = vector.multi_reduction <maximumf>, %659, %cst_118 [1] : vector<6x2x128xf32> to vector<6x128xf32>
    %661 = vector.shape_cast %660 : vector<6x128xf32> to vector<6x1x128xf32>
    %662 = vector.broadcast %661 : vector<6x1x128xf32> to vector<6x2x128xf32>
    %663 = arith.subf %659, %662 : vector<6x2x128xf32>
    %664 = math.exp %663 : vector<6x2x128xf32>
    %cst_119 = arith.constant dense<0.000000e+00> : vector<6x128xf32>
    %665 = vector.multi_reduction <add>, %664, %cst_119 [1] : vector<6x2x128xf32> to vector<6x128xf32>
    %666 = vector.shape_cast %654 : vector<6x2xf32> to vector<6x2x1xf32>
    %667 = vector.broadcast %666 : vector<6x2x1xf32> to vector<6x2x128xf32>
    %668 = arith.mulf %664, %667 : vector<6x2x128xf32>
    %cst_120 = arith.constant dense<0.000000e+00> : vector<6x128xf32>
    %669 = vector.multi_reduction <add>, %668, %cst_120 [1] : vector<6x2x128xf32> to vector<6x128xf32>
    %670 = tpu.reciprocal %665 {approx = true} : vector<6x128xf32> -> vector<6x128xf32>
    %671 = arith.mulf %665, %670 : vector<6x128xf32>
    %cst_121 = arith.constant 2.000000e+00 : f32
    %672 = vector.broadcast %cst_121 : f32 to vector<6x128xf32>
    %673 = arith.subf %672, %671 : vector<6x128xf32>
    %674 = arith.mulf %670, %673 : vector<6x128xf32>
    %675 = arith.mulf %669, %674 : vector<6x128xf32>
    %c24_122 = arith.constant 24 : index
    %c96_123 = arith.constant 96 : index
    %676 = vector.load %arg1[%c24_122, %c96_123] : memref<152x128xf32, #tpu.memory_space<vmem>>, vector<6x6xf32>
    %c24_124 = arith.constant 24 : index
    %c112_125 = arith.constant 112 : index
    %677 = vector.load %arg1[%c24_124, %c112_125] : memref<152x128xf32, #tpu.memory_space<vmem>>, vector<6x1xf32>
    %678 = vector.extract_strided_slice %676 {offsets = [0, 0], sizes = [6, 1], strides = [1, 1]} : vector<6x6xf32> to vector<6x1xf32>
    %679 = vector.extract_strided_slice %675 {offsets = [0, 0], sizes = [1, 128], strides = [1, 1]} : vector<6x128xf32> to vector<1x128xf32>
    %680 = vector.broadcast %678 : vector<6x1xf32> to vector<6x128xf32>
    %681 = vector.broadcast %679 : vector<1x128xf32> to vector<6x128xf32>
    %682 = arith.mulf %680, %681 : vector<6x128xf32>
    %683 = vector.broadcast %677 : vector<6x1xf32> to vector<6x128xf32>
    %684 = arith.addf %683, %682 : vector<6x128xf32>
    %685 = vector.extract_strided_slice %676 {offsets = [0, 1], sizes = [6, 1], strides = [1, 1]} : vector<6x6xf32> to vector<6x1xf32>
    %686 = vector.extract_strided_slice %675 {offsets = [1, 0], sizes = [1, 128], strides = [1, 1]} : vector<6x128xf32> to vector<1x128xf32>
    %687 = vector.broadcast %685 : vector<6x1xf32> to vector<6x128xf32>
    %688 = vector.broadcast %686 : vector<1x128xf32> to vector<6x128xf32>
    %689 = arith.mulf %687, %688 : vector<6x128xf32>
    %690 = arith.addf %684, %689 : vector<6x128xf32>
    %691 = vector.extract_strided_slice %676 {offsets = [0, 2], sizes = [6, 1], strides = [1, 1]} : vector<6x6xf32> to vector<6x1xf32>
    %692 = vector.extract_strided_slice %675 {offsets = [2, 0], sizes = [1, 128], strides = [1, 1]} : vector<6x128xf32> to vector<1x128xf32>
    %693 = vector.broadcast %691 : vector<6x1xf32> to vector<6x128xf32>
    %694 = vector.broadcast %692 : vector<1x128xf32> to vector<6x128xf32>
    %695 = arith.mulf %693, %694 : vector<6x128xf32>
    %696 = arith.addf %690, %695 : vector<6x128xf32>
    %697 = vector.extract_strided_slice %676 {offsets = [0, 3], sizes = [6, 1], strides = [1, 1]} : vector<6x6xf32> to vector<6x1xf32>
    %698 = vector.extract_strided_slice %675 {offsets = [3, 0], sizes = [1, 128], strides = [1, 1]} : vector<6x128xf32> to vector<1x128xf32>
    %699 = vector.broadcast %697 : vector<6x1xf32> to vector<6x128xf32>
    %700 = vector.broadcast %698 : vector<1x128xf32> to vector<6x128xf32>
    %701 = arith.mulf %699, %700 : vector<6x128xf32>
    %702 = arith.addf %696, %701 : vector<6x128xf32>
    %703 = vector.extract_strided_slice %676 {offsets = [0, 4], sizes = [6, 1], strides = [1, 1]} : vector<6x6xf32> to vector<6x1xf32>
    %704 = vector.extract_strided_slice %675 {offsets = [4, 0], sizes = [1, 128], strides = [1, 1]} : vector<6x128xf32> to vector<1x128xf32>
    %705 = vector.broadcast %703 : vector<6x1xf32> to vector<6x128xf32>
    %706 = vector.broadcast %704 : vector<1x128xf32> to vector<6x128xf32>
    %707 = arith.mulf %705, %706 : vector<6x128xf32>
    %708 = arith.addf %702, %707 : vector<6x128xf32>
    %709 = vector.extract_strided_slice %676 {offsets = [0, 5], sizes = [6, 1], strides = [1, 1]} : vector<6x6xf32> to vector<6x1xf32>
    %710 = vector.extract_strided_slice %675 {offsets = [5, 0], sizes = [1, 128], strides = [1, 1]} : vector<6x128xf32> to vector<1x128xf32>
    %711 = vector.broadcast %709 : vector<6x1xf32> to vector<6x128xf32>
    %712 = vector.broadcast %710 : vector<1x128xf32> to vector<6x128xf32>
    %713 = arith.mulf %711, %712 : vector<6x128xf32>
    %714 = arith.addf %708, %713 : vector<6x128xf32>
    %715 = arith.addf %0, %714 : vector<6x128xf32>
    %cst_126 = arith.constant dense<0.000000e+00> : vector<128xf32>
    %716 = vector.multi_reduction <add>, %715, %cst_126 [0] : vector<6x128xf32> to vector<128xf32>
    %717 = vector.shape_cast %716 : vector<128xf32> to vector<1x128xf32>
    %cst_127 = arith.constant 6.000000e+00 : f32
    %718 = vector.broadcast %cst_127 : f32 to vector<1x128xf32>
    %719 = arith.divf %717, %718 : vector<1x128xf32>
    %720 = vector.broadcast %719 : vector<1x128xf32> to vector<6x128xf32>
    %721 = arith.subf %715, %720 : vector<6x128xf32>
    %722 = arith.mulf %721, %721 : vector<6x128xf32>
    %cst_128 = arith.constant dense<0.000000e+00> : vector<128xf32>
    %723 = vector.multi_reduction <add>, %722, %cst_128 [0] : vector<6x128xf32> to vector<128xf32>
    %724 = vector.shape_cast %723 : vector<128xf32> to vector<1x128xf32>
    %cst_129 = arith.constant 6.000000e+00 : f32
    %725 = vector.broadcast %cst_129 : f32 to vector<1x128xf32>
    %726 = arith.divf %724, %725 : vector<1x128xf32>
    %cst_130 = arith.constant 9.99999974E-6 : f32
    %727 = vector.broadcast %cst_130 : f32 to vector<1x128xf32>
    %728 = arith.addf %726, %727 : vector<1x128xf32>
    %729 = math.rsqrt %728 : vector<1x128xf32>
    %730 = vector.broadcast %729 : vector<1x128xf32> to vector<6x128xf32>
    %731 = arith.mulf %721, %730 : vector<6x128xf32>
    %c32_131 = arith.constant 32 : index
    %c64_132 = arith.constant 64 : index
    %732 = vector.load %arg1[%c32_131, %c64_132] : memref<152x128xf32, #tpu.memory_space<vmem>>, vector<6x1xf32>
    %733 = vector.broadcast %732 : vector<6x1xf32> to vector<6x128xf32>
    %734 = arith.mulf %731, %733 : vector<6x128xf32>
    %c32_133 = arith.constant 32 : index
    %c80_134 = arith.constant 80 : index
    %735 = vector.load %arg1[%c32_133, %c80_134] : memref<152x128xf32, #tpu.memory_space<vmem>>, vector<6x1xf32>
    %736 = vector.broadcast %735 : vector<6x1xf32> to vector<6x128xf32>
    %737 = arith.addf %734, %736 : vector<6x128xf32>
    %c32_135 = arith.constant 32 : index
    %c112_136 = arith.constant 112 : index
    %738 = vector.load %arg1[%c32_135, %c112_136] : memref<152x128xf32, #tpu.memory_space<vmem>>, vector<6x6xf32>
    %c40_137 = arith.constant 40 : index
    %c24_138 = arith.constant 24 : index
    %739 = vector.load %arg1[%c40_137, %c24_138] : memref<152x128xf32, #tpu.memory_space<vmem>>, vector<6x1xf32>
    %740 = vector.extract_strided_slice %738 {offsets = [0, 0], sizes = [6, 1], strides = [1, 1]} : vector<6x6xf32> to vector<6x1xf32>
    %741 = vector.extract_strided_slice %737 {offsets = [0, 0], sizes = [1, 128], strides = [1, 1]} : vector<6x128xf32> to vector<1x128xf32>
    %742 = vector.broadcast %740 : vector<6x1xf32> to vector<6x128xf32>
    %743 = vector.broadcast %741 : vector<1x128xf32> to vector<6x128xf32>
    %744 = arith.mulf %742, %743 : vector<6x128xf32>
    %745 = vector.broadcast %739 : vector<6x1xf32> to vector<6x128xf32>
    %746 = arith.addf %745, %744 : vector<6x128xf32>
    %747 = vector.extract_strided_slice %738 {offsets = [0, 1], sizes = [6, 1], strides = [1, 1]} : vector<6x6xf32> to vector<6x1xf32>
    %748 = vector.extract_strided_slice %737 {offsets = [1, 0], sizes = [1, 128], strides = [1, 1]} : vector<6x128xf32> to vector<1x128xf32>
    %749 = vector.broadcast %747 : vector<6x1xf32> to vector<6x128xf32>
    %750 = vector.broadcast %748 : vector<1x128xf32> to vector<6x128xf32>
    %751 = arith.mulf %749, %750 : vector<6x128xf32>
    %752 = arith.addf %746, %751 : vector<6x128xf32>
    %753 = vector.extract_strided_slice %738 {offsets = [0, 2], sizes = [6, 1], strides = [1, 1]} : vector<6x6xf32> to vector<6x1xf32>
    %754 = vector.extract_strided_slice %737 {offsets = [2, 0], sizes = [1, 128], strides = [1, 1]} : vector<6x128xf32> to vector<1x128xf32>
    %755 = vector.broadcast %753 : vector<6x1xf32> to vector<6x128xf32>
    %756 = vector.broadcast %754 : vector<1x128xf32> to vector<6x128xf32>
    %757 = arith.mulf %755, %756 : vector<6x128xf32>
    %758 = arith.addf %752, %757 : vector<6x128xf32>
    %759 = vector.extract_strided_slice %738 {offsets = [0, 3], sizes = [6, 1], strides = [1, 1]} : vector<6x6xf32> to vector<6x1xf32>
    %760 = vector.extract_strided_slice %737 {offsets = [3, 0], sizes = [1, 128], strides = [1, 1]} : vector<6x128xf32> to vector<1x128xf32>
    %761 = vector.broadcast %759 : vector<6x1xf32> to vector<6x128xf32>
    %762 = vector.broadcast %760 : vector<1x128xf32> to vector<6x128xf32>
    %763 = arith.mulf %761, %762 : vector<6x128xf32>
    %764 = arith.addf %758, %763 : vector<6x128xf32>
    %765 = vector.extract_strided_slice %738 {offsets = [0, 4], sizes = [6, 1], strides = [1, 1]} : vector<6x6xf32> to vector<6x1xf32>
    %766 = vector.extract_strided_slice %737 {offsets = [4, 0], sizes = [1, 128], strides = [1, 1]} : vector<6x128xf32> to vector<1x128xf32>
    %767 = vector.broadcast %765 : vector<6x1xf32> to vector<6x128xf32>
    %768 = vector.broadcast %766 : vector<1x128xf32> to vector<6x128xf32>
    %769 = arith.mulf %767, %768 : vector<6x128xf32>
    %770 = arith.addf %764, %769 : vector<6x128xf32>
    %771 = vector.extract_strided_slice %738 {offsets = [0, 5], sizes = [6, 1], strides = [1, 1]} : vector<6x6xf32> to vector<6x1xf32>
    %772 = vector.extract_strided_slice %737 {offsets = [5, 0], sizes = [1, 128], strides = [1, 1]} : vector<6x128xf32> to vector<1x128xf32>
    %773 = vector.broadcast %771 : vector<6x1xf32> to vector<6x128xf32>
    %774 = vector.broadcast %772 : vector<1x128xf32> to vector<6x128xf32>
    %775 = arith.mulf %773, %774 : vector<6x128xf32>
    %776 = arith.addf %770, %775 : vector<6x128xf32>
    %c40_139 = arith.constant 40 : index
    %c64_140 = arith.constant 64 : index
    %777 = vector.load %arg1[%c40_139, %c64_140] : memref<152x128xf32, #tpu.memory_space<vmem>>, vector<6x6xf32>
    %c40_141 = arith.constant 40 : index
    %c80_142 = arith.constant 80 : index
    %778 = vector.load %arg1[%c40_141, %c80_142] : memref<152x128xf32, #tpu.memory_space<vmem>>, vector<6x1xf32>
    %779 = vector.extract_strided_slice %777 {offsets = [0, 0], sizes = [6, 1], strides = [1, 1]} : vector<6x6xf32> to vector<6x1xf32>
    %780 = vector.extract_strided_slice %610 {offsets = [0, 0], sizes = [1, 128], strides = [1, 1]} : vector<6x128xf32> to vector<1x128xf32>
    %781 = vector.broadcast %779 : vector<6x1xf32> to vector<6x128xf32>
    %782 = vector.broadcast %780 : vector<1x128xf32> to vector<6x128xf32>
    %783 = arith.mulf %781, %782 : vector<6x128xf32>
    %784 = vector.broadcast %778 : vector<6x1xf32> to vector<6x128xf32>
    %785 = arith.addf %784, %783 : vector<6x128xf32>
    %786 = vector.extract_strided_slice %777 {offsets = [0, 1], sizes = [6, 1], strides = [1, 1]} : vector<6x6xf32> to vector<6x1xf32>
    %787 = vector.extract_strided_slice %610 {offsets = [1, 0], sizes = [1, 128], strides = [1, 1]} : vector<6x128xf32> to vector<1x128xf32>
    %788 = vector.broadcast %786 : vector<6x1xf32> to vector<6x128xf32>
    %789 = vector.broadcast %787 : vector<1x128xf32> to vector<6x128xf32>
    %790 = arith.mulf %788, %789 : vector<6x128xf32>
    %791 = arith.addf %785, %790 : vector<6x128xf32>
    %792 = vector.extract_strided_slice %777 {offsets = [0, 2], sizes = [6, 1], strides = [1, 1]} : vector<6x6xf32> to vector<6x1xf32>
    %793 = vector.extract_strided_slice %610 {offsets = [2, 0], sizes = [1, 128], strides = [1, 1]} : vector<6x128xf32> to vector<1x128xf32>
    %794 = vector.broadcast %792 : vector<6x1xf32> to vector<6x128xf32>
    %795 = vector.broadcast %793 : vector<1x128xf32> to vector<6x128xf32>
    %796 = arith.mulf %794, %795 : vector<6x128xf32>
    %797 = arith.addf %791, %796 : vector<6x128xf32>
    %798 = vector.extract_strided_slice %777 {offsets = [0, 3], sizes = [6, 1], strides = [1, 1]} : vector<6x6xf32> to vector<6x1xf32>
    %799 = vector.extract_strided_slice %610 {offsets = [3, 0], sizes = [1, 128], strides = [1, 1]} : vector<6x128xf32> to vector<1x128xf32>
    %800 = vector.broadcast %798 : vector<6x1xf32> to vector<6x128xf32>
    %801 = vector.broadcast %799 : vector<1x128xf32> to vector<6x128xf32>
    %802 = arith.mulf %800, %801 : vector<6x128xf32>
    %803 = arith.addf %797, %802 : vector<6x128xf32>
    %804 = vector.extract_strided_slice %777 {offsets = [0, 4], sizes = [6, 1], strides = [1, 1]} : vector<6x6xf32> to vector<6x1xf32>
    %805 = vector.extract_strided_slice %610 {offsets = [4, 0], sizes = [1, 128], strides = [1, 1]} : vector<6x128xf32> to vector<1x128xf32>
    %806 = vector.broadcast %804 : vector<6x1xf32> to vector<6x128xf32>
    %807 = vector.broadcast %805 : vector<1x128xf32> to vector<6x128xf32>
    %808 = arith.mulf %806, %807 : vector<6x128xf32>
    %809 = arith.addf %803, %808 : vector<6x128xf32>
    %810 = vector.extract_strided_slice %777 {offsets = [0, 5], sizes = [6, 1], strides = [1, 1]} : vector<6x6xf32> to vector<6x1xf32>
    %811 = vector.extract_strided_slice %610 {offsets = [5, 0], sizes = [1, 128], strides = [1, 1]} : vector<6x128xf32> to vector<1x128xf32>
    %812 = vector.broadcast %810 : vector<6x1xf32> to vector<6x128xf32>
    %813 = vector.broadcast %811 : vector<1x128xf32> to vector<6x128xf32>
    %814 = arith.mulf %812, %813 : vector<6x128xf32>
    %815 = arith.addf %809, %814 : vector<6x128xf32>
    %c40_143 = arith.constant 40 : index
    %c96_144 = arith.constant 96 : index
    %816 = vector.load %arg1[%c40_143, %c96_144] : memref<152x128xf32, #tpu.memory_space<vmem>>, vector<6x6xf32>
    %c40_145 = arith.constant 40 : index
    %c104_146 = arith.constant 104 : index
    %817 = vector.load %arg1[%c40_145, %c104_146] : memref<152x128xf32, #tpu.memory_space<vmem>>, vector<6x1xf32>
    %818 = vector.extract_strided_slice %816 {offsets = [0, 0], sizes = [6, 1], strides = [1, 1]} : vector<6x6xf32> to vector<6x1xf32>
    %819 = vector.extract_strided_slice %610 {offsets = [0, 0], sizes = [1, 128], strides = [1, 1]} : vector<6x128xf32> to vector<1x128xf32>
    %820 = vector.broadcast %818 : vector<6x1xf32> to vector<6x128xf32>
    %821 = vector.broadcast %819 : vector<1x128xf32> to vector<6x128xf32>
    %822 = arith.mulf %820, %821 : vector<6x128xf32>
    %823 = vector.broadcast %817 : vector<6x1xf32> to vector<6x128xf32>
    %824 = arith.addf %823, %822 : vector<6x128xf32>
    %825 = vector.extract_strided_slice %816 {offsets = [0, 1], sizes = [6, 1], strides = [1, 1]} : vector<6x6xf32> to vector<6x1xf32>
    %826 = vector.extract_strided_slice %610 {offsets = [1, 0], sizes = [1, 128], strides = [1, 1]} : vector<6x128xf32> to vector<1x128xf32>
    %827 = vector.broadcast %825 : vector<6x1xf32> to vector<6x128xf32>
    %828 = vector.broadcast %826 : vector<1x128xf32> to vector<6x128xf32>
    %829 = arith.mulf %827, %828 : vector<6x128xf32>
    %830 = arith.addf %824, %829 : vector<6x128xf32>
    %831 = vector.extract_strided_slice %816 {offsets = [0, 2], sizes = [6, 1], strides = [1, 1]} : vector<6x6xf32> to vector<6x1xf32>
    %832 = vector.extract_strided_slice %610 {offsets = [2, 0], sizes = [1, 128], strides = [1, 1]} : vector<6x128xf32> to vector<1x128xf32>
    %833 = vector.broadcast %831 : vector<6x1xf32> to vector<6x128xf32>
    %834 = vector.broadcast %832 : vector<1x128xf32> to vector<6x128xf32>
    %835 = arith.mulf %833, %834 : vector<6x128xf32>
    %836 = arith.addf %830, %835 : vector<6x128xf32>
    %837 = vector.extract_strided_slice %816 {offsets = [0, 3], sizes = [6, 1], strides = [1, 1]} : vector<6x6xf32> to vector<6x1xf32>
    %838 = vector.extract_strided_slice %610 {offsets = [3, 0], sizes = [1, 128], strides = [1, 1]} : vector<6x128xf32> to vector<1x128xf32>
    %839 = vector.broadcast %837 : vector<6x1xf32> to vector<6x128xf32>
    %840 = vector.broadcast %838 : vector<1x128xf32> to vector<6x128xf32>
    %841 = arith.mulf %839, %840 : vector<6x128xf32>
    %842 = arith.addf %836, %841 : vector<6x128xf32>
    %843 = vector.extract_strided_slice %816 {offsets = [0, 4], sizes = [6, 1], strides = [1, 1]} : vector<6x6xf32> to vector<6x1xf32>
    %844 = vector.extract_strided_slice %610 {offsets = [4, 0], sizes = [1, 128], strides = [1, 1]} : vector<6x128xf32> to vector<1x128xf32>
    %845 = vector.broadcast %843 : vector<6x1xf32> to vector<6x128xf32>
    %846 = vector.broadcast %844 : vector<1x128xf32> to vector<6x128xf32>
    %847 = arith.mulf %845, %846 : vector<6x128xf32>
    %848 = arith.addf %842, %847 : vector<6x128xf32>
    %849 = vector.extract_strided_slice %816 {offsets = [0, 5], sizes = [6, 1], strides = [1, 1]} : vector<6x6xf32> to vector<6x1xf32>
    %850 = vector.extract_strided_slice %610 {offsets = [5, 0], sizes = [1, 128], strides = [1, 1]} : vector<6x128xf32> to vector<1x128xf32>
    %851 = vector.broadcast %849 : vector<6x1xf32> to vector<6x128xf32>
    %852 = vector.broadcast %850 : vector<1x128xf32> to vector<6x128xf32>
    %853 = arith.mulf %851, %852 : vector<6x128xf32>
    %854 = arith.addf %848, %853 : vector<6x128xf32>
    %855 = vector.extract_strided_slice %815 {offsets = [0, 0], sizes = [6, 2], strides = [1, 1]} : vector<6x128xf32> to vector<6x2xf32>
    %856 = vector.extract_strided_slice %854 {offsets = [0, 0], sizes = [6, 2], strides = [1, 1]} : vector<6x128xf32> to vector<6x2xf32>
    %857 = vector.shape_cast %855 : vector<6x2xf32> to vector<6x2x1xf32>
    %858 = vector.shape_cast %776 : vector<6x128xf32> to vector<6x1x128xf32>
    %859 = vector.broadcast %857 : vector<6x2x1xf32> to vector<6x2x128xf32>
    %860 = vector.broadcast %858 : vector<6x1x128xf32> to vector<6x2x128xf32>
    %861 = arith.mulf %859, %860 : vector<6x2x128xf32>
    %cst_147 = arith.constant dense<0xFF800000> : vector<6x128xf32>
    %862 = vector.multi_reduction <maximumf>, %861, %cst_147 [1] : vector<6x2x128xf32> to vector<6x128xf32>
    %863 = vector.shape_cast %862 : vector<6x128xf32> to vector<6x1x128xf32>
    %864 = vector.broadcast %863 : vector<6x1x128xf32> to vector<6x2x128xf32>
    %865 = arith.subf %861, %864 : vector<6x2x128xf32>
    %866 = math.exp %865 : vector<6x2x128xf32>
    %cst_148 = arith.constant dense<0.000000e+00> : vector<6x128xf32>
    %867 = vector.multi_reduction <add>, %866, %cst_148 [1] : vector<6x2x128xf32> to vector<6x128xf32>
    %868 = vector.shape_cast %856 : vector<6x2xf32> to vector<6x2x1xf32>
    %869 = vector.broadcast %868 : vector<6x2x1xf32> to vector<6x2x128xf32>
    %870 = arith.mulf %866, %869 : vector<6x2x128xf32>
    %cst_149 = arith.constant dense<0.000000e+00> : vector<6x128xf32>
    %871 = vector.multi_reduction <add>, %870, %cst_149 [1] : vector<6x2x128xf32> to vector<6x128xf32>
    %872 = tpu.reciprocal %867 {approx = true} : vector<6x128xf32> -> vector<6x128xf32>
    %873 = arith.mulf %867, %872 : vector<6x128xf32>
    %cst_150 = arith.constant 2.000000e+00 : f32
    %874 = vector.broadcast %cst_150 : f32 to vector<6x128xf32>
    %875 = arith.subf %874, %873 : vector<6x128xf32>
    %876 = arith.mulf %872, %875 : vector<6x128xf32>
    %877 = arith.mulf %871, %876 : vector<6x128xf32>
    %c40_151 = arith.constant 40 : index
    %c112_152 = arith.constant 112 : index
    %878 = vector.load %arg1[%c40_151, %c112_152] : memref<152x128xf32, #tpu.memory_space<vmem>>, vector<6x6xf32>
    %c48_153 = arith.constant 48 : index
    %c24_154 = arith.constant 24 : index
    %879 = vector.load %arg1[%c48_153, %c24_154] : memref<152x128xf32, #tpu.memory_space<vmem>>, vector<6x1xf32>
    %880 = vector.extract_strided_slice %878 {offsets = [0, 0], sizes = [6, 1], strides = [1, 1]} : vector<6x6xf32> to vector<6x1xf32>
    %881 = vector.extract_strided_slice %877 {offsets = [0, 0], sizes = [1, 128], strides = [1, 1]} : vector<6x128xf32> to vector<1x128xf32>
    %882 = vector.broadcast %880 : vector<6x1xf32> to vector<6x128xf32>
    %883 = vector.broadcast %881 : vector<1x128xf32> to vector<6x128xf32>
    %884 = arith.mulf %882, %883 : vector<6x128xf32>
    %885 = vector.broadcast %879 : vector<6x1xf32> to vector<6x128xf32>
    %886 = arith.addf %885, %884 : vector<6x128xf32>
    %887 = vector.extract_strided_slice %878 {offsets = [0, 1], sizes = [6, 1], strides = [1, 1]} : vector<6x6xf32> to vector<6x1xf32>
    %888 = vector.extract_strided_slice %877 {offsets = [1, 0], sizes = [1, 128], strides = [1, 1]} : vector<6x128xf32> to vector<1x128xf32>
    %889 = vector.broadcast %887 : vector<6x1xf32> to vector<6x128xf32>
    %890 = vector.broadcast %888 : vector<1x128xf32> to vector<6x128xf32>
    %891 = arith.mulf %889, %890 : vector<6x128xf32>
    %892 = arith.addf %886, %891 : vector<6x128xf32>
    %893 = vector.extract_strided_slice %878 {offsets = [0, 2], sizes = [6, 1], strides = [1, 1]} : vector<6x6xf32> to vector<6x1xf32>
    %894 = vector.extract_strided_slice %877 {offsets = [2, 0], sizes = [1, 128], strides = [1, 1]} : vector<6x128xf32> to vector<1x128xf32>
    %895 = vector.broadcast %893 : vector<6x1xf32> to vector<6x128xf32>
    %896 = vector.broadcast %894 : vector<1x128xf32> to vector<6x128xf32>
    %897 = arith.mulf %895, %896 : vector<6x128xf32>
    %898 = arith.addf %892, %897 : vector<6x128xf32>
    %899 = vector.extract_strided_slice %878 {offsets = [0, 3], sizes = [6, 1], strides = [1, 1]} : vector<6x6xf32> to vector<6x1xf32>
    %900 = vector.extract_strided_slice %877 {offsets = [3, 0], sizes = [1, 128], strides = [1, 1]} : vector<6x128xf32> to vector<1x128xf32>
    %901 = vector.broadcast %899 : vector<6x1xf32> to vector<6x128xf32>
    %902 = vector.broadcast %900 : vector<1x128xf32> to vector<6x128xf32>
    %903 = arith.mulf %901, %902 : vector<6x128xf32>
    %904 = arith.addf %898, %903 : vector<6x128xf32>
    %905 = vector.extract_strided_slice %878 {offsets = [0, 4], sizes = [6, 1], strides = [1, 1]} : vector<6x6xf32> to vector<6x1xf32>
    %906 = vector.extract_strided_slice %877 {offsets = [4, 0], sizes = [1, 128], strides = [1, 1]} : vector<6x128xf32> to vector<1x128xf32>
    %907 = vector.broadcast %905 : vector<6x1xf32> to vector<6x128xf32>
    %908 = vector.broadcast %906 : vector<1x128xf32> to vector<6x128xf32>
    %909 = arith.mulf %907, %908 : vector<6x128xf32>
    %910 = arith.addf %904, %909 : vector<6x128xf32>
    %911 = vector.extract_strided_slice %878 {offsets = [0, 5], sizes = [6, 1], strides = [1, 1]} : vector<6x6xf32> to vector<6x1xf32>
    %912 = vector.extract_strided_slice %877 {offsets = [5, 0], sizes = [1, 128], strides = [1, 1]} : vector<6x128xf32> to vector<1x128xf32>
    %913 = vector.broadcast %911 : vector<6x1xf32> to vector<6x128xf32>
    %914 = vector.broadcast %912 : vector<1x128xf32> to vector<6x128xf32>
    %915 = arith.mulf %913, %914 : vector<6x128xf32>
    %916 = arith.addf %910, %915 : vector<6x128xf32>
    %917 = arith.addf %737, %916 : vector<6x128xf32>
    %cst_155 = arith.constant dense<0.000000e+00> : vector<128xf32>
    %918 = vector.multi_reduction <add>, %917, %cst_155 [0] : vector<6x128xf32> to vector<128xf32>
    %919 = vector.shape_cast %918 : vector<128xf32> to vector<1x128xf32>
    %cst_156 = arith.constant 6.000000e+00 : f32
    %920 = vector.broadcast %cst_156 : f32 to vector<1x128xf32>
    %921 = arith.divf %919, %920 : vector<1x128xf32>
    %922 = vector.broadcast %921 : vector<1x128xf32> to vector<6x128xf32>
    %923 = arith.subf %917, %922 : vector<6x128xf32>
    %924 = arith.mulf %923, %923 : vector<6x128xf32>
    %cst_157 = arith.constant dense<0.000000e+00> : vector<128xf32>
    %925 = vector.multi_reduction <add>, %924, %cst_157 [0] : vector<6x128xf32> to vector<128xf32>
    %926 = vector.shape_cast %925 : vector<128xf32> to vector<1x128xf32>
    %cst_158 = arith.constant 6.000000e+00 : f32
    %927 = vector.broadcast %cst_158 : f32 to vector<1x128xf32>
    %928 = arith.divf %926, %927 : vector<1x128xf32>
    %cst_159 = arith.constant 9.99999974E-6 : f32
    %929 = vector.broadcast %cst_159 : f32 to vector<1x128xf32>
    %930 = arith.addf %928, %929 : vector<1x128xf32>
    %931 = math.rsqrt %930 : vector<1x128xf32>
    %932 = vector.broadcast %931 : vector<1x128xf32> to vector<6x128xf32>
    %933 = arith.mulf %923, %932 : vector<6x128xf32>
    %c32_160 = arith.constant 32 : index
    %c96_161 = arith.constant 96 : index
    %934 = vector.load %arg1[%c32_160, %c96_161] : memref<152x128xf32, #tpu.memory_space<vmem>>, vector<6x1xf32>
    %935 = vector.broadcast %934 : vector<6x1xf32> to vector<6x128xf32>
    %936 = arith.mulf %933, %935 : vector<6x128xf32>
    %c32_162 = arith.constant 32 : index
    %c104_163 = arith.constant 104 : index
    %937 = vector.load %arg1[%c32_162, %c104_163] : memref<152x128xf32, #tpu.memory_space<vmem>>, vector<6x1xf32>
    %938 = vector.broadcast %937 : vector<6x1xf32> to vector<6x128xf32>
    %939 = arith.addf %936, %938 : vector<6x128xf32>
    %c32_164 = arith.constant 32 : index
    %c0_165 = arith.constant 0 : index
    %940 = vector.load %arg1[%c32_164, %c0_165] : memref<152x128xf32, #tpu.memory_space<vmem>>, vector<72x6xf32>
    %c32_166 = arith.constant 32 : index
    %c8_167 = arith.constant 8 : index
    %941 = vector.load %arg1[%c32_166, %c8_167] : memref<152x128xf32, #tpu.memory_space<vmem>>, vector<72x1xf32>
    %942 = vector.extract_strided_slice %940 {offsets = [0, 0], sizes = [72, 1], strides = [1, 1]} : vector<72x6xf32> to vector<72x1xf32>
    %943 = vector.extract_strided_slice %939 {offsets = [0, 0], sizes = [1, 128], strides = [1, 1]} : vector<6x128xf32> to vector<1x128xf32>
    %944 = vector.broadcast %942 : vector<72x1xf32> to vector<72x128xf32>
    %945 = vector.broadcast %943 : vector<1x128xf32> to vector<72x128xf32>
    %946 = arith.mulf %944, %945 : vector<72x128xf32>
    %947 = vector.broadcast %941 : vector<72x1xf32> to vector<72x128xf32>
    %948 = arith.addf %947, %946 : vector<72x128xf32>
    %949 = vector.extract_strided_slice %940 {offsets = [0, 1], sizes = [72, 1], strides = [1, 1]} : vector<72x6xf32> to vector<72x1xf32>
    %950 = vector.extract_strided_slice %939 {offsets = [1, 0], sizes = [1, 128], strides = [1, 1]} : vector<6x128xf32> to vector<1x128xf32>
    %951 = vector.broadcast %949 : vector<72x1xf32> to vector<72x128xf32>
    %952 = vector.broadcast %950 : vector<1x128xf32> to vector<72x128xf32>
    %953 = arith.mulf %951, %952 : vector<72x128xf32>
    %954 = arith.addf %948, %953 : vector<72x128xf32>
    %955 = vector.extract_strided_slice %940 {offsets = [0, 2], sizes = [72, 1], strides = [1, 1]} : vector<72x6xf32> to vector<72x1xf32>
    %956 = vector.extract_strided_slice %939 {offsets = [2, 0], sizes = [1, 128], strides = [1, 1]} : vector<6x128xf32> to vector<1x128xf32>
    %957 = vector.broadcast %955 : vector<72x1xf32> to vector<72x128xf32>
    %958 = vector.broadcast %956 : vector<1x128xf32> to vector<72x128xf32>
    %959 = arith.mulf %957, %958 : vector<72x128xf32>
    %960 = arith.addf %954, %959 : vector<72x128xf32>
    %961 = vector.extract_strided_slice %940 {offsets = [0, 3], sizes = [72, 1], strides = [1, 1]} : vector<72x6xf32> to vector<72x1xf32>
    %962 = vector.extract_strided_slice %939 {offsets = [3, 0], sizes = [1, 128], strides = [1, 1]} : vector<6x128xf32> to vector<1x128xf32>
    %963 = vector.broadcast %961 : vector<72x1xf32> to vector<72x128xf32>
    %964 = vector.broadcast %962 : vector<1x128xf32> to vector<72x128xf32>
    %965 = arith.mulf %963, %964 : vector<72x128xf32>
    %966 = arith.addf %960, %965 : vector<72x128xf32>
    %967 = vector.extract_strided_slice %940 {offsets = [0, 4], sizes = [72, 1], strides = [1, 1]} : vector<72x6xf32> to vector<72x1xf32>
    %968 = vector.extract_strided_slice %939 {offsets = [4, 0], sizes = [1, 128], strides = [1, 1]} : vector<6x128xf32> to vector<1x128xf32>
    %969 = vector.broadcast %967 : vector<72x1xf32> to vector<72x128xf32>
    %970 = vector.broadcast %968 : vector<1x128xf32> to vector<72x128xf32>
    %971 = arith.mulf %969, %970 : vector<72x128xf32>
    %972 = arith.addf %966, %971 : vector<72x128xf32>
    %973 = vector.extract_strided_slice %940 {offsets = [0, 5], sizes = [72, 1], strides = [1, 1]} : vector<72x6xf32> to vector<72x1xf32>
    %974 = vector.extract_strided_slice %939 {offsets = [5, 0], sizes = [1, 128], strides = [1, 1]} : vector<6x128xf32> to vector<1x128xf32>
    %975 = vector.broadcast %973 : vector<72x1xf32> to vector<72x128xf32>
    %976 = vector.broadcast %974 : vector<1x128xf32> to vector<72x128xf32>
    %977 = arith.mulf %975, %976 : vector<72x128xf32>
    %978 = arith.addf %972, %977 : vector<72x128xf32>
    %cst_168 = arith.constant 0.000000e+00 : f32
    %979 = vector.broadcast %cst_168 : f32 to vector<72x128xf32>
    %980 = arith.maximumf %978, %979 : vector<72x128xf32>
    %c24_169 = arith.constant 24 : index
    %c0_170 = arith.constant 0 : index
    %981 = vector.load %arg2[%c24_169, %c0_170] : memref<48x72xf32, #tpu.memory_space<vmem>>, vector<6x72xf32>
    %cst_171 = arith.constant dense<0.000000e+00> : vector<6x128xf32>
    %982 = tpu.matmul %981, %980, %cst_171 {dimension_numbers = #tpu.dot_dimension_numbers<[1], [0], [0], [1], [0, 0, 1, 1], [], []>} : vector<6x72xf32>, vector<72x128xf32>, vector<6x128xf32> -> vector<6x128xf32>
    %c32_172 = arith.constant 32 : index
    %c24_173 = arith.constant 24 : index
    %983 = vector.load %arg1[%c32_172, %c24_173] : memref<152x128xf32, #tpu.memory_space<vmem>>, vector<6x1xf32>
    %984 = vector.broadcast %983 : vector<6x1xf32> to vector<6x128xf32>
    %985 = arith.addf %982, %984 : vector<6x128xf32>
    %986 = arith.addf %939, %985 : vector<6x128xf32>
    %cst_174 = arith.constant dense<0.000000e+00> : vector<128xf32>
    %987 = vector.multi_reduction <add>, %986, %cst_174 [0] : vector<6x128xf32> to vector<128xf32>
    %988 = vector.shape_cast %987 : vector<128xf32> to vector<1x128xf32>
    %cst_175 = arith.constant 6.000000e+00 : f32
    %989 = vector.broadcast %cst_175 : f32 to vector<1x128xf32>
    %990 = arith.divf %988, %989 : vector<1x128xf32>
    %991 = vector.broadcast %990 : vector<1x128xf32> to vector<6x128xf32>
    %992 = arith.subf %986, %991 : vector<6x128xf32>
    %993 = arith.mulf %992, %992 : vector<6x128xf32>
    %cst_176 = arith.constant dense<0.000000e+00> : vector<128xf32>
    %994 = vector.multi_reduction <add>, %993, %cst_176 [0] : vector<6x128xf32> to vector<128xf32>
    %995 = vector.shape_cast %994 : vector<128xf32> to vector<1x128xf32>
    %cst_177 = arith.constant 6.000000e+00 : f32
    %996 = vector.broadcast %cst_177 : f32 to vector<1x128xf32>
    %997 = arith.divf %995, %996 : vector<1x128xf32>
    %cst_178 = arith.constant 9.99999974E-6 : f32
    %998 = vector.broadcast %cst_178 : f32 to vector<1x128xf32>
    %999 = arith.addf %997, %998 : vector<1x128xf32>
    %1000 = math.rsqrt %999 : vector<1x128xf32>
    %1001 = vector.broadcast %1000 : vector<1x128xf32> to vector<6x128xf32>
    %1002 = arith.mulf %992, %1001 : vector<6x128xf32>
    %c48_179 = arith.constant 48 : index
    %c64_180 = arith.constant 64 : index
    %1003 = vector.load %arg1[%c48_179, %c64_180] : memref<152x128xf32, #tpu.memory_space<vmem>>, vector<6x1xf32>
    %1004 = vector.broadcast %1003 : vector<6x1xf32> to vector<6x128xf32>
    %1005 = arith.mulf %1002, %1004 : vector<6x128xf32>
    %c48_181 = arith.constant 48 : index
    %c72_182 = arith.constant 72 : index
    %1006 = vector.load %arg1[%c48_181, %c72_182] : memref<152x128xf32, #tpu.memory_space<vmem>>, vector<6x1xf32>
    %1007 = vector.broadcast %1006 : vector<6x1xf32> to vector<6x128xf32>
    %1008 = arith.addf %1005, %1007 : vector<6x128xf32>
    %c48_183 = arith.constant 48 : index
    %c80_184 = arith.constant 80 : index
    %1009 = vector.load %arg1[%c48_183, %c80_184] : memref<152x128xf32, #tpu.memory_space<vmem>>, vector<18x6xf32>
    %c48_185 = arith.constant 48 : index
    %c88_186 = arith.constant 88 : index
    %1010 = vector.load %arg1[%c48_185, %c88_186] : memref<152x128xf32, #tpu.memory_space<vmem>>, vector<18x1xf32>
    %1011 = vector.extract_strided_slice %1009 {offsets = [0, 0], sizes = [18, 1], strides = [1, 1]} : vector<18x6xf32> to vector<18x1xf32>
    %1012 = vector.extract_strided_slice %1008 {offsets = [0, 0], sizes = [1, 128], strides = [1, 1]} : vector<6x128xf32> to vector<1x128xf32>
    %1013 = vector.broadcast %1011 : vector<18x1xf32> to vector<18x128xf32>
    %1014 = vector.broadcast %1012 : vector<1x128xf32> to vector<18x128xf32>
    %1015 = arith.mulf %1013, %1014 : vector<18x128xf32>
    %1016 = vector.broadcast %1010 : vector<18x1xf32> to vector<18x128xf32>
    %1017 = arith.addf %1016, %1015 : vector<18x128xf32>
    %1018 = vector.extract_strided_slice %1009 {offsets = [0, 1], sizes = [18, 1], strides = [1, 1]} : vector<18x6xf32> to vector<18x1xf32>
    %1019 = vector.extract_strided_slice %1008 {offsets = [1, 0], sizes = [1, 128], strides = [1, 1]} : vector<6x128xf32> to vector<1x128xf32>
    %1020 = vector.broadcast %1018 : vector<18x1xf32> to vector<18x128xf32>
    %1021 = vector.broadcast %1019 : vector<1x128xf32> to vector<18x128xf32>
    %1022 = arith.mulf %1020, %1021 : vector<18x128xf32>
    %1023 = arith.addf %1017, %1022 : vector<18x128xf32>
    %1024 = vector.extract_strided_slice %1009 {offsets = [0, 2], sizes = [18, 1], strides = [1, 1]} : vector<18x6xf32> to vector<18x1xf32>
    %1025 = vector.extract_strided_slice %1008 {offsets = [2, 0], sizes = [1, 128], strides = [1, 1]} : vector<6x128xf32> to vector<1x128xf32>
    %1026 = vector.broadcast %1024 : vector<18x1xf32> to vector<18x128xf32>
    %1027 = vector.broadcast %1025 : vector<1x128xf32> to vector<18x128xf32>
    %1028 = arith.mulf %1026, %1027 : vector<18x128xf32>
    %1029 = arith.addf %1023, %1028 : vector<18x128xf32>
    %1030 = vector.extract_strided_slice %1009 {offsets = [0, 3], sizes = [18, 1], strides = [1, 1]} : vector<18x6xf32> to vector<18x1xf32>
    %1031 = vector.extract_strided_slice %1008 {offsets = [3, 0], sizes = [1, 128], strides = [1, 1]} : vector<6x128xf32> to vector<1x128xf32>
    %1032 = vector.broadcast %1030 : vector<18x1xf32> to vector<18x128xf32>
    %1033 = vector.broadcast %1031 : vector<1x128xf32> to vector<18x128xf32>
    %1034 = arith.mulf %1032, %1033 : vector<18x128xf32>
    %1035 = arith.addf %1029, %1034 : vector<18x128xf32>
    %1036 = vector.extract_strided_slice %1009 {offsets = [0, 4], sizes = [18, 1], strides = [1, 1]} : vector<18x6xf32> to vector<18x1xf32>
    %1037 = vector.extract_strided_slice %1008 {offsets = [4, 0], sizes = [1, 128], strides = [1, 1]} : vector<6x128xf32> to vector<1x128xf32>
    %1038 = vector.broadcast %1036 : vector<18x1xf32> to vector<18x128xf32>
    %1039 = vector.broadcast %1037 : vector<1x128xf32> to vector<18x128xf32>
    %1040 = arith.mulf %1038, %1039 : vector<18x128xf32>
    %1041 = arith.addf %1035, %1040 : vector<18x128xf32>
    %1042 = vector.extract_strided_slice %1009 {offsets = [0, 5], sizes = [18, 1], strides = [1, 1]} : vector<18x6xf32> to vector<18x1xf32>
    %1043 = vector.extract_strided_slice %1008 {offsets = [5, 0], sizes = [1, 128], strides = [1, 1]} : vector<6x128xf32> to vector<1x128xf32>
    %1044 = vector.broadcast %1042 : vector<18x1xf32> to vector<18x128xf32>
    %1045 = vector.broadcast %1043 : vector<1x128xf32> to vector<18x128xf32>
    %1046 = arith.mulf %1044, %1045 : vector<18x128xf32>
    %1047 = arith.addf %1041, %1046 : vector<18x128xf32>
    %1048 = vector.extract_strided_slice %1047 {offsets = [0, 0], sizes = [6, 128], strides = [1, 1]} : vector<18x128xf32> to vector<6x128xf32>
    %1049 = vector.extract_strided_slice %1047 {offsets = [6, 0], sizes = [6, 128], strides = [1, 1]} : vector<18x128xf32> to vector<6x128xf32>
    %1050 = vector.extract_strided_slice %1047 {offsets = [12, 0], sizes = [6, 128], strides = [1, 1]} : vector<18x128xf32> to vector<6x128xf32>
    %1051 = vector.extract_strided_slice %1049 {offsets = [0, 0], sizes = [6, 2], strides = [1, 1]} : vector<6x128xf32> to vector<6x2xf32>
    %1052 = vector.extract_strided_slice %1050 {offsets = [0, 0], sizes = [6, 2], strides = [1, 1]} : vector<6x128xf32> to vector<6x2xf32>
    %1053 = vector.shape_cast %1051 : vector<6x2xf32> to vector<6x2x1xf32>
    %1054 = vector.shape_cast %1048 : vector<6x128xf32> to vector<6x1x128xf32>
    %1055 = vector.broadcast %1053 : vector<6x2x1xf32> to vector<6x2x128xf32>
    %1056 = vector.broadcast %1054 : vector<6x1x128xf32> to vector<6x2x128xf32>
    %1057 = arith.mulf %1055, %1056 : vector<6x2x128xf32>
    %cst_187 = arith.constant dense<0xFF800000> : vector<6x128xf32>
    %1058 = vector.multi_reduction <maximumf>, %1057, %cst_187 [1] : vector<6x2x128xf32> to vector<6x128xf32>
    %1059 = vector.shape_cast %1058 : vector<6x128xf32> to vector<6x1x128xf32>
    %1060 = vector.broadcast %1059 : vector<6x1x128xf32> to vector<6x2x128xf32>
    %1061 = arith.subf %1057, %1060 : vector<6x2x128xf32>
    %1062 = math.exp %1061 : vector<6x2x128xf32>
    %cst_188 = arith.constant dense<0.000000e+00> : vector<6x128xf32>
    %1063 = vector.multi_reduction <add>, %1062, %cst_188 [1] : vector<6x2x128xf32> to vector<6x128xf32>
    %1064 = vector.shape_cast %1052 : vector<6x2xf32> to vector<6x2x1xf32>
    %1065 = vector.broadcast %1064 : vector<6x2x1xf32> to vector<6x2x128xf32>
    %1066 = arith.mulf %1062, %1065 : vector<6x2x128xf32>
    %cst_189 = arith.constant dense<0.000000e+00> : vector<6x128xf32>
    %1067 = vector.multi_reduction <add>, %1066, %cst_189 [1] : vector<6x2x128xf32> to vector<6x128xf32>
    %1068 = tpu.reciprocal %1063 {approx = true} : vector<6x128xf32> -> vector<6x128xf32>
    %1069 = arith.mulf %1063, %1068 : vector<6x128xf32>
    %cst_190 = arith.constant 2.000000e+00 : f32
    %1070 = vector.broadcast %cst_190 : f32 to vector<6x128xf32>
    %1071 = arith.subf %1070, %1069 : vector<6x128xf32>
    %1072 = arith.mulf %1068, %1071 : vector<6x128xf32>
    %1073 = arith.mulf %1067, %1072 : vector<6x128xf32>
    %c48_191 = arith.constant 48 : index
    %c96_192 = arith.constant 96 : index
    %1074 = vector.load %arg1[%c48_191, %c96_192] : memref<152x128xf32, #tpu.memory_space<vmem>>, vector<6x6xf32>
    %c48_193 = arith.constant 48 : index
    %c104_194 = arith.constant 104 : index
    %1075 = vector.load %arg1[%c48_193, %c104_194] : memref<152x128xf32, #tpu.memory_space<vmem>>, vector<6x1xf32>
    %1076 = vector.extract_strided_slice %1074 {offsets = [0, 0], sizes = [6, 1], strides = [1, 1]} : vector<6x6xf32> to vector<6x1xf32>
    %1077 = vector.extract_strided_slice %1073 {offsets = [0, 0], sizes = [1, 128], strides = [1, 1]} : vector<6x128xf32> to vector<1x128xf32>
    %1078 = vector.broadcast %1076 : vector<6x1xf32> to vector<6x128xf32>
    %1079 = vector.broadcast %1077 : vector<1x128xf32> to vector<6x128xf32>
    %1080 = arith.mulf %1078, %1079 : vector<6x128xf32>
    %1081 = vector.broadcast %1075 : vector<6x1xf32> to vector<6x128xf32>
    %1082 = arith.addf %1081, %1080 : vector<6x128xf32>
    %1083 = vector.extract_strided_slice %1074 {offsets = [0, 1], sizes = [6, 1], strides = [1, 1]} : vector<6x6xf32> to vector<6x1xf32>
    %1084 = vector.extract_strided_slice %1073 {offsets = [1, 0], sizes = [1, 128], strides = [1, 1]} : vector<6x128xf32> to vector<1x128xf32>
    %1085 = vector.broadcast %1083 : vector<6x1xf32> to vector<6x128xf32>
    %1086 = vector.broadcast %1084 : vector<1x128xf32> to vector<6x128xf32>
    %1087 = arith.mulf %1085, %1086 : vector<6x128xf32>
    %1088 = arith.addf %1082, %1087 : vector<6x128xf32>
    %1089 = vector.extract_strided_slice %1074 {offsets = [0, 2], sizes = [6, 1], strides = [1, 1]} : vector<6x6xf32> to vector<6x1xf32>
    %1090 = vector.extract_strided_slice %1073 {offsets = [2, 0], sizes = [1, 128], strides = [1, 1]} : vector<6x128xf32> to vector<1x128xf32>
    %1091 = vector.broadcast %1089 : vector<6x1xf32> to vector<6x128xf32>
    %1092 = vector.broadcast %1090 : vector<1x128xf32> to vector<6x128xf32>
    %1093 = arith.mulf %1091, %1092 : vector<6x128xf32>
    %1094 = arith.addf %1088, %1093 : vector<6x128xf32>
    %1095 = vector.extract_strided_slice %1074 {offsets = [0, 3], sizes = [6, 1], strides = [1, 1]} : vector<6x6xf32> to vector<6x1xf32>
    %1096 = vector.extract_strided_slice %1073 {offsets = [3, 0], sizes = [1, 128], strides = [1, 1]} : vector<6x128xf32> to vector<1x128xf32>
    %1097 = vector.broadcast %1095 : vector<6x1xf32> to vector<6x128xf32>
    %1098 = vector.broadcast %1096 : vector<1x128xf32> to vector<6x128xf32>
    %1099 = arith.mulf %1097, %1098 : vector<6x128xf32>
    %1100 = arith.addf %1094, %1099 : vector<6x128xf32>
    %1101 = vector.extract_strided_slice %1074 {offsets = [0, 4], sizes = [6, 1], strides = [1, 1]} : vector<6x6xf32> to vector<6x1xf32>
    %1102 = vector.extract_strided_slice %1073 {offsets = [4, 0], sizes = [1, 128], strides = [1, 1]} : vector<6x128xf32> to vector<1x128xf32>
    %1103 = vector.broadcast %1101 : vector<6x1xf32> to vector<6x128xf32>
    %1104 = vector.broadcast %1102 : vector<1x128xf32> to vector<6x128xf32>
    %1105 = arith.mulf %1103, %1104 : vector<6x128xf32>
    %1106 = arith.addf %1100, %1105 : vector<6x128xf32>
    %1107 = vector.extract_strided_slice %1074 {offsets = [0, 5], sizes = [6, 1], strides = [1, 1]} : vector<6x6xf32> to vector<6x1xf32>
    %1108 = vector.extract_strided_slice %1073 {offsets = [5, 0], sizes = [1, 128], strides = [1, 1]} : vector<6x128xf32> to vector<1x128xf32>
    %1109 = vector.broadcast %1107 : vector<6x1xf32> to vector<6x128xf32>
    %1110 = vector.broadcast %1108 : vector<1x128xf32> to vector<6x128xf32>
    %1111 = arith.mulf %1109, %1110 : vector<6x128xf32>
    %1112 = arith.addf %1106, %1111 : vector<6x128xf32>
    %1113 = arith.addf %1008, %1112 : vector<6x128xf32>
    %cst_195 = arith.constant dense<0.000000e+00> : vector<128xf32>
    %1114 = vector.multi_reduction <add>, %1113, %cst_195 [0] : vector<6x128xf32> to vector<128xf32>
    %1115 = vector.shape_cast %1114 : vector<128xf32> to vector<1x128xf32>
    %cst_196 = arith.constant 6.000000e+00 : f32
    %1116 = vector.broadcast %cst_196 : f32 to vector<1x128xf32>
    %1117 = arith.divf %1115, %1116 : vector<1x128xf32>
    %1118 = vector.broadcast %1117 : vector<1x128xf32> to vector<6x128xf32>
    %1119 = arith.subf %1113, %1118 : vector<6x128xf32>
    %1120 = arith.mulf %1119, %1119 : vector<6x128xf32>
    %cst_197 = arith.constant dense<0.000000e+00> : vector<128xf32>
    %1121 = vector.multi_reduction <add>, %1120, %cst_197 [0] : vector<6x128xf32> to vector<128xf32>
    %1122 = vector.shape_cast %1121 : vector<128xf32> to vector<1x128xf32>
    %cst_198 = arith.constant 6.000000e+00 : f32
    %1123 = vector.broadcast %cst_198 : f32 to vector<1x128xf32>
    %1124 = arith.divf %1122, %1123 : vector<1x128xf32>
    %cst_199 = arith.constant 9.99999974E-6 : f32
    %1125 = vector.broadcast %cst_199 : f32 to vector<1x128xf32>
    %1126 = arith.addf %1124, %1125 : vector<1x128xf32>
    %1127 = math.rsqrt %1126 : vector<1x128xf32>
    %1128 = vector.broadcast %1127 : vector<1x128xf32> to vector<6x128xf32>
    %1129 = arith.mulf %1119, %1128 : vector<6x128xf32>
    %c56_200 = arith.constant 56 : index
    %c72_201 = arith.constant 72 : index
    %1130 = vector.load %arg1[%c56_200, %c72_201] : memref<152x128xf32, #tpu.memory_space<vmem>>, vector<6x1xf32>
    %1131 = vector.broadcast %1130 : vector<6x1xf32> to vector<6x128xf32>
    %1132 = arith.mulf %1129, %1131 : vector<6x128xf32>
    %c56_202 = arith.constant 56 : index
    %c96_203 = arith.constant 96 : index
    %1133 = vector.load %arg1[%c56_202, %c96_203] : memref<152x128xf32, #tpu.memory_space<vmem>>, vector<6x1xf32>
    %1134 = vector.broadcast %1133 : vector<6x1xf32> to vector<6x128xf32>
    %1135 = arith.addf %1132, %1134 : vector<6x128xf32>
    %c64_204 = arith.constant 64 : index
    %c72_205 = arith.constant 72 : index
    %1136 = vector.load %arg1[%c64_204, %c72_205] : memref<152x128xf32, #tpu.memory_space<vmem>>, vector<6x6xf32>
    %c64_206 = arith.constant 64 : index
    %c96_207 = arith.constant 96 : index
    %1137 = vector.load %arg1[%c64_206, %c96_207] : memref<152x128xf32, #tpu.memory_space<vmem>>, vector<6x1xf32>
    %1138 = vector.extract_strided_slice %1136 {offsets = [0, 0], sizes = [6, 1], strides = [1, 1]} : vector<6x6xf32> to vector<6x1xf32>
    %1139 = vector.extract_strided_slice %1135 {offsets = [0, 0], sizes = [1, 128], strides = [1, 1]} : vector<6x128xf32> to vector<1x128xf32>
    %1140 = vector.broadcast %1138 : vector<6x1xf32> to vector<6x128xf32>
    %1141 = vector.broadcast %1139 : vector<1x128xf32> to vector<6x128xf32>
    %1142 = arith.mulf %1140, %1141 : vector<6x128xf32>
    %1143 = vector.broadcast %1137 : vector<6x1xf32> to vector<6x128xf32>
    %1144 = arith.addf %1143, %1142 : vector<6x128xf32>
    %1145 = vector.extract_strided_slice %1136 {offsets = [0, 1], sizes = [6, 1], strides = [1, 1]} : vector<6x6xf32> to vector<6x1xf32>
    %1146 = vector.extract_strided_slice %1135 {offsets = [1, 0], sizes = [1, 128], strides = [1, 1]} : vector<6x128xf32> to vector<1x128xf32>
    %1147 = vector.broadcast %1145 : vector<6x1xf32> to vector<6x128xf32>
    %1148 = vector.broadcast %1146 : vector<1x128xf32> to vector<6x128xf32>
    %1149 = arith.mulf %1147, %1148 : vector<6x128xf32>
    %1150 = arith.addf %1144, %1149 : vector<6x128xf32>
    %1151 = vector.extract_strided_slice %1136 {offsets = [0, 2], sizes = [6, 1], strides = [1, 1]} : vector<6x6xf32> to vector<6x1xf32>
    %1152 = vector.extract_strided_slice %1135 {offsets = [2, 0], sizes = [1, 128], strides = [1, 1]} : vector<6x128xf32> to vector<1x128xf32>
    %1153 = vector.broadcast %1151 : vector<6x1xf32> to vector<6x128xf32>
    %1154 = vector.broadcast %1152 : vector<1x128xf32> to vector<6x128xf32>
    %1155 = arith.mulf %1153, %1154 : vector<6x128xf32>
    %1156 = arith.addf %1150, %1155 : vector<6x128xf32>
    %1157 = vector.extract_strided_slice %1136 {offsets = [0, 3], sizes = [6, 1], strides = [1, 1]} : vector<6x6xf32> to vector<6x1xf32>
    %1158 = vector.extract_strided_slice %1135 {offsets = [3, 0], sizes = [1, 128], strides = [1, 1]} : vector<6x128xf32> to vector<1x128xf32>
    %1159 = vector.broadcast %1157 : vector<6x1xf32> to vector<6x128xf32>
    %1160 = vector.broadcast %1158 : vector<1x128xf32> to vector<6x128xf32>
    %1161 = arith.mulf %1159, %1160 : vector<6x128xf32>
    %1162 = arith.addf %1156, %1161 : vector<6x128xf32>
    %1163 = vector.extract_strided_slice %1136 {offsets = [0, 4], sizes = [6, 1], strides = [1, 1]} : vector<6x6xf32> to vector<6x1xf32>
    %1164 = vector.extract_strided_slice %1135 {offsets = [4, 0], sizes = [1, 128], strides = [1, 1]} : vector<6x128xf32> to vector<1x128xf32>
    %1165 = vector.broadcast %1163 : vector<6x1xf32> to vector<6x128xf32>
    %1166 = vector.broadcast %1164 : vector<1x128xf32> to vector<6x128xf32>
    %1167 = arith.mulf %1165, %1166 : vector<6x128xf32>
    %1168 = arith.addf %1162, %1167 : vector<6x128xf32>
    %1169 = vector.extract_strided_slice %1136 {offsets = [0, 5], sizes = [6, 1], strides = [1, 1]} : vector<6x6xf32> to vector<6x1xf32>
    %1170 = vector.extract_strided_slice %1135 {offsets = [5, 0], sizes = [1, 128], strides = [1, 1]} : vector<6x128xf32> to vector<1x128xf32>
    %1171 = vector.broadcast %1169 : vector<6x1xf32> to vector<6x128xf32>
    %1172 = vector.broadcast %1170 : vector<1x128xf32> to vector<6x128xf32>
    %1173 = arith.mulf %1171, %1172 : vector<6x128xf32>
    %1174 = arith.addf %1168, %1173 : vector<6x128xf32>
    %c64_208 = arith.constant 64 : index
    %c104_209 = arith.constant 104 : index
    %1175 = vector.load %arg1[%c64_208, %c104_209] : memref<152x128xf32, #tpu.memory_space<vmem>>, vector<6x6xf32>
    %c72_210 = arith.constant 72 : index
    %c32_211 = arith.constant 32 : index
    %1176 = vector.load %arg1[%c72_210, %c32_211] : memref<152x128xf32, #tpu.memory_space<vmem>>, vector<6x1xf32>
    %1177 = vector.extract_strided_slice %1175 {offsets = [0, 0], sizes = [6, 1], strides = [1, 1]} : vector<6x6xf32> to vector<6x1xf32>
    %1178 = vector.extract_strided_slice %610 {offsets = [0, 0], sizes = [1, 128], strides = [1, 1]} : vector<6x128xf32> to vector<1x128xf32>
    %1179 = vector.broadcast %1177 : vector<6x1xf32> to vector<6x128xf32>
    %1180 = vector.broadcast %1178 : vector<1x128xf32> to vector<6x128xf32>
    %1181 = arith.mulf %1179, %1180 : vector<6x128xf32>
    %1182 = vector.broadcast %1176 : vector<6x1xf32> to vector<6x128xf32>
    %1183 = arith.addf %1182, %1181 : vector<6x128xf32>
    %1184 = vector.extract_strided_slice %1175 {offsets = [0, 1], sizes = [6, 1], strides = [1, 1]} : vector<6x6xf32> to vector<6x1xf32>
    %1185 = vector.extract_strided_slice %610 {offsets = [1, 0], sizes = [1, 128], strides = [1, 1]} : vector<6x128xf32> to vector<1x128xf32>
    %1186 = vector.broadcast %1184 : vector<6x1xf32> to vector<6x128xf32>
    %1187 = vector.broadcast %1185 : vector<1x128xf32> to vector<6x128xf32>
    %1188 = arith.mulf %1186, %1187 : vector<6x128xf32>
    %1189 = arith.addf %1183, %1188 : vector<6x128xf32>
    %1190 = vector.extract_strided_slice %1175 {offsets = [0, 2], sizes = [6, 1], strides = [1, 1]} : vector<6x6xf32> to vector<6x1xf32>
    %1191 = vector.extract_strided_slice %610 {offsets = [2, 0], sizes = [1, 128], strides = [1, 1]} : vector<6x128xf32> to vector<1x128xf32>
    %1192 = vector.broadcast %1190 : vector<6x1xf32> to vector<6x128xf32>
    %1193 = vector.broadcast %1191 : vector<1x128xf32> to vector<6x128xf32>
    %1194 = arith.mulf %1192, %1193 : vector<6x128xf32>
    %1195 = arith.addf %1189, %1194 : vector<6x128xf32>
    %1196 = vector.extract_strided_slice %1175 {offsets = [0, 3], sizes = [6, 1], strides = [1, 1]} : vector<6x6xf32> to vector<6x1xf32>
    %1197 = vector.extract_strided_slice %610 {offsets = [3, 0], sizes = [1, 128], strides = [1, 1]} : vector<6x128xf32> to vector<1x128xf32>
    %1198 = vector.broadcast %1196 : vector<6x1xf32> to vector<6x128xf32>
    %1199 = vector.broadcast %1197 : vector<1x128xf32> to vector<6x128xf32>
    %1200 = arith.mulf %1198, %1199 : vector<6x128xf32>
    %1201 = arith.addf %1195, %1200 : vector<6x128xf32>
    %1202 = vector.extract_strided_slice %1175 {offsets = [0, 4], sizes = [6, 1], strides = [1, 1]} : vector<6x6xf32> to vector<6x1xf32>
    %1203 = vector.extract_strided_slice %610 {offsets = [4, 0], sizes = [1, 128], strides = [1, 1]} : vector<6x128xf32> to vector<1x128xf32>
    %1204 = vector.broadcast %1202 : vector<6x1xf32> to vector<6x128xf32>
    %1205 = vector.broadcast %1203 : vector<1x128xf32> to vector<6x128xf32>
    %1206 = arith.mulf %1204, %1205 : vector<6x128xf32>
    %1207 = arith.addf %1201, %1206 : vector<6x128xf32>
    %1208 = vector.extract_strided_slice %1175 {offsets = [0, 5], sizes = [6, 1], strides = [1, 1]} : vector<6x6xf32> to vector<6x1xf32>
    %1209 = vector.extract_strided_slice %610 {offsets = [5, 0], sizes = [1, 128], strides = [1, 1]} : vector<6x128xf32> to vector<1x128xf32>
    %1210 = vector.broadcast %1208 : vector<6x1xf32> to vector<6x128xf32>
    %1211 = vector.broadcast %1209 : vector<1x128xf32> to vector<6x128xf32>
    %1212 = arith.mulf %1210, %1211 : vector<6x128xf32>
    %1213 = arith.addf %1207, %1212 : vector<6x128xf32>
    %c72_212 = arith.constant 72 : index
    %c40_213 = arith.constant 40 : index
    %1214 = vector.load %arg1[%c72_212, %c40_213] : memref<152x128xf32, #tpu.memory_space<vmem>>, vector<6x6xf32>
    %c72_214 = arith.constant 72 : index
    %c64_215 = arith.constant 64 : index
    %1215 = vector.load %arg1[%c72_214, %c64_215] : memref<152x128xf32, #tpu.memory_space<vmem>>, vector<6x1xf32>
    %1216 = vector.extract_strided_slice %1214 {offsets = [0, 0], sizes = [6, 1], strides = [1, 1]} : vector<6x6xf32> to vector<6x1xf32>
    %1217 = vector.extract_strided_slice %610 {offsets = [0, 0], sizes = [1, 128], strides = [1, 1]} : vector<6x128xf32> to vector<1x128xf32>
    %1218 = vector.broadcast %1216 : vector<6x1xf32> to vector<6x128xf32>
    %1219 = vector.broadcast %1217 : vector<1x128xf32> to vector<6x128xf32>
    %1220 = arith.mulf %1218, %1219 : vector<6x128xf32>
    %1221 = vector.broadcast %1215 : vector<6x1xf32> to vector<6x128xf32>
    %1222 = arith.addf %1221, %1220 : vector<6x128xf32>
    %1223 = vector.extract_strided_slice %1214 {offsets = [0, 1], sizes = [6, 1], strides = [1, 1]} : vector<6x6xf32> to vector<6x1xf32>
    %1224 = vector.extract_strided_slice %610 {offsets = [1, 0], sizes = [1, 128], strides = [1, 1]} : vector<6x128xf32> to vector<1x128xf32>
    %1225 = vector.broadcast %1223 : vector<6x1xf32> to vector<6x128xf32>
    %1226 = vector.broadcast %1224 : vector<1x128xf32> to vector<6x128xf32>
    %1227 = arith.mulf %1225, %1226 : vector<6x128xf32>
    %1228 = arith.addf %1222, %1227 : vector<6x128xf32>
    %1229 = vector.extract_strided_slice %1214 {offsets = [0, 2], sizes = [6, 1], strides = [1, 1]} : vector<6x6xf32> to vector<6x1xf32>
    %1230 = vector.extract_strided_slice %610 {offsets = [2, 0], sizes = [1, 128], strides = [1, 1]} : vector<6x128xf32> to vector<1x128xf32>
    %1231 = vector.broadcast %1229 : vector<6x1xf32> to vector<6x128xf32>
    %1232 = vector.broadcast %1230 : vector<1x128xf32> to vector<6x128xf32>
    %1233 = arith.mulf %1231, %1232 : vector<6x128xf32>
    %1234 = arith.addf %1228, %1233 : vector<6x128xf32>
    %1235 = vector.extract_strided_slice %1214 {offsets = [0, 3], sizes = [6, 1], strides = [1, 1]} : vector<6x6xf32> to vector<6x1xf32>
    %1236 = vector.extract_strided_slice %610 {offsets = [3, 0], sizes = [1, 128], strides = [1, 1]} : vector<6x128xf32> to vector<1x128xf32>
    %1237 = vector.broadcast %1235 : vector<6x1xf32> to vector<6x128xf32>
    %1238 = vector.broadcast %1236 : vector<1x128xf32> to vector<6x128xf32>
    %1239 = arith.mulf %1237, %1238 : vector<6x128xf32>
    %1240 = arith.addf %1234, %1239 : vector<6x128xf32>
    %1241 = vector.extract_strided_slice %1214 {offsets = [0, 4], sizes = [6, 1], strides = [1, 1]} : vector<6x6xf32> to vector<6x1xf32>
    %1242 = vector.extract_strided_slice %610 {offsets = [4, 0], sizes = [1, 128], strides = [1, 1]} : vector<6x128xf32> to vector<1x128xf32>
    %1243 = vector.broadcast %1241 : vector<6x1xf32> to vector<6x128xf32>
    %1244 = vector.broadcast %1242 : vector<1x128xf32> to vector<6x128xf32>
    %1245 = arith.mulf %1243, %1244 : vector<6x128xf32>
    %1246 = arith.addf %1240, %1245 : vector<6x128xf32>
    %1247 = vector.extract_strided_slice %1214 {offsets = [0, 5], sizes = [6, 1], strides = [1, 1]} : vector<6x6xf32> to vector<6x1xf32>
    %1248 = vector.extract_strided_slice %610 {offsets = [5, 0], sizes = [1, 128], strides = [1, 1]} : vector<6x128xf32> to vector<1x128xf32>
    %1249 = vector.broadcast %1247 : vector<6x1xf32> to vector<6x128xf32>
    %1250 = vector.broadcast %1248 : vector<1x128xf32> to vector<6x128xf32>
    %1251 = arith.mulf %1249, %1250 : vector<6x128xf32>
    %1252 = arith.addf %1246, %1251 : vector<6x128xf32>
    %1253 = vector.extract_strided_slice %1213 {offsets = [0, 0], sizes = [6, 2], strides = [1, 1]} : vector<6x128xf32> to vector<6x2xf32>
    %1254 = vector.extract_strided_slice %1252 {offsets = [0, 0], sizes = [6, 2], strides = [1, 1]} : vector<6x128xf32> to vector<6x2xf32>
    %1255 = vector.shape_cast %1253 : vector<6x2xf32> to vector<6x2x1xf32>
    %1256 = vector.shape_cast %1174 : vector<6x128xf32> to vector<6x1x128xf32>
    %1257 = vector.broadcast %1255 : vector<6x2x1xf32> to vector<6x2x128xf32>
    %1258 = vector.broadcast %1256 : vector<6x1x128xf32> to vector<6x2x128xf32>
    %1259 = arith.mulf %1257, %1258 : vector<6x2x128xf32>
    %cst_216 = arith.constant dense<0xFF800000> : vector<6x128xf32>
    %1260 = vector.multi_reduction <maximumf>, %1259, %cst_216 [1] : vector<6x2x128xf32> to vector<6x128xf32>
    %1261 = vector.shape_cast %1260 : vector<6x128xf32> to vector<6x1x128xf32>
    %1262 = vector.broadcast %1261 : vector<6x1x128xf32> to vector<6x2x128xf32>
    %1263 = arith.subf %1259, %1262 : vector<6x2x128xf32>
    %1264 = math.exp %1263 : vector<6x2x128xf32>
    %cst_217 = arith.constant dense<0.000000e+00> : vector<6x128xf32>
    %1265 = vector.multi_reduction <add>, %1264, %cst_217 [1] : vector<6x2x128xf32> to vector<6x128xf32>
    %1266 = vector.shape_cast %1254 : vector<6x2xf32> to vector<6x2x1xf32>
    %1267 = vector.broadcast %1266 : vector<6x2x1xf32> to vector<6x2x128xf32>
    %1268 = arith.mulf %1264, %1267 : vector<6x2x128xf32>
    %cst_218 = arith.constant dense<0.000000e+00> : vector<6x128xf32>
    %1269 = vector.multi_reduction <add>, %1268, %cst_218 [1] : vector<6x2x128xf32> to vector<6x128xf32>
    %1270 = tpu.reciprocal %1265 {approx = true} : vector<6x128xf32> -> vector<6x128xf32>
    %1271 = arith.mulf %1265, %1270 : vector<6x128xf32>
    %cst_219 = arith.constant 2.000000e+00 : f32
    %1272 = vector.broadcast %cst_219 : f32 to vector<6x128xf32>
    %1273 = arith.subf %1272, %1271 : vector<6x128xf32>
    %1274 = arith.mulf %1270, %1273 : vector<6x128xf32>
    %1275 = arith.mulf %1269, %1274 : vector<6x128xf32>
    %c72_220 = arith.constant 72 : index
    %c72_221 = arith.constant 72 : index
    %1276 = vector.load %arg1[%c72_220, %c72_221] : memref<152x128xf32, #tpu.memory_space<vmem>>, vector<6x6xf32>
    %c72_222 = arith.constant 72 : index
    %c80_223 = arith.constant 80 : index
    %1277 = vector.load %arg1[%c72_222, %c80_223] : memref<152x128xf32, #tpu.memory_space<vmem>>, vector<6x1xf32>
    %1278 = vector.extract_strided_slice %1276 {offsets = [0, 0], sizes = [6, 1], strides = [1, 1]} : vector<6x6xf32> to vector<6x1xf32>
    %1279 = vector.extract_strided_slice %1275 {offsets = [0, 0], sizes = [1, 128], strides = [1, 1]} : vector<6x128xf32> to vector<1x128xf32>
    %1280 = vector.broadcast %1278 : vector<6x1xf32> to vector<6x128xf32>
    %1281 = vector.broadcast %1279 : vector<1x128xf32> to vector<6x128xf32>
    %1282 = arith.mulf %1280, %1281 : vector<6x128xf32>
    %1283 = vector.broadcast %1277 : vector<6x1xf32> to vector<6x128xf32>
    %1284 = arith.addf %1283, %1282 : vector<6x128xf32>
    %1285 = vector.extract_strided_slice %1276 {offsets = [0, 1], sizes = [6, 1], strides = [1, 1]} : vector<6x6xf32> to vector<6x1xf32>
    %1286 = vector.extract_strided_slice %1275 {offsets = [1, 0], sizes = [1, 128], strides = [1, 1]} : vector<6x128xf32> to vector<1x128xf32>
    %1287 = vector.broadcast %1285 : vector<6x1xf32> to vector<6x128xf32>
    %1288 = vector.broadcast %1286 : vector<1x128xf32> to vector<6x128xf32>
    %1289 = arith.mulf %1287, %1288 : vector<6x128xf32>
    %1290 = arith.addf %1284, %1289 : vector<6x128xf32>
    %1291 = vector.extract_strided_slice %1276 {offsets = [0, 2], sizes = [6, 1], strides = [1, 1]} : vector<6x6xf32> to vector<6x1xf32>
    %1292 = vector.extract_strided_slice %1275 {offsets = [2, 0], sizes = [1, 128], strides = [1, 1]} : vector<6x128xf32> to vector<1x128xf32>
    %1293 = vector.broadcast %1291 : vector<6x1xf32> to vector<6x128xf32>
    %1294 = vector.broadcast %1292 : vector<1x128xf32> to vector<6x128xf32>
    %1295 = arith.mulf %1293, %1294 : vector<6x128xf32>
    %1296 = arith.addf %1290, %1295 : vector<6x128xf32>
    %1297 = vector.extract_strided_slice %1276 {offsets = [0, 3], sizes = [6, 1], strides = [1, 1]} : vector<6x6xf32> to vector<6x1xf32>
    %1298 = vector.extract_strided_slice %1275 {offsets = [3, 0], sizes = [1, 128], strides = [1, 1]} : vector<6x128xf32> to vector<1x128xf32>
    %1299 = vector.broadcast %1297 : vector<6x1xf32> to vector<6x128xf32>
    %1300 = vector.broadcast %1298 : vector<1x128xf32> to vector<6x128xf32>
    %1301 = arith.mulf %1299, %1300 : vector<6x128xf32>
    %1302 = arith.addf %1296, %1301 : vector<6x128xf32>
    %1303 = vector.extract_strided_slice %1276 {offsets = [0, 4], sizes = [6, 1], strides = [1, 1]} : vector<6x6xf32> to vector<6x1xf32>
    %1304 = vector.extract_strided_slice %1275 {offsets = [4, 0], sizes = [1, 128], strides = [1, 1]} : vector<6x128xf32> to vector<1x128xf32>
    %1305 = vector.broadcast %1303 : vector<6x1xf32> to vector<6x128xf32>
    %1306 = vector.broadcast %1304 : vector<1x128xf32> to vector<6x128xf32>
    %1307 = arith.mulf %1305, %1306 : vector<6x128xf32>
    %1308 = arith.addf %1302, %1307 : vector<6x128xf32>
    %1309 = vector.extract_strided_slice %1276 {offsets = [0, 5], sizes = [6, 1], strides = [1, 1]} : vector<6x6xf32> to vector<6x1xf32>
    %1310 = vector.extract_strided_slice %1275 {offsets = [5, 0], sizes = [1, 128], strides = [1, 1]} : vector<6x128xf32> to vector<1x128xf32>
    %1311 = vector.broadcast %1309 : vector<6x1xf32> to vector<6x128xf32>
    %1312 = vector.broadcast %1310 : vector<1x128xf32> to vector<6x128xf32>
    %1313 = arith.mulf %1311, %1312 : vector<6x128xf32>
    %1314 = arith.addf %1308, %1313 : vector<6x128xf32>
    %1315 = arith.addf %1135, %1314 : vector<6x128xf32>
    %cst_224 = arith.constant dense<0.000000e+00> : vector<128xf32>
    %1316 = vector.multi_reduction <add>, %1315, %cst_224 [0] : vector<6x128xf32> to vector<128xf32>
    %1317 = vector.shape_cast %1316 : vector<128xf32> to vector<1x128xf32>
    %cst_225 = arith.constant 6.000000e+00 : f32
    %1318 = vector.broadcast %cst_225 : f32 to vector<1x128xf32>
    %1319 = arith.divf %1317, %1318 : vector<1x128xf32>
    %1320 = vector.broadcast %1319 : vector<1x128xf32> to vector<6x128xf32>
    %1321 = arith.subf %1315, %1320 : vector<6x128xf32>
    %1322 = arith.mulf %1321, %1321 : vector<6x128xf32>
    %cst_226 = arith.constant dense<0.000000e+00> : vector<128xf32>
    %1323 = vector.multi_reduction <add>, %1322, %cst_226 [0] : vector<6x128xf32> to vector<128xf32>
    %1324 = vector.shape_cast %1323 : vector<128xf32> to vector<1x128xf32>
    %cst_227 = arith.constant 6.000000e+00 : f32
    %1325 = vector.broadcast %cst_227 : f32 to vector<1x128xf32>
    %1326 = arith.divf %1324, %1325 : vector<1x128xf32>
    %cst_228 = arith.constant 9.99999974E-6 : f32
    %1327 = vector.broadcast %cst_228 : f32 to vector<1x128xf32>
    %1328 = arith.addf %1326, %1327 : vector<1x128xf32>
    %1329 = math.rsqrt %1328 : vector<1x128xf32>
    %1330 = vector.broadcast %1329 : vector<1x128xf32> to vector<6x128xf32>
    %1331 = arith.mulf %1321, %1330 : vector<6x128xf32>
    %c56_229 = arith.constant 56 : index
    %c104_230 = arith.constant 104 : index
    %1332 = vector.load %arg1[%c56_229, %c104_230] : memref<152x128xf32, #tpu.memory_space<vmem>>, vector<6x1xf32>
    %1333 = vector.broadcast %1332 : vector<6x1xf32> to vector<6x128xf32>
    %1334 = arith.mulf %1331, %1333 : vector<6x128xf32>
    %c64_231 = arith.constant 64 : index
    %c64_232 = arith.constant 64 : index
    %1335 = vector.load %arg1[%c64_231, %c64_232] : memref<152x128xf32, #tpu.memory_space<vmem>>, vector<6x1xf32>
    %1336 = vector.broadcast %1335 : vector<6x1xf32> to vector<6x128xf32>
    %1337 = arith.addf %1334, %1336 : vector<6x128xf32>
    %c48_233 = arith.constant 48 : index
    %c112_234 = arith.constant 112 : index
    %1338 = vector.load %arg1[%c48_233, %c112_234] : memref<152x128xf32, #tpu.memory_space<vmem>>, vector<72x6xf32>
    %c56_235 = arith.constant 56 : index
    %c24_236 = arith.constant 24 : index
    %1339 = vector.load %arg1[%c56_235, %c24_236] : memref<152x128xf32, #tpu.memory_space<vmem>>, vector<72x1xf32>
    %1340 = vector.extract_strided_slice %1338 {offsets = [0, 0], sizes = [72, 1], strides = [1, 1]} : vector<72x6xf32> to vector<72x1xf32>
    %1341 = vector.extract_strided_slice %1337 {offsets = [0, 0], sizes = [1, 128], strides = [1, 1]} : vector<6x128xf32> to vector<1x128xf32>
    %1342 = vector.broadcast %1340 : vector<72x1xf32> to vector<72x128xf32>
    %1343 = vector.broadcast %1341 : vector<1x128xf32> to vector<72x128xf32>
    %1344 = arith.mulf %1342, %1343 : vector<72x128xf32>
    %1345 = vector.broadcast %1339 : vector<72x1xf32> to vector<72x128xf32>
    %1346 = arith.addf %1345, %1344 : vector<72x128xf32>
    %1347 = vector.extract_strided_slice %1338 {offsets = [0, 1], sizes = [72, 1], strides = [1, 1]} : vector<72x6xf32> to vector<72x1xf32>
    %1348 = vector.extract_strided_slice %1337 {offsets = [1, 0], sizes = [1, 128], strides = [1, 1]} : vector<6x128xf32> to vector<1x128xf32>
    %1349 = vector.broadcast %1347 : vector<72x1xf32> to vector<72x128xf32>
    %1350 = vector.broadcast %1348 : vector<1x128xf32> to vector<72x128xf32>
    %1351 = arith.mulf %1349, %1350 : vector<72x128xf32>
    %1352 = arith.addf %1346, %1351 : vector<72x128xf32>
    %1353 = vector.extract_strided_slice %1338 {offsets = [0, 2], sizes = [72, 1], strides = [1, 1]} : vector<72x6xf32> to vector<72x1xf32>
    %1354 = vector.extract_strided_slice %1337 {offsets = [2, 0], sizes = [1, 128], strides = [1, 1]} : vector<6x128xf32> to vector<1x128xf32>
    %1355 = vector.broadcast %1353 : vector<72x1xf32> to vector<72x128xf32>
    %1356 = vector.broadcast %1354 : vector<1x128xf32> to vector<72x128xf32>
    %1357 = arith.mulf %1355, %1356 : vector<72x128xf32>
    %1358 = arith.addf %1352, %1357 : vector<72x128xf32>
    %1359 = vector.extract_strided_slice %1338 {offsets = [0, 3], sizes = [72, 1], strides = [1, 1]} : vector<72x6xf32> to vector<72x1xf32>
    %1360 = vector.extract_strided_slice %1337 {offsets = [3, 0], sizes = [1, 128], strides = [1, 1]} : vector<6x128xf32> to vector<1x128xf32>
    %1361 = vector.broadcast %1359 : vector<72x1xf32> to vector<72x128xf32>
    %1362 = vector.broadcast %1360 : vector<1x128xf32> to vector<72x128xf32>
    %1363 = arith.mulf %1361, %1362 : vector<72x128xf32>
    %1364 = arith.addf %1358, %1363 : vector<72x128xf32>
    %1365 = vector.extract_strided_slice %1338 {offsets = [0, 4], sizes = [72, 1], strides = [1, 1]} : vector<72x6xf32> to vector<72x1xf32>
    %1366 = vector.extract_strided_slice %1337 {offsets = [4, 0], sizes = [1, 128], strides = [1, 1]} : vector<6x128xf32> to vector<1x128xf32>
    %1367 = vector.broadcast %1365 : vector<72x1xf32> to vector<72x128xf32>
    %1368 = vector.broadcast %1366 : vector<1x128xf32> to vector<72x128xf32>
    %1369 = arith.mulf %1367, %1368 : vector<72x128xf32>
    %1370 = arith.addf %1364, %1369 : vector<72x128xf32>
    %1371 = vector.extract_strided_slice %1338 {offsets = [0, 5], sizes = [72, 1], strides = [1, 1]} : vector<72x6xf32> to vector<72x1xf32>
    %1372 = vector.extract_strided_slice %1337 {offsets = [5, 0], sizes = [1, 128], strides = [1, 1]} : vector<6x128xf32> to vector<1x128xf32>
    %1373 = vector.broadcast %1371 : vector<72x1xf32> to vector<72x128xf32>
    %1374 = vector.broadcast %1372 : vector<1x128xf32> to vector<72x128xf32>
    %1375 = arith.mulf %1373, %1374 : vector<72x128xf32>
    %1376 = arith.addf %1370, %1375 : vector<72x128xf32>
    %cst_237 = arith.constant 0.000000e+00 : f32
    %1377 = vector.broadcast %cst_237 : f32 to vector<72x128xf32>
    %1378 = arith.maximumf %1376, %1377 : vector<72x128xf32>
    %c32_238 = arith.constant 32 : index
    %c0_239 = arith.constant 0 : index
    %1379 = vector.load %arg2[%c32_238, %c0_239] : memref<48x72xf32, #tpu.memory_space<vmem>>, vector<6x72xf32>
    %cst_240 = arith.constant dense<0.000000e+00> : vector<6x128xf32>
    %1380 = tpu.matmul %1379, %1378, %cst_240 {dimension_numbers = #tpu.dot_dimension_numbers<[1], [0], [0], [1], [0, 0, 1, 1], [], []>} : vector<6x72xf32>, vector<72x128xf32>, vector<6x128xf32> -> vector<6x128xf32>
    %c56_241 = arith.constant 56 : index
    %c64_242 = arith.constant 64 : index
    %1381 = vector.load %arg1[%c56_241, %c64_242] : memref<152x128xf32, #tpu.memory_space<vmem>>, vector<6x1xf32>
    %1382 = vector.broadcast %1381 : vector<6x1xf32> to vector<6x128xf32>
    %1383 = arith.addf %1380, %1382 : vector<6x128xf32>
    %1384 = arith.addf %1337, %1383 : vector<6x128xf32>
    %cst_243 = arith.constant dense<0.000000e+00> : vector<128xf32>
    %1385 = vector.multi_reduction <add>, %1384, %cst_243 [0] : vector<6x128xf32> to vector<128xf32>
    %1386 = vector.shape_cast %1385 : vector<128xf32> to vector<1x128xf32>
    %cst_244 = arith.constant 6.000000e+00 : f32
    %1387 = vector.broadcast %cst_244 : f32 to vector<1x128xf32>
    %1388 = arith.divf %1386, %1387 : vector<1x128xf32>
    %1389 = vector.broadcast %1388 : vector<1x128xf32> to vector<6x128xf32>
    %1390 = arith.subf %1384, %1389 : vector<6x128xf32>
    %1391 = arith.mulf %1390, %1390 : vector<6x128xf32>
    %cst_245 = arith.constant dense<0.000000e+00> : vector<128xf32>
    %1392 = vector.multi_reduction <add>, %1391, %cst_245 [0] : vector<6x128xf32> to vector<128xf32>
    %1393 = vector.shape_cast %1392 : vector<128xf32> to vector<1x128xf32>
    %cst_246 = arith.constant 6.000000e+00 : f32
    %1394 = vector.broadcast %cst_246 : f32 to vector<1x128xf32>
    %1395 = arith.divf %1393, %1394 : vector<1x128xf32>
    %cst_247 = arith.constant 9.99999974E-6 : f32
    %1396 = vector.broadcast %cst_247 : f32 to vector<1x128xf32>
    %1397 = arith.addf %1395, %1396 : vector<1x128xf32>
    %1398 = math.rsqrt %1397 : vector<1x128xf32>
    %1399 = vector.broadcast %1398 : vector<1x128xf32> to vector<6x128xf32>
    %1400 = arith.mulf %1390, %1399 : vector<6x128xf32>
    %c72_248 = arith.constant 72 : index
    %c88_249 = arith.constant 88 : index
    %1401 = vector.load %arg1[%c72_248, %c88_249] : memref<152x128xf32, #tpu.memory_space<vmem>>, vector<6x1xf32>
    %1402 = vector.broadcast %1401 : vector<6x1xf32> to vector<6x128xf32>
    %1403 = arith.mulf %1400, %1402 : vector<6x128xf32>
    %c72_250 = arith.constant 72 : index
    %c96_251 = arith.constant 96 : index
    %1404 = vector.load %arg1[%c72_250, %c96_251] : memref<152x128xf32, #tpu.memory_space<vmem>>, vector<6x1xf32>
    %1405 = vector.broadcast %1404 : vector<6x1xf32> to vector<6x128xf32>
    %1406 = arith.addf %1403, %1405 : vector<6x128xf32>
    %c72_252 = arith.constant 72 : index
    %c104_253 = arith.constant 104 : index
    %1407 = vector.load %arg1[%c72_252, %c104_253] : memref<152x128xf32, #tpu.memory_space<vmem>>, vector<18x6xf32>
    %c72_254 = arith.constant 72 : index
    %c120_255 = arith.constant 120 : index
    %1408 = vector.load %arg1[%c72_254, %c120_255] : memref<152x128xf32, #tpu.memory_space<vmem>>, vector<18x1xf32>
    %1409 = vector.extract_strided_slice %1407 {offsets = [0, 0], sizes = [18, 1], strides = [1, 1]} : vector<18x6xf32> to vector<18x1xf32>
    %1410 = vector.extract_strided_slice %1406 {offsets = [0, 0], sizes = [1, 128], strides = [1, 1]} : vector<6x128xf32> to vector<1x128xf32>
    %1411 = vector.broadcast %1409 : vector<18x1xf32> to vector<18x128xf32>
    %1412 = vector.broadcast %1410 : vector<1x128xf32> to vector<18x128xf32>
    %1413 = arith.mulf %1411, %1412 : vector<18x128xf32>
    %1414 = vector.broadcast %1408 : vector<18x1xf32> to vector<18x128xf32>
    %1415 = arith.addf %1414, %1413 : vector<18x128xf32>
    %1416 = vector.extract_strided_slice %1407 {offsets = [0, 1], sizes = [18, 1], strides = [1, 1]} : vector<18x6xf32> to vector<18x1xf32>
    %1417 = vector.extract_strided_slice %1406 {offsets = [1, 0], sizes = [1, 128], strides = [1, 1]} : vector<6x128xf32> to vector<1x128xf32>
    %1418 = vector.broadcast %1416 : vector<18x1xf32> to vector<18x128xf32>
    %1419 = vector.broadcast %1417 : vector<1x128xf32> to vector<18x128xf32>
    %1420 = arith.mulf %1418, %1419 : vector<18x128xf32>
    %1421 = arith.addf %1415, %1420 : vector<18x128xf32>
    %1422 = vector.extract_strided_slice %1407 {offsets = [0, 2], sizes = [18, 1], strides = [1, 1]} : vector<18x6xf32> to vector<18x1xf32>
    %1423 = vector.extract_strided_slice %1406 {offsets = [2, 0], sizes = [1, 128], strides = [1, 1]} : vector<6x128xf32> to vector<1x128xf32>
    %1424 = vector.broadcast %1422 : vector<18x1xf32> to vector<18x128xf32>
    %1425 = vector.broadcast %1423 : vector<1x128xf32> to vector<18x128xf32>
    %1426 = arith.mulf %1424, %1425 : vector<18x128xf32>
    %1427 = arith.addf %1421, %1426 : vector<18x128xf32>
    %1428 = vector.extract_strided_slice %1407 {offsets = [0, 3], sizes = [18, 1], strides = [1, 1]} : vector<18x6xf32> to vector<18x1xf32>
    %1429 = vector.extract_strided_slice %1406 {offsets = [3, 0], sizes = [1, 128], strides = [1, 1]} : vector<6x128xf32> to vector<1x128xf32>
    %1430 = vector.broadcast %1428 : vector<18x1xf32> to vector<18x128xf32>
    %1431 = vector.broadcast %1429 : vector<1x128xf32> to vector<18x128xf32>
    %1432 = arith.mulf %1430, %1431 : vector<18x128xf32>
    %1433 = arith.addf %1427, %1432 : vector<18x128xf32>
    %1434 = vector.extract_strided_slice %1407 {offsets = [0, 4], sizes = [18, 1], strides = [1, 1]} : vector<18x6xf32> to vector<18x1xf32>
    %1435 = vector.extract_strided_slice %1406 {offsets = [4, 0], sizes = [1, 128], strides = [1, 1]} : vector<6x128xf32> to vector<1x128xf32>
    %1436 = vector.broadcast %1434 : vector<18x1xf32> to vector<18x128xf32>
    %1437 = vector.broadcast %1435 : vector<1x128xf32> to vector<18x128xf32>
    %1438 = arith.mulf %1436, %1437 : vector<18x128xf32>
    %1439 = arith.addf %1433, %1438 : vector<18x128xf32>
    %1440 = vector.extract_strided_slice %1407 {offsets = [0, 5], sizes = [18, 1], strides = [1, 1]} : vector<18x6xf32> to vector<18x1xf32>
    %1441 = vector.extract_strided_slice %1406 {offsets = [5, 0], sizes = [1, 128], strides = [1, 1]} : vector<6x128xf32> to vector<1x128xf32>
    %1442 = vector.broadcast %1440 : vector<18x1xf32> to vector<18x128xf32>
    %1443 = vector.broadcast %1441 : vector<1x128xf32> to vector<18x128xf32>
    %1444 = arith.mulf %1442, %1443 : vector<18x128xf32>
    %1445 = arith.addf %1439, %1444 : vector<18x128xf32>
    %1446 = vector.extract_strided_slice %1445 {offsets = [0, 0], sizes = [6, 128], strides = [1, 1]} : vector<18x128xf32> to vector<6x128xf32>
    %1447 = vector.extract_strided_slice %1445 {offsets = [6, 0], sizes = [6, 128], strides = [1, 1]} : vector<18x128xf32> to vector<6x128xf32>
    %1448 = vector.extract_strided_slice %1445 {offsets = [12, 0], sizes = [6, 128], strides = [1, 1]} : vector<18x128xf32> to vector<6x128xf32>
    %1449 = vector.extract_strided_slice %1447 {offsets = [0, 0], sizes = [6, 2], strides = [1, 1]} : vector<6x128xf32> to vector<6x2xf32>
    %1450 = vector.extract_strided_slice %1448 {offsets = [0, 0], sizes = [6, 2], strides = [1, 1]} : vector<6x128xf32> to vector<6x2xf32>
    %1451 = vector.shape_cast %1449 : vector<6x2xf32> to vector<6x2x1xf32>
    %1452 = vector.shape_cast %1446 : vector<6x128xf32> to vector<6x1x128xf32>
    %1453 = vector.broadcast %1451 : vector<6x2x1xf32> to vector<6x2x128xf32>
    %1454 = vector.broadcast %1452 : vector<6x1x128xf32> to vector<6x2x128xf32>
    %1455 = arith.mulf %1453, %1454 : vector<6x2x128xf32>
    %cst_256 = arith.constant dense<0xFF800000> : vector<6x128xf32>
    %1456 = vector.multi_reduction <maximumf>, %1455, %cst_256 [1] : vector<6x2x128xf32> to vector<6x128xf32>
    %1457 = vector.shape_cast %1456 : vector<6x128xf32> to vector<6x1x128xf32>
    %1458 = vector.broadcast %1457 : vector<6x1x128xf32> to vector<6x2x128xf32>
    %1459 = arith.subf %1455, %1458 : vector<6x2x128xf32>
    %1460 = math.exp %1459 : vector<6x2x128xf32>
    %cst_257 = arith.constant dense<0.000000e+00> : vector<6x128xf32>
    %1461 = vector.multi_reduction <add>, %1460, %cst_257 [1] : vector<6x2x128xf32> to vector<6x128xf32>
    %1462 = vector.shape_cast %1450 : vector<6x2xf32> to vector<6x2x1xf32>
    %1463 = vector.broadcast %1462 : vector<6x2x1xf32> to vector<6x2x128xf32>
    %1464 = arith.mulf %1460, %1463 : vector<6x2x128xf32>
    %cst_258 = arith.constant dense<0.000000e+00> : vector<6x128xf32>
    %1465 = vector.multi_reduction <add>, %1464, %cst_258 [1] : vector<6x2x128xf32> to vector<6x128xf32>
    %1466 = tpu.reciprocal %1461 {approx = true} : vector<6x128xf32> -> vector<6x128xf32>
    %1467 = arith.mulf %1461, %1466 : vector<6x128xf32>
    %cst_259 = arith.constant 2.000000e+00 : f32
    %1468 = vector.broadcast %cst_259 : f32 to vector<6x128xf32>
    %1469 = arith.subf %1468, %1467 : vector<6x128xf32>
    %1470 = arith.mulf %1466, %1469 : vector<6x128xf32>
    %1471 = arith.mulf %1465, %1470 : vector<6x128xf32>
    %c80_260 = arith.constant 80 : index
    %c16_261 = arith.constant 16 : index
    %1472 = vector.load %arg1[%c80_260, %c16_261] : memref<152x128xf32, #tpu.memory_space<vmem>>, vector<6x6xf32>
    %c80_262 = arith.constant 80 : index
    %c32_263 = arith.constant 32 : index
    %1473 = vector.load %arg1[%c80_262, %c32_263] : memref<152x128xf32, #tpu.memory_space<vmem>>, vector<6x1xf32>
    %1474 = vector.extract_strided_slice %1472 {offsets = [0, 0], sizes = [6, 1], strides = [1, 1]} : vector<6x6xf32> to vector<6x1xf32>
    %1475 = vector.extract_strided_slice %1471 {offsets = [0, 0], sizes = [1, 128], strides = [1, 1]} : vector<6x128xf32> to vector<1x128xf32>
    %1476 = vector.broadcast %1474 : vector<6x1xf32> to vector<6x128xf32>
    %1477 = vector.broadcast %1475 : vector<1x128xf32> to vector<6x128xf32>
    %1478 = arith.mulf %1476, %1477 : vector<6x128xf32>
    %1479 = vector.broadcast %1473 : vector<6x1xf32> to vector<6x128xf32>
    %1480 = arith.addf %1479, %1478 : vector<6x128xf32>
    %1481 = vector.extract_strided_slice %1472 {offsets = [0, 1], sizes = [6, 1], strides = [1, 1]} : vector<6x6xf32> to vector<6x1xf32>
    %1482 = vector.extract_strided_slice %1471 {offsets = [1, 0], sizes = [1, 128], strides = [1, 1]} : vector<6x128xf32> to vector<1x128xf32>
    %1483 = vector.broadcast %1481 : vector<6x1xf32> to vector<6x128xf32>
    %1484 = vector.broadcast %1482 : vector<1x128xf32> to vector<6x128xf32>
    %1485 = arith.mulf %1483, %1484 : vector<6x128xf32>
    %1486 = arith.addf %1480, %1485 : vector<6x128xf32>
    %1487 = vector.extract_strided_slice %1472 {offsets = [0, 2], sizes = [6, 1], strides = [1, 1]} : vector<6x6xf32> to vector<6x1xf32>
    %1488 = vector.extract_strided_slice %1471 {offsets = [2, 0], sizes = [1, 128], strides = [1, 1]} : vector<6x128xf32> to vector<1x128xf32>
    %1489 = vector.broadcast %1487 : vector<6x1xf32> to vector<6x128xf32>
    %1490 = vector.broadcast %1488 : vector<1x128xf32> to vector<6x128xf32>
    %1491 = arith.mulf %1489, %1490 : vector<6x128xf32>
    %1492 = arith.addf %1486, %1491 : vector<6x128xf32>
    %1493 = vector.extract_strided_slice %1472 {offsets = [0, 3], sizes = [6, 1], strides = [1, 1]} : vector<6x6xf32> to vector<6x1xf32>
    %1494 = vector.extract_strided_slice %1471 {offsets = [3, 0], sizes = [1, 128], strides = [1, 1]} : vector<6x128xf32> to vector<1x128xf32>
    %1495 = vector.broadcast %1493 : vector<6x1xf32> to vector<6x128xf32>
    %1496 = vector.broadcast %1494 : vector<1x128xf32> to vector<6x128xf32>
    %1497 = arith.mulf %1495, %1496 : vector<6x128xf32>
    %1498 = arith.addf %1492, %1497 : vector<6x128xf32>
    %1499 = vector.extract_strided_slice %1472 {offsets = [0, 4], sizes = [6, 1], strides = [1, 1]} : vector<6x6xf32> to vector<6x1xf32>
    %1500 = vector.extract_strided_slice %1471 {offsets = [4, 0], sizes = [1, 128], strides = [1, 1]} : vector<6x128xf32> to vector<1x128xf32>
    %1501 = vector.broadcast %1499 : vector<6x1xf32> to vector<6x128xf32>
    %1502 = vector.broadcast %1500 : vector<1x128xf32> to vector<6x128xf32>
    %1503 = arith.mulf %1501, %1502 : vector<6x128xf32>
    %1504 = arith.addf %1498, %1503 : vector<6x128xf32>
    %1505 = vector.extract_strided_slice %1472 {offsets = [0, 5], sizes = [6, 1], strides = [1, 1]} : vector<6x6xf32> to vector<6x1xf32>
    %1506 = vector.extract_strided_slice %1471 {offsets = [5, 0], sizes = [1, 128], strides = [1, 1]} : vector<6x128xf32> to vector<1x128xf32>
    %1507 = vector.broadcast %1505 : vector<6x1xf32> to vector<6x128xf32>
    %1508 = vector.broadcast %1506 : vector<1x128xf32> to vector<6x128xf32>
    %1509 = arith.mulf %1507, %1508 : vector<6x128xf32>
    %1510 = arith.addf %1504, %1509 : vector<6x128xf32>
    %1511 = arith.addf %1406, %1510 : vector<6x128xf32>
    %cst_264 = arith.constant dense<0.000000e+00> : vector<128xf32>
    %1512 = vector.multi_reduction <add>, %1511, %cst_264 [0] : vector<6x128xf32> to vector<128xf32>
    %1513 = vector.shape_cast %1512 : vector<128xf32> to vector<1x128xf32>
    %cst_265 = arith.constant 6.000000e+00 : f32
    %1514 = vector.broadcast %cst_265 : f32 to vector<1x128xf32>
    %1515 = arith.divf %1513, %1514 : vector<1x128xf32>
    %1516 = vector.broadcast %1515 : vector<1x128xf32> to vector<6x128xf32>
    %1517 = arith.subf %1511, %1516 : vector<6x128xf32>
    %1518 = arith.mulf %1517, %1517 : vector<6x128xf32>
    %cst_266 = arith.constant dense<0.000000e+00> : vector<128xf32>
    %1519 = vector.multi_reduction <add>, %1518, %cst_266 [0] : vector<6x128xf32> to vector<128xf32>
    %1520 = vector.shape_cast %1519 : vector<128xf32> to vector<1x128xf32>
    %cst_267 = arith.constant 6.000000e+00 : f32
    %1521 = vector.broadcast %cst_267 : f32 to vector<1x128xf32>
    %1522 = arith.divf %1520, %1521 : vector<1x128xf32>
    %cst_268 = arith.constant 9.99999974E-6 : f32
    %1523 = vector.broadcast %cst_268 : f32 to vector<1x128xf32>
    %1524 = arith.addf %1522, %1523 : vector<1x128xf32>
    %1525 = math.rsqrt %1524 : vector<1x128xf32>
    %1526 = vector.broadcast %1525 : vector<1x128xf32> to vector<6x128xf32>
    %1527 = arith.mulf %1517, %1526 : vector<6x128xf32>
    %c80_269 = arith.constant 80 : index
    %c80_270 = arith.constant 80 : index
    %1528 = vector.load %arg1[%c80_269, %c80_270] : memref<152x128xf32, #tpu.memory_space<vmem>>, vector<6x1xf32>
    %1529 = vector.broadcast %1528 : vector<6x1xf32> to vector<6x128xf32>
    %1530 = arith.mulf %1527, %1529 : vector<6x128xf32>
    %c80_271 = arith.constant 80 : index
    %c88_272 = arith.constant 88 : index
    %1531 = vector.load %arg1[%c80_271, %c88_272] : memref<152x128xf32, #tpu.memory_space<vmem>>, vector<6x1xf32>
    %1532 = vector.broadcast %1531 : vector<6x1xf32> to vector<6x128xf32>
    %1533 = arith.addf %1530, %1532 : vector<6x128xf32>
    %c88_273 = arith.constant 88 : index
    %c32_274 = arith.constant 32 : index
    %1534 = vector.load %arg1[%c88_273, %c32_274] : memref<152x128xf32, #tpu.memory_space<vmem>>, vector<6x6xf32>
    %c88_275 = arith.constant 88 : index
    %c48_276 = arith.constant 48 : index
    %1535 = vector.load %arg1[%c88_275, %c48_276] : memref<152x128xf32, #tpu.memory_space<vmem>>, vector<6x1xf32>
    %1536 = vector.extract_strided_slice %1534 {offsets = [0, 0], sizes = [6, 1], strides = [1, 1]} : vector<6x6xf32> to vector<6x1xf32>
    %1537 = vector.extract_strided_slice %1533 {offsets = [0, 0], sizes = [1, 128], strides = [1, 1]} : vector<6x128xf32> to vector<1x128xf32>
    %1538 = vector.broadcast %1536 : vector<6x1xf32> to vector<6x128xf32>
    %1539 = vector.broadcast %1537 : vector<1x128xf32> to vector<6x128xf32>
    %1540 = arith.mulf %1538, %1539 : vector<6x128xf32>
    %1541 = vector.broadcast %1535 : vector<6x1xf32> to vector<6x128xf32>
    %1542 = arith.addf %1541, %1540 : vector<6x128xf32>
    %1543 = vector.extract_strided_slice %1534 {offsets = [0, 1], sizes = [6, 1], strides = [1, 1]} : vector<6x6xf32> to vector<6x1xf32>
    %1544 = vector.extract_strided_slice %1533 {offsets = [1, 0], sizes = [1, 128], strides = [1, 1]} : vector<6x128xf32> to vector<1x128xf32>
    %1545 = vector.broadcast %1543 : vector<6x1xf32> to vector<6x128xf32>
    %1546 = vector.broadcast %1544 : vector<1x128xf32> to vector<6x128xf32>
    %1547 = arith.mulf %1545, %1546 : vector<6x128xf32>
    %1548 = arith.addf %1542, %1547 : vector<6x128xf32>
    %1549 = vector.extract_strided_slice %1534 {offsets = [0, 2], sizes = [6, 1], strides = [1, 1]} : vector<6x6xf32> to vector<6x1xf32>
    %1550 = vector.extract_strided_slice %1533 {offsets = [2, 0], sizes = [1, 128], strides = [1, 1]} : vector<6x128xf32> to vector<1x128xf32>
    %1551 = vector.broadcast %1549 : vector<6x1xf32> to vector<6x128xf32>
    %1552 = vector.broadcast %1550 : vector<1x128xf32> to vector<6x128xf32>
    %1553 = arith.mulf %1551, %1552 : vector<6x128xf32>
    %1554 = arith.addf %1548, %1553 : vector<6x128xf32>
    %1555 = vector.extract_strided_slice %1534 {offsets = [0, 3], sizes = [6, 1], strides = [1, 1]} : vector<6x6xf32> to vector<6x1xf32>
    %1556 = vector.extract_strided_slice %1533 {offsets = [3, 0], sizes = [1, 128], strides = [1, 1]} : vector<6x128xf32> to vector<1x128xf32>
    %1557 = vector.broadcast %1555 : vector<6x1xf32> to vector<6x128xf32>
    %1558 = vector.broadcast %1556 : vector<1x128xf32> to vector<6x128xf32>
    %1559 = arith.mulf %1557, %1558 : vector<6x128xf32>
    %1560 = arith.addf %1554, %1559 : vector<6x128xf32>
    %1561 = vector.extract_strided_slice %1534 {offsets = [0, 4], sizes = [6, 1], strides = [1, 1]} : vector<6x6xf32> to vector<6x1xf32>
    %1562 = vector.extract_strided_slice %1533 {offsets = [4, 0], sizes = [1, 128], strides = [1, 1]} : vector<6x128xf32> to vector<1x128xf32>
    %1563 = vector.broadcast %1561 : vector<6x1xf32> to vector<6x128xf32>
    %1564 = vector.broadcast %1562 : vector<1x128xf32> to vector<6x128xf32>
    %1565 = arith.mulf %1563, %1564 : vector<6x128xf32>
    %1566 = arith.addf %1560, %1565 : vector<6x128xf32>
    %1567 = vector.extract_strided_slice %1534 {offsets = [0, 5], sizes = [6, 1], strides = [1, 1]} : vector<6x6xf32> to vector<6x1xf32>
    %1568 = vector.extract_strided_slice %1533 {offsets = [5, 0], sizes = [1, 128], strides = [1, 1]} : vector<6x128xf32> to vector<1x128xf32>
    %1569 = vector.broadcast %1567 : vector<6x1xf32> to vector<6x128xf32>
    %1570 = vector.broadcast %1568 : vector<1x128xf32> to vector<6x128xf32>
    %1571 = arith.mulf %1569, %1570 : vector<6x128xf32>
    %1572 = arith.addf %1566, %1571 : vector<6x128xf32>
    %c88_277 = arith.constant 88 : index
    %c56_278 = arith.constant 56 : index
    %1573 = vector.load %arg1[%c88_277, %c56_278] : memref<152x128xf32, #tpu.memory_space<vmem>>, vector<6x6xf32>
    %c88_279 = arith.constant 88 : index
    %c72_280 = arith.constant 72 : index
    %1574 = vector.load %arg1[%c88_279, %c72_280] : memref<152x128xf32, #tpu.memory_space<vmem>>, vector<6x1xf32>
    %1575 = vector.extract_strided_slice %1573 {offsets = [0, 0], sizes = [6, 1], strides = [1, 1]} : vector<6x6xf32> to vector<6x1xf32>
    %1576 = vector.extract_strided_slice %610 {offsets = [0, 0], sizes = [1, 128], strides = [1, 1]} : vector<6x128xf32> to vector<1x128xf32>
    %1577 = vector.broadcast %1575 : vector<6x1xf32> to vector<6x128xf32>
    %1578 = vector.broadcast %1576 : vector<1x128xf32> to vector<6x128xf32>
    %1579 = arith.mulf %1577, %1578 : vector<6x128xf32>
    %1580 = vector.broadcast %1574 : vector<6x1xf32> to vector<6x128xf32>
    %1581 = arith.addf %1580, %1579 : vector<6x128xf32>
    %1582 = vector.extract_strided_slice %1573 {offsets = [0, 1], sizes = [6, 1], strides = [1, 1]} : vector<6x6xf32> to vector<6x1xf32>
    %1583 = vector.extract_strided_slice %610 {offsets = [1, 0], sizes = [1, 128], strides = [1, 1]} : vector<6x128xf32> to vector<1x128xf32>
    %1584 = vector.broadcast %1582 : vector<6x1xf32> to vector<6x128xf32>
    %1585 = vector.broadcast %1583 : vector<1x128xf32> to vector<6x128xf32>
    %1586 = arith.mulf %1584, %1585 : vector<6x128xf32>
    %1587 = arith.addf %1581, %1586 : vector<6x128xf32>
    %1588 = vector.extract_strided_slice %1573 {offsets = [0, 2], sizes = [6, 1], strides = [1, 1]} : vector<6x6xf32> to vector<6x1xf32>
    %1589 = vector.extract_strided_slice %610 {offsets = [2, 0], sizes = [1, 128], strides = [1, 1]} : vector<6x128xf32> to vector<1x128xf32>
    %1590 = vector.broadcast %1588 : vector<6x1xf32> to vector<6x128xf32>
    %1591 = vector.broadcast %1589 : vector<1x128xf32> to vector<6x128xf32>
    %1592 = arith.mulf %1590, %1591 : vector<6x128xf32>
    %1593 = arith.addf %1587, %1592 : vector<6x128xf32>
    %1594 = vector.extract_strided_slice %1573 {offsets = [0, 3], sizes = [6, 1], strides = [1, 1]} : vector<6x6xf32> to vector<6x1xf32>
    %1595 = vector.extract_strided_slice %610 {offsets = [3, 0], sizes = [1, 128], strides = [1, 1]} : vector<6x128xf32> to vector<1x128xf32>
    %1596 = vector.broadcast %1594 : vector<6x1xf32> to vector<6x128xf32>
    %1597 = vector.broadcast %1595 : vector<1x128xf32> to vector<6x128xf32>
    %1598 = arith.mulf %1596, %1597 : vector<6x128xf32>
    %1599 = arith.addf %1593, %1598 : vector<6x128xf32>
    %1600 = vector.extract_strided_slice %1573 {offsets = [0, 4], sizes = [6, 1], strides = [1, 1]} : vector<6x6xf32> to vector<6x1xf32>
    %1601 = vector.extract_strided_slice %610 {offsets = [4, 0], sizes = [1, 128], strides = [1, 1]} : vector<6x128xf32> to vector<1x128xf32>
    %1602 = vector.broadcast %1600 : vector<6x1xf32> to vector<6x128xf32>
    %1603 = vector.broadcast %1601 : vector<1x128xf32> to vector<6x128xf32>
    %1604 = arith.mulf %1602, %1603 : vector<6x128xf32>
    %1605 = arith.addf %1599, %1604 : vector<6x128xf32>
    %1606 = vector.extract_strided_slice %1573 {offsets = [0, 5], sizes = [6, 1], strides = [1, 1]} : vector<6x6xf32> to vector<6x1xf32>
    %1607 = vector.extract_strided_slice %610 {offsets = [5, 0], sizes = [1, 128], strides = [1, 1]} : vector<6x128xf32> to vector<1x128xf32>
    %1608 = vector.broadcast %1606 : vector<6x1xf32> to vector<6x128xf32>
    %1609 = vector.broadcast %1607 : vector<1x128xf32> to vector<6x128xf32>
    %1610 = arith.mulf %1608, %1609 : vector<6x128xf32>
    %1611 = arith.addf %1605, %1610 : vector<6x128xf32>
    %c88_281 = arith.constant 88 : index
    %c80_282 = arith.constant 80 : index
    %1612 = vector.load %arg1[%c88_281, %c80_282] : memref<152x128xf32, #tpu.memory_space<vmem>>, vector<6x6xf32>
    %c88_283 = arith.constant 88 : index
    %c88_284 = arith.constant 88 : index
    %1613 = vector.load %arg1[%c88_283, %c88_284] : memref<152x128xf32, #tpu.memory_space<vmem>>, vector<6x1xf32>
    %1614 = vector.extract_strided_slice %1612 {offsets = [0, 0], sizes = [6, 1], strides = [1, 1]} : vector<6x6xf32> to vector<6x1xf32>
    %1615 = vector.extract_strided_slice %610 {offsets = [0, 0], sizes = [1, 128], strides = [1, 1]} : vector<6x128xf32> to vector<1x128xf32>
    %1616 = vector.broadcast %1614 : vector<6x1xf32> to vector<6x128xf32>
    %1617 = vector.broadcast %1615 : vector<1x128xf32> to vector<6x128xf32>
    %1618 = arith.mulf %1616, %1617 : vector<6x128xf32>
    %1619 = vector.broadcast %1613 : vector<6x1xf32> to vector<6x128xf32>
    %1620 = arith.addf %1619, %1618 : vector<6x128xf32>
    %1621 = vector.extract_strided_slice %1612 {offsets = [0, 1], sizes = [6, 1], strides = [1, 1]} : vector<6x6xf32> to vector<6x1xf32>
    %1622 = vector.extract_strided_slice %610 {offsets = [1, 0], sizes = [1, 128], strides = [1, 1]} : vector<6x128xf32> to vector<1x128xf32>
    %1623 = vector.broadcast %1621 : vector<6x1xf32> to vector<6x128xf32>
    %1624 = vector.broadcast %1622 : vector<1x128xf32> to vector<6x128xf32>
    %1625 = arith.mulf %1623, %1624 : vector<6x128xf32>
    %1626 = arith.addf %1620, %1625 : vector<6x128xf32>
    %1627 = vector.extract_strided_slice %1612 {offsets = [0, 2], sizes = [6, 1], strides = [1, 1]} : vector<6x6xf32> to vector<6x1xf32>
    %1628 = vector.extract_strided_slice %610 {offsets = [2, 0], sizes = [1, 128], strides = [1, 1]} : vector<6x128xf32> to vector<1x128xf32>
    %1629 = vector.broadcast %1627 : vector<6x1xf32> to vector<6x128xf32>
    %1630 = vector.broadcast %1628 : vector<1x128xf32> to vector<6x128xf32>
    %1631 = arith.mulf %1629, %1630 : vector<6x128xf32>
    %1632 = arith.addf %1626, %1631 : vector<6x128xf32>
    %1633 = vector.extract_strided_slice %1612 {offsets = [0, 3], sizes = [6, 1], strides = [1, 1]} : vector<6x6xf32> to vector<6x1xf32>
    %1634 = vector.extract_strided_slice %610 {offsets = [3, 0], sizes = [1, 128], strides = [1, 1]} : vector<6x128xf32> to vector<1x128xf32>
    %1635 = vector.broadcast %1633 : vector<6x1xf32> to vector<6x128xf32>
    %1636 = vector.broadcast %1634 : vector<1x128xf32> to vector<6x128xf32>
    %1637 = arith.mulf %1635, %1636 : vector<6x128xf32>
    %1638 = arith.addf %1632, %1637 : vector<6x128xf32>
    %1639 = vector.extract_strided_slice %1612 {offsets = [0, 4], sizes = [6, 1], strides = [1, 1]} : vector<6x6xf32> to vector<6x1xf32>
    %1640 = vector.extract_strided_slice %610 {offsets = [4, 0], sizes = [1, 128], strides = [1, 1]} : vector<6x128xf32> to vector<1x128xf32>
    %1641 = vector.broadcast %1639 : vector<6x1xf32> to vector<6x128xf32>
    %1642 = vector.broadcast %1640 : vector<1x128xf32> to vector<6x128xf32>
    %1643 = arith.mulf %1641, %1642 : vector<6x128xf32>
    %1644 = arith.addf %1638, %1643 : vector<6x128xf32>
    %1645 = vector.extract_strided_slice %1612 {offsets = [0, 5], sizes = [6, 1], strides = [1, 1]} : vector<6x6xf32> to vector<6x1xf32>
    %1646 = vector.extract_strided_slice %610 {offsets = [5, 0], sizes = [1, 128], strides = [1, 1]} : vector<6x128xf32> to vector<1x128xf32>
    %1647 = vector.broadcast %1645 : vector<6x1xf32> to vector<6x128xf32>
    %1648 = vector.broadcast %1646 : vector<1x128xf32> to vector<6x128xf32>
    %1649 = arith.mulf %1647, %1648 : vector<6x128xf32>
    %1650 = arith.addf %1644, %1649 : vector<6x128xf32>
    %1651 = vector.extract_strided_slice %1611 {offsets = [0, 0], sizes = [6, 2], strides = [1, 1]} : vector<6x128xf32> to vector<6x2xf32>
    %1652 = vector.extract_strided_slice %1650 {offsets = [0, 0], sizes = [6, 2], strides = [1, 1]} : vector<6x128xf32> to vector<6x2xf32>
    %1653 = vector.shape_cast %1651 : vector<6x2xf32> to vector<6x2x1xf32>
    %1654 = vector.shape_cast %1572 : vector<6x128xf32> to vector<6x1x128xf32>
    %1655 = vector.broadcast %1653 : vector<6x2x1xf32> to vector<6x2x128xf32>
    %1656 = vector.broadcast %1654 : vector<6x1x128xf32> to vector<6x2x128xf32>
    %1657 = arith.mulf %1655, %1656 : vector<6x2x128xf32>
    %cst_285 = arith.constant dense<0xFF800000> : vector<6x128xf32>
    %1658 = vector.multi_reduction <maximumf>, %1657, %cst_285 [1] : vector<6x2x128xf32> to vector<6x128xf32>
    %1659 = vector.shape_cast %1658 : vector<6x128xf32> to vector<6x1x128xf32>
    %1660 = vector.broadcast %1659 : vector<6x1x128xf32> to vector<6x2x128xf32>
    %1661 = arith.subf %1657, %1660 : vector<6x2x128xf32>
    %1662 = math.exp %1661 : vector<6x2x128xf32>
    %cst_286 = arith.constant dense<0.000000e+00> : vector<6x128xf32>
    %1663 = vector.multi_reduction <add>, %1662, %cst_286 [1] : vector<6x2x128xf32> to vector<6x128xf32>
    %1664 = vector.shape_cast %1652 : vector<6x2xf32> to vector<6x2x1xf32>
    %1665 = vector.broadcast %1664 : vector<6x2x1xf32> to vector<6x2x128xf32>
    %1666 = arith.mulf %1662, %1665 : vector<6x2x128xf32>
    %cst_287 = arith.constant dense<0.000000e+00> : vector<6x128xf32>
    %1667 = vector.multi_reduction <add>, %1666, %cst_287 [1] : vector<6x2x128xf32> to vector<6x128xf32>
    %1668 = tpu.reciprocal %1663 {approx = true} : vector<6x128xf32> -> vector<6x128xf32>
    %1669 = arith.mulf %1663, %1668 : vector<6x128xf32>
    %cst_288 = arith.constant 2.000000e+00 : f32
    %1670 = vector.broadcast %cst_288 : f32 to vector<6x128xf32>
    %1671 = arith.subf %1670, %1669 : vector<6x128xf32>
    %1672 = arith.mulf %1668, %1671 : vector<6x128xf32>
    %1673 = arith.mulf %1667, %1672 : vector<6x128xf32>
    %c88_289 = arith.constant 88 : index
    %c96_290 = arith.constant 96 : index
    %1674 = vector.load %arg1[%c88_289, %c96_290] : memref<152x128xf32, #tpu.memory_space<vmem>>, vector<6x6xf32>
    %c96_291 = arith.constant 96 : index
    %c16_292 = arith.constant 16 : index
    %1675 = vector.load %arg1[%c96_291, %c16_292] : memref<152x128xf32, #tpu.memory_space<vmem>>, vector<6x1xf32>
    %1676 = vector.extract_strided_slice %1674 {offsets = [0, 0], sizes = [6, 1], strides = [1, 1]} : vector<6x6xf32> to vector<6x1xf32>
    %1677 = vector.extract_strided_slice %1673 {offsets = [0, 0], sizes = [1, 128], strides = [1, 1]} : vector<6x128xf32> to vector<1x128xf32>
    %1678 = vector.broadcast %1676 : vector<6x1xf32> to vector<6x128xf32>
    %1679 = vector.broadcast %1677 : vector<1x128xf32> to vector<6x128xf32>
    %1680 = arith.mulf %1678, %1679 : vector<6x128xf32>
    %1681 = vector.broadcast %1675 : vector<6x1xf32> to vector<6x128xf32>
    %1682 = arith.addf %1681, %1680 : vector<6x128xf32>
    %1683 = vector.extract_strided_slice %1674 {offsets = [0, 1], sizes = [6, 1], strides = [1, 1]} : vector<6x6xf32> to vector<6x1xf32>
    %1684 = vector.extract_strided_slice %1673 {offsets = [1, 0], sizes = [1, 128], strides = [1, 1]} : vector<6x128xf32> to vector<1x128xf32>
    %1685 = vector.broadcast %1683 : vector<6x1xf32> to vector<6x128xf32>
    %1686 = vector.broadcast %1684 : vector<1x128xf32> to vector<6x128xf32>
    %1687 = arith.mulf %1685, %1686 : vector<6x128xf32>
    %1688 = arith.addf %1682, %1687 : vector<6x128xf32>
    %1689 = vector.extract_strided_slice %1674 {offsets = [0, 2], sizes = [6, 1], strides = [1, 1]} : vector<6x6xf32> to vector<6x1xf32>
    %1690 = vector.extract_strided_slice %1673 {offsets = [2, 0], sizes = [1, 128], strides = [1, 1]} : vector<6x128xf32> to vector<1x128xf32>
    %1691 = vector.broadcast %1689 : vector<6x1xf32> to vector<6x128xf32>
    %1692 = vector.broadcast %1690 : vector<1x128xf32> to vector<6x128xf32>
    %1693 = arith.mulf %1691, %1692 : vector<6x128xf32>
    %1694 = arith.addf %1688, %1693 : vector<6x128xf32>
    %1695 = vector.extract_strided_slice %1674 {offsets = [0, 3], sizes = [6, 1], strides = [1, 1]} : vector<6x6xf32> to vector<6x1xf32>
    %1696 = vector.extract_strided_slice %1673 {offsets = [3, 0], sizes = [1, 128], strides = [1, 1]} : vector<6x128xf32> to vector<1x128xf32>
    %1697 = vector.broadcast %1695 : vector<6x1xf32> to vector<6x128xf32>
    %1698 = vector.broadcast %1696 : vector<1x128xf32> to vector<6x128xf32>
    %1699 = arith.mulf %1697, %1698 : vector<6x128xf32>
    %1700 = arith.addf %1694, %1699 : vector<6x128xf32>
    %1701 = vector.extract_strided_slice %1674 {offsets = [0, 4], sizes = [6, 1], strides = [1, 1]} : vector<6x6xf32> to vector<6x1xf32>
    %1702 = vector.extract_strided_slice %1673 {offsets = [4, 0], sizes = [1, 128], strides = [1, 1]} : vector<6x128xf32> to vector<1x128xf32>
    %1703 = vector.broadcast %1701 : vector<6x1xf32> to vector<6x128xf32>
    %1704 = vector.broadcast %1702 : vector<1x128xf32> to vector<6x128xf32>
    %1705 = arith.mulf %1703, %1704 : vector<6x128xf32>
    %1706 = arith.addf %1700, %1705 : vector<6x128xf32>
    %1707 = vector.extract_strided_slice %1674 {offsets = [0, 5], sizes = [6, 1], strides = [1, 1]} : vector<6x6xf32> to vector<6x1xf32>
    %1708 = vector.extract_strided_slice %1673 {offsets = [5, 0], sizes = [1, 128], strides = [1, 1]} : vector<6x128xf32> to vector<1x128xf32>
    %1709 = vector.broadcast %1707 : vector<6x1xf32> to vector<6x128xf32>
    %1710 = vector.broadcast %1708 : vector<1x128xf32> to vector<6x128xf32>
    %1711 = arith.mulf %1709, %1710 : vector<6x128xf32>
    %1712 = arith.addf %1706, %1711 : vector<6x128xf32>
    %1713 = arith.addf %1533, %1712 : vector<6x128xf32>
    %cst_293 = arith.constant dense<0.000000e+00> : vector<128xf32>
    %1714 = vector.multi_reduction <add>, %1713, %cst_293 [0] : vector<6x128xf32> to vector<128xf32>
    %1715 = vector.shape_cast %1714 : vector<128xf32> to vector<1x128xf32>
    %cst_294 = arith.constant 6.000000e+00 : f32
    %1716 = vector.broadcast %cst_294 : f32 to vector<1x128xf32>
    %1717 = arith.divf %1715, %1716 : vector<1x128xf32>
    %1718 = vector.broadcast %1717 : vector<1x128xf32> to vector<6x128xf32>
    %1719 = arith.subf %1713, %1718 : vector<6x128xf32>
    %1720 = arith.mulf %1719, %1719 : vector<6x128xf32>
    %cst_295 = arith.constant dense<0.000000e+00> : vector<128xf32>
    %1721 = vector.multi_reduction <add>, %1720, %cst_295 [0] : vector<6x128xf32> to vector<128xf32>
    %1722 = vector.shape_cast %1721 : vector<128xf32> to vector<1x128xf32>
    %cst_296 = arith.constant 6.000000e+00 : f32
    %1723 = vector.broadcast %cst_296 : f32 to vector<1x128xf32>
    %1724 = arith.divf %1722, %1723 : vector<1x128xf32>
    %cst_297 = arith.constant 9.99999974E-6 : f32
    %1725 = vector.broadcast %cst_297 : f32 to vector<1x128xf32>
    %1726 = arith.addf %1724, %1725 : vector<1x128xf32>
    %1727 = math.rsqrt %1726 : vector<1x128xf32>
    %1728 = vector.broadcast %1727 : vector<1x128xf32> to vector<6x128xf32>
    %1729 = arith.mulf %1719, %1728 : vector<6x128xf32>
    %c80_298 = arith.constant 80 : index
    %c96_299 = arith.constant 96 : index
    %1730 = vector.load %arg1[%c80_298, %c96_299] : memref<152x128xf32, #tpu.memory_space<vmem>>, vector<6x1xf32>
    %1731 = vector.broadcast %1730 : vector<6x1xf32> to vector<6x128xf32>
    %1732 = arith.mulf %1729, %1731 : vector<6x128xf32>
    %c88_300 = arith.constant 88 : index
    %c16_301 = arith.constant 16 : index
    %1733 = vector.load %arg1[%c88_300, %c16_301] : memref<152x128xf32, #tpu.memory_space<vmem>>, vector<6x1xf32>
    %1734 = vector.broadcast %1733 : vector<6x1xf32> to vector<6x128xf32>
    %1735 = arith.addf %1732, %1734 : vector<6x128xf32>
    %c80_302 = arith.constant 80 : index
    %c40_303 = arith.constant 40 : index
    %1736 = vector.load %arg1[%c80_302, %c40_303] : memref<152x128xf32, #tpu.memory_space<vmem>>, vector<72x6xf32>
    %c80_304 = arith.constant 80 : index
    %c64_305 = arith.constant 64 : index
    %1737 = vector.load %arg1[%c80_304, %c64_305] : memref<152x128xf32, #tpu.memory_space<vmem>>, vector<72x1xf32>
    %1738 = vector.extract_strided_slice %1736 {offsets = [0, 0], sizes = [72, 1], strides = [1, 1]} : vector<72x6xf32> to vector<72x1xf32>
    %1739 = vector.extract_strided_slice %1735 {offsets = [0, 0], sizes = [1, 128], strides = [1, 1]} : vector<6x128xf32> to vector<1x128xf32>
    %1740 = vector.broadcast %1738 : vector<72x1xf32> to vector<72x128xf32>
    %1741 = vector.broadcast %1739 : vector<1x128xf32> to vector<72x128xf32>
    %1742 = arith.mulf %1740, %1741 : vector<72x128xf32>
    %1743 = vector.broadcast %1737 : vector<72x1xf32> to vector<72x128xf32>
    %1744 = arith.addf %1743, %1742 : vector<72x128xf32>
    %1745 = vector.extract_strided_slice %1736 {offsets = [0, 1], sizes = [72, 1], strides = [1, 1]} : vector<72x6xf32> to vector<72x1xf32>
    %1746 = vector.extract_strided_slice %1735 {offsets = [1, 0], sizes = [1, 128], strides = [1, 1]} : vector<6x128xf32> to vector<1x128xf32>
    %1747 = vector.broadcast %1745 : vector<72x1xf32> to vector<72x128xf32>
    %1748 = vector.broadcast %1746 : vector<1x128xf32> to vector<72x128xf32>
    %1749 = arith.mulf %1747, %1748 : vector<72x128xf32>
    %1750 = arith.addf %1744, %1749 : vector<72x128xf32>
    %1751 = vector.extract_strided_slice %1736 {offsets = [0, 2], sizes = [72, 1], strides = [1, 1]} : vector<72x6xf32> to vector<72x1xf32>
    %1752 = vector.extract_strided_slice %1735 {offsets = [2, 0], sizes = [1, 128], strides = [1, 1]} : vector<6x128xf32> to vector<1x128xf32>
    %1753 = vector.broadcast %1751 : vector<72x1xf32> to vector<72x128xf32>
    %1754 = vector.broadcast %1752 : vector<1x128xf32> to vector<72x128xf32>
    %1755 = arith.mulf %1753, %1754 : vector<72x128xf32>
    %1756 = arith.addf %1750, %1755 : vector<72x128xf32>
    %1757 = vector.extract_strided_slice %1736 {offsets = [0, 3], sizes = [72, 1], strides = [1, 1]} : vector<72x6xf32> to vector<72x1xf32>
    %1758 = vector.extract_strided_slice %1735 {offsets = [3, 0], sizes = [1, 128], strides = [1, 1]} : vector<6x128xf32> to vector<1x128xf32>
    %1759 = vector.broadcast %1757 : vector<72x1xf32> to vector<72x128xf32>
    %1760 = vector.broadcast %1758 : vector<1x128xf32> to vector<72x128xf32>
    %1761 = arith.mulf %1759, %1760 : vector<72x128xf32>
    %1762 = arith.addf %1756, %1761 : vector<72x128xf32>
    %1763 = vector.extract_strided_slice %1736 {offsets = [0, 4], sizes = [72, 1], strides = [1, 1]} : vector<72x6xf32> to vector<72x1xf32>
    %1764 = vector.extract_strided_slice %1735 {offsets = [4, 0], sizes = [1, 128], strides = [1, 1]} : vector<6x128xf32> to vector<1x128xf32>
    %1765 = vector.broadcast %1763 : vector<72x1xf32> to vector<72x128xf32>
    %1766 = vector.broadcast %1764 : vector<1x128xf32> to vector<72x128xf32>
    %1767 = arith.mulf %1765, %1766 : vector<72x128xf32>
    %1768 = arith.addf %1762, %1767 : vector<72x128xf32>
    %1769 = vector.extract_strided_slice %1736 {offsets = [0, 5], sizes = [72, 1], strides = [1, 1]} : vector<72x6xf32> to vector<72x1xf32>
    %1770 = vector.extract_strided_slice %1735 {offsets = [5, 0], sizes = [1, 128], strides = [1, 1]} : vector<6x128xf32> to vector<1x128xf32>
    %1771 = vector.broadcast %1769 : vector<72x1xf32> to vector<72x128xf32>
    %1772 = vector.broadcast %1770 : vector<1x128xf32> to vector<72x128xf32>
    %1773 = arith.mulf %1771, %1772 : vector<72x128xf32>
    %1774 = arith.addf %1768, %1773 : vector<72x128xf32>
    %cst_306 = arith.constant 0.000000e+00 : f32
    %1775 = vector.broadcast %cst_306 : f32 to vector<72x128xf32>
    %1776 = arith.maximumf %1774, %1775 : vector<72x128xf32>
    %c40_307 = arith.constant 40 : index
    %c0_308 = arith.constant 0 : index
    %1777 = vector.load %arg2[%c40_307, %c0_308] : memref<48x72xf32, #tpu.memory_space<vmem>>, vector<6x72xf32>
    %cst_309 = arith.constant dense<0.000000e+00> : vector<6x128xf32>
    %1778 = tpu.matmul %1777, %1776, %cst_309 {dimension_numbers = #tpu.dot_dimension_numbers<[1], [0], [0], [1], [0, 0, 1, 1], [], []>} : vector<6x72xf32>, vector<72x128xf32>, vector<6x128xf32> -> vector<6x128xf32>
    %c80_310 = arith.constant 80 : index
    %c72_311 = arith.constant 72 : index
    %1779 = vector.load %arg1[%c80_310, %c72_311] : memref<152x128xf32, #tpu.memory_space<vmem>>, vector<6x1xf32>
    %1780 = vector.broadcast %1779 : vector<6x1xf32> to vector<6x128xf32>
    %1781 = arith.addf %1778, %1780 : vector<6x128xf32>
    %1782 = arith.addf %1735, %1781 : vector<6x128xf32>
    %cst_312 = arith.constant dense<0.000000e+00> : vector<128xf32>
    %1783 = vector.multi_reduction <add>, %1782, %cst_312 [0] : vector<6x128xf32> to vector<128xf32>
    %1784 = vector.shape_cast %1783 : vector<128xf32> to vector<1x128xf32>
    %cst_313 = arith.constant 6.000000e+00 : f32
    %1785 = vector.broadcast %cst_313 : f32 to vector<1x128xf32>
    %1786 = arith.divf %1784, %1785 : vector<1x128xf32>
    %1787 = vector.broadcast %1786 : vector<1x128xf32> to vector<6x128xf32>
    %1788 = arith.subf %1782, %1787 : vector<6x128xf32>
    %1789 = arith.mulf %1788, %1788 : vector<6x128xf32>
    %cst_314 = arith.constant dense<0.000000e+00> : vector<128xf32>
    %1790 = vector.multi_reduction <add>, %1789, %cst_314 [0] : vector<6x128xf32> to vector<128xf32>
    %1791 = vector.shape_cast %1790 : vector<128xf32> to vector<1x128xf32>
    %cst_315 = arith.constant 6.000000e+00 : f32
    %1792 = vector.broadcast %cst_315 : f32 to vector<1x128xf32>
    %1793 = arith.divf %1791, %1792 : vector<1x128xf32>
    %cst_316 = arith.constant 9.99999974E-6 : f32
    %1794 = vector.broadcast %cst_316 : f32 to vector<1x128xf32>
    %1795 = arith.addf %1793, %1794 : vector<1x128xf32>
    %1796 = math.rsqrt %1795 : vector<1x128xf32>
    %1797 = vector.broadcast %1796 : vector<1x128xf32> to vector<6x128xf32>
    %1798 = arith.mulf %1788, %1797 : vector<6x128xf32>
    %c96_317 = arith.constant 96 : index
    %c32_318 = arith.constant 32 : index
    %1799 = vector.load %arg1[%c96_317, %c32_318] : memref<152x128xf32, #tpu.memory_space<vmem>>, vector<6x1xf32>
    %1800 = vector.broadcast %1799 : vector<6x1xf32> to vector<6x128xf32>
    %1801 = arith.mulf %1798, %1800 : vector<6x128xf32>
    %c96_319 = arith.constant 96 : index
    %c48_320 = arith.constant 48 : index
    %1802 = vector.load %arg1[%c96_319, %c48_320] : memref<152x128xf32, #tpu.memory_space<vmem>>, vector<6x1xf32>
    %1803 = vector.broadcast %1802 : vector<6x1xf32> to vector<6x128xf32>
    %1804 = arith.addf %1801, %1803 : vector<6x128xf32>
    %cst_321 = arith.constant dense<0.000000e+00> : vector<128xf32>
    %1805 = vector.multi_reduction <add>, %1804, %cst_321 [0] : vector<6x128xf32> to vector<128xf32>
    %1806 = vector.shape_cast %1805 : vector<128xf32> to vector<1x128xf32>
    %cst_322 = arith.constant 6.000000e+00 : f32
    %1807 = vector.broadcast %cst_322 : f32 to vector<1x128xf32>
    %1808 = arith.divf %1806, %1807 : vector<1x128xf32>
    %1809 = vector.broadcast %1808 : vector<1x128xf32> to vector<6x128xf32>
    %1810 = arith.subf %1804, %1809 : vector<6x128xf32>
    %1811 = arith.mulf %1810, %1810 : vector<6x128xf32>
    %cst_323 = arith.constant dense<0.000000e+00> : vector<128xf32>
    %1812 = vector.multi_reduction <add>, %1811, %cst_323 [0] : vector<6x128xf32> to vector<128xf32>
    %1813 = vector.shape_cast %1812 : vector<128xf32> to vector<1x128xf32>
    %cst_324 = arith.constant 6.000000e+00 : f32
    %1814 = vector.broadcast %cst_324 : f32 to vector<1x128xf32>
    %1815 = arith.divf %1813, %1814 : vector<1x128xf32>
    %cst_325 = arith.constant 9.99999974E-6 : f32
    %1816 = vector.broadcast %cst_325 : f32 to vector<1x128xf32>
    %1817 = arith.addf %1815, %1816 : vector<1x128xf32>
    %1818 = math.rsqrt %1817 : vector<1x128xf32>
    %1819 = vector.broadcast %1818 : vector<1x128xf32> to vector<6x128xf32>
    %1820 = arith.mulf %1810, %1819 : vector<6x128xf32>
    %c96_326 = arith.constant 96 : index
    %c56_327 = arith.constant 56 : index
    %1821 = vector.load %arg1[%c96_326, %c56_327] : memref<152x128xf32, #tpu.memory_space<vmem>>, vector<6x1xf32>
    %1822 = vector.broadcast %1821 : vector<6x1xf32> to vector<6x128xf32>
    %1823 = arith.mulf %1820, %1822 : vector<6x128xf32>
    %c96_328 = arith.constant 96 : index
    %c72_329 = arith.constant 72 : index
    %1824 = vector.load %arg1[%c96_328, %c72_329] : memref<152x128xf32, #tpu.memory_space<vmem>>, vector<6x1xf32>
    %1825 = vector.broadcast %1824 : vector<6x1xf32> to vector<6x128xf32>
    %1826 = arith.addf %1823, %1825 : vector<6x128xf32>
    %c96_330 = arith.constant 96 : index
    %c80_331 = arith.constant 80 : index
    %1827 = vector.load %arg1[%c96_330, %c80_331] : memref<152x128xf32, #tpu.memory_space<vmem>>, vector<12x6xf32>
    %c96_332 = arith.constant 96 : index
    %c88_333 = arith.constant 88 : index
    %1828 = vector.load %arg1[%c96_332, %c88_333] : memref<152x128xf32, #tpu.memory_space<vmem>>, vector<12x1xf32>
    %1829 = vector.extract_strided_slice %1827 {offsets = [0, 0], sizes = [12, 1], strides = [1, 1]} : vector<12x6xf32> to vector<12x1xf32>
    %1830 = vector.extract_strided_slice %1826 {offsets = [0, 0], sizes = [1, 128], strides = [1, 1]} : vector<6x128xf32> to vector<1x128xf32>
    %1831 = vector.broadcast %1829 : vector<12x1xf32> to vector<12x128xf32>
    %1832 = vector.broadcast %1830 : vector<1x128xf32> to vector<12x128xf32>
    %1833 = arith.mulf %1831, %1832 : vector<12x128xf32>
    %1834 = vector.broadcast %1828 : vector<12x1xf32> to vector<12x128xf32>
    %1835 = arith.addf %1834, %1833 : vector<12x128xf32>
    %1836 = vector.extract_strided_slice %1827 {offsets = [0, 1], sizes = [12, 1], strides = [1, 1]} : vector<12x6xf32> to vector<12x1xf32>
    %1837 = vector.extract_strided_slice %1826 {offsets = [1, 0], sizes = [1, 128], strides = [1, 1]} : vector<6x128xf32> to vector<1x128xf32>
    %1838 = vector.broadcast %1836 : vector<12x1xf32> to vector<12x128xf32>
    %1839 = vector.broadcast %1837 : vector<1x128xf32> to vector<12x128xf32>
    %1840 = arith.mulf %1838, %1839 : vector<12x128xf32>
    %1841 = arith.addf %1835, %1840 : vector<12x128xf32>
    %1842 = vector.extract_strided_slice %1827 {offsets = [0, 2], sizes = [12, 1], strides = [1, 1]} : vector<12x6xf32> to vector<12x1xf32>
    %1843 = vector.extract_strided_slice %1826 {offsets = [2, 0], sizes = [1, 128], strides = [1, 1]} : vector<6x128xf32> to vector<1x128xf32>
    %1844 = vector.broadcast %1842 : vector<12x1xf32> to vector<12x128xf32>
    %1845 = vector.broadcast %1843 : vector<1x128xf32> to vector<12x128xf32>
    %1846 = arith.mulf %1844, %1845 : vector<12x128xf32>
    %1847 = arith.addf %1841, %1846 : vector<12x128xf32>
    %1848 = vector.extract_strided_slice %1827 {offsets = [0, 3], sizes = [12, 1], strides = [1, 1]} : vector<12x6xf32> to vector<12x1xf32>
    %1849 = vector.extract_strided_slice %1826 {offsets = [3, 0], sizes = [1, 128], strides = [1, 1]} : vector<6x128xf32> to vector<1x128xf32>
    %1850 = vector.broadcast %1848 : vector<12x1xf32> to vector<12x128xf32>
    %1851 = vector.broadcast %1849 : vector<1x128xf32> to vector<12x128xf32>
    %1852 = arith.mulf %1850, %1851 : vector<12x128xf32>
    %1853 = arith.addf %1847, %1852 : vector<12x128xf32>
    %1854 = vector.extract_strided_slice %1827 {offsets = [0, 4], sizes = [12, 1], strides = [1, 1]} : vector<12x6xf32> to vector<12x1xf32>
    %1855 = vector.extract_strided_slice %1826 {offsets = [4, 0], sizes = [1, 128], strides = [1, 1]} : vector<6x128xf32> to vector<1x128xf32>
    %1856 = vector.broadcast %1854 : vector<12x1xf32> to vector<12x128xf32>
    %1857 = vector.broadcast %1855 : vector<1x128xf32> to vector<12x128xf32>
    %1858 = arith.mulf %1856, %1857 : vector<12x128xf32>
    %1859 = arith.addf %1853, %1858 : vector<12x128xf32>
    %1860 = vector.extract_strided_slice %1827 {offsets = [0, 5], sizes = [12, 1], strides = [1, 1]} : vector<12x6xf32> to vector<12x1xf32>
    %1861 = vector.extract_strided_slice %1826 {offsets = [5, 0], sizes = [1, 128], strides = [1, 1]} : vector<6x128xf32> to vector<1x128xf32>
    %1862 = vector.broadcast %1860 : vector<12x1xf32> to vector<12x128xf32>
    %1863 = vector.broadcast %1861 : vector<1x128xf32> to vector<12x128xf32>
    %1864 = arith.mulf %1862, %1863 : vector<12x128xf32>
    %1865 = arith.addf %1859, %1864 : vector<12x128xf32>
    %c0_334 = arith.constant 0 : index
    %c0_335 = arith.constant 0 : index
    %1866 = vector.load %arg3[%c0_334, %c0_335] : memref<12x128xf32, #tpu.memory_space<vmem>>, vector<12x128xf32>
    tpu.vector_store %arg3[%c0_334, %c0_335], %1865 {strides = array<i32>} : memref<12x128xf32, #tpu.memory_space<vmem>>, vector<12x128xf32>,
    return
  }
}

</mosaic_0001>

<llo_original>
// kernel: tpu_custom_call.1
$region0: #{tpu_custom_call.1}
  #allocation0 [shape = 'u32[]', space=smem, size = 0x4, offset = 0x4, fixed_abs, tag = 'smem constant byte address 0x4 - core index']
  #allocation1 [shape = 'u32[144,128]{1,0:T(1,128)}', space=vmem, size = 0x12000, scoped, tag = 'internal scratch']
  %s0 = inlined_call_operand.hbm [shape: f32[6,128], index: 0, kind: input, shape index: {}]
  %s1 = inlined_call_operand.hbm [shape: f32[152,128], index: 1, kind: input, shape index: {}]
  %s2 = inlined_call_operand.hbm [shape: f32[48,72], index: 2, kind: input, shape index: {}]
  %s3 = inlined_call_operand.hbm [shape: f32[12,128], index: 3, kind: output, shape index: {}]
  %s4 = sld [smem:[#allocation0]]
  $region34: #{tpu_custom_call.1} parent=0
    _
  %s6 = ssub.s32 1, %s4
  %s7 = scalar_select 0, %s6, %s4
  $region1: #{tpu_custom_call.1} parent=0
    #allocation2 [shape = 'u8[4096]{0}', space=vmem, size = 0x1000, scoped, tag = 'input window, operand 0, single buffered']
    #allocation3 [shape = 's32[1]{0}', space=sflag, size = 0x4, scoped, tag = 'scoped memory for tpu_custom_call.1']
    #allocation4 [shape = 's32[1]{0}', space=sflag, size = 0x4, scoped, tag = 'scoped memory for tpu_custom_call.1']
    #allocation5 [shape = 'u8[77824]{0}', space=vmem, size = 0x13000, scoped, tag = 'input window, operand 1, single buffered']
    #allocation6 [shape = 's32[1]{0}', space=sflag, size = 0x4, scoped, tag = 'scoped memory for tpu_custom_call.1']
    #allocation7 [shape = 'u8[24576]{0}', space=vmem, size = 0x6000, scoped, tag = 'input window, operand 2, single buffered']
    #allocation8 [shape = 'u8[8192]{0}', space=vmem, size = 0x2000, scoped, tag = 'output window, operand 0, single buffered']
    %8 = vsyncpa [#allocation3], 0
    %9 = vsyncpa [#allocation6], 0
    %10 = vsyncpa [#allocation4], 0
    // Predicated region
    $region2: #{tpu_custom_call.1} parent=1 // pred_check
      _
    $region3: #{tpu_custom_call.1} parent=1 // pred_check_branch
      %12 = sbr.rel (0) target = $region5
    $region4: #{tpu_custom_call.1} parent=1 // pred_region
      %s14 = ssub.s32 128, 128
      %15 = vsyncadd [#allocation3], %s14
      %s17 = sshll.u32 [#allocation2], 4
      %s18 = int_to_ptr.vmem [resolvable:$true] %s17
      %20 = dma.hbm_to_vmem [thread:$0]  %s0, 128, %s18, [#allocation3]
    $region5: #{tpu_custom_call.1} parent=1 // pred_fallthru
      _
    // Predicated region
    $region6: #{tpu_custom_call.1} parent=1 // pred_check
      _
    $region7: #{tpu_custom_call.1} parent=1 // pred_check_branch
      %22 = sbr.rel (0) target = $region9
    $region8: #{tpu_custom_call.1} parent=1 // pred_region
      %s24 = ssub.s32 2432, 2432
      %25 = vsyncadd [#allocation6], %s24
      %s26 = sshll.u32 [#allocation5], 4
      %s27 = int_to_ptr.vmem [resolvable:$true] %s26
      %32 = dma.hbm_to_vmem [thread:$0]  %s1, 2432, %s27, [#allocation6], 128, 128, 8
    $region9: #{tpu_custom_call.1} parent=1 // pred_fallthru
      _
    // Predicated region
    $region10: #{tpu_custom_call.1} parent=1 // pred_check
      _
    $region11: #{tpu_custom_call.1} parent=1 // pred_check_branch
      %34 = sbr.rel (0) target = $region13
    $region12: #{tpu_custom_call.1} parent=1 // pred_region
      %s36 = ssub.s32 768, 768
      %37 = vsyncadd [#allocation6], %s36
      %s38 = sshll.u32 [#allocation7], 4
      %s39 = int_to_ptr.vmem [resolvable:$true] %s38
      %44 = dma.hbm_to_vmem [thread:$0]  %s2, 768, %s39, [#allocation6], 128, 128, 8
    $region13: #{tpu_custom_call.1} parent=1 // pred_fallthru
      _
    // Predicated region
    $region14: #{tpu_custom_call.1} parent=1 // pred_check
      _
    $region15: #{tpu_custom_call.1} parent=1 // pred_check_branch
      %46 = sbr.rel (0) target = $region17
    $region16: #{tpu_custom_call.1} parent=1 // pred_region
      %47 = dma.done [#allocation3], 128
    $region17: #{tpu_custom_call.1} parent=1 // pred_fallthru
      _
    // Predicated region
    $region18: #{tpu_custom_call.1} parent=1 // pred_check
      _
    $region19: #{tpu_custom_call.1} parent=1 // pred_check_branch
      %49 = sbr.rel (0) target = $region21
    $region20: #{tpu_custom_call.1} parent=1 // pred_region
      %50 = dma.done [#allocation6], 2432
    $region21: #{tpu_custom_call.1} parent=1 // pred_fallthru
      _
    // Predicated region
    $region22: #{tpu_custom_call.1} parent=1 // pred_check
      _
    $region23: #{tpu_custom_call.1} parent=1 // pred_check_branch
      %52 = sbr.rel (0) target = $region25
    $region24: #{tpu_custom_call.1} parent=1 // pred_region
      %53 = dma.done [#allocation6], 768
    $region25: #{tpu_custom_call.1} parent=1 // pred_fallthru
      _
    %v54 = vld [vmem:[#allocation2] sm:$0x3f]
    %v55 = vld [vmem:[#allocation5] sm:$0xff]
    %v56 = vld [vmem:[#allocation5 + $0x8] sm:$0xff]
    %v57 = vld [vmem:[#allocation5 + $0x10] sm:$0x3]
    %59 = vset.pattern.permute.xlu0 0
    %60 = vperm.xlu0 %59, %v55
    %v61 = vpop.permute.xlu0 %60
    %64 = vset.pattern.permute.xlu0 0
    %65 = vperm.xlu0 %64, %v56
    %v66 = vpop.permute.xlu0 %65
    %69 = vset.pattern.permute.xlu0 0
    %70 = vperm.xlu0 %69, %v57
    %v71 = vpop.permute.xlu0 %70
    %v73 = vlaneseq
    %v74 = vshrl.u32 %v73, 7
    %v75 = vsub.s32 0, %v74
    %v76 = vrot.slane %v54, %v75
    %v77 = vmul.f32 %v61, %v76
    %v78 = vmul.f32 %v66, %v76
    %v79 = vmul.f32 %v71, %v76
    %80 = vset.pattern.permute.xlu0 8
    %81 = vperm.xlu0 %80, %v55
    %v82 = vpop.permute.xlu0 %81
    %84 = vset.pattern.permute.xlu0 8
    %85 = vperm.xlu0 %84, %v56
    %v86 = vpop.permute.xlu0 %85
    %88 = vset.pattern.permute.xlu0 8
    %89 = vperm.xlu0 %88, %v57
    %v90 = vpop.permute.xlu0 %89
    %v92 = vadd.f32 %v82, %v77
    %v93 = vadd.f32 %v86, %v78
    %v94 = vadd.f32 %v90, %v79
    %95 = vset.pattern.permute.xlu0 1
    %96 = vperm.xlu0 %95, %v55
    %v97 = vpop.permute.xlu0 %96
    %99 = vset.pattern.permute.xlu0 1
    %100 = vperm.xlu0 %99, %v56
    %v101 = vpop.permute.xlu0 %100
    %103 = vset.pattern.permute.xlu0 1
    %104 = vperm.xlu0 %103, %v57
    %v105 = vpop.permute.xlu0 %104
    %v107 = vlaneseq
    %v108 = vshrl.u32 %v107, 7
    %v109 = vsub.s32 1, %v108
    %v110 = vrot.slane %v54, %v109
    %v111 = vmul.f32 %v97, %v110
    %v112 = vmul.f32 %v101, %v110
    %v113 = vmul.f32 %v105, %v110
    %v114 = vadd.f32 %v92, %v111
    %v115 = vadd.f32 %v93, %v112
    %v116 = vadd.f32 %v94, %v113
    %117 = vset.pattern.permute.xlu0 2
    %118 = vperm.xlu0 %117, %v55
    %v119 = vpop.permute.xlu0 %118
    %121 = vset.pattern.permute.xlu0 2
    %122 = vperm.xlu0 %121, %v56
    %v123 = vpop.permute.xlu0 %122
    %125 = vset.pattern.permute.xlu0 2
    %126 = vperm.xlu0 %125, %v57
    %v127 = vpop.permute.xlu0 %126
    %v129 = vlaneseq
    %v130 = vshrl.u32 %v129, 7
    %v131 = vsub.s32 2, %v130
    %v132 = vrot.slane %v54, %v131
    %v133 = vmul.f32 %v119, %v132
    %v134 = vmul.f32 %v123, %v132
    %v135 = vmul.f32 %v127, %v132
    %v136 = vadd.f32 %v114, %v133
    %v137 = vadd.f32 %v115, %v134
    %v138 = vadd.f32 %v116, %v135
    %139 = vset.pattern.permute.xlu0 3
    %140 = vperm.xlu0 %139, %v55
    %v141 = vpop.permute.xlu0 %140
    %143 = vset.pattern.permute.xlu0 3
    %144 = vperm.xlu0 %143, %v56
    %v145 = vpop.permute.xlu0 %144
    %147 = vset.pattern.permute.xlu0 3
    %148 = vperm.xlu0 %147, %v57
    %v149 = vpop.permute.xlu0 %148
    %v151 = vlaneseq
    %v152 = vshrl.u32 %v151, 7
    %v153 = vsub.s32 3, %v152
    %v154 = vrot.slane %v54, %v153
    %v155 = vmul.f32 %v141, %v154
    %v156 = vmul.f32 %v145, %v154
    %v157 = vmul.f32 %v149, %v154
    %v158 = vadd.f32 %v136, %v155
    %v159 = vadd.f32 %v137, %v156
    %v160 = vadd.f32 %v138, %v157
    %161 = vset.pattern.permute.xlu0 4
    %162 = vperm.xlu0 %161, %v55
    %v163 = vpop.permute.xlu0 %162
    %165 = vset.pattern.permute.xlu0 4
    %166 = vperm.xlu0 %165, %v56
    %v167 = vpop.permute.xlu0 %166
    %169 = vset.pattern.permute.xlu0 4
    %170 = vperm.xlu0 %169, %v57
    %v171 = vpop.permute.xlu0 %170
    %v173 = vlaneseq
    %v174 = vshrl.u32 %v173, 7
    %v175 = vsub.s32 4, %v174
    %v176 = vrot.slane %v54, %v175
    %v177 = vmul.f32 %v163, %v176
    %v178 = vmul.f32 %v167, %v176
    %v179 = vmul.f32 %v171, %v176
    %v180 = vadd.f32 %v158, %v177
    %v181 = vadd.f32 %v159, %v178
    %v182 = vadd.f32 %v160, %v179
    %183 = vset.pattern.permute.xlu0 5
    %184 = vperm.xlu0 %183, %v55
    %v185 = vpop.permute.xlu0 %184
    %187 = vset.pattern.permute.xlu0 5
    %188 = vperm.xlu0 %187, %v56
    %v189 = vpop.permute.xlu0 %188
    %191 = vset.pattern.permute.xlu0 5
    %192 = vperm.xlu0 %191, %v57
    %v193 = vpop.permute.xlu0 %192
    %v195 = vlaneseq
    %v196 = vshrl.u32 %v195, 7
    %v197 = vsub.s32 5, %v196
    %v198 = vrot.slane %v54, %v197
    %v199 = vmul.f32 %v185, %v198
    %v200 = vmul.f32 %v189, %v198
    %v201 = vmul.f32 %v193, %v198
    %v202 = vadd.f32 %v180, %v199
    %v203 = vadd.f32 %v181, %v200
    %v204 = vadd.f32 %v182, %v201
    %v205 = vlaneseq
    %v206 = vshrl.u32 %v205, 7
    %v207 = vsub.s32 6, %v206
    %v208 = vrot.slane %v202, %v207
    %210 = vbcast.lane.b32.xlu0 %v208, 256
    %v211 = vpop.permute.xlu0 %210
    %v212 = vlaneseq
    %v213 = vshrl.u32 %v212, 7
    %v214 = vsub.s32 7, %v213
    %v215 = vrot.slane %v202, %v214
    %217 = vbcast.lane.b32.xlu0 %v215, 256
    %v218 = vpop.permute.xlu0 %217
    %v219 = vlaneseq
    %v220 = vshrl.u32 %v219, 7
    %v221 = vsub.s32 0, %v220
    %v222 = vrot.slane %v203, %v221
    %224 = vbcast.lane.b32.xlu0 %v222, 256
    %v225 = vpop.permute.xlu0 %224
    %v226 = vlaneseq
    %v227 = vshrl.u32 %v226, 7
    %v228 = vsub.s32 1, %v227
    %v229 = vrot.slane %v203, %v228
    %231 = vbcast.lane.b32.xlu0 %v229, 256
    %v232 = vpop.permute.xlu0 %231
    %v233 = vlaneseq
    %v234 = vshrl.u32 %v233, 7
    %v235 = vsub.s32 2, %v234
    %v236 = vrot.slane %v203, %v235
    %238 = vbcast.lane.b32.xlu0 %v236, 256
    %v239 = vpop.permute.xlu0 %238
    %v240 = vlaneseq
    %v241 = vshrl.u32 %v240, 7
    %v242 = vsub.s32 3, %v241
    %v243 = vrot.slane %v203, %v242
    %245 = vbcast.lane.b32.xlu0 %v243, 256
    %v246 = vpop.permute.xlu0 %245
    %v248 = vcombine.high %v202, %v202
    %v250 = vunpack.c.l.s4 1966171168
    %v251 = vunpack.c.0.s8 %v250
    %v252 = vlaneseq
    %v253 = vshrl.u32 %v252, 7
    %v254 = vsub.s32 %v251, %v253
    %v255 = vrot.slane %v202, %v254
    %v257 = vunpack.c.l.s4 1966171168
    %v258 = vunpack.c.0.s8 %v257
    %v259 = vlaneseq
    %v260 = vshrl.u32 %v259, 7
    %v261 = vsub.s32 %v258, %v260
    %v262 = vrot.slane %v248, %v261
    %v263 = vcombine.high %v255, %v255
    %v264 = vcombine.high %v262, %v262
    %v266 = vunpack.c.l.s4 1966171168
    %v267 = vunpack.c.0.s8 %v266
    %v268 = vlaneseq
    %v269 = vshrl.u32 %v268, 7
    %v270 = vsub.s32 %v267, %v269
    %v271 = vrot.slane %v255, %v270
    %v273 = vunpack.c.l.s4 1966171168
    %v274 = vunpack.c.0.s8 %v273
    %v275 = vlaneseq
    %v276 = vshrl.u32 %v275, 7
    %v277 = vsub.s32 %v274, %v276
    %v278 = vrot.slane %v262, %v277
    %v280 = vunpack.c.l.s4 1966171168
    %v281 = vunpack.c.0.s8 %v280
    %v282 = vlaneseq
    %v283 = vshrl.u32 %v282, 7
    %v284 = vsub.s32 %v281, %v283
    %v285 = vrot.slane %v263, %v284
    %v287 = vunpack.c.l.s4 1966171168
    %v288 = vunpack.c.0.s8 %v287
    %v289 = vlaneseq
    %v290 = vshrl.u32 %v289, 7
    %v291 = vsub.s32 %v288, %v290
    %v292 = vrot.slane %v264, %v291
    %v293 = vcombine.high %v271, %v271
    %v294 = vcombine.high %v285, %v285
    %v295 = vlaneseq
    %v296 = vshrl.u32 %v295, 7
    %v297 = vsub.s32 0, %v296
    %v298 = vrot.slane %v271, %v297
    %v299 = vlaneseq
    %v300 = vshrl.u32 %v299, 7
    %v301 = vsub.s32 0, %v300
    %v302 = vrot.slane %v285, %v301
    %v303 = vlaneseq
    %v304 = vshrl.u32 %v303, 7
    %v305 = vsub.s32 0, %v304
    %v306 = vrot.slane %v293, %v305
    %v307 = vlaneseq
    %v308 = vshrl.u32 %v307, 7
    %v309 = vsub.s32 0, %v308
    %v310 = vrot.slane %v294, %v309
    %v311 = vlaneseq
    %v312 = vshrl.u32 %v311, 7
    %v313 = vsub.s32 0, %v312
    %v314 = vrot.slane %v278, %v313
    %v315 = vlaneseq
    %v316 = vshrl.u32 %v315, 7
    %v317 = vsub.s32 0, %v316
    %v318 = vrot.slane %v292, %v317
    %v325 = vmul.f32 %v211, %v298
    %v326 = vmul.f32 %v218, %v302
    %v327 = vmul.f32 %v225, %v306
    %v328 = vmul.f32 %v232, %v310
    %v329 = vmul.f32 %v239, %v314
    %v330 = vmul.f32 %v246, %v318
    %vm331 = vcmask 1041408
    %v332 = vsel %vm331, %v325, -inf
    %v333 = vrot.slane %v332, 4
    %v334 = vmax.f32 %v332, %v333
    %v335 = vrot.slane %v334, 2
    %v336 = vmax.f32 %v334, %v335
    %v337 = vrot.slane %v336, 1
    %v338 = vmax.f32 %v336, %v337
    %v339 = vsel %vm331, %v326, -inf
    %v340 = vrot.slane %v339, 4
    %v341 = vmax.f32 %v339, %v340
    %v342 = vrot.slane %v341, 2
    %v343 = vmax.f32 %v341, %v342
    %v344 = vrot.slane %v343, 1
    %v345 = vmax.f32 %v343, %v344
    %v346 = vsel %vm331, %v327, -inf
    %v347 = vrot.slane %v346, 4
    %v348 = vmax.f32 %v346, %v347
    %v349 = vrot.slane %v348, 2
    %v350 = vmax.f32 %v348, %v349
    %v351 = vrot.slane %v350, 1
    %v352 = vmax.f32 %v350, %v351
    %v353 = vsel %vm331, %v328, -inf
    %v354 = vrot.slane %v353, 4
    %v355 = vmax.f32 %v353, %v354
    %v356 = vrot.slane %v355, 2
    %v357 = vmax.f32 %v355, %v356
    %v358 = vrot.slane %v357, 1
    %v359 = vmax.f32 %v357, %v358
    %v360 = vsel %vm331, %v329, -inf
    %v361 = vrot.slane %v360, 4
    %v362 = vmax.f32 %v360, %v361
    %v363 = vrot.slane %v362, 2
    %v364 = vmax.f32 %v362, %v363
    %v365 = vrot.slane %v364, 1
    %v366 = vmax.f32 %v364, %v365
    %v367 = vsel %vm331, %v330, -inf
    %v368 = vrot.slane %v367, 4
    %v369 = vmax.f32 %v367, %v368
    %v370 = vrot.slane %v369, 2
    %v371 = vmax.f32 %v369, %v370
    %v372 = vrot.slane %v371, 1
    %v373 = vmax.f32 %v371, %v372
    %v374 = vsub.f32 %v325, %v338
    %v375 = vsub.f32 %v326, %v345
    %v376 = vsub.f32 %v327, %v352
    %v377 = vsub.f32 %v328, %v359
    %v378 = vsub.f32 %v329, %v366
    %v379 = vsub.f32 %v330, %v373
    %v380 = vmul.f32 %v374, 1.442695
    %v381 = vpow.pop %v380
    %v382 = vmul.f32 %v375, 1.442695
    %v383 = vpow.pop %v382
    %v384 = vmul.f32 %v376, 1.442695
    %v385 = vpow.pop %v384
    %v386 = vmul.f32 %v377, 1.442695
    %v387 = vpow.pop %v386
    %v388 = vmul.f32 %v378, 1.442695
    %v389 = vpow.pop %v388
    %v390 = vmul.f32 %v379, 1.442695
    %v391 = vpow.pop %v390
    %v392 = vsel %vm331, %v381, 0.0
    %v393 = vrot.slane %v392, 4
    %v394 = vadd.f32 %v392, %v393
    %v395 = vrot.slane %v394, 2
    %v396 = vadd.f32 %v394, %v395
    %v397 = vrot.slane %v396, 1
    %v398 = vadd.f32 %v396, %v397
    %v399 = vsel %vm331, %v383, 0.0
    %v400 = vrot.slane %v399, 4
    %v401 = vadd.f32 %v399, %v400
    %v402 = vrot.slane %v401, 2
    %v403 = vadd.f32 %v401, %v402
    %v404 = vrot.slane %v403, 1
    %v405 = vadd.f32 %v403, %v404
    %v406 = vsel %vm331, %v385, 0.0
    %v407 = vrot.slane %v406, 4
    %v408 = vadd.f32 %v406, %v407
    %v409 = vrot.slane %v408, 2
    %v410 = vadd.f32 %v408, %v409
    %v411 = vrot.slane %v410, 1
    %v412 = vadd.f32 %v410, %v411
    %v413 = vsel %vm331, %v387, 0.0
    %v414 = vrot.slane %v413, 4
    %v415 = vadd.f32 %v413, %v414
    %v416 = vrot.slane %v415, 2
    %v417 = vadd.f32 %v415, %v416
    %v418 = vrot.slane %v417, 1
    %v419 = vadd.f32 %v417, %v418
    %v420 = vsel %vm331, %v389, 0.0
    %v421 = vrot.slane %v420, 4
    %v422 = vadd.f32 %v420, %v421
    %v423 = vrot.slane %v422, 2
    %v424 = vadd.f32 %v422, %v423
    %v425 = vrot.slane %v424, 1
    %v426 = vadd.f32 %v424, %v425
    %v427 = vsel %vm331, %v391, 0.0
    %v428 = vrot.slane %v427, 4
    %v429 = vadd.f32 %v427, %v428
    %v430 = vrot.slane %v429, 2
    %v431 = vadd.f32 %v429, %v430
    %v432 = vrot.slane %v431, 1
    %v433 = vadd.f32 %v431, %v432
    %v434 = vlaneseq
    %v435 = vshrl.u32 %v434, 7
    %v436 = vsub.s32 4, %v435
    %v437 = vrot.slane %v203, %v436
    %439 = vbcast.lane.b32.xlu0 %v437, 256
    %v440 = vpop.permute.xlu0 %439
    %v441 = vlaneseq
    %v442 = vshrl.u32 %v441, 7
    %v443 = vsub.s32 5, %v442
    %v444 = vrot.slane %v203, %v443
    %446 = vbcast.lane.b32.xlu0 %v444, 256
    %v447 = vpop.permute.xlu0 %446
    %v448 = vlaneseq
    %v449 = vshrl.u32 %v448, 7
    %v450 = vsub.s32 6, %v449
    %v451 = vrot.slane %v203, %v450
    %453 = vbcast.lane.b32.xlu0 %v451, 256
    %v454 = vpop.permute.xlu0 %453
    %v455 = vlaneseq
    %v456 = vshrl.u32 %v455, 7
    %v457 = vsub.s32 7, %v456
    %v458 = vrot.slane %v203, %v457
    %460 = vbcast.lane.b32.xlu0 %v458, 256
    %v461 = vpop.permute.xlu0 %460
    %v462 = vlaneseq
    %v463 = vshrl.u32 %v462, 7
    %v464 = vsub.s32 0, %v463
    %v465 = vrot.slane %v204, %v464
    %467 = vbcast.lane.b32.xlu0 %v465, 256
    %v468 = vpop.permute.xlu0 %467
    %v469 = vlaneseq
    %v470 = vshrl.u32 %v469, 7
    %v471 = vsub.s32 1, %v470
    %v472 = vrot.slane %v204, %v471
    %474 = vbcast.lane.b32.xlu0 %v472, 256
    %v475 = vpop.permute.xlu0 %474
    %v476 = vmul.f32 %v381, %v440
    %v477 = vmul.f32 %v383, %v447
    %v478 = vmul.f32 %v385, %v454
    %v479 = vmul.f32 %v387, %v461
    %v480 = vmul.f32 %v389, %v468
    %v481 = vmul.f32 %v391, %v475
    %v482 = vsel %vm331, %v476, 0.0
    %v483 = vrot.slane %v482, 4
    %v484 = vadd.f32 %v482, %v483
    %v485 = vrot.slane %v484, 2
    %v486 = vadd.f32 %v484, %v485
    %v487 = vrot.slane %v486, 1
    %v488 = vadd.f32 %v486, %v487
    %v489 = vsel %vm331, %v477, 0.0
    %v490 = vrot.slane %v489, 4
    %v491 = vadd.f32 %v489, %v490
    %v492 = vrot.slane %v491, 2
    %v493 = vadd.f32 %v491, %v492
    %v494 = vrot.slane %v493, 1
    %v495 = vadd.f32 %v493, %v494
    %v496 = vsel %vm331, %v478, 0.0
    %v497 = vrot.slane %v496, 4
    %v498 = vadd.f32 %v496, %v497
    %v499 = vrot.slane %v498, 2
    %v500 = vadd.f32 %v498, %v499
    %v501 = vrot.slane %v500, 1
    %v502 = vadd.f32 %v500, %v501
    %v503 = vsel %vm331, %v479, 0.0
    %v504 = vrot.slane %v503, 4
    %v505 = vadd.f32 %v503, %v504
    %v506 = vrot.slane %v505, 2
    %v507 = vadd.f32 %v505, %v506
    %v508 = vrot.slane %v507, 1
    %v509 = vadd.f32 %v507, %v508
    %v510 = vsel %vm331, %v480, 0.0
    %v511 = vrot.slane %v510, 4
    %v512 = vadd.f32 %v510, %v511
    %v513 = vrot.slane %v512, 2
    %v514 = vadd.f32 %v512, %v513
    %v515 = vrot.slane %v514, 1
    %v516 = vadd.f32 %v514, %v515
    %v517 = vsel %vm331, %v481, 0.0
    %v518 = vrot.slane %v517, 4
    %v519 = vadd.f32 %v517, %v518
    %v520 = vrot.slane %v519, 2
    %v521 = vadd.f32 %v519, %v520
    %v522 = vrot.slane %v521, 1
    %v523 = vadd.f32 %v521, %v522
    %v524 = vrcp.pop %v398
    %v525 = vrcp.pop %v405
    %v526 = vrcp.pop %v412
    %v527 = vrcp.pop %v419
    %v528 = vrcp.pop %v426
    %v529 = vrcp.pop %v433
    %v530 = vmul.f32 %v398, %v524
    %v531 = vmul.f32 %v405, %v525
    %v532 = vmul.f32 %v412, %v526
    %v533 = vmul.f32 %v419, %v527
    %v534 = vmul.f32 %v426, %v528
    %v535 = vmul.f32 %v433, %v529
    %v536 = vsub.f32 2.0, %v530
    %v537 = vsub.f32 2.0, %v531
    %v538 = vsub.f32 2.0, %v532
    %v539 = vsub.f32 2.0, %v533
    %v540 = vsub.f32 2.0, %v534
    %v541 = vsub.f32 2.0, %v535
    %v542 = vmul.f32 %v524, %v536
    %v543 = vmul.f32 %v525, %v537
    %v544 = vmul.f32 %v526, %v538
    %v545 = vmul.f32 %v527, %v539
    %v546 = vmul.f32 %v528, %v540
    %v547 = vmul.f32 %v529, %v541
    %v548 = vmul.f32 %v488, %v542
    %v549 = vmul.f32 %v495, %v543
    %v550 = vmul.f32 %v502, %v544
    %v551 = vmul.f32 %v509, %v545
    %v552 = vmul.f32 %v516, %v546
    %v553 = vmul.f32 %v523, %v547
    %v554 = vld [vmem:[#allocation5] sm:$0x3f]
    %556 = vset.pattern.permute.xlu0 16
    %557 = vperm.xlu0 %556, %v554
    %v558 = vpop.permute.xlu0 %557
    %v560 = vmul.f32 %v558, %v548
    %561 = vset.pattern.permute.xlu0 24
    %562 = vperm.xlu0 %561, %v554
    %v563 = vpop.permute.xlu0 %562
    %v565 = vadd.f32 %v563, %v560
    %566 = vset.pattern.permute.xlu0 17
    %567 = vperm.xlu0 %566, %v554
    %v568 = vpop.permute.xlu0 %567
    %v570 = vmul.f32 %v568, %v549
    %v571 = vadd.f32 %v565, %v570
    %572 = vset.pattern.permute.xlu0 18
    %573 = vperm.xlu0 %572, %v554
    %v574 = vpop.permute.xlu0 %573
    %v576 = vmul.f32 %v574, %v550
    %v577 = vadd.f32 %v571, %v576
    %578 = vset.pattern.permute.xlu0 19
    %579 = vperm.xlu0 %578, %v554
    %v580 = vpop.permute.xlu0 %579
    %v582 = vmul.f32 %v580, %v551
    %v583 = vadd.f32 %v577, %v582
    %584 = vset.pattern.permute.xlu0 20
    %585 = vperm.xlu0 %584, %v554
    %v586 = vpop.permute.xlu0 %585
    %v588 = vmul.f32 %v586, %v552
    %v589 = vadd.f32 %v583, %v588
    %590 = vset.pattern.permute.xlu0 21
    %591 = vperm.xlu0 %590, %v554
    %v592 = vpop.permute.xlu0 %591
    %v594 = vmul.f32 %v592, %v553
    %v595 = vadd.f32 %v589, %v594
    %v596 = vadd.f32 %v54, %v595
    %vm597 = vcmask 1045504
    %v598 = vsel %vm597, %v596, 0.0
    %v599 = vrot.slane %v598, 4
    %v600 = vadd.f32 %v598, %v599
    %v601 = vrot.slane %v600, 2
    %v602 = vadd.f32 %v600, %v601
    %v603 = vrot.slane %v602, 1
    %v604 = vadd.f32 %v602, %v603
    %v605 = vrcp.pop 6.0
    %v606 = vmul.f32 %v604, %v605
    %v607 = vsub.f32 %v596, %v606
    %v608 = vmul.f32 %v607, %v607
    %v609 = vsel %vm597, %v608, 0.0
    %v610 = vrot.slane %v609, 4
    %v611 = vadd.f32 %v609, %v610
    %v612 = vrot.slane %v611, 2
    %v613 = vadd.f32 %v611, %v612
    %v614 = vrot.slane %v613, 1
    %v615 = vadd.f32 %v613, %v614
    %v616 = vmul.f32 %v615, %v605
    %v617 = vadd.f32 %v616, 1e-05
    %v618 = vrsqrt.pop %v617
    %v619 = vmul.f32 %v607, %v618
    %620 = vset.pattern.permute.xlu0 56
    %621 = vperm.xlu0 %620, %v554
    %v622 = vpop.permute.xlu0 %621
    %v624 = vmul.f32 %v619, %v622
    %625 = vset.pattern.permute.xlu0 64
    %626 = vperm.xlu0 %625, %v554
    %v627 = vpop.permute.xlu0 %626
    %v629 = vadd.f32 %v624, %v627
    %v630 = vld [vmem:[#allocation5] sm:$0xff]
    %v631 = vld [vmem:[#allocation5 + $0x8] sm:$0xff]
    %v632 = vld [vmem:[#allocation5 + $0x10] sm:$0xff]
    %v633 = vld [vmem:[#allocation5 + $0x18] sm:$0xff]
    %v634 = vld [vmem:[#allocation5 + $0x20] sm:$0xff]
    %v635 = vld [vmem:[#allocation5 + $0x28] sm:$0xff]
    %v636 = vld [vmem:[#allocation5 + $0x30] sm:$0xff]
    %v637 = vld [vmem:[#allocation5 + $0x38] sm:$0xff]
    %v638 = vld [vmem:[#allocation5 + $0x40] sm:$0xff]
    %640 = vset.pattern.permute.xlu0 32
    %641 = vperm.xlu0 %640, %v630
    %v642 = vpop.permute.xlu0 %641
    %645 = vset.pattern.permute.xlu0 32
    %646 = vperm.xlu0 %645, %v631
    %v647 = vpop.permute.xlu0 %646
    %650 = vset.pattern.permute.xlu0 32
    %651 = vperm.xlu0 %650, %v632
    %v652 = vpop.permute.xlu0 %651
    %655 = vset.pattern.permute.xlu0 32
    %656 = vperm.xlu0 %655, %v633
    %v657 = vpop.permute.xlu0 %656
    %660 = vset.pattern.permute.xlu0 32
    %661 = vperm.xlu0 %660, %v634
    %v662 = vpop.permute.xlu0 %661
    %665 = vset.pattern.permute.xlu0 32
    %666 = vperm.xlu0 %665, %v635
    %v667 = vpop.permute.xlu0 %666
    %670 = vset.pattern.permute.xlu0 32
    %671 = vperm.xlu0 %670, %v636
    %v672 = vpop.permute.xlu0 %671
    %675 = vset.pattern.permute.xlu0 32
    %676 = vperm.xlu0 %675, %v637
    %v677 = vpop.permute.xlu0 %676
    %680 = vset.pattern.permute.xlu0 32
    %681 = vperm.xlu0 %680, %v638
    %v682 = vpop.permute.xlu0 %681
    %v684 = vlaneseq
    %v685 = vshrl.u32 %v684, 7
    %v686 = vsub.s32 0, %v685
    %v687 = vrot.slane %v629, %v686
    %v688 = vmul.f32 %v642, %v687
    %v689 = vmul.f32 %v647, %v687
    %v690 = vmul.f32 %v652, %v687
    %v691 = vmul.f32 %v657, %v687
    %v692 = vmul.f32 %v662, %v687
    %v693 = vmul.f32 %v667, %v687
    %v694 = vmul.f32 %v672, %v687
    %v695 = vmul.f32 %v677, %v687
    %v696 = vmul.f32 %v682, %v687
    %697 = vset.pattern.permute.xlu0 40
    %698 = vperm.xlu0 %697, %v630
    %v699 = vpop.permute.xlu0 %698
    %701 = vset.pattern.permute.xlu0 40
    %702 = vperm.xlu0 %701, %v631
    %v703 = vpop.permute.xlu0 %702
    %705 = vset.pattern.permute.xlu0 40
    %706 = vperm.xlu0 %705, %v632
    %v707 = vpop.permute.xlu0 %706
    %709 = vset.pattern.permute.xlu0 40
    %710 = vperm.xlu0 %709, %v633
    %v711 = vpop.permute.xlu0 %710
    %713 = vset.pattern.permute.xlu0 40
    %714 = vperm.xlu0 %713, %v634
    %v715 = vpop.permute.xlu0 %714
    %717 = vset.pattern.permute.xlu0 40
    %718 = vperm.xlu0 %717, %v635
    %v719 = vpop.permute.xlu0 %718
    %721 = vset.pattern.permute.xlu0 40
    %722 = vperm.xlu0 %721, %v636
    %v723 = vpop.permute.xlu0 %722
    %725 = vset.pattern.permute.xlu0 40
    %726 = vperm.xlu0 %725, %v637
    %v727 = vpop.permute.xlu0 %726
    %729 = vset.pattern.permute.xlu0 40
    %730 = vperm.xlu0 %729, %v638
    %v731 = vpop.permute.xlu0 %730
    %v733 = vadd.f32 %v699, %v688
    %v734 = vadd.f32 %v703, %v689
    %v735 = vadd.f32 %v707, %v690
    %v736 = vadd.f32 %v711, %v691
    %v737 = vadd.f32 %v715, %v692
    %v738 = vadd.f32 %v719, %v693
    %v739 = vadd.f32 %v723, %v694
    %v740 = vadd.f32 %v727, %v695
    %v741 = vadd.f32 %v731, %v696
    %742 = vset.pattern.permute.xlu0 33
    %743 = vperm.xlu0 %742, %v630
    %v744 = vpop.permute.xlu0 %743
    %746 = vset.pattern.permute.xlu0 33
    %747 = vperm.xlu0 %746, %v631
    %v748 = vpop.permute.xlu0 %747
    %750 = vset.pattern.permute.xlu0 33
    %751 = vperm.xlu0 %750, %v632
    %v752 = vpop.permute.xlu0 %751
    %754 = vset.pattern.permute.xlu0 33
    %755 = vperm.xlu0 %754, %v633
    %v756 = vpop.permute.xlu0 %755
    %758 = vset.pattern.permute.xlu0 33
    %759 = vperm.xlu0 %758, %v634
    %v760 = vpop.permute.xlu0 %759
    %762 = vset.pattern.permute.xlu0 33
    %763 = vperm.xlu0 %762, %v635
    %v764 = vpop.permute.xlu0 %763
    %766 = vset.pattern.permute.xlu0 33
    %767 = vperm.xlu0 %766, %v636
    %v768 = vpop.permute.xlu0 %767
    %770 = vset.pattern.permute.xlu0 33
    %771 = vperm.xlu0 %770, %v637
    %v772 = vpop.permute.xlu0 %771
    %774 = vset.pattern.permute.xlu0 33
    %775 = vperm.xlu0 %774, %v638
    %v776 = vpop.permute.xlu0 %775
    %v778 = vlaneseq
    %v779 = vshrl.u32 %v778, 7
    %v780 = vsub.s32 1, %v779
    %v781 = vrot.slane %v629, %v780
    %v782 = vmul.f32 %v744, %v781
    %v783 = vmul.f32 %v748, %v781
    %v784 = vmul.f32 %v752, %v781
    %v785 = vmul.f32 %v756, %v781
    %v786 = vmul.f32 %v760, %v781
    %v787 = vmul.f32 %v764, %v781
    %v788 = vmul.f32 %v768, %v781
    %v789 = vmul.f32 %v772, %v781
    %v790 = vmul.f32 %v776, %v781
    %v791 = vadd.f32 %v733, %v782
    %v792 = vadd.f32 %v734, %v783
    %v793 = vadd.f32 %v735, %v784
    %v794 = vadd.f32 %v736, %v785
    %v795 = vadd.f32 %v737, %v786
    %v796 = vadd.f32 %v738, %v787
    %v797 = vadd.f32 %v739, %v788
    %v798 = vadd.f32 %v740, %v789
    %v799 = vadd.f32 %v741, %v790
    %800 = vset.pattern.permute.xlu0 34
    %801 = vperm.xlu0 %800, %v630
    %v802 = vpop.permute.xlu0 %801
    %804 = vset.pattern.permute.xlu0 34
    %805 = vperm.xlu0 %804, %v631
    %v806 = vpop.permute.xlu0 %805
    %808 = vset.pattern.permute.xlu0 34
    %809 = vperm.xlu0 %808, %v632
    %v810 = vpop.permute.xlu0 %809
    %812 = vset.pattern.permute.xlu0 34
    %813 = vperm.xlu0 %812, %v633
    %v814 = vpop.permute.xlu0 %813
    %816 = vset.pattern.permute.xlu0 34
    %817 = vperm.xlu0 %816, %v634
    %v818 = vpop.permute.xlu0 %817
    %820 = vset.pattern.permute.xlu0 34
    %821 = vperm.xlu0 %820, %v635
    %v822 = vpop.permute.xlu0 %821
    %824 = vset.pattern.permute.xlu0 34
    %825 = vperm.xlu0 %824, %v636
    %v826 = vpop.permute.xlu0 %825
    %828 = vset.pattern.permute.xlu0 34
    %829 = vperm.xlu0 %828, %v637
    %v830 = vpop.permute.xlu0 %829
    %832 = vset.pattern.permute.xlu0 34
    %833 = vperm.xlu0 %832, %v638
    %v834 = vpop.permute.xlu0 %833
    %v836 = vlaneseq
    %v837 = vshrl.u32 %v836, 7
    %v838 = vsub.s32 2, %v837
    %v839 = vrot.slane %v629, %v838
    %v840 = vmul.f32 %v802, %v839
    %v841 = vmul.f32 %v806, %v839
    %v842 = vmul.f32 %v810, %v839
    %v843 = vmul.f32 %v814, %v839
    %v844 = vmul.f32 %v818, %v839
    %v845 = vmul.f32 %v822, %v839
    %v846 = vmul.f32 %v826, %v839
    %v847 = vmul.f32 %v830, %v839
    %v848 = vmul.f32 %v834, %v839
    %v849 = vadd.f32 %v791, %v840
    %v850 = vadd.f32 %v792, %v841
    %v851 = vadd.f32 %v793, %v842
    %v852 = vadd.f32 %v794, %v843
    %v853 = vadd.f32 %v795, %v844
    %v854 = vadd.f32 %v796, %v845
    %v855 = vadd.f32 %v797, %v846
    %v856 = vadd.f32 %v798, %v847
    %v857 = vadd.f32 %v799, %v848
    %858 = vset.pattern.permute.xlu0 35
    %859 = vperm.xlu0 %858, %v630
    %v860 = vpop.permute.xlu0 %859
    %862 = vset.pattern.permute.xlu0 35
    %863 = vperm.xlu0 %862, %v631
    %v864 = vpop.permute.xlu0 %863
    %866 = vset.pattern.permute.xlu0 35
    %867 = vperm.xlu0 %866, %v632
    %v868 = vpop.permute.xlu0 %867
    %870 = vset.pattern.permute.xlu0 35
    %871 = vperm.xlu0 %870, %v633
    %v872 = vpop.permute.xlu0 %871
    %874 = vset.pattern.permute.xlu0 35
    %875 = vperm.xlu0 %874, %v634
    %v876 = vpop.permute.xlu0 %875
    %878 = vset.pattern.permute.xlu0 35
    %879 = vperm.xlu0 %878, %v635
    %v880 = vpop.permute.xlu0 %879
    %882 = vset.pattern.permute.xlu0 35
    %883 = vperm.xlu0 %882, %v636
    %v884 = vpop.permute.xlu0 %883
    %886 = vset.pattern.permute.xlu0 35
    %887 = vperm.xlu0 %886, %v637
    %v888 = vpop.permute.xlu0 %887
    %890 = vset.pattern.permute.xlu0 35
    %891 = vperm.xlu0 %890, %v638
    %v892 = vpop.permute.xlu0 %891
    %v894 = vlaneseq
    %v895 = vshrl.u32 %v894, 7
    %v896 = vsub.s32 3, %v895
    %v897 = vrot.slane %v629, %v896
    %v898 = vmul.f32 %v860, %v897
    %v899 = vmul.f32 %v864, %v897
    %v900 = vmul.f32 %v868, %v897
    %v901 = vmul.f32 %v872, %v897
    %v902 = vmul.f32 %v876, %v897
    %v903 = vmul.f32 %v880, %v897
    %v904 = vmul.f32 %v884, %v897
    %v905 = vmul.f32 %v888, %v897
    %v906 = vmul.f32 %v892, %v897
    %v907 = vadd.f32 %v849, %v898
    %v908 = vadd.f32 %v850, %v899
    %v909 = vadd.f32 %v851, %v900
    %v910 = vadd.f32 %v852, %v901
    %v911 = vadd.f32 %v853, %v902
    %v912 = vadd.f32 %v854, %v903
    %v913 = vadd.f32 %v855, %v904
    %v914 = vadd.f32 %v856, %v905
    %v915 = vadd.f32 %v857, %v906
    %916 = vset.pattern.permute.xlu0 36
    %917 = vperm.xlu0 %916, %v630
    %v918 = vpop.permute.xlu0 %917
    %920 = vset.pattern.permute.xlu0 36
    %921 = vperm.xlu0 %920, %v631
    %v922 = vpop.permute.xlu0 %921
    %924 = vset.pattern.permute.xlu0 36
    %925 = vperm.xlu0 %924, %v632
    %v926 = vpop.permute.xlu0 %925
    %928 = vset.pattern.permute.xlu0 36
    %929 = vperm.xlu0 %928, %v633
    %v930 = vpop.permute.xlu0 %929
    %932 = vset.pattern.permute.xlu0 36
    %933 = vperm.xlu0 %932, %v634
    %v934 = vpop.permute.xlu0 %933
    %936 = vset.pattern.permute.xlu0 36
    %937 = vperm.xlu0 %936, %v635
    %v938 = vpop.permute.xlu0 %937
    %940 = vset.pattern.permute.xlu0 36
    %941 = vperm.xlu0 %940, %v636
    %v942 = vpop.permute.xlu0 %941
    %944 = vset.pattern.permute.xlu0 36
    %945 = vperm.xlu0 %944, %v637
    %v946 = vpop.permute.xlu0 %945
    %948 = vset.pattern.permute.xlu0 36
    %949 = vperm.xlu0 %948, %v638
    %v950 = vpop.permute.xlu0 %949
    %v952 = vlaneseq
    %v953 = vshrl.u32 %v952, 7
    %v954 = vsub.s32 4, %v953
    %v955 = vrot.slane %v629, %v954
    %v956 = vmul.f32 %v918, %v955
    %v957 = vmul.f32 %v922, %v955
    %v958 = vmul.f32 %v926, %v955
    %v959 = vmul.f32 %v930, %v955
    %v960 = vmul.f32 %v934, %v955
    %v961 = vmul.f32 %v938, %v955
    %v962 = vmul.f32 %v942, %v955
    %v963 = vmul.f32 %v946, %v955
    %v964 = vmul.f32 %v950, %v955
    %v965 = vadd.f32 %v907, %v956
    %v966 = vadd.f32 %v908, %v957
    %v967 = vadd.f32 %v909, %v958
    %v968 = vadd.f32 %v910, %v959
    %v969 = vadd.f32 %v911, %v960
    %v970 = vadd.f32 %v912, %v961
    %v971 = vadd.f32 %v913, %v962
    %v972 = vadd.f32 %v914, %v963
    %v973 = vadd.f32 %v915, %v964
    %974 = vset.pattern.permute.xlu0 37
    %975 = vperm.xlu0 %974, %v630
    %v976 = vpop.permute.xlu0 %975
    %978 = vset.pattern.permute.xlu0 37
    %979 = vperm.xlu0 %978, %v631
    %v980 = vpop.permute.xlu0 %979
    %982 = vset.pattern.permute.xlu0 37
    %983 = vperm.xlu0 %982, %v632
    %v984 = vpop.permute.xlu0 %983
    %986 = vset.pattern.permute.xlu0 37
    %987 = vperm.xlu0 %986, %v633
    %v988 = vpop.permute.xlu0 %987
    %990 = vset.pattern.permute.xlu0 37
    %991 = vperm.xlu0 %990, %v634
    %v992 = vpop.permute.xlu0 %991
    %994 = vset.pattern.permute.xlu0 37
    %995 = vperm.xlu0 %994, %v635
    %v996 = vpop.permute.xlu0 %995
    %998 = vset.pattern.permute.xlu0 37
    %999 = vperm.xlu0 %998, %v636
    %v1000 = vpop.permute.xlu0 %999
    %1002 = vset.pattern.permute.xlu0 37
    %1003 = vperm.xlu0 %1002, %v637
    %v1004 = vpop.permute.xlu0 %1003
    %1006 = vset.pattern.permute.xlu0 37
    %1007 = vperm.xlu0 %1006, %v638
    %v1008 = vpop.permute.xlu0 %1007
    %v1010 = vlaneseq
    %v1011 = vshrl.u32 %v1010, 7
    %v1012 = vsub.s32 5, %v1011
    %v1013 = vrot.slane %v629, %v1012
    %v1014 = vmul.f32 %v976, %v1013
    %v1015 = vmul.f32 %v980, %v1013
    %v1016 = vmul.f32 %v984, %v1013
    %v1017 = vmul.f32 %v988, %v1013
    %v1018 = vmul.f32 %v992, %v1013
    %v1019 = vmul.f32 %v996, %v1013
    %v1020 = vmul.f32 %v1000, %v1013
    %v1021 = vmul.f32 %v1004, %v1013
    %v1022 = vmul.f32 %v1008, %v1013
    %v1023 = vadd.f32 %v965, %v1014
    %v1024 = vadd.f32 %v966, %v1015
    %v1025 = vadd.f32 %v967, %v1016
    %v1026 = vadd.f32 %v968, %v1017
    %v1027 = vadd.f32 %v969, %v1018
    %v1028 = vadd.f32 %v970, %v1019
    %v1029 = vadd.f32 %v971, %v1020
    %v1030 = vadd.f32 %v972, %v1021
    %v1031 = vadd.f32 %v973, %v1022
    %v1032 = vmax.f32 %v1023, 0.0
    %v1033 = vmax.f32 %v1024, 0.0
    %v1034 = vmax.f32 %v1025, 0.0
    %v1035 = vmax.f32 %v1026, 0.0
    %v1036 = vmax.f32 %v1027, 0.0
    %v1037 = vmax.f32 %v1028, 0.0
    %v1038 = vmax.f32 %v1029, 0.0
    %v1039 = vmax.f32 %v1030, 0.0
    %v1040 = vmax.f32 %v1031, 0.0
    %v1041 = vld [vmem:[#allocation7] sm:$0x3f]
    %1042 = vset.pattern.permute.xlu0 48
    %1043 = vperm.xlu0 %1042, %v554
    %v1044 = vpop.permute.xlu0 %1043
    %vm1046 = vcmask 588800
    %v1048 = vsel %vm1046, %v1041, 0
    %1050 = vmatprep.subr.mxu0 0.0
    %1051 = vmatpush1.msra.mxu0 %v1032
    %1052 = vmatprep.subr.mxu0 0.0
    %1053 = vmatpush1.msra.mxu0 %v1033
    %1054 = vmatprep.subr.mxu0 0.0
    %1055 = vmatpush1.msra.mxu0 %v1034
    %1056 = vmatprep.subr.mxu0 0.0
    %1057 = vmatpush1.msra.mxu0 %v1035
    %1058 = vmatprep.subr.mxu0 0.0
    %1059 = vmatpush1.msra.mxu0 %v1036
    %1060 = vmatprep.subr.mxu0 0.0
    %1061 = vmatpush1.msra.mxu0 %v1037
    %1062 = vmatprep.subr.mxu0 0.0
    %1063 = vmatpush1.msra.mxu0 %v1038
    %1064 = vmatprep.subr.mxu0 0.0
    %1065 = vmatpush1.msra.mxu0 %v1039
    %1066 = vmatprep.subr.mxu0 0.0
    %1067 = vmatpush1.msra.mxu0 %v1040
    %1068 = vmatprep.subr.mxu0 0.0
    %1069 = vmatpush1.msra.mxu0 0.0
    %1070 = vmatprep.subr.mxu0 0.0
    %1071 = vmatpush1.msra.mxu0 0.0
    %1072 = vmatprep.subr.mxu0 0.0
    %1073 = vmatpush1.msra.mxu0 0.0
    %1074 = vmatprep.subr.mxu0 0.0
    %1075 = vmatpush1.msra.mxu0 0.0
    %1076 = vmatprep.subr.mxu0 0.0
    %1077 = vmatpush1.msra.mxu0 0.0
    %1078 = vmatprep.subr.mxu0 0.0
    %1079 = vmatpush1.msra.mxu0 0.0
    %1080 = vmatprep.subr.mxu0 0.0
    %1081 = vmatpush1.msra.mxu0 0.0
    %1082 = vmatprep.subr.mxu0 0.0
    %1083 = vmatpush1.msra.mxu0 0.0
    %1084 = vmatprep.subr.mxu0 0.0
    %1085 = vmatpush1.msra.mxu0 0.0
    %1086 = vmatprep.subr.mxu0 0.0
    %1087 = vmatpush1.msra.mxu0 0.0
    %1088 = vmatprep.subr.mxu0 0.0
    %1089 = vmatpush1.msra.mxu0 0.0
    %1090 = vmatprep.subr.mxu0 0.0
    %1091 = vmatpush1.msra.mxu0 0.0
    %1092 = vmatprep.subr.mxu0 0.0
    %1093 = vmatpush1.msra.mxu0 0.0
    %1094 = vmatprep.subr.mxu0 0.0
    %1095 = vmatpush1.msra.mxu0 0.0
    %1096 = vmatprep.subr.mxu0 0.0
    %1097 = vmatpush1.msra.mxu0 0.0
    %1098 = vmatprep.subr.mxu0 0.0
    %1099 = vmatpush1.msra.mxu0 0.0
    %1100 = vmatprep.subr.mxu0 0.0
    %1101 = vmatpush1.msra.mxu0 0.0
    %1102 = vmatprep.subr.mxu0 0.0
    %1103 = vmatpush1.msra.mxu0 0.0
    %1104 = vmatprep.subr.mxu0 0.0
    %1105 = vmatpush1.msra.mxu0 0.0
    %1106 = vmatprep.subr.mxu0 0.0
    %1107 = vmatpush1.msra.mxu0 0.0
    %1108 = vmatprep.subr.mxu0 0.0
    %1109 = vmatpush1.msra.mxu0 0.0
    %1110 = vmatprep.subr.mxu0 0.0
    %1111 = vmatpush1.msra.mxu0 0.0
    %1112 = vmatprep.subr.mxu0 0.0
    %1113 = vmatpush1.msra.mxu0 0.0
    %1114 = vmatprep.mubr.f32.mxu0 0.0
    %1115 = vmatmul.mubr.f32.gmra.mrb[0].mxu0 %v1048
    %v1116 = vpop.f32.mrb[0].mxu0
    %v1117 = vadd.f32 %v1044, %v1116
    %v1118 = vpop.f32.mrb[0].mxu0
    %1119 = vdwg.mxu0
    %v1120 = vadd.f32 %v629, %v1117
    %v1121 = vsel %vm597, %v1120, 0.0
    %v1122 = vrot.slane %v1121, 4
    %v1123 = vadd.f32 %v1121, %v1122
    %v1124 = vrot.slane %v1123, 2
    %v1125 = vadd.f32 %v1123, %v1124
    %v1126 = vrot.slane %v1125, 1
    %v1127 = vadd.f32 %v1125, %v1126
    %v1128 = vmul.f32 %v1127, %v605
    %v1129 = vsub.f32 %v1120, %v1128
    %v1130 = vmul.f32 %v1129, %v1129
    %v1131 = vsel %vm597, %v1130, 0.0
    %v1132 = vrot.slane %v1131, 4
    %v1133 = vadd.f32 %v1131, %v1132
    %v1134 = vrot.slane %v1133, 2
    %v1135 = vadd.f32 %v1133, %v1134
    %v1136 = vrot.slane %v1135, 1
    %v1137 = vadd.f32 %v1135, %v1136
    %v1138 = vmul.f32 %v1137, %v605
    %v1139 = vadd.f32 %v1138, 1e-05
    %v1140 = vrsqrt.pop %v1139
    %v1141 = vmul.f32 %v1129, %v1140
    %1142 = vset.pattern.permute.xlu0 72
    %1143 = vperm.xlu0 %1142, %v554
    %v1144 = vpop.permute.xlu0 %1143
    %v1146 = vmul.f32 %v1141, %v1144
    %1147 = vset.pattern.permute.xlu0 80
    %1148 = vperm.xlu0 %1147, %v554
    %v1149 = vpop.permute.xlu0 %1148
    %v1151 = vadd.f32 %v1146, %v1149
    %v1152 = vld [vmem:[#allocation5] sm:$0xff]
    %v1153 = vld [vmem:[#allocation5 + $0x8] sm:$0xff]
    %v1154 = vld [vmem:[#allocation5 + $0x10] sm:$0x3]
    %1156 = vset.pattern.permute.xlu0 88
    %1157 = vperm.xlu0 %1156, %v1152
    %v1158 = vpop.permute.xlu0 %1157
    %1161 = vset.pattern.permute.xlu0 88
    %1162 = vperm.xlu0 %1161, %v1153
    %v1163 = vpop.permute.xlu0 %1162
    %1166 = vset.pattern.permute.xlu0 88
    %1167 = vperm.xlu0 %1166, %v1154
    %v1168 = vpop.permute.xlu0 %1167
    %v1170 = vlaneseq
    %v1171 = vshrl.u32 %v1170, 7
    %v1172 = vsub.s32 0, %v1171
    %v1173 = vrot.slane %v1151, %v1172
    %v1174 = vmul.f32 %v1158, %v1173
    %v1175 = vmul.f32 %v1163, %v1173
    %v1176 = vmul.f32 %v1168, %v1173
    %1177 = vset.pattern.permute.xlu0 96
    %1178 = vperm.xlu0 %1177, %v1152
    %v1179 = vpop.permute.xlu0 %1178
    %1181 = vset.pattern.permute.xlu0 96
    %1182 = vperm.xlu0 %1181, %v1153
    %v1183 = vpop.permute.xlu0 %1182
    %1185 = vset.pattern.permute.xlu0 96
    %1186 = vperm.xlu0 %1185, %v1154
    %v1187 = vpop.permute.xlu0 %1186
    %v1189 = vadd.f32 %v1179, %v1174
    %v1190 = vadd.f32 %v1183, %v1175
    %v1191 = vadd.f32 %v1187, %v1176
    %1192 = vset.pattern.permute.xlu0 89
    %1193 = vperm.xlu0 %1192, %v1152
    %v1194 = vpop.permute.xlu0 %1193
    %1196 = vset.pattern.permute.xlu0 89
    %1197 = vperm.xlu0 %1196, %v1153
    %v1198 = vpop.permute.xlu0 %1197
    %1200 = vset.pattern.permute.xlu0 89
    %1201 = vperm.xlu0 %1200, %v1154
    %v1202 = vpop.permute.xlu0 %1201
    %v1204 = vlaneseq
    %v1205 = vshrl.u32 %v1204, 7
    %v1206 = vsub.s32 1, %v1205
    %v1207 = vrot.slane %v1151, %v1206
    %v1208 = vmul.f32 %v1194, %v1207
    %v1209 = vmul.f32 %v1198, %v1207
    %v1210 = vmul.f32 %v1202, %v1207
    %v1211 = vadd.f32 %v1189, %v1208
    %v1212 = vadd.f32 %v1190, %v1209
    %v1213 = vadd.f32 %v1191, %v1210
    %1214 = vset.pattern.permute.xlu0 90
    %1215 = vperm.xlu0 %1214, %v1152
    %v1216 = vpop.permute.xlu0 %1215
    %1218 = vset.pattern.permute.xlu0 90
    %1219 = vperm.xlu0 %1218, %v1153
    %v1220 = vpop.permute.xlu0 %1219
    %1222 = vset.pattern.permute.xlu0 90
    %1223 = vperm.xlu0 %1222, %v1154
    %v1224 = vpop.permute.xlu0 %1223
    %v1226 = vlaneseq
    %v1227 = vshrl.u32 %v1226, 7
    %v1228 = vsub.s32 2, %v1227
    %v1229 = vrot.slane %v1151, %v1228
    %v1230 = vmul.f32 %v1216, %v1229
    %v1231 = vmul.f32 %v1220, %v1229
    %v1232 = vmul.f32 %v1224, %v1229
    %v1233 = vadd.f32 %v1211, %v1230
    %v1234 = vadd.f32 %v1212, %v1231
    %v1235 = vadd.f32 %v1213, %v1232
    %1236 = vset.pattern.permute.xlu0 91
    %1237 = vperm.xlu0 %1236, %v1152
    %v1238 = vpop.permute.xlu0 %1237
    %1240 = vset.pattern.permute.xlu0 91
    %1241 = vperm.xlu0 %1240, %v1153
    %v1242 = vpop.permute.xlu0 %1241
    %1244 = vset.pattern.permute.xlu0 91
    %1245 = vperm.xlu0 %1244, %v1154
    %v1246 = vpop.permute.xlu0 %1245
    %v1248 = vlaneseq
    %v1249 = vshrl.u32 %v1248, 7
    %v1250 = vsub.s32 3, %v1249
    %v1251 = vrot.slane %v1151, %v1250
    %v1252 = vmul.f32 %v1238, %v1251
    %v1253 = vmul.f32 %v1242, %v1251
    %v1254 = vmul.f32 %v1246, %v1251
    %v1255 = vadd.f32 %v1233, %v1252
    %v1256 = vadd.f32 %v1234, %v1253
    %v1257 = vadd.f32 %v1235, %v1254
    %1258 = vset.pattern.permute.xlu0 92
    %1259 = vperm.xlu0 %1258, %v1152
    %v1260 = vpop.permute.xlu0 %1259
    %1262 = vset.pattern.permute.xlu0 92
    %1263 = vperm.xlu0 %1262, %v1153
    %v1264 = vpop.permute.xlu0 %1263
    %1266 = vset.pattern.permute.xlu0 92
    %1267 = vperm.xlu0 %1266, %v1154
    %v1268 = vpop.permute.xlu0 %1267
    %v1270 = vlaneseq
    %v1271 = vshrl.u32 %v1270, 7
    %v1272 = vsub.s32 4, %v1271
    %v1273 = vrot.slane %v1151, %v1272
    %v1274 = vmul.f32 %v1260, %v1273
    %v1275 = vmul.f32 %v1264, %v1273
    %v1276 = vmul.f32 %v1268, %v1273
    %v1277 = vadd.f32 %v1255, %v1274
    %v1278 = vadd.f32 %v1256, %v1275
    %v1279 = vadd.f32 %v1257, %v1276
    %1280 = vset.pattern.permute.xlu0 93
    %1281 = vperm.xlu0 %1280, %v1152
    %v1282 = vpop.permute.xlu0 %1281
    %1284 = vset.pattern.permute.xlu0 93
    %1285 = vperm.xlu0 %1284, %v1153
    %v1286 = vpop.permute.xlu0 %1285
    %1288 = vset.pattern.permute.xlu0 93
    %1289 = vperm.xlu0 %1288, %v1154
    %v1290 = vpop.permute.xlu0 %1289
    %v1292 = vlaneseq
    %v1293 = vshrl.u32 %v1292, 7
    %v1294 = vsub.s32 5, %v1293
    %v1295 = vrot.slane %v1151, %v1294
    %v1296 = vmul.f32 %v1282, %v1295
    %v1297 = vmul.f32 %v1286, %v1295
    %v1298 = vmul.f32 %v1290, %v1295
    %v1299 = vadd.f32 %v1277, %v1296
    %v1300 = vadd.f32 %v1278, %v1297
    %v1301 = vadd.f32 %v1279, %v1298
    %v1302 = vlaneseq
    %v1303 = vshrl.u32 %v1302, 7
    %v1304 = vsub.s32 6, %v1303
    %v1305 = vrot.slane %v1299, %v1304
    %1307 = vbcast.lane.b32.xlu0 %v1305, 256
    %v1308 = vpop.permute.xlu0 %1307
    %v1309 = vlaneseq
    %v1310 = vshrl.u32 %v1309, 7
    %v1311 = vsub.s32 7, %v1310
    %v1312 = vrot.slane %v1299, %v1311
    %1314 = vbcast.lane.b32.xlu0 %v1312, 256
    %v1315 = vpop.permute.xlu0 %1314
    %v1316 = vlaneseq
    %v1317 = vshrl.u32 %v1316, 7
    %v1318 = vsub.s32 0, %v1317
    %v1319 = vrot.slane %v1300, %v1318
    %1321 = vbcast.lane.b32.xlu0 %v1319, 256
    %v1322 = vpop.permute.xlu0 %1321
    %v1323 = vlaneseq
    %v1324 = vshrl.u32 %v1323, 7
    %v1325 = vsub.s32 1, %v1324
    %v1326 = vrot.slane %v1300, %v1325
    %1328 = vbcast.lane.b32.xlu0 %v1326, 256
    %v1329 = vpop.permute.xlu0 %1328
    %v1330 = vlaneseq
    %v1331 = vshrl.u32 %v1330, 7
    %v1332 = vsub.s32 2, %v1331
    %v1333 = vrot.slane %v1300, %v1332
    %1335 = vbcast.lane.b32.xlu0 %v1333, 256
    %v1336 = vpop.permute.xlu0 %1335
    %v1337 = vlaneseq
    %v1338 = vshrl.u32 %v1337, 7
    %v1339 = vsub.s32 3, %v1338
    %v1340 = vrot.slane %v1300, %v1339
    %1342 = vbcast.lane.b32.xlu0 %v1340, 256
    %v1343 = vpop.permute.xlu0 %1342
    %v1345 = vcombine.high %v1299, %v1299
    %v1347 = vunpack.c.l.s4 1966171168
    %v1348 = vunpack.c.0.s8 %v1347
    %v1349 = vlaneseq
    %v1350 = vshrl.u32 %v1349, 7
    %v1351 = vsub.s32 %v1348, %v1350
    %v1352 = vrot.slane %v1299, %v1351
    %v1354 = vunpack.c.l.s4 1966171168
    %v1355 = vunpack.c.0.s8 %v1354
    %v1356 = vlaneseq
    %v1357 = vshrl.u32 %v1356, 7
    %v1358 = vsub.s32 %v1355, %v1357
    %v1359 = vrot.slane %v1345, %v1358
    %v1360 = vcombine.high %v1352, %v1352
    %v1361 = vcombine.high %v1359, %v1359
    %v1363 = vunpack.c.l.s4 1966171168
    %v1364 = vunpack.c.0.s8 %v1363
    %v1365 = vlaneseq
    %v1366 = vshrl.u32 %v1365, 7
    %v1367 = vsub.s32 %v1364, %v1366
    %v1368 = vrot.slane %v1352, %v1367
    %v1370 = vunpack.c.l.s4 1966171168
    %v1371 = vunpack.c.0.s8 %v1370
    %v1372 = vlaneseq
    %v1373 = vshrl.u32 %v1372, 7
    %v1374 = vsub.s32 %v1371, %v1373
    %v1375 = vrot.slane %v1359, %v1374
    %v1377 = vunpack.c.l.s4 1966171168
    %v1378 = vunpack.c.0.s8 %v1377
    %v1379 = vlaneseq
    %v1380 = vshrl.u32 %v1379, 7
    %v1381 = vsub.s32 %v1378, %v1380
    %v1382 = vrot.slane %v1360, %v1381
    %v1384 = vunpack.c.l.s4 1966171168
    %v1385 = vunpack.c.0.s8 %v1384
    %v1386 = vlaneseq
    %v1387 = vshrl.u32 %v1386, 7
    %v1388 = vsub.s32 %v1385, %v1387
    %v1389 = vrot.slane %v1361, %v1388
    %v1390 = vcombine.high %v1368, %v1368
    %v1391 = vcombine.high %v1382, %v1382
    %v1392 = vlaneseq
    %v1393 = vshrl.u32 %v1392, 7
    %v1394 = vsub.s32 0, %v1393
    %v1395 = vrot.slane %v1368, %v1394
    %v1396 = vlaneseq
    %v1397 = vshrl.u32 %v1396, 7
    %v1398 = vsub.s32 0, %v1397
    %v1399 = vrot.slane %v1382, %v1398
    %v1400 = vlaneseq
    %v1401 = vshrl.u32 %v1400, 7
    %v1402 = vsub.s32 0, %v1401
    %v1403 = vrot.slane %v1390, %v1402
    %v1404 = vlaneseq
    %v1405 = vshrl.u32 %v1404, 7
    %v1406 = vsub.s32 0, %v1405
    %v1407 = vrot.slane %v1391, %v1406
    %v1408 = vlaneseq
    %v1409 = vshrl.u32 %v1408, 7
    %v1410 = vsub.s32 0, %v1409
    %v1411 = vrot.slane %v1375, %v1410
    %v1412 = vlaneseq
    %v1413 = vshrl.u32 %v1412, 7
    %v1414 = vsub.s32 0, %v1413
    %v1415 = vrot.slane %v1389, %v1414
    %v1422 = vmul.f32 %v1308, %v1395
    %v1423 = vmul.f32 %v1315, %v1399
    %v1424 = vmul.f32 %v1322, %v1403
    %v1425 = vmul.f32 %v1329, %v1407
    %v1426 = vmul.f32 %v1336, %v1411
    %v1427 = vmul.f32 %v1343, %v1415
    %v1428 = vsel %vm331, %v1422, -inf
    %v1429 = vrot.slane %v1428, 4
    %v1430 = vmax.f32 %v1428, %v1429
    %v1431 = vrot.slane %v1430, 2
    %v1432 = vmax.f32 %v1430, %v1431
    %v1433 = vrot.slane %v1432, 1
    %v1434 = vmax.f32 %v1432, %v1433
    %v1435 = vsel %vm331, %v1423, -inf
    %v1436 = vrot.slane %v1435, 4
    %v1437 = vmax.f32 %v1435, %v1436
    %v1438 = vrot.slane %v1437, 2
    %v1439 = vmax.f32 %v1437, %v1438
    %v1440 = vrot.slane %v1439, 1
    %v1441 = vmax.f32 %v1439, %v1440
    %v1442 = vsel %vm331, %v1424, -inf
    %v1443 = vrot.slane %v1442, 4
    %v1444 = vmax.f32 %v1442, %v1443
    %v1445 = vrot.slane %v1444, 2
    %v1446 = vmax.f32 %v1444, %v1445
    %v1447 = vrot.slane %v1446, 1
    %v1448 = vmax.f32 %v1446, %v1447
    %v1449 = vsel %vm331, %v1425, -inf
    %v1450 = vrot.slane %v1449, 4
    %v1451 = vmax.f32 %v1449, %v1450
    %v1452 = vrot.slane %v1451, 2
    %v1453 = vmax.f32 %v1451, %v1452
    %v1454 = vrot.slane %v1453, 1
    %v1455 = vmax.f32 %v1453, %v1454
    %v1456 = vsel %vm331, %v1426, -inf
    %v1457 = vrot.slane %v1456, 4
    %v1458 = vmax.f32 %v1456, %v1457
    %v1459 = vrot.slane %v1458, 2
    %v1460 = vmax.f32 %v1458, %v1459
    %v1461 = vrot.slane %v1460, 1
    %v1462 = vmax.f32 %v1460, %v1461
    %v1463 = vsel %vm331, %v1427, -inf
    %v1464 = vrot.slane %v1463, 4
    %v1465 = vmax.f32 %v1463, %v1464
    %v1466 = vrot.slane %v1465, 2
    %v1467 = vmax.f32 %v1465, %v1466
    %v1468 = vrot.slane %v1467, 1
    %v1469 = vmax.f32 %v1467, %v1468
    %v1470 = vsub.f32 %v1422, %v1434
    %v1471 = vsub.f32 %v1423, %v1441
    %v1472 = vsub.f32 %v1424, %v1448
    %v1473 = vsub.f32 %v1425, %v1455
    %v1474 = vsub.f32 %v1426, %v1462
    %v1475 = vsub.f32 %v1427, %v1469
    %v1476 = vmul.f32 %v1470, 1.442695
    %v1477 = vpow.pop %v1476
    %v1478 = vmul.f32 %v1471, 1.442695
    %v1479 = vpow.pop %v1478
    %v1480 = vmul.f32 %v1472, 1.442695
    %v1481 = vpow.pop %v1480
    %v1482 = vmul.f32 %v1473, 1.442695
    %v1483 = vpow.pop %v1482
    %v1484 = vmul.f32 %v1474, 1.442695
    %v1485 = vpow.pop %v1484
    %v1486 = vmul.f32 %v1475, 1.442695
    %v1487 = vpow.pop %v1486
    %v1488 = vsel %vm331, %v1477, 0.0
    %v1489 = vrot.slane %v1488, 4
    %v1490 = vadd.f32 %v1488, %v1489
    %v1491 = vrot.slane %v1490, 2
    %v1492 = vadd.f32 %v1490, %v1491
    %v1493 = vrot.slane %v1492, 1
    %v1494 = vadd.f32 %v1492, %v1493
    %v1495 = vsel %vm331, %v1479, 0.0
    %v1496 = vrot.slane %v1495, 4
    %v1497 = vadd.f32 %v1495, %v1496
    %v1498 = vrot.slane %v1497, 2
    %v1499 = vadd.f32 %v1497, %v1498
    %v1500 = vrot.slane %v1499, 1
    %v1501 = vadd.f32 %v1499, %v1500
    %v1502 = vsel %vm331, %v1481, 0.0
    %v1503 = vrot.slane %v1502, 4
    %v1504 = vadd.f32 %v1502, %v1503
    %v1505 = vrot.slane %v1504, 2
    %v1506 = vadd.f32 %v1504, %v1505
    %v1507 = vrot.slane %v1506, 1
    %v1508 = vadd.f32 %v1506, %v1507
    %v1509 = vsel %vm331, %v1483, 0.0
    %v1510 = vrot.slane %v1509, 4
    %v1511 = vadd.f32 %v1509, %v1510
    %v1512 = vrot.slane %v1511, 2
    %v1513 = vadd.f32 %v1511, %v1512
    %v1514 = vrot.slane %v1513, 1
    %v1515 = vadd.f32 %v1513, %v1514
    %v1516 = vsel %vm331, %v1485, 0.0
    %v1517 = vrot.slane %v1516, 4
    %v1518 = vadd.f32 %v1516, %v1517
    %v1519 = vrot.slane %v1518, 2
    %v1520 = vadd.f32 %v1518, %v1519
    %v1521 = vrot.slane %v1520, 1
    %v1522 = vadd.f32 %v1520, %v1521
    %v1523 = vsel %vm331, %v1487, 0.0
    %v1524 = vrot.slane %v1523, 4
    %v1525 = vadd.f32 %v1523, %v1524
    %v1526 = vrot.slane %v1525, 2
    %v1527 = vadd.f32 %v1525, %v1526
    %v1528 = vrot.slane %v1527, 1
    %v1529 = vadd.f32 %v1527, %v1528
    %v1530 = vlaneseq
    %v1531 = vshrl.u32 %v1530, 7
    %v1532 = vsub.s32 4, %v1531
    %v1533 = vrot.slane %v1300, %v1532
    %1535 = vbcast.lane.b32.xlu0 %v1533, 256
    %v1536 = vpop.permute.xlu0 %1535
    %v1537 = vlaneseq
    %v1538 = vshrl.u32 %v1537, 7
    %v1539 = vsub.s32 5, %v1538
    %v1540 = vrot.slane %v1300, %v1539
    %1542 = vbcast.lane.b32.xlu0 %v1540, 256
    %v1543 = vpop.permute.xlu0 %1542
    %v1544 = vlaneseq
    %v1545 = vshrl.u32 %v1544, 7
    %v1546 = vsub.s32 6, %v1545
    %v1547 = vrot.slane %v1300, %v1546
    %1549 = vbcast.lane.b32.xlu0 %v1547, 256
    %v1550 = vpop.permute.xlu0 %1549
    %v1551 = vlaneseq
    %v1552 = vshrl.u32 %v1551, 7
    %v1553 = vsub.s32 7, %v1552
    %v1554 = vrot.slane %v1300, %v1553
    %1556 = vbcast.lane.b32.xlu0 %v1554, 256
    %v1557 = vpop.permute.xlu0 %1556
    %v1558 = vlaneseq
    %v1559 = vshrl.u32 %v1558, 7
    %v1560 = vsub.s32 0, %v1559
    %v1561 = vrot.slane %v1301, %v1560
    %1563 = vbcast.lane.b32.xlu0 %v1561, 256
    %v1564 = vpop.permute.xlu0 %1563
    %v1565 = vlaneseq
    %v1566 = vshrl.u32 %v1565, 7
    %v1567 = vsub.s32 1, %v1566
    %v1568 = vrot.slane %v1301, %v1567
    %1570 = vbcast.lane.b32.xlu0 %v1568, 256
    %v1571 = vpop.permute.xlu0 %1570
    %v1572 = vmul.f32 %v1477, %v1536
    %v1573 = vmul.f32 %v1479, %v1543
    %v1574 = vmul.f32 %v1481, %v1550
    %v1575 = vmul.f32 %v1483, %v1557
    %v1576 = vmul.f32 %v1485, %v1564
    %v1577 = vmul.f32 %v1487, %v1571
    %v1578 = vsel %vm331, %v1572, 0.0
    %v1579 = vrot.slane %v1578, 4
    %v1580 = vadd.f32 %v1578, %v1579
    %v1581 = vrot.slane %v1580, 2
    %v1582 = vadd.f32 %v1580, %v1581
    %v1583 = vrot.slane %v1582, 1
    %v1584 = vadd.f32 %v1582, %v1583
    %v1585 = vsel %vm331, %v1573, 0.0
    %v1586 = vrot.slane %v1585, 4
    %v1587 = vadd.f32 %v1585, %v1586
    %v1588 = vrot.slane %v1587, 2
    %v1589 = vadd.f32 %v1587, %v1588
    %v1590 = vrot.slane %v1589, 1
    %v1591 = vadd.f32 %v1589, %v1590
    %v1592 = vsel %vm331, %v1574, 0.0
    %v1593 = vrot.slane %v1592, 4
    %v1594 = vadd.f32 %v1592, %v1593
    %v1595 = vrot.slane %v1594, 2
    %v1596 = vadd.f32 %v1594, %v1595
    %v1597 = vrot.slane %v1596, 1
    %v1598 = vadd.f32 %v1596, %v1597
    %v1599 = vsel %vm331, %v1575, 0.0
    %v1600 = vrot.slane %v1599, 4
    %v1601 = vadd.f32 %v1599, %v1600
    %v1602 = vrot.slane %v1601, 2
    %v1603 = vadd.f32 %v1601, %v1602
    %v1604 = vrot.slane %v1603, 1
    %v1605 = vadd.f32 %v1603, %v1604
    %v1606 = vsel %vm331, %v1576, 0.0
    %v1607 = vrot.slane %v1606, 4
    %v1608 = vadd.f32 %v1606, %v1607
    %v1609 = vrot.slane %v1608, 2
    %v1610 = vadd.f32 %v1608, %v1609
    %v1611 = vrot.slane %v1610, 1
    %v1612 = vadd.f32 %v1610, %v1611
    %v1613 = vsel %vm331, %v1577, 0.0
    %v1614 = vrot.slane %v1613, 4
    %v1615 = vadd.f32 %v1613, %v1614
    %v1616 = vrot.slane %v1615, 2
    %v1617 = vadd.f32 %v1615, %v1616
    %v1618 = vrot.slane %v1617, 1
    %v1619 = vadd.f32 %v1617, %v1618
    %v1620 = vrcp.pop %v1494
    %v1621 = vrcp.pop %v1501
    %v1622 = vrcp.pop %v1508
    %v1623 = vrcp.pop %v1515
    %v1624 = vrcp.pop %v1522
    %v1625 = vrcp.pop %v1529
    %v1626 = vmul.f32 %v1494, %v1620
    %v1627 = vmul.f32 %v1501, %v1621
    %v1628 = vmul.f32 %v1508, %v1622
    %v1629 = vmul.f32 %v1515, %v1623
    %v1630 = vmul.f32 %v1522, %v1624
    %v1631 = vmul.f32 %v1529, %v1625
    %v1632 = vsub.f32 2.0, %v1626
    %v1633 = vsub.f32 2.0, %v1627
    %v1634 = vsub.f32 2.0, %v1628
    %v1635 = vsub.f32 2.0, %v1629
    %v1636 = vsub.f32 2.0, %v1630
    %v1637 = vsub.f32 2.0, %v1631
    %v1638 = vmul.f32 %v1620, %v1632
    %v1639 = vmul.f32 %v1621, %v1633
    %v1640 = vmul.f32 %v1622, %v1634
    %v1641 = vmul.f32 %v1623, %v1635
    %v1642 = vmul.f32 %v1624, %v1636
    %v1643 = vmul.f32 %v1625, %v1637
    %v1644 = vmul.f32 %v1584, %v1638
    %v1645 = vmul.f32 %v1591, %v1639
    %v1646 = vmul.f32 %v1598, %v1640
    %v1647 = vmul.f32 %v1605, %v1641
    %v1648 = vmul.f32 %v1612, %v1642
    %v1649 = vmul.f32 %v1619, %v1643
    %v1650 = vld [vmem:[#allocation5] sm:$0x3f]
    %1652 = vset.pattern.permute.xlu0 104
    %1653 = vperm.xlu0 %1652, %v1650
    %v1654 = vpop.permute.xlu0 %1653
    %v1656 = vmul.f32 %v1654, %v1644
    %1657 = vset.pattern.permute.xlu0 112
    %1658 = vperm.xlu0 %1657, %v1650
    %v1659 = vpop.permute.xlu0 %1658
    %v1661 = vadd.f32 %v1659, %v1656
    %1662 = vset.pattern.permute.xlu0 105
    %1663 = vperm.xlu0 %1662, %v1650
    %v1664 = vpop.permute.xlu0 %1663
    %v1666 = vmul.f32 %v1664, %v1645
    %v1667 = vadd.f32 %v1661, %v1666
    %1668 = vset.pattern.permute.xlu0 106
    %1669 = vperm.xlu0 %1668, %v1650
    %v1670 = vpop.permute.xlu0 %1669
    %v1672 = vmul.f32 %v1670, %v1646
    %v1673 = vadd.f32 %v1667, %v1672
    %1674 = vset.pattern.permute.xlu0 107
    %1675 = vperm.xlu0 %1674, %v1650
    %v1676 = vpop.permute.xlu0 %1675
    %v1678 = vmul.f32 %v1676, %v1647
    %v1679 = vadd.f32 %v1673, %v1678
    %1680 = vset.pattern.permute.xlu0 108
    %1681 = vperm.xlu0 %1680, %v1650
    %v1682 = vpop.permute.xlu0 %1681
    %v1684 = vmul.f32 %v1682, %v1648
    %v1685 = vadd.f32 %v1679, %v1684
    %1686 = vset.pattern.permute.xlu0 109
    %1687 = vperm.xlu0 %1686, %v1650
    %v1688 = vpop.permute.xlu0 %1687
    %v1690 = vmul.f32 %v1688, %v1649
    %v1691 = vadd.f32 %v1685, %v1690
    %v1692 = vadd.f32 %v1151, %v1691
    %v1693 = vsel %vm597, %v1692, 0.0
    %v1694 = vrot.slane %v1693, 4
    %v1695 = vadd.f32 %v1693, %v1694
    %v1696 = vrot.slane %v1695, 2
    %v1697 = vadd.f32 %v1695, %v1696
    %v1698 = vrot.slane %v1697, 1
    %v1699 = vadd.f32 %v1697, %v1698
    %v1700 = vmul.f32 %v1699, %v605
    %v1701 = vsub.f32 %v1692, %v1700
    %v1702 = vmul.f32 %v1701, %v1701
    %v1703 = vsel %vm597, %v1702, 0.0
    %v1704 = vrot.slane %v1703, 4
    %v1705 = vadd.f32 %v1703, %v1704
    %v1706 = vrot.slane %v1705, 2
    %v1707 = vadd.f32 %v1705, %v1706
    %v1708 = vrot.slane %v1707, 1
    %v1709 = vadd.f32 %v1707, %v1708
    %v1710 = vmul.f32 %v1709, %v605
    %v1711 = vadd.f32 %v1710, 1e-05
    %v1712 = vrsqrt.pop %v1711
    %v1713 = vmul.f32 %v1701, %v1712
    %v1714 = vld [vmem:[#allocation5 + $0x8] sm:$0x3f]
    %1716 = vset.pattern.permute.xlu0 48
    %1717 = vperm.xlu0 %1716, %v1714
    %v1718 = vpop.permute.xlu0 %1717
    %v1720 = vmul.f32 %v1713, %v1718
    %1721 = vset.pattern.permute.xlu0 56
    %1722 = vperm.xlu0 %1721, %v1714
    %v1723 = vpop.permute.xlu0 %1722
    %v1725 = vadd.f32 %v1720, %v1723
    %v1726 = vld [vmem:[#allocation5] sm:$0xff]
    %v1727 = vld [vmem:[#allocation5 + $0x8] sm:$0xff]
    %v1728 = vld [vmem:[#allocation5 + $0x10] sm:$0xff]
    %v1729 = vld [vmem:[#allocation5 + $0x18] sm:$0xff]
    %v1730 = vld [vmem:[#allocation5 + $0x20] sm:$0xff]
    %v1731 = vld [vmem:[#allocation5 + $0x28] sm:$0xff]
    %v1732 = vld [vmem:[#allocation5 + $0x30] sm:$0xff]
    %v1733 = vld [vmem:[#allocation5 + $0x38] sm:$0xff]
    %v1734 = vld [vmem:[#allocation5 + $0x40] sm:$0xff]
    %v1735 = vld [vmem:[#allocation5 + $0x48] sm:$0xff]
    %1737 = vset.pattern.permute.xlu0 120
    %1738 = vperm.xlu0 %1737, %v1726
    %v1739 = vpop.permute.xlu0 %1738
    %1742 = vset.pattern.permute.xlu0 120
    %1743 = vperm.xlu0 %1742, %v1727
    %v1744 = vpop.permute.xlu0 %1743
    %1747 = vset.pattern.permute.xlu0 120
    %1748 = vperm.xlu0 %1747, %v1728
    %v1749 = vpop.permute.xlu0 %1748
    %1752 = vset.pattern.permute.xlu0 120
    %1753 = vperm.xlu0 %1752, %v1729
    %v1754 = vpop.permute.xlu0 %1753
    %1757 = vset.pattern.permute.xlu0 120
    %1758 = vperm.xlu0 %1757, %v1730
    %v1759 = vpop.permute.xlu0 %1758
    %1762 = vset.pattern.permute.xlu0 120
    %1763 = vperm.xlu0 %1762, %v1731
    %v1764 = vpop.permute.xlu0 %1763
    %1767 = vset.pattern.permute.xlu0 120
    %1768 = vperm.xlu0 %1767, %v1732
    %v1769 = vpop.permute.xlu0 %1768
    %1772 = vset.pattern.permute.xlu0 120
    %1773 = vperm.xlu0 %1772, %v1733
    %v1774 = vpop.permute.xlu0 %1773
    %1777 = vset.pattern.permute.xlu0 120
    %1778 = vperm.xlu0 %1777, %v1734
    %v1779 = vpop.permute.xlu0 %1778
    %v1781 = vlaneseq
    %v1782 = vshrl.u32 %v1781, 7
    %v1783 = vsub.s32 0, %v1782
    %v1784 = vrot.slane %v1725, %v1783
    %v1785 = vmul.f32 %v1739, %v1784
    %v1786 = vmul.f32 %v1744, %v1784
    %v1787 = vmul.f32 %v1749, %v1784
    %v1788 = vmul.f32 %v1754, %v1784
    %v1789 = vmul.f32 %v1759, %v1784
    %v1790 = vmul.f32 %v1764, %v1784
    %v1791 = vmul.f32 %v1769, %v1784
    %v1792 = vmul.f32 %v1774, %v1784
    %v1793 = vmul.f32 %v1779, %v1784
    %1794 = vset.pattern.permute.xlu0 16
    %1795 = vperm.xlu0 %1794, %v1727
    %v1796 = vpop.permute.xlu0 %1795
    %1798 = vset.pattern.permute.xlu0 16
    %1799 = vperm.xlu0 %1798, %v1728
    %v1800 = vpop.permute.xlu0 %1799
    %1802 = vset.pattern.permute.xlu0 16
    %1803 = vperm.xlu0 %1802, %v1729
    %v1804 = vpop.permute.xlu0 %1803
    %1806 = vset.pattern.permute.xlu0 16
    %1807 = vperm.xlu0 %1806, %v1730
    %v1808 = vpop.permute.xlu0 %1807
    %1810 = vset.pattern.permute.xlu0 16
    %1811 = vperm.xlu0 %1810, %v1731
    %v1812 = vpop.permute.xlu0 %1811
    %1814 = vset.pattern.permute.xlu0 16
    %1815 = vperm.xlu0 %1814, %v1732
    %v1816 = vpop.permute.xlu0 %1815
    %1818 = vset.pattern.permute.xlu0 16
    %1819 = vperm.xlu0 %1818, %v1733
    %v1820 = vpop.permute.xlu0 %1819
    %1822 = vset.pattern.permute.xlu0 16
    %1823 = vperm.xlu0 %1822, %v1734
    %v1824 = vpop.permute.xlu0 %1823
    %1827 = vset.pattern.permute.xlu0 16
    %1828 = vperm.xlu0 %1827, %v1735
    %v1829 = vpop.permute.xlu0 %1828
    %v1831 = vadd.f32 %v1796, %v1785
    %v1832 = vadd.f32 %v1800, %v1786
    %v1833 = vadd.f32 %v1804, %v1787
    %v1834 = vadd.f32 %v1808, %v1788
    %v1835 = vadd.f32 %v1812, %v1789
    %v1836 = vadd.f32 %v1816, %v1790
    %v1837 = vadd.f32 %v1820, %v1791
    %v1838 = vadd.f32 %v1824, %v1792
    %v1839 = vadd.f32 %v1829, %v1793
    %1840 = vset.pattern.permute.xlu0 121
    %1841 = vperm.xlu0 %1840, %v1726
    %v1842 = vpop.permute.xlu0 %1841
    %1844 = vset.pattern.permute.xlu0 121
    %1845 = vperm.xlu0 %1844, %v1727
    %v1846 = vpop.permute.xlu0 %1845
    %1848 = vset.pattern.permute.xlu0 121
    %1849 = vperm.xlu0 %1848, %v1728
    %v1850 = vpop.permute.xlu0 %1849
    %1852 = vset.pattern.permute.xlu0 121
    %1853 = vperm.xlu0 %1852, %v1729
    %v1854 = vpop.permute.xlu0 %1853
    %1856 = vset.pattern.permute.xlu0 121
    %1857 = vperm.xlu0 %1856, %v1730
    %v1858 = vpop.permute.xlu0 %1857
    %1860 = vset.pattern.permute.xlu0 121
    %1861 = vperm.xlu0 %1860, %v1731
    %v1862 = vpop.permute.xlu0 %1861
    %1864 = vset.pattern.permute.xlu0 121
    %1865 = vperm.xlu0 %1864, %v1732
    %v1866 = vpop.permute.xlu0 %1865
    %1868 = vset.pattern.permute.xlu0 121
    %1869 = vperm.xlu0 %1868, %v1733
    %v1870 = vpop.permute.xlu0 %1869
    %1872 = vset.pattern.permute.xlu0 121
    %1873 = vperm.xlu0 %1872, %v1734
    %v1874 = vpop.permute.xlu0 %1873
    %v1876 = vlaneseq
    %v1877 = vshrl.u32 %v1876, 7
    %v1878 = vsub.s32 1, %v1877
    %v1879 = vrot.slane %v1725, %v1878
    %v1880 = vmul.f32 %v1842, %v1879
    %v1881 = vmul.f32 %v1846, %v1879
    %v1882 = vmul.f32 %v1850, %v1879
    %v1883 = vmul.f32 %v1854, %v1879
    %v1884 = vmul.f32 %v1858, %v1879
    %v1885 = vmul.f32 %v1862, %v1879
    %v1886 = vmul.f32 %v1866, %v1879
    %v1887 = vmul.f32 %v1870, %v1879
    %v1888 = vmul.f32 %v1874, %v1879
    %v1889 = vadd.f32 %v1831, %v1880
    %v1890 = vadd.f32 %v1832, %v1881
    %v1891 = vadd.f32 %v1833, %v1882
    %v1892 = vadd.f32 %v1834, %v1883
    %v1893 = vadd.f32 %v1835, %v1884
    %v1894 = vadd.f32 %v1836, %v1885
    %v1895 = vadd.f32 %v1837, %v1886
    %v1896 = vadd.f32 %v1838, %v1887
    %v1897 = vadd.f32 %v1839, %v1888
    %1898 = vset.pattern.permute.xlu0 122
    %1899 = vperm.xlu0 %1898, %v1726
    %v1900 = vpop.permute.xlu0 %1899
    %1902 = vset.pattern.permute.xlu0 122
    %1903 = vperm.xlu0 %1902, %v1727
    %v1904 = vpop.permute.xlu0 %1903
    %1906 = vset.pattern.permute.xlu0 122
    %1907 = vperm.xlu0 %1906, %v1728
    %v1908 = vpop.permute.xlu0 %1907
    %1910 = vset.pattern.permute.xlu0 122
    %1911 = vperm.xlu0 %1910, %v1729
    %v1912 = vpop.permute.xlu0 %1911
    %1914 = vset.pattern.permute.xlu0 122
    %1915 = vperm.xlu0 %1914, %v1730
    %v1916 = vpop.permute.xlu0 %1915
    %1918 = vset.pattern.permute.xlu0 122
    %1919 = vperm.xlu0 %1918, %v1731
    %v1920 = vpop.permute.xlu0 %1919
    %1922 = vset.pattern.permute.xlu0 122
    %1923 = vperm.xlu0 %1922, %v1732
    %v1924 = vpop.permute.xlu0 %1923
    %1926 = vset.pattern.permute.xlu0 122
    %1927 = vperm.xlu0 %1926, %v1733
    %v1928 = vpop.permute.xlu0 %1927
    %1930 = vset.pattern.permute.xlu0 122
    %1931 = vperm.xlu0 %1930, %v1734
    %v1932 = vpop.permute.xlu0 %1931
    %v1934 = vlaneseq
    %v1935 = vshrl.u32 %v1934, 7
    %v1936 = vsub.s32 2, %v1935
    %v1937 = vrot.slane %v1725, %v1936
    %v1938 = vmul.f32 %v1900, %v1937
    %v1939 = vmul.f32 %v1904, %v1937
    %v1940 = vmul.f32 %v1908, %v1937
    %v1941 = vmul.f32 %v1912, %v1937
    %v1942 = vmul.f32 %v1916, %v1937
    %v1943 = vmul.f32 %v1920, %v1937
    %v1944 = vmul.f32 %v1924, %v1937
    %v1945 = vmul.f32 %v1928, %v1937
    %v1946 = vmul.f32 %v1932, %v1937
    %v1947 = vadd.f32 %v1889, %v1938
    %v1948 = vadd.f32 %v1890, %v1939
    %v1949 = vadd.f32 %v1891, %v1940
    %v1950 = vadd.f32 %v1892, %v1941
    %v1951 = vadd.f32 %v1893, %v1942
    %v1952 = vadd.f32 %v1894, %v1943
    %v1953 = vadd.f32 %v1895, %v1944
    %v1954 = vadd.f32 %v1896, %v1945
    %v1955 = vadd.f32 %v1897, %v1946
    %1956 = vset.pattern.permute.xlu0 123
    %1957 = vperm.xlu0 %1956, %v1726
    %v1958 = vpop.permute.xlu0 %1957
    %1960 = vset.pattern.permute.xlu0 123
    %1961 = vperm.xlu0 %1960, %v1727
    %v1962 = vpop.permute.xlu0 %1961
    %1964 = vset.pattern.permute.xlu0 123
    %1965 = vperm.xlu0 %1964, %v1728
    %v1966 = vpop.permute.xlu0 %1965
    %1968 = vset.pattern.permute.xlu0 123
    %1969 = vperm.xlu0 %1968, %v1729
    %v1970 = vpop.permute.xlu0 %1969
    %1972 = vset.pattern.permute.xlu0 123
    %1973 = vperm.xlu0 %1972, %v1730
    %v1974 = vpop.permute.xlu0 %1973
    %1976 = vset.pattern.permute.xlu0 123
    %1977 = vperm.xlu0 %1976, %v1731
    %v1978 = vpop.permute.xlu0 %1977
    %1980 = vset.pattern.permute.xlu0 123
    %1981 = vperm.xlu0 %1980, %v1732
    %v1982 = vpop.permute.xlu0 %1981
    %1984 = vset.pattern.permute.xlu0 123
    %1985 = vperm.xlu0 %1984, %v1733
    %v1986 = vpop.permute.xlu0 %1985
    %1988 = vset.pattern.permute.xlu0 123
    %1989 = vperm.xlu0 %1988, %v1734
    %v1990 = vpop.permute.xlu0 %1989
    %v1992 = vlaneseq
    %v1993 = vshrl.u32 %v1992, 7
    %v1994 = vsub.s32 3, %v1993
    %v1995 = vrot.slane %v1725, %v1994
    %v1996 = vmul.f32 %v1958, %v1995
    %v1997 = vmul.f32 %v1962, %v1995
    %v1998 = vmul.f32 %v1966, %v1995
    %v1999 = vmul.f32 %v1970, %v1995
    %v2000 = vmul.f32 %v1974, %v1995
    %v2001 = vmul.f32 %v1978, %v1995
    %v2002 = vmul.f32 %v1982, %v1995
    %v2003 = vmul.f32 %v1986, %v1995
    %v2004 = vmul.f32 %v1990, %v1995
    %v2005 = vadd.f32 %v1947, %v1996
    %v2006 = vadd.f32 %v1948, %v1997
    %v2007 = vadd.f32 %v1949, %v1998
    %v2008 = vadd.f32 %v1950, %v1999
    %v2009 = vadd.f32 %v1951, %v2000
    %v2010 = vadd.f32 %v1952, %v2001
    %v2011 = vadd.f32 %v1953, %v2002
    %v2012 = vadd.f32 %v1954, %v2003
    %v2013 = vadd.f32 %v1955, %v2004
    %2014 = vset.pattern.permute.xlu0 124
    %2015 = vperm.xlu0 %2014, %v1726
    %v2016 = vpop.permute.xlu0 %2015
    %2018 = vset.pattern.permute.xlu0 124
    %2019 = vperm.xlu0 %2018, %v1727
    %v2020 = vpop.permute.xlu0 %2019
    %2022 = vset.pattern.permute.xlu0 124
    %2023 = vperm.xlu0 %2022, %v1728
    %v2024 = vpop.permute.xlu0 %2023
    %2026 = vset.pattern.permute.xlu0 124
    %2027 = vperm.xlu0 %2026, %v1729
    %v2028 = vpop.permute.xlu0 %2027
    %2030 = vset.pattern.permute.xlu0 124
    %2031 = vperm.xlu0 %2030, %v1730
    %v2032 = vpop.permute.xlu0 %2031
    %2034 = vset.pattern.permute.xlu0 124
    %2035 = vperm.xlu0 %2034, %v1731
    %v2036 = vpop.permute.xlu0 %2035
    %2038 = vset.pattern.permute.xlu0 124
    %2039 = vperm.xlu0 %2038, %v1732
    %v2040 = vpop.permute.xlu0 %2039
    %2042 = vset.pattern.permute.xlu0 124
    %2043 = vperm.xlu0 %2042, %v1733
    %v2044 = vpop.permute.xlu0 %2043
    %2046 = vset.pattern.permute.xlu0 124
    %2047 = vperm.xlu0 %2046, %v1734
    %v2048 = vpop.permute.xlu0 %2047
    %v2050 = vlaneseq
    %v2051 = vshrl.u32 %v2050, 7
    %v2052 = vsub.s32 4, %v2051
    %v2053 = vrot.slane %v1725, %v2052
    %v2054 = vmul.f32 %v2016, %v2053
    %v2055 = vmul.f32 %v2020, %v2053
    %v2056 = vmul.f32 %v2024, %v2053
    %v2057 = vmul.f32 %v2028, %v2053
    %v2058 = vmul.f32 %v2032, %v2053
    %v2059 = vmul.f32 %v2036, %v2053
    %v2060 = vmul.f32 %v2040, %v2053
    %v2061 = vmul.f32 %v2044, %v2053
    %v2062 = vmul.f32 %v2048, %v2053
    %v2063 = vadd.f32 %v2005, %v2054
    %v2064 = vadd.f32 %v2006, %v2055
    %v2065 = vadd.f32 %v2007, %v2056
    %v2066 = vadd.f32 %v2008, %v2057
    %v2067 = vadd.f32 %v2009, %v2058
    %v2068 = vadd.f32 %v2010, %v2059
    %v2069 = vadd.f32 %v2011, %v2060
    %v2070 = vadd.f32 %v2012, %v2061
    %v2071 = vadd.f32 %v2013, %v2062
    %2072 = vset.pattern.permute.xlu0 125
    %2073 = vperm.xlu0 %2072, %v1726
    %v2074 = vpop.permute.xlu0 %2073
    %2076 = vset.pattern.permute.xlu0 125
    %2077 = vperm.xlu0 %2076, %v1727
    %v2078 = vpop.permute.xlu0 %2077
    %2080 = vset.pattern.permute.xlu0 125
    %2081 = vperm.xlu0 %2080, %v1728
    %v2082 = vpop.permute.xlu0 %2081
    %2084 = vset.pattern.permute.xlu0 125
    %2085 = vperm.xlu0 %2084, %v1729
    %v2086 = vpop.permute.xlu0 %2085
    %2088 = vset.pattern.permute.xlu0 125
    %2089 = vperm.xlu0 %2088, %v1730
    %v2090 = vpop.permute.xlu0 %2089
    %2092 = vset.pattern.permute.xlu0 125
    %2093 = vperm.xlu0 %2092, %v1731
    %v2094 = vpop.permute.xlu0 %2093
    %2096 = vset.pattern.permute.xlu0 125
    %2097 = vperm.xlu0 %2096, %v1732
    %v2098 = vpop.permute.xlu0 %2097
    %2100 = vset.pattern.permute.xlu0 125
    %2101 = vperm.xlu0 %2100, %v1733
    %v2102 = vpop.permute.xlu0 %2101
    %2104 = vset.pattern.permute.xlu0 125
    %2105 = vperm.xlu0 %2104, %v1734
    %v2106 = vpop.permute.xlu0 %2105
    %v2108 = vlaneseq
    %v2109 = vshrl.u32 %v2108, 7
    %v2110 = vsub.s32 5, %v2109
    %v2111 = vrot.slane %v1725, %v2110
    %v2112 = vmul.f32 %v2074, %v2111
    %v2113 = vmul.f32 %v2078, %v2111
    %v2114 = vmul.f32 %v2082, %v2111
    %v2115 = vmul.f32 %v2086, %v2111
    %v2116 = vmul.f32 %v2090, %v2111
    %v2117 = vmul.f32 %v2094, %v2111
    %v2118 = vmul.f32 %v2098, %v2111
    %v2119 = vmul.f32 %v2102, %v2111
    %v2120 = vmul.f32 %v2106, %v2111
    %v2121 = vadd.f32 %v2063, %v2112
    %v2122 = vadd.f32 %v2064, %v2113
    %v2123 = vadd.f32 %v2065, %v2114
    %v2124 = vadd.f32 %v2066, %v2115
    %v2125 = vadd.f32 %v2067, %v2116
    %v2126 = vadd.f32 %v2068, %v2117
    %v2127 = vadd.f32 %v2069, %v2118
    %v2128 = vadd.f32 %v2070, %v2119
    %v2129 = vadd.f32 %v2071, %v2120
    %v2130 = vmax.f32 %v2121, 0.0
    %v2131 = vmax.f32 %v2122, 0.0
    %v2132 = vmax.f32 %v2123, 0.0
    %v2133 = vmax.f32 %v2124, 0.0
    %v2134 = vmax.f32 %v2125, 0.0
    %v2135 = vmax.f32 %v2126, 0.0
    %v2136 = vmax.f32 %v2127, 0.0
    %v2137 = vmax.f32 %v2128, 0.0
    %v2138 = vmax.f32 %v2129, 0.0
    %v2139 = vld [vmem:[#allocation7 + $0x8] sm:$0x3f]
    %2140 = vset.pattern.permute.xlu0 24
    %2141 = vperm.xlu0 %2140, %v1714
    %v2142 = vpop.permute.xlu0 %2141
    %v2145 = vsel %vm1046, %v2139, 0
    %2147 = vmatprep.subr.mxu0 0.0
    %2148 = vmatpush1.msra.mxu0 %v2130
    %2149 = vmatprep.subr.mxu0 0.0
    %2150 = vmatpush1.msra.mxu0 %v2131
    %2151 = vmatprep.subr.mxu0 0.0
    %2152 = vmatpush1.msra.mxu0 %v2132
    %2153 = vmatprep.subr.mxu0 0.0
    %2154 = vmatpush1.msra.mxu0 %v2133
    %2155 = vmatprep.subr.mxu0 0.0
    %2156 = vmatpush1.msra.mxu0 %v2134
    %2157 = vmatprep.subr.mxu0 0.0
    %2158 = vmatpush1.msra.mxu0 %v2135
    %2159 = vmatprep.subr.mxu0 0.0
    %2160 = vmatpush1.msra.mxu0 %v2136
    %2161 = vmatprep.subr.mxu0 0.0
    %2162 = vmatpush1.msra.mxu0 %v2137
    %2163 = vmatprep.subr.mxu0 0.0
    %2164 = vmatpush1.msra.mxu0 %v2138
    %2165 = vmatprep.subr.mxu0 0.0
    %2166 = vmatpush1.msra.mxu0 0.0
    %2167 = vmatprep.subr.mxu0 0.0
    %2168 = vmatpush1.msra.mxu0 0.0
    %2169 = vmatprep.subr.mxu0 0.0
    %2170 = vmatpush1.msra.mxu0 0.0
    %2171 = vmatprep.subr.mxu0 0.0
    %2172 = vmatpush1.msra.mxu0 0.0
    %2173 = vmatprep.subr.mxu0 0.0
    %2174 = vmatpush1.msra.mxu0 0.0
    %2175 = vmatprep.subr.mxu0 0.0
    %2176 = vmatpush1.msra.mxu0 0.0
    %2177 = vmatprep.subr.mxu0 0.0
    %2178 = vmatpush1.msra.mxu0 0.0
    %2179 = vmatprep.subr.mxu0 0.0
    %2180 = vmatpush1.msra.mxu0 0.0
    %2181 = vmatprep.subr.mxu0 0.0
    %2182 = vmatpush1.msra.mxu0 0.0
    %2183 = vmatprep.subr.mxu0 0.0
    %2184 = vmatpush1.msra.mxu0 0.0
    %2185 = vmatprep.subr.mxu0 0.0
    %2186 = vmatpush1.msra.mxu0 0.0
    %2187 = vmatprep.subr.mxu0 0.0
    %2188 = vmatpush1.msra.mxu0 0.0
    %2189 = vmatprep.subr.mxu0 0.0
    %2190 = vmatpush1.msra.mxu0 0.0
    %2191 = vmatprep.subr.mxu0 0.0
    %2192 = vmatpush1.msra.mxu0 0.0
    %2193 = vmatprep.subr.mxu0 0.0
    %2194 = vmatpush1.msra.mxu0 0.0
    %2195 = vmatprep.subr.mxu0 0.0
    %2196 = vmatpush1.msra.mxu0 0.0
    %2197 = vmatprep.subr.mxu0 0.0
    %2198 = vmatpush1.msra.mxu0 0.0
    %2199 = vmatprep.subr.mxu0 0.0
    %2200 = vmatpush1.msra.mxu0 0.0
    %2201 = vmatprep.subr.mxu0 0.0
    %2202 = vmatpush1.msra.mxu0 0.0
    %2203 = vmatprep.subr.mxu0 0.0
    %2204 = vmatpush1.msra.mxu0 0.0
    %2205 = vmatprep.subr.mxu0 0.0
    %2206 = vmatpush1.msra.mxu0 0.0
    %2207 = vmatprep.subr.mxu0 0.0
    %2208 = vmatpush1.msra.mxu0 0.0
    %2209 = vmatprep.subr.mxu0 0.0
    %2210 = vmatpush1.msra.mxu0 0.0
    %2211 = vmatprep.mubr.f32.mxu0 0.0
    %2212 = vmatmul.mubr.f32.gmra.mrb[0].mxu0 %v2145
    %v2213 = vpop.f32.mrb[0].mxu0
    %v2214 = vadd.f32 %v2142, %v2213
    %v2215 = vpop.f32.mrb[0].mxu0
    %2216 = vdwg.mxu0
    %v2217 = vadd.f32 %v1725, %v2214
    %v2218 = vsel %vm597, %v2217, 0.0
    %v2219 = vrot.slane %v2218, 4
    %v2220 = vadd.f32 %v2218, %v2219
    %v2221 = vrot.slane %v2220, 2
    %v2222 = vadd.f32 %v2220, %v2221
    %v2223 = vrot.slane %v2222, 1
    %v2224 = vadd.f32 %v2222, %v2223
    %v2225 = vmul.f32 %v2224, %v605
    %v2226 = vsub.f32 %v2217, %v2225
    %v2227 = vmul.f32 %v2226, %v2226
    %v2228 = vsel %vm597, %v2227, 0.0
    %v2229 = vrot.slane %v2228, 4
    %v2230 = vadd.f32 %v2228, %v2229
    %v2231 = vrot.slane %v2230, 2
    %v2232 = vadd.f32 %v2230, %v2231
    %v2233 = vrot.slane %v2232, 1
    %v2234 = vadd.f32 %v2232, %v2233
    %v2235 = vmul.f32 %v2234, %v605
    %v2236 = vadd.f32 %v2235, 1e-05
    %v2237 = vrsqrt.pop %v2236
    %v2238 = vmul.f32 %v2226, %v2237
    %2239 = vset.pattern.permute.xlu0 64
    %2240 = vperm.xlu0 %2239, %v1714
    %v2241 = vpop.permute.xlu0 %2240
    %v2243 = vmul.f32 %v2238, %v2241
    %2244 = vset.pattern.permute.xlu0 72
    %2245 = vperm.xlu0 %2244, %v1714
    %v2246 = vpop.permute.xlu0 %2245
    %v2248 = vadd.f32 %v2243, %v2246
    %v2249 = vld [vmem:[#allocation5 + $0x8] sm:$0xff]
    %v2250 = vld [vmem:[#allocation5 + $0x10] sm:$0xff]
    %v2251 = vld [vmem:[#allocation5 + $0x18] sm:$0x3]
    %2253 = vset.pattern.permute.xlu0 80
    %2254 = vperm.xlu0 %2253, %v2249
    %v2255 = vpop.permute.xlu0 %2254
    %2258 = vset.pattern.permute.xlu0 80
    %2259 = vperm.xlu0 %2258, %v2250
    %v2260 = vpop.permute.xlu0 %2259
    %2263 = vset.pattern.permute.xlu0 80
    %2264 = vperm.xlu0 %2263, %v2251
    %v2265 = vpop.permute.xlu0 %2264
    %v2267 = vlaneseq
    %v2268 = vshrl.u32 %v2267, 7
    %v2269 = vsub.s32 0, %v2268
    %v2270 = vrot.slane %v2248, %v2269
    %v2271 = vmul.f32 %v2255, %v2270
    %v2272 = vmul.f32 %v2260, %v2270
    %v2273 = vmul.f32 %v2265, %v2270
    %2274 = vset.pattern.permute.xlu0 104
    %2275 = vperm.xlu0 %2274, %v2249
    %v2276 = vpop.permute.xlu0 %2275
    %2278 = vset.pattern.permute.xlu0 104
    %2279 = vperm.xlu0 %2278, %v2250
    %v2280 = vpop.permute.xlu0 %2279
    %2282 = vset.pattern.permute.xlu0 104
    %2283 = vperm.xlu0 %2282, %v2251
    %v2284 = vpop.permute.xlu0 %2283
    %v2286 = vadd.f32 %v2276, %v2271
    %v2287 = vadd.f32 %v2280, %v2272
    %v2288 = vadd.f32 %v2284, %v2273
    %2289 = vset.pattern.permute.xlu0 81
    %2290 = vperm.xlu0 %2289, %v2249
    %v2291 = vpop.permute.xlu0 %2290
    %2293 = vset.pattern.permute.xlu0 81
    %2294 = vperm.xlu0 %2293, %v2250
    %v2295 = vpop.permute.xlu0 %2294
    %2297 = vset.pattern.permute.xlu0 81
    %2298 = vperm.xlu0 %2297, %v2251
    %v2299 = vpop.permute.xlu0 %2298
    %v2301 = vlaneseq
    %v2302 = vshrl.u32 %v2301, 7
    %v2303 = vsub.s32 1, %v2302
    %v2304 = vrot.slane %v2248, %v2303
    %v2305 = vmul.f32 %v2291, %v2304
    %v2306 = vmul.f32 %v2295, %v2304
    %v2307 = vmul.f32 %v2299, %v2304
    %v2308 = vadd.f32 %v2286, %v2305
    %v2309 = vadd.f32 %v2287, %v2306
    %v2310 = vadd.f32 %v2288, %v2307
    %2311 = vset.pattern.permute.xlu0 82
    %2312 = vperm.xlu0 %2311, %v2249
    %v2313 = vpop.permute.xlu0 %2312
    %2315 = vset.pattern.permute.xlu0 82
    %2316 = vperm.xlu0 %2315, %v2250
    %v2317 = vpop.permute.xlu0 %2316
    %2319 = vset.pattern.permute.xlu0 82
    %2320 = vperm.xlu0 %2319, %v2251
    %v2321 = vpop.permute.xlu0 %2320
    %v2323 = vlaneseq
    %v2324 = vshrl.u32 %v2323, 7
    %v2325 = vsub.s32 2, %v2324
    %v2326 = vrot.slane %v2248, %v2325
    %v2327 = vmul.f32 %v2313, %v2326
    %v2328 = vmul.f32 %v2317, %v2326
    %v2329 = vmul.f32 %v2321, %v2326
    %v2330 = vadd.f32 %v2308, %v2327
    %v2331 = vadd.f32 %v2309, %v2328
    %v2332 = vadd.f32 %v2310, %v2329
    %2333 = vset.pattern.permute.xlu0 83
    %2334 = vperm.xlu0 %2333, %v2249
    %v2335 = vpop.permute.xlu0 %2334
    %2337 = vset.pattern.permute.xlu0 83
    %2338 = vperm.xlu0 %2337, %v2250
    %v2339 = vpop.permute.xlu0 %2338
    %2341 = vset.pattern.permute.xlu0 83
    %2342 = vperm.xlu0 %2341, %v2251
    %v2343 = vpop.permute.xlu0 %2342
    %v2345 = vlaneseq
    %v2346 = vshrl.u32 %v2345, 7
    %v2347 = vsub.s32 3, %v2346
    %v2348 = vrot.slane %v2248, %v2347
    %v2349 = vmul.f32 %v2335, %v2348
    %v2350 = vmul.f32 %v2339, %v2348
    %v2351 = vmul.f32 %v2343, %v2348
    %v2352 = vadd.f32 %v2330, %v2349
    %v2353 = vadd.f32 %v2331, %v2350
    %v2354 = vadd.f32 %v2332, %v2351
    %2355 = vset.pattern.permute.xlu0 84
    %2356 = vperm.xlu0 %2355, %v2249
    %v2357 = vpop.permute.xlu0 %2356
    %2359 = vset.pattern.permute.xlu0 84
    %2360 = vperm.xlu0 %2359, %v2250
    %v2361 = vpop.permute.xlu0 %2360
    %2363 = vset.pattern.permute.xlu0 84
    %2364 = vperm.xlu0 %2363, %v2251
    %v2365 = vpop.permute.xlu0 %2364
    %v2367 = vlaneseq
    %v2368 = vshrl.u32 %v2367, 7
    %v2369 = vsub.s32 4, %v2368
    %v2370 = vrot.slane %v2248, %v2369
    %v2371 = vmul.f32 %v2357, %v2370
    %v2372 = vmul.f32 %v2361, %v2370
    %v2373 = vmul.f32 %v2365, %v2370
    %v2374 = vadd.f32 %v2352, %v2371
    %v2375 = vadd.f32 %v2353, %v2372
    %v2376 = vadd.f32 %v2354, %v2373
    %2377 = vset.pattern.permute.xlu0 85
    %2378 = vperm.xlu0 %2377, %v2249
    %v2379 = vpop.permute.xlu0 %2378
    %2381 = vset.pattern.permute.xlu0 85
    %2382 = vperm.xlu0 %2381, %v2250
    %v2383 = vpop.permute.xlu0 %2382
    %2385 = vset.pattern.permute.xlu0 85
    %2386 = vperm.xlu0 %2385, %v2251
    %v2387 = vpop.permute.xlu0 %2386
    %v2389 = vlaneseq
    %v2390 = vshrl.u32 %v2389, 7
    %v2391 = vsub.s32 5, %v2390
    %v2392 = vrot.slane %v2248, %v2391
    %v2393 = vmul.f32 %v2379, %v2392
    %v2394 = vmul.f32 %v2383, %v2392
    %v2395 = vmul.f32 %v2387, %v2392
    %v2396 = vadd.f32 %v2374, %v2393
    %v2397 = vadd.f32 %v2375, %v2394
    %v2398 = vadd.f32 %v2376, %v2395
    %v2399 = vlaneseq
    %v2400 = vshrl.u32 %v2399, 7
    %v2401 = vsub.s32 6, %v2400
    %v2402 = vrot.slane %v2396, %v2401
    %2404 = vbcast.lane.b32.xlu0 %v2402, 256
    %v2405 = vpop.permute.xlu0 %2404
    %v2406 = vlaneseq
    %v2407 = vshrl.u32 %v2406, 7
    %v2408 = vsub.s32 7, %v2407
    %v2409 = vrot.slane %v2396, %v2408
    %2411 = vbcast.lane.b32.xlu0 %v2409, 256
    %v2412 = vpop.permute.xlu0 %2411
    %v2413 = vlaneseq
    %v2414 = vshrl.u32 %v2413, 7
    %v2415 = vsub.s32 0, %v2414
    %v2416 = vrot.slane %v2397, %v2415
    %2418 = vbcast.lane.b32.xlu0 %v2416, 256
    %v2419 = vpop.permute.xlu0 %2418
    %v2420 = vlaneseq
    %v2421 = vshrl.u32 %v2420, 7
    %v2422 = vsub.s32 1, %v2421
    %v2423 = vrot.slane %v2397, %v2422
    %2425 = vbcast.lane.b32.xlu0 %v2423, 256
    %v2426 = vpop.permute.xlu0 %2425
    %v2427 = vlaneseq
    %v2428 = vshrl.u32 %v2427, 7
    %v2429 = vsub.s32 2, %v2428
    %v2430 = vrot.slane %v2397, %v2429
    %2432 = vbcast.lane.b32.xlu0 %v2430, 256
    %v2433 = vpop.permute.xlu0 %2432
    %v2434 = vlaneseq
    %v2435 = vshrl.u32 %v2434, 7
    %v2436 = vsub.s32 3, %v2435
    %v2437 = vrot.slane %v2397, %v2436
    %2439 = vbcast.lane.b32.xlu0 %v2437, 256
    %v2440 = vpop.permute.xlu0 %2439
    %v2442 = vcombine.high %v2396, %v2396
    %v2444 = vunpack.c.l.s4 1966171168
    %v2445 = vunpack.c.0.s8 %v2444
    %v2446 = vlaneseq
    %v2447 = vshrl.u32 %v2446, 7
    %v2448 = vsub.s32 %v2445, %v2447
    %v2449 = vrot.slane %v2396, %v2448
    %v2451 = vunpack.c.l.s4 1966171168
    %v2452 = vunpack.c.0.s8 %v2451
    %v2453 = vlaneseq
    %v2454 = vshrl.u32 %v2453, 7
    %v2455 = vsub.s32 %v2452, %v2454
    %v2456 = vrot.slane %v2442, %v2455
    %v2457 = vcombine.high %v2449, %v2449
    %v2458 = vcombine.high %v2456, %v2456
    %v2460 = vunpack.c.l.s4 1966171168
    %v2461 = vunpack.c.0.s8 %v2460
    %v2462 = vlaneseq
    %v2463 = vshrl.u32 %v2462, 7
    %v2464 = vsub.s32 %v2461, %v2463
    %v2465 = vrot.slane %v2449, %v2464
    %v2467 = vunpack.c.l.s4 1966171168
    %v2468 = vunpack.c.0.s8 %v2467
    %v2469 = vlaneseq
    %v2470 = vshrl.u32 %v2469, 7
    %v2471 = vsub.s32 %v2468, %v2470
    %v2472 = vrot.slane %v2456, %v2471
    %v2474 = vunpack.c.l.s4 1966171168
    %v2475 = vunpack.c.0.s8 %v2474
    %v2476 = vlaneseq
    %v2477 = vshrl.u32 %v2476, 7
    %v2478 = vsub.s32 %v2475, %v2477
    %v2479 = vrot.slane %v2457, %v2478
    %v2481 = vunpack.c.l.s4 1966171168
    %v2482 = vunpack.c.0.s8 %v2481
    %v2483 = vlaneseq
    %v2484 = vshrl.u32 %v2483, 7
    %v2485 = vsub.s32 %v2482, %v2484
    %v2486 = vrot.slane %v2458, %v2485
    %v2487 = vcombine.high %v2465, %v2465
    %v2488 = vcombine.high %v2479, %v2479
    %v2489 = vlaneseq
    %v2490 = vshrl.u32 %v2489, 7
    %v2491 = vsub.s32 0, %v2490
    %v2492 = vrot.slane %v2465, %v2491
    %v2493 = vlaneseq
    %v2494 = vshrl.u32 %v2493, 7
    %v2495 = vsub.s32 0, %v2494
    %v2496 = vrot.slane %v2479, %v2495
    %v2497 = vlaneseq
    %v2498 = vshrl.u32 %v2497, 7
    %v2499 = vsub.s32 0, %v2498
    %v2500 = vrot.slane %v2487, %v2499
    %v2501 = vlaneseq
    %v2502 = vshrl.u32 %v2501, 7
    %v2503 = vsub.s32 0, %v2502
    %v2504 = vrot.slane %v2488, %v2503
    %v2505 = vlaneseq
    %v2506 = vshrl.u32 %v2505, 7
    %v2507 = vsub.s32 0, %v2506
    %v2508 = vrot.slane %v2472, %v2507
    %v2509 = vlaneseq
    %v2510 = vshrl.u32 %v2509, 7
    %v2511 = vsub.s32 0, %v2510
    %v2512 = vrot.slane %v2486, %v2511
    %v2519 = vmul.f32 %v2405, %v2492
    %v2520 = vmul.f32 %v2412, %v2496
    %v2521 = vmul.f32 %v2419, %v2500
    %v2522 = vmul.f32 %v2426, %v2504
    %v2523 = vmul.f32 %v2433, %v2508
    %v2524 = vmul.f32 %v2440, %v2512
    %v2525 = vsel %vm331, %v2519, -inf
    %v2526 = vrot.slane %v2525, 4
    %v2527 = vmax.f32 %v2525, %v2526
    %v2528 = vrot.slane %v2527, 2
    %v2529 = vmax.f32 %v2527, %v2528
    %v2530 = vrot.slane %v2529, 1
    %v2531 = vmax.f32 %v2529, %v2530
    %v2532 = vsel %vm331, %v2520, -inf
    %v2533 = vrot.slane %v2532, 4
    %v2534 = vmax.f32 %v2532, %v2533
    %v2535 = vrot.slane %v2534, 2
    %v2536 = vmax.f32 %v2534, %v2535
    %v2537 = vrot.slane %v2536, 1
    %v2538 = vmax.f32 %v2536, %v2537
    %v2539 = vsel %vm331, %v2521, -inf
    %v2540 = vrot.slane %v2539, 4
    %v2541 = vmax.f32 %v2539, %v2540
    %v2542 = vrot.slane %v2541, 2
    %v2543 = vmax.f32 %v2541, %v2542
    %v2544 = vrot.slane %v2543, 1
    %v2545 = vmax.f32 %v2543, %v2544
    %v2546 = vsel %vm331, %v2522, -inf
    %v2547 = vrot.slane %v2546, 4
    %v2548 = vmax.f32 %v2546, %v2547
    %v2549 = vrot.slane %v2548, 2
    %v2550 = vmax.f32 %v2548, %v2549
    %v2551 = vrot.slane %v2550, 1
    %v2552 = vmax.f32 %v2550, %v2551
    %v2553 = vsel %vm331, %v2523, -inf
    %v2554 = vrot.slane %v2553, 4
    %v2555 = vmax.f32 %v2553, %v2554
    %v2556 = vrot.slane %v2555, 2
    %v2557 = vmax.f32 %v2555, %v2556
    %v2558 = vrot.slane %v2557, 1
    %v2559 = vmax.f32 %v2557, %v2558
    %v2560 = vsel %vm331, %v2524, -inf
    %v2561 = vrot.slane %v2560, 4
    %v2562 = vmax.f32 %v2560, %v2561
    %v2563 = vrot.slane %v2562, 2
    %v2564 = vmax.f32 %v2562, %v2563
    %v2565 = vrot.slane %v2564, 1
    %v2566 = vmax.f32 %v2564, %v2565
    %v2567 = vsub.f32 %v2519, %v2531
    %v2568 = vsub.f32 %v2520, %v2538
    %v2569 = vsub.f32 %v2521, %v2545
    %v2570 = vsub.f32 %v2522, %v2552
    %v2571 = vsub.f32 %v2523, %v2559
    %v2572 = vsub.f32 %v2524, %v2566
    %v2573 = vmul.f32 %v2567, 1.442695
    %v2574 = vpow.pop %v2573
    %v2575 = vmul.f32 %v2568, 1.442695
    %v2576 = vpow.pop %v2575
    %v2577 = vmul.f32 %v2569, 1.442695
    %v2578 = vpow.pop %v2577
    %v2579 = vmul.f32 %v2570, 1.442695
    %v2580 = vpow.pop %v2579
    %v2581 = vmul.f32 %v2571, 1.442695
    %v2582 = vpow.pop %v2581
    %v2583 = vmul.f32 %v2572, 1.442695
    %v2584 = vpow.pop %v2583
    %v2585 = vsel %vm331, %v2574, 0.0
    %v2586 = vrot.slane %v2585, 4
    %v2587 = vadd.f32 %v2585, %v2586
    %v2588 = vrot.slane %v2587, 2
    %v2589 = vadd.f32 %v2587, %v2588
    %v2590 = vrot.slane %v2589, 1
    %v2591 = vadd.f32 %v2589, %v2590
    %v2592 = vsel %vm331, %v2576, 0.0
    %v2593 = vrot.slane %v2592, 4
    %v2594 = vadd.f32 %v2592, %v2593
    %v2595 = vrot.slane %v2594, 2
    %v2596 = vadd.f32 %v2594, %v2595
    %v2597 = vrot.slane %v2596, 1
    %v2598 = vadd.f32 %v2596, %v2597
    %v2599 = vsel %vm331, %v2578, 0.0
    %v2600 = vrot.slane %v2599, 4
    %v2601 = vadd.f32 %v2599, %v2600
    %v2602 = vrot.slane %v2601, 2
    %v2603 = vadd.f32 %v2601, %v2602
    %v2604 = vrot.slane %v2603, 1
    %v2605 = vadd.f32 %v2603, %v2604
    %v2606 = vsel %vm331, %v2580, 0.0
    %v2607 = vrot.slane %v2606, 4
    %v2608 = vadd.f32 %v2606, %v2607
    %v2609 = vrot.slane %v2608, 2
    %v2610 = vadd.f32 %v2608, %v2609
    %v2611 = vrot.slane %v2610, 1
    %v2612 = vadd.f32 %v2610, %v2611
    %v2613 = vsel %vm331, %v2582, 0.0
    %v2614 = vrot.slane %v2613, 4
    %v2615 = vadd.f32 %v2613, %v2614
    %v2616 = vrot.slane %v2615, 2
    %v2617 = vadd.f32 %v2615, %v2616
    %v2618 = vrot.slane %v2617, 1
    %v2619 = vadd.f32 %v2617, %v2618
    %v2620 = vsel %vm331, %v2584, 0.0
    %v2621 = vrot.slane %v2620, 4
    %v2622 = vadd.f32 %v2620, %v2621
    %v2623 = vrot.slane %v2622, 2
    %v2624 = vadd.f32 %v2622, %v2623
    %v2625 = vrot.slane %v2624, 1
    %v2626 = vadd.f32 %v2624, %v2625
    %v2627 = vlaneseq
    %v2628 = vshrl.u32 %v2627, 7
    %v2629 = vsub.s32 4, %v2628
    %v2630 = vrot.slane %v2397, %v2629
    %2632 = vbcast.lane.b32.xlu0 %v2630, 256
    %v2633 = vpop.permute.xlu0 %2632
    %v2634 = vlaneseq
    %v2635 = vshrl.u32 %v2634, 7
    %v2636 = vsub.s32 5, %v2635
    %v2637 = vrot.slane %v2397, %v2636
    %2639 = vbcast.lane.b32.xlu0 %v2637, 256
    %v2640 = vpop.permute.xlu0 %2639
    %v2641 = vlaneseq
    %v2642 = vshrl.u32 %v2641, 7
    %v2643 = vsub.s32 6, %v2642
    %v2644 = vrot.slane %v2397, %v2643
    %2646 = vbcast.lane.b32.xlu0 %v2644, 256
    %v2647 = vpop.permute.xlu0 %2646
    %v2648 = vlaneseq
    %v2649 = vshrl.u32 %v2648, 7
    %v2650 = vsub.s32 7, %v2649
    %v2651 = vrot.slane %v2397, %v2650
    %2653 = vbcast.lane.b32.xlu0 %v2651, 256
    %v2654 = vpop.permute.xlu0 %2653
    %v2655 = vlaneseq
    %v2656 = vshrl.u32 %v2655, 7
    %v2657 = vsub.s32 0, %v2656
    %v2658 = vrot.slane %v2398, %v2657
    %2660 = vbcast.lane.b32.xlu0 %v2658, 256
    %v2661 = vpop.permute.xlu0 %2660
    %v2662 = vlaneseq
    %v2663 = vshrl.u32 %v2662, 7
    %v2664 = vsub.s32 1, %v2663
    %v2665 = vrot.slane %v2398, %v2664
    %2667 = vbcast.lane.b32.xlu0 %v2665, 256
    %v2668 = vpop.permute.xlu0 %2667
    %v2669 = vmul.f32 %v2574, %v2633
    %v2670 = vmul.f32 %v2576, %v2640
    %v2671 = vmul.f32 %v2578, %v2647
    %v2672 = vmul.f32 %v2580, %v2654
    %v2673 = vmul.f32 %v2582, %v2661
    %v2674 = vmul.f32 %v2584, %v2668
    %v2675 = vsel %vm331, %v2669, 0.0
    %v2676 = vrot.slane %v2675, 4
    %v2677 = vadd.f32 %v2675, %v2676
    %v2678 = vrot.slane %v2677, 2
    %v2679 = vadd.f32 %v2677, %v2678
    %v2680 = vrot.slane %v2679, 1
    %v2681 = vadd.f32 %v2679, %v2680
    %v2682 = vsel %vm331, %v2670, 0.0
    %v2683 = vrot.slane %v2682, 4
    %v2684 = vadd.f32 %v2682, %v2683
    %v2685 = vrot.slane %v2684, 2
    %v2686 = vadd.f32 %v2684, %v2685
    %v2687 = vrot.slane %v2686, 1
    %v2688 = vadd.f32 %v2686, %v2687
    %v2689 = vsel %vm331, %v2671, 0.0
    %v2690 = vrot.slane %v2689, 4
    %v2691 = vadd.f32 %v2689, %v2690
    %v2692 = vrot.slane %v2691, 2
    %v2693 = vadd.f32 %v2691, %v2692
    %v2694 = vrot.slane %v2693, 1
    %v2695 = vadd.f32 %v2693, %v2694
    %v2696 = vsel %vm331, %v2672, 0.0
    %v2697 = vrot.slane %v2696, 4
    %v2698 = vadd.f32 %v2696, %v2697
    %v2699 = vrot.slane %v2698, 2
    %v2700 = vadd.f32 %v2698, %v2699
    %v2701 = vrot.slane %v2700, 1
    %v2702 = vadd.f32 %v2700, %v2701
    %v2703 = vsel %vm331, %v2673, 0.0
    %v2704 = vrot.slane %v2703, 4
    %v2705 = vadd.f32 %v2703, %v2704
    %v2706 = vrot.slane %v2705, 2
    %v2707 = vadd.f32 %v2705, %v2706
    %v2708 = vrot.slane %v2707, 1
    %v2709 = vadd.f32 %v2707, %v2708
    %v2710 = vsel %vm331, %v2674, 0.0
    %v2711 = vrot.slane %v2710, 4
    %v2712 = vadd.f32 %v2710, %v2711
    %v2713 = vrot.slane %v2712, 2
    %v2714 = vadd.f32 %v2712, %v2713
    %v2715 = vrot.slane %v2714, 1
    %v2716 = vadd.f32 %v2714, %v2715
    %v2717 = vrcp.pop %v2591
    %v2718 = vrcp.pop %v2598
    %v2719 = vrcp.pop %v2605
    %v2720 = vrcp.pop %v2612
    %v2721 = vrcp.pop %v2619
    %v2722 = vrcp.pop %v2626
    %v2723 = vmul.f32 %v2591, %v2717
    %v2724 = vmul.f32 %v2598, %v2718
    %v2725 = vmul.f32 %v2605, %v2719
    %v2726 = vmul.f32 %v2612, %v2720
    %v2727 = vmul.f32 %v2619, %v2721
    %v2728 = vmul.f32 %v2626, %v2722
    %v2729 = vsub.f32 2.0, %v2723
    %v2730 = vsub.f32 2.0, %v2724
    %v2731 = vsub.f32 2.0, %v2725
    %v2732 = vsub.f32 2.0, %v2726
    %v2733 = vsub.f32 2.0, %v2727
    %v2734 = vsub.f32 2.0, %v2728
    %v2735 = vmul.f32 %v2717, %v2729
    %v2736 = vmul.f32 %v2718, %v2730
    %v2737 = vmul.f32 %v2719, %v2731
    %v2738 = vmul.f32 %v2720, %v2732
    %v2739 = vmul.f32 %v2721, %v2733
    %v2740 = vmul.f32 %v2722, %v2734
    %v2741 = vmul.f32 %v2681, %v2735
    %v2742 = vmul.f32 %v2688, %v2736
    %v2743 = vmul.f32 %v2695, %v2737
    %v2744 = vmul.f32 %v2702, %v2738
    %v2745 = vmul.f32 %v2709, %v2739
    %v2746 = vmul.f32 %v2716, %v2740
    %v2747 = vld [vmem:[#allocation5 + $0x8] sm:$0x3f]
    %v2748 = vld [vmem:[#allocation5 + $0x10] sm:$0x3f]
    %2750 = vset.pattern.permute.xlu0 112
    %2751 = vperm.xlu0 %2750, %v2747
    %v2752 = vpop.permute.xlu0 %2751
    %v2754 = vmul.f32 %v2752, %v2741
    %2756 = vset.pattern.permute.xlu0 24
    %2757 = vperm.xlu0 %2756, %v2748
    %v2758 = vpop.permute.xlu0 %2757
    %v2760 = vadd.f32 %v2758, %v2754
    %2761 = vset.pattern.permute.xlu0 113
    %2762 = vperm.xlu0 %2761, %v2747
    %v2763 = vpop.permute.xlu0 %2762
    %v2765 = vmul.f32 %v2763, %v2742
    %v2766 = vadd.f32 %v2760, %v2765
    %2767 = vset.pattern.permute.xlu0 114
    %2768 = vperm.xlu0 %2767, %v2747
    %v2769 = vpop.permute.xlu0 %2768
    %v2771 = vmul.f32 %v2769, %v2743
    %v2772 = vadd.f32 %v2766, %v2771
    %2773 = vset.pattern.permute.xlu0 115
    %2774 = vperm.xlu0 %2773, %v2747
    %v2775 = vpop.permute.xlu0 %2774
    %v2777 = vmul.f32 %v2775, %v2744
    %v2778 = vadd.f32 %v2772, %v2777
    %2779 = vset.pattern.permute.xlu0 116
    %2780 = vperm.xlu0 %2779, %v2747
    %v2781 = vpop.permute.xlu0 %2780
    %v2783 = vmul.f32 %v2781, %v2745
    %v2784 = vadd.f32 %v2778, %v2783
    %2785 = vset.pattern.permute.xlu0 117
    %2786 = vperm.xlu0 %2785, %v2747
    %v2787 = vpop.permute.xlu0 %2786
    %v2789 = vmul.f32 %v2787, %v2746
    %v2790 = vadd.f32 %v2784, %v2789
    %v2791 = vadd.f32 %v2248, %v2790
    %v2792 = vsel %vm597, %v2791, 0.0
    %v2793 = vrot.slane %v2792, 4
    %v2794 = vadd.f32 %v2792, %v2793
    %v2795 = vrot.slane %v2794, 2
    %v2796 = vadd.f32 %v2794, %v2795
    %v2797 = vrot.slane %v2796, 1
    %v2798 = vadd.f32 %v2796, %v2797
    %v2799 = vmul.f32 %v2798, %v605
    %v2800 = vsub.f32 %v2791, %v2799
    %v2801 = vmul.f32 %v2800, %v2800
    %v2802 = vsel %vm597, %v2801, 0.0
    %v2803 = vrot.slane %v2802, 4
    %v2804 = vadd.f32 %v2802, %v2803
    %v2805 = vrot.slane %v2804, 2
    %v2806 = vadd.f32 %v2804, %v2805
    %v2807 = vrot.slane %v2806, 1
    %v2808 = vadd.f32 %v2806, %v2807
    %v2809 = vmul.f32 %v2808, %v605
    %v2810 = vadd.f32 %v2809, 1e-05
    %v2811 = vrsqrt.pop %v2810
    %v2812 = vmul.f32 %v2800, %v2811
    %2813 = vset.pattern.permute.xlu0 72
    %2814 = vperm.xlu0 %2813, %v2748
    %v2815 = vpop.permute.xlu0 %2814
    %v2817 = vmul.f32 %v2812, %v2815
    %2818 = vset.pattern.permute.xlu0 112
    %2819 = vperm.xlu0 %2818, %v2748
    %v2820 = vpop.permute.xlu0 %2819
    %v2822 = vadd.f32 %v2817, %v2820
    %v2823 = vld [vmem:[#allocation5 + $0x10] sm:$0xff]
    %v2824 = vld [vmem:[#allocation5 + $0x18] sm:$0xff]
    %v2825 = vld [vmem:[#allocation5 + $0x20] sm:$0xff]
    %v2826 = vld [vmem:[#allocation5 + $0x28] sm:$0xff]
    %v2827 = vld [vmem:[#allocation5 + $0x30] sm:$0xff]
    %v2828 = vld [vmem:[#allocation5 + $0x38] sm:$0xff]
    %v2829 = vld [vmem:[#allocation5 + $0x40] sm:$0xff]
    %v2830 = vld [vmem:[#allocation5 + $0x48] sm:$0xff]
    %v2831 = vld [vmem:[#allocation5 + $0x50] sm:$0xff]
    %2833 = vset.pattern.permute.xlu0 48
    %2834 = vperm.xlu0 %2833, %v2823
    %v2835 = vpop.permute.xlu0 %2834
    %2838 = vset.pattern.permute.xlu0 48
    %2839 = vperm.xlu0 %2838, %v2824
    %v2840 = vpop.permute.xlu0 %2839
    %2843 = vset.pattern.permute.xlu0 48
    %2844 = vperm.xlu0 %2843, %v2825
    %v2845 = vpop.permute.xlu0 %2844
    %2848 = vset.pattern.permute.xlu0 48
    %2849 = vperm.xlu0 %2848, %v2826
    %v2850 = vpop.permute.xlu0 %2849
    %2853 = vset.pattern.permute.xlu0 48
    %2854 = vperm.xlu0 %2853, %v2827
    %v2855 = vpop.permute.xlu0 %2854
    %2858 = vset.pattern.permute.xlu0 48
    %2859 = vperm.xlu0 %2858, %v2828
    %v2860 = vpop.permute.xlu0 %2859
    %2863 = vset.pattern.permute.xlu0 48
    %2864 = vperm.xlu0 %2863, %v2829
    %v2865 = vpop.permute.xlu0 %2864
    %2868 = vset.pattern.permute.xlu0 48
    %2869 = vperm.xlu0 %2868, %v2830
    %v2870 = vpop.permute.xlu0 %2869
    %2873 = vset.pattern.permute.xlu0 48
    %2874 = vperm.xlu0 %2873, %v2831
    %v2875 = vpop.permute.xlu0 %2874
    %v2877 = vlaneseq
    %v2878 = vshrl.u32 %v2877, 7
    %v2879 = vsub.s32 0, %v2878
    %v2880 = vrot.slane %v2822, %v2879
    %v2881 = vmul.f32 %v2835, %v2880
    %v2882 = vmul.f32 %v2840, %v2880
    %v2883 = vmul.f32 %v2845, %v2880
    %v2884 = vmul.f32 %v2850, %v2880
    %v2885 = vmul.f32 %v2855, %v2880
    %v2886 = vmul.f32 %v2860, %v2880
    %v2887 = vmul.f32 %v2865, %v2880
    %v2888 = vmul.f32 %v2870, %v2880
    %v2889 = vmul.f32 %v2875, %v2880
    %2890 = vset.pattern.permute.xlu0 56
    %2891 = vperm.xlu0 %2890, %v2823
    %v2892 = vpop.permute.xlu0 %2891
    %2894 = vset.pattern.permute.xlu0 56
    %2895 = vperm.xlu0 %2894, %v2824
    %v2896 = vpop.permute.xlu0 %2895
    %2898 = vset.pattern.permute.xlu0 56
    %2899 = vperm.xlu0 %2898, %v2825
    %v2900 = vpop.permute.xlu0 %2899
    %2902 = vset.pattern.permute.xlu0 56
    %2903 = vperm.xlu0 %2902, %v2826
    %v2904 = vpop.permute.xlu0 %2903
    %2906 = vset.pattern.permute.xlu0 56
    %2907 = vperm.xlu0 %2906, %v2827
    %v2908 = vpop.permute.xlu0 %2907
    %2910 = vset.pattern.permute.xlu0 56
    %2911 = vperm.xlu0 %2910, %v2828
    %v2912 = vpop.permute.xlu0 %2911
    %2914 = vset.pattern.permute.xlu0 56
    %2915 = vperm.xlu0 %2914, %v2829
    %v2916 = vpop.permute.xlu0 %2915
    %2918 = vset.pattern.permute.xlu0 56
    %2919 = vperm.xlu0 %2918, %v2830
    %v2920 = vpop.permute.xlu0 %2919
    %2922 = vset.pattern.permute.xlu0 56
    %2923 = vperm.xlu0 %2922, %v2831
    %v2924 = vpop.permute.xlu0 %2923
    %v2926 = vadd.f32 %v2892, %v2881
    %v2927 = vadd.f32 %v2896, %v2882
    %v2928 = vadd.f32 %v2900, %v2883
    %v2929 = vadd.f32 %v2904, %v2884
    %v2930 = vadd.f32 %v2908, %v2885
    %v2931 = vadd.f32 %v2912, %v2886
    %v2932 = vadd.f32 %v2916, %v2887
    %v2933 = vadd.f32 %v2920, %v2888
    %v2934 = vadd.f32 %v2924, %v2889
    %2935 = vset.pattern.permute.xlu0 49
    %2936 = vperm.xlu0 %2935, %v2823
    %v2937 = vpop.permute.xlu0 %2936
    %2939 = vset.pattern.permute.xlu0 49
    %2940 = vperm.xlu0 %2939, %v2824
    %v2941 = vpop.permute.xlu0 %2940
    %2943 = vset.pattern.permute.xlu0 49
    %2944 = vperm.xlu0 %2943, %v2825
    %v2945 = vpop.permute.xlu0 %2944
    %2947 = vset.pattern.permute.xlu0 49
    %2948 = vperm.xlu0 %2947, %v2826
    %v2949 = vpop.permute.xlu0 %2948
    %2951 = vset.pattern.permute.xlu0 49
    %2952 = vperm.xlu0 %2951, %v2827
    %v2953 = vpop.permute.xlu0 %2952
    %2955 = vset.pattern.permute.xlu0 49
    %2956 = vperm.xlu0 %2955, %v2828
    %v2957 = vpop.permute.xlu0 %2956
    %2959 = vset.pattern.permute.xlu0 49
    %2960 = vperm.xlu0 %2959, %v2829
    %v2961 = vpop.permute.xlu0 %2960
    %2963 = vset.pattern.permute.xlu0 49
    %2964 = vperm.xlu0 %2963, %v2830
    %v2965 = vpop.permute.xlu0 %2964
    %2967 = vset.pattern.permute.xlu0 49
    %2968 = vperm.xlu0 %2967, %v2831
    %v2969 = vpop.permute.xlu0 %2968
    %v2971 = vlaneseq
    %v2972 = vshrl.u32 %v2971, 7
    %v2973 = vsub.s32 1, %v2972
    %v2974 = vrot.slane %v2822, %v2973
    %v2975 = vmul.f32 %v2937, %v2974
    %v2976 = vmul.f32 %v2941, %v2974
    %v2977 = vmul.f32 %v2945, %v2974
    %v2978 = vmul.f32 %v2949, %v2974
    %v2979 = vmul.f32 %v2953, %v2974
    %v2980 = vmul.f32 %v2957, %v2974
    %v2981 = vmul.f32 %v2961, %v2974
    %v2982 = vmul.f32 %v2965, %v2974
    %v2983 = vmul.f32 %v2969, %v2974
    %v2984 = vadd.f32 %v2926, %v2975
    %v2985 = vadd.f32 %v2927, %v2976
    %v2986 = vadd.f32 %v2928, %v2977
    %v2987 = vadd.f32 %v2929, %v2978
    %v2988 = vadd.f32 %v2930, %v2979
    %v2989 = vadd.f32 %v2931, %v2980
    %v2990 = vadd.f32 %v2932, %v2981
    %v2991 = vadd.f32 %v2933, %v2982
    %v2992 = vadd.f32 %v2934, %v2983
    %2993 = vset.pattern.permute.xlu0 50
    %2994 = vperm.xlu0 %2993, %v2823
    %v2995 = vpop.permute.xlu0 %2994
    %2997 = vset.pattern.permute.xlu0 50
    %2998 = vperm.xlu0 %2997, %v2824
    %v2999 = vpop.permute.xlu0 %2998
    %3001 = vset.pattern.permute.xlu0 50
    %3002 = vperm.xlu0 %3001, %v2825
    %v3003 = vpop.permute.xlu0 %3002
    %3005 = vset.pattern.permute.xlu0 50
    %3006 = vperm.xlu0 %3005, %v2826
    %v3007 = vpop.permute.xlu0 %3006
    %3009 = vset.pattern.permute.xlu0 50
    %3010 = vperm.xlu0 %3009, %v2827
    %v3011 = vpop.permute.xlu0 %3010
    %3013 = vset.pattern.permute.xlu0 50
    %3014 = vperm.xlu0 %3013, %v2828
    %v3015 = vpop.permute.xlu0 %3014
    %3017 = vset.pattern.permute.xlu0 50
    %3018 = vperm.xlu0 %3017, %v2829
    %v3019 = vpop.permute.xlu0 %3018
    %3021 = vset.pattern.permute.xlu0 50
    %3022 = vperm.xlu0 %3021, %v2830
    %v3023 = vpop.permute.xlu0 %3022
    %3025 = vset.pattern.permute.xlu0 50
    %3026 = vperm.xlu0 %3025, %v2831
    %v3027 = vpop.permute.xlu0 %3026
    %v3029 = vlaneseq
    %v3030 = vshrl.u32 %v3029, 7
    %v3031 = vsub.s32 2, %v3030
    %v3032 = vrot.slane %v2822, %v3031
    %v3033 = vmul.f32 %v2995, %v3032
    %v3034 = vmul.f32 %v2999, %v3032
    %v3035 = vmul.f32 %v3003, %v3032
    %v3036 = vmul.f32 %v3007, %v3032
    %v3037 = vmul.f32 %v3011, %v3032
    %v3038 = vmul.f32 %v3015, %v3032
    %v3039 = vmul.f32 %v3019, %v3032
    %v3040 = vmul.f32 %v3023, %v3032
    %v3041 = vmul.f32 %v3027, %v3032
    %v3042 = vadd.f32 %v2984, %v3033
    %v3043 = vadd.f32 %v2985, %v3034
    %v3044 = vadd.f32 %v2986, %v3035
    %v3045 = vadd.f32 %v2987, %v3036
    %v3046 = vadd.f32 %v2988, %v3037
    %v3047 = vadd.f32 %v2989, %v3038
    %v3048 = vadd.f32 %v2990, %v3039
    %v3049 = vadd.f32 %v2991, %v3040
    %v3050 = vadd.f32 %v2992, %v3041
    %3051 = vset.pattern.permute.xlu0 51
    %3052 = vperm.xlu0 %3051, %v2823
    %v3053 = vpop.permute.xlu0 %3052
    %3055 = vset.pattern.permute.xlu0 51
    %3056 = vperm.xlu0 %3055, %v2824
    %v3057 = vpop.permute.xlu0 %3056
    %3059 = vset.pattern.permute.xlu0 51
    %3060 = vperm.xlu0 %3059, %v2825
    %v3061 = vpop.permute.xlu0 %3060
    %3063 = vset.pattern.permute.xlu0 51
    %3064 = vperm.xlu0 %3063, %v2826
    %v3065 = vpop.permute.xlu0 %3064
    %3067 = vset.pattern.permute.xlu0 51
    %3068 = vperm.xlu0 %3067, %v2827
    %v3069 = vpop.permute.xlu0 %3068
    %3071 = vset.pattern.permute.xlu0 51
    %3072 = vperm.xlu0 %3071, %v2828
    %v3073 = vpop.permute.xlu0 %3072
    %3075 = vset.pattern.permute.xlu0 51
    %3076 = vperm.xlu0 %3075, %v2829
    %v3077 = vpop.permute.xlu0 %3076
    %3079 = vset.pattern.permute.xlu0 51
    %3080 = vperm.xlu0 %3079, %v2830
    %v3081 = vpop.permute.xlu0 %3080
    %3083 = vset.pattern.permute.xlu0 51
    %3084 = vperm.xlu0 %3083, %v2831
    %v3085 = vpop.permute.xlu0 %3084
    %v3087 = vlaneseq
    %v3088 = vshrl.u32 %v3087, 7
    %v3089 = vsub.s32 3, %v3088
    %v3090 = vrot.slane %v2822, %v3089
    %v3091 = vmul.f32 %v3053, %v3090
    %v3092 = vmul.f32 %v3057, %v3090
    %v3093 = vmul.f32 %v3061, %v3090
    %v3094 = vmul.f32 %v3065, %v3090
    %v3095 = vmul.f32 %v3069, %v3090
    %v3096 = vmul.f32 %v3073, %v3090
    %v3097 = vmul.f32 %v3077, %v3090
    %v3098 = vmul.f32 %v3081, %v3090
    %v3099 = vmul.f32 %v3085, %v3090
    %v3100 = vadd.f32 %v3042, %v3091
    %v3101 = vadd.f32 %v3043, %v3092
    %v3102 = vadd.f32 %v3044, %v3093
    %v3103 = vadd.f32 %v3045, %v3094
    %v3104 = vadd.f32 %v3046, %v3095
    %v3105 = vadd.f32 %v3047, %v3096
    %v3106 = vadd.f32 %v3048, %v3097
    %v3107 = vadd.f32 %v3049, %v3098
    %v3108 = vadd.f32 %v3050, %v3099
    %3109 = vset.pattern.permute.xlu0 52
    %3110 = vperm.xlu0 %3109, %v2823
    %v3111 = vpop.permute.xlu0 %3110
    %3113 = vset.pattern.permute.xlu0 52
    %3114 = vperm.xlu0 %3113, %v2824
    %v3115 = vpop.permute.xlu0 %3114
    %3117 = vset.pattern.permute.xlu0 52
    %3118 = vperm.xlu0 %3117, %v2825
    %v3119 = vpop.permute.xlu0 %3118
    %3121 = vset.pattern.permute.xlu0 52
    %3122 = vperm.xlu0 %3121, %v2826
    %v3123 = vpop.permute.xlu0 %3122
    %3125 = vset.pattern.permute.xlu0 52
    %3126 = vperm.xlu0 %3125, %v2827
    %v3127 = vpop.permute.xlu0 %3126
    %3129 = vset.pattern.permute.xlu0 52
    %3130 = vperm.xlu0 %3129, %v2828
    %v3131 = vpop.permute.xlu0 %3130
    %3133 = vset.pattern.permute.xlu0 52
    %3134 = vperm.xlu0 %3133, %v2829
    %v3135 = vpop.permute.xlu0 %3134
    %3137 = vset.pattern.permute.xlu0 52
    %3138 = vperm.xlu0 %3137, %v2830
    %v3139 = vpop.permute.xlu0 %3138
    %3141 = vset.pattern.permute.xlu0 52
    %3142 = vperm.xlu0 %3141, %v2831
    %v3143 = vpop.permute.xlu0 %3142
    %v3145 = vlaneseq
    %v3146 = vshrl.u32 %v3145, 7
    %v3147 = vsub.s32 4, %v3146
    %v3148 = vrot.slane %v2822, %v3147
    %v3149 = vmul.f32 %v3111, %v3148
    %v3150 = vmul.f32 %v3115, %v3148
    %v3151 = vmul.f32 %v3119, %v3148
    %v3152 = vmul.f32 %v3123, %v3148
    %v3153 = vmul.f32 %v3127, %v3148
    %v3154 = vmul.f32 %v3131, %v3148
    %v3155 = vmul.f32 %v3135, %v3148
    %v3156 = vmul.f32 %v3139, %v3148
    %v3157 = vmul.f32 %v3143, %v3148
    %v3158 = vadd.f32 %v3100, %v3149
    %v3159 = vadd.f32 %v3101, %v3150
    %v3160 = vadd.f32 %v3102, %v3151
    %v3161 = vadd.f32 %v3103, %v3152
    %v3162 = vadd.f32 %v3104, %v3153
    %v3163 = vadd.f32 %v3105, %v3154
    %v3164 = vadd.f32 %v3106, %v3155
    %v3165 = vadd.f32 %v3107, %v3156
    %v3166 = vadd.f32 %v3108, %v3157
    %3167 = vset.pattern.permute.xlu0 53
    %3168 = vperm.xlu0 %3167, %v2823
    %v3169 = vpop.permute.xlu0 %3168
    %3171 = vset.pattern.permute.xlu0 53
    %3172 = vperm.xlu0 %3171, %v2824
    %v3173 = vpop.permute.xlu0 %3172
    %3175 = vset.pattern.permute.xlu0 53
    %3176 = vperm.xlu0 %3175, %v2825
    %v3177 = vpop.permute.xlu0 %3176
    %3179 = vset.pattern.permute.xlu0 53
    %3180 = vperm.xlu0 %3179, %v2826
    %v3181 = vpop.permute.xlu0 %3180
    %3183 = vset.pattern.permute.xlu0 53
    %3184 = vperm.xlu0 %3183, %v2827
    %v3185 = vpop.permute.xlu0 %3184
    %3187 = vset.pattern.permute.xlu0 53
    %3188 = vperm.xlu0 %3187, %v2828
    %v3189 = vpop.permute.xlu0 %3188
    %3191 = vset.pattern.permute.xlu0 53
    %3192 = vperm.xlu0 %3191, %v2829
    %v3193 = vpop.permute.xlu0 %3192
    %3195 = vset.pattern.permute.xlu0 53
    %3196 = vperm.xlu0 %3195, %v2830
    %v3197 = vpop.permute.xlu0 %3196
    %3199 = vset.pattern.permute.xlu0 53
    %3200 = vperm.xlu0 %3199, %v2831
    %v3201 = vpop.permute.xlu0 %3200
    %v3203 = vlaneseq
    %v3204 = vshrl.u32 %v3203, 7
    %v3205 = vsub.s32 5, %v3204
    %v3206 = vrot.slane %v2822, %v3205
    %v3207 = vmul.f32 %v3169, %v3206
    %v3208 = vmul.f32 %v3173, %v3206
    %v3209 = vmul.f32 %v3177, %v3206
    %v3210 = vmul.f32 %v3181, %v3206
    %v3211 = vmul.f32 %v3185, %v3206
    %v3212 = vmul.f32 %v3189, %v3206
    %v3213 = vmul.f32 %v3193, %v3206
    %v3214 = vmul.f32 %v3197, %v3206
    %v3215 = vmul.f32 %v3201, %v3206
    %v3216 = vadd.f32 %v3158, %v3207
    %v3217 = vadd.f32 %v3159, %v3208
    %v3218 = vadd.f32 %v3160, %v3209
    %v3219 = vadd.f32 %v3161, %v3210
    %v3220 = vadd.f32 %v3162, %v3211
    %v3221 = vadd.f32 %v3163, %v3212
    %v3222 = vadd.f32 %v3164, %v3213
    %v3223 = vadd.f32 %v3165, %v3214
    %v3224 = vadd.f32 %v3166, %v3215
    %v3225 = vmax.f32 %v3216, 0.0
    %v3226 = vmax.f32 %v3217, 0.0
    %v3227 = vmax.f32 %v3218, 0.0
    %v3228 = vmax.f32 %v3219, 0.0
    %v3229 = vmax.f32 %v3220, 0.0
    %v3230 = vmax.f32 %v3221, 0.0
    %v3231 = vmax.f32 %v3222, 0.0
    %v3232 = vmax.f32 %v3223, 0.0
    %v3233 = vmax.f32 %v3224, 0.0
    %v3234 = vld [vmem:[#allocation7 + $0x10] sm:$0x3f]
    %3235 = vset.pattern.permute.xlu0 64
    %3236 = vperm.xlu0 %3235, %v2748
    %v3237 = vpop.permute.xlu0 %3236
    %v3240 = vsel %vm1046, %v3234, 0
    %3242 = vmatprep.subr.mxu0 0.0
    %3243 = vmatpush1.msra.mxu0 %v3225
    %3244 = vmatprep.subr.mxu0 0.0
    %3245 = vmatpush1.msra.mxu0 %v3226
    %3246 = vmatprep.subr.mxu0 0.0
    %3247 = vmatpush1.msra.mxu0 %v3227
    %3248 = vmatprep.subr.mxu0 0.0
    %3249 = vmatpush1.msra.mxu0 %v3228
    %3250 = vmatprep.subr.mxu0 0.0
    %3251 = vmatpush1.msra.mxu0 %v3229
    %3252 = vmatprep.subr.mxu0 0.0
    %3253 = vmatpush1.msra.mxu0 %v3230
    %3254 = vmatprep.subr.mxu0 0.0
    %3255 = vmatpush1.msra.mxu0 %v3231
    %3256 = vmatprep.subr.mxu0 0.0
    %3257 = vmatpush1.msra.mxu0 %v3232
    %3258 = vmatprep.subr.mxu0 0.0
    %3259 = vmatpush1.msra.mxu0 %v3233
    %3260 = vmatprep.subr.mxu0 0.0
    %3261 = vmatpush1.msra.mxu0 0.0
    %3262 = vmatprep.subr.mxu0 0.0
    %3263 = vmatpush1.msra.mxu0 0.0
    %3264 = vmatprep.subr.mxu0 0.0
    %3265 = vmatpush1.msra.mxu0 0.0
    %3266 = vmatprep.subr.mxu0 0.0
    %3267 = vmatpush1.msra.mxu0 0.0
    %3268 = vmatprep.subr.mxu0 0.0
    %3269 = vmatpush1.msra.mxu0 0.0
    %3270 = vmatprep.subr.mxu0 0.0
    %3271 = vmatpush1.msra.mxu0 0.0
    %3272 = vmatprep.subr.mxu0 0.0
    %3273 = vmatpush1.msra.mxu0 0.0
    %3274 = vmatprep.subr.mxu0 0.0
    %3275 = vmatpush1.msra.mxu0 0.0
    %3276 = vmatprep.subr.mxu0 0.0
    %3277 = vmatpush1.msra.mxu0 0.0
    %3278 = vmatprep.subr.mxu0 0.0
    %3279 = vmatpush1.msra.mxu0 0.0
    %3280 = vmatprep.subr.mxu0 0.0
    %3281 = vmatpush1.msra.mxu0 0.0
    %3282 = vmatprep.subr.mxu0 0.0
    %3283 = vmatpush1.msra.mxu0 0.0
    %3284 = vmatprep.subr.mxu0 0.0
    %3285 = vmatpush1.msra.mxu0 0.0
    %3286 = vmatprep.subr.mxu0 0.0
    %3287 = vmatpush1.msra.mxu0 0.0
    %3288 = vmatprep.subr.mxu0 0.0
    %3289 = vmatpush1.msra.mxu0 0.0
    %3290 = vmatprep.subr.mxu0 0.0
    %3291 = vmatpush1.msra.mxu0 0.0
    %3292 = vmatprep.subr.mxu0 0.0
    %3293 = vmatpush1.msra.mxu0 0.0
    %3294 = vmatprep.subr.mxu0 0.0
    %3295 = vmatpush1.msra.mxu0 0.0
    %3296 = vmatprep.subr.mxu0 0.0
    %3297 = vmatpush1.msra.mxu0 0.0
    %3298 = vmatprep.subr.mxu0 0.0
    %3299 = vmatpush1.msra.mxu0 0.0
    %3300 = vmatprep.subr.mxu0 0.0
    %3301 = vmatpush1.msra.mxu0 0.0
    %3302 = vmatprep.subr.mxu0 0.0
    %3303 = vmatpush1.msra.mxu0 0.0
    %3304 = vmatprep.subr.mxu0 0.0
    %3305 = vmatpush1.msra.mxu0 0.0
    %3306 = vmatprep.mubr.f32.mxu0 0.0
    %3307 = vmatmul.mubr.f32.gmra.mrb[0].mxu0 %v3240
    %v3308 = vpop.f32.mrb[0].mxu0
    %v3309 = vadd.f32 %v3237, %v3308
    %v3310 = vpop.f32.mrb[0].mxu0
    %3311 = vdwg.mxu0
    %v3312 = vadd.f32 %v2822, %v3309
    %v3313 = vsel %vm597, %v3312, 0.0
    %v3314 = vrot.slane %v3313, 4
    %v3315 = vadd.f32 %v3313, %v3314
    %v3316 = vrot.slane %v3315, 2
    %v3317 = vadd.f32 %v3315, %v3316
    %v3318 = vrot.slane %v3317, 1
    %v3319 = vadd.f32 %v3317, %v3318
    %v3320 = vmul.f32 %v3319, %v605
    %v3321 = vsub.f32 %v3312, %v3320
    %v3322 = vmul.f32 %v3321, %v3321
    %v3323 = vsel %vm597, %v3322, 0.0
    %v3324 = vrot.slane %v3323, 4
    %v3325 = vadd.f32 %v3323, %v3324
    %v3326 = vrot.slane %v3325, 2
    %v3327 = vadd.f32 %v3325, %v3326
    %v3328 = vrot.slane %v3327, 1
    %v3329 = vadd.f32 %v3327, %v3328
    %v3330 = vmul.f32 %v3329, %v605
    %v3331 = vadd.f32 %v3330, 1e-05
    %v3332 = vrsqrt.pop %v3331
    %v3333 = vmul.f32 %v3321, %v3332
    %v3334 = vld [vmem:[#allocation5 + $0x18] sm:$0x3f]
    %3336 = vset.pattern.permute.xlu0 0
    %3337 = vperm.xlu0 %3336, %v3334
    %v3338 = vpop.permute.xlu0 %3337
    %v3340 = vmul.f32 %v3333, %v3338
    %3341 = vset.pattern.permute.xlu0 8
    %3342 = vperm.xlu0 %3341, %v3334
    %v3343 = vpop.permute.xlu0 %3342
    %v3345 = vadd.f32 %v3340, %v3343
    %v3346 = vsel %vm597, %v3345, 0.0
    %v3347 = vrot.slane %v3346, 4
    %v3348 = vadd.f32 %v3346, %v3347
    %v3349 = vrot.slane %v3348, 2
    %v3350 = vadd.f32 %v3348, %v3349
    %v3351 = vrot.slane %v3350, 1
    %v3352 = vadd.f32 %v3350, %v3351
    %v3353 = vmul.f32 %v3352, %v605
    %v3354 = vsub.f32 %v3345, %v3353
    %v3355 = vmul.f32 %v3354, %v3354
    %v3356 = vsel %vm597, %v3355, 0.0
    %v3357 = vrot.slane %v3356, 4
    %v3358 = vadd.f32 %v3356, %v3357
    %v3359 = vrot.slane %v3358, 2
    %v3360 = vadd.f32 %v3358, %v3359
    %v3361 = vrot.slane %v3360, 1
    %v3362 = vadd.f32 %v3360, %v3361
    %v3363 = vmul.f32 %v3362, %v605
    %v3364 = vadd.f32 %v3363, 1e-05
    %v3365 = vrsqrt.pop %v3364
    %v3366 = vmul.f32 %v3354, %v3365
    %3367 = vset.pattern.permute.xlu0 24
    %3368 = vperm.xlu0 %3367, %v3334
    %v3369 = vpop.permute.xlu0 %3368
    %v3371 = vmul.f32 %v3366, %v3369
    %3372 = vset.pattern.permute.xlu0 64
    %3373 = vperm.xlu0 %3372, %v3334
    %v3374 = vpop.permute.xlu0 %3373
    %v3376 = vadd.f32 %v3371, %v3374
    %v3377 = vld [vmem:[#allocation5 + $0x18] sm:$0xff]
    %v3378 = vld [vmem:[#allocation5 + $0x20] sm:$0xff]
    %v3379 = vld [vmem:[#allocation5 + $0x28] sm:$0x3]
    %3381 = vset.pattern.permute.xlu0 72
    %3382 = vperm.xlu0 %3381, %v3377
    %v3383 = vpop.permute.xlu0 %3382
    %3386 = vset.pattern.permute.xlu0 72
    %3387 = vperm.xlu0 %3386, %v3378
    %v3388 = vpop.permute.xlu0 %3387
    %3391 = vset.pattern.permute.xlu0 72
    %3392 = vperm.xlu0 %3391, %v3379
    %v3393 = vpop.permute.xlu0 %3392
    %v3395 = vmul.f32 %v3383, %v76
    %v3396 = vmul.f32 %v3388, %v76
    %v3397 = vmul.f32 %v3393, %v76
    %3398 = vset.pattern.permute.xlu0 88
    %3399 = vperm.xlu0 %3398, %v3377
    %v3400 = vpop.permute.xlu0 %3399
    %3402 = vset.pattern.permute.xlu0 88
    %3403 = vperm.xlu0 %3402, %v3378
    %v3404 = vpop.permute.xlu0 %3403
    %3406 = vset.pattern.permute.xlu0 88
    %3407 = vperm.xlu0 %3406, %v3379
    %v3408 = vpop.permute.xlu0 %3407
    %v3410 = vadd.f32 %v3400, %v3395
    %v3411 = vadd.f32 %v3404, %v3396
    %v3412 = vadd.f32 %v3408, %v3397
    %3413 = vset.pattern.permute.xlu0 73
    %3414 = vperm.xlu0 %3413, %v3377
    %v3415 = vpop.permute.xlu0 %3414
    %3417 = vset.pattern.permute.xlu0 73
    %3418 = vperm.xlu0 %3417, %v3378
    %v3419 = vpop.permute.xlu0 %3418
    %3421 = vset.pattern.permute.xlu0 73
    %3422 = vperm.xlu0 %3421, %v3379
    %v3423 = vpop.permute.xlu0 %3422
    %v3425 = vmul.f32 %v3415, %v110
    %v3426 = vmul.f32 %v3419, %v110
    %v3427 = vmul.f32 %v3423, %v110
    %v3428 = vadd.f32 %v3410, %v3425
    %v3429 = vadd.f32 %v3411, %v3426
    %v3430 = vadd.f32 %v3412, %v3427
    %3431 = vset.pattern.permute.xlu0 74
    %3432 = vperm.xlu0 %3431, %v3377
    %v3433 = vpop.permute.xlu0 %3432
    %3435 = vset.pattern.permute.xlu0 74
    %3436 = vperm.xlu0 %3435, %v3378
    %v3437 = vpop.permute.xlu0 %3436
    %3439 = vset.pattern.permute.xlu0 74
    %3440 = vperm.xlu0 %3439, %v3379
    %v3441 = vpop.permute.xlu0 %3440
    %v3443 = vmul.f32 %v3433, %v132
    %v3444 = vmul.f32 %v3437, %v132
    %v3445 = vmul.f32 %v3441, %v132
    %v3446 = vadd.f32 %v3428, %v3443
    %v3447 = vadd.f32 %v3429, %v3444
    %v3448 = vadd.f32 %v3430, %v3445
    %3449 = vset.pattern.permute.xlu0 75
    %3450 = vperm.xlu0 %3449, %v3377
    %v3451 = vpop.permute.xlu0 %3450
    %3453 = vset.pattern.permute.xlu0 75
    %3454 = vperm.xlu0 %3453, %v3378
    %v3455 = vpop.permute.xlu0 %3454
    %3457 = vset.pattern.permute.xlu0 75
    %3458 = vperm.xlu0 %3457, %v3379
    %v3459 = vpop.permute.xlu0 %3458
    %v3461 = vmul.f32 %v3451, %v154
    %v3462 = vmul.f32 %v3455, %v154
    %v3463 = vmul.f32 %v3459, %v154
    %v3464 = vadd.f32 %v3446, %v3461
    %v3465 = vadd.f32 %v3447, %v3462
    %v3466 = vadd.f32 %v3448, %v3463
    %3467 = vset.pattern.permute.xlu0 76
    %3468 = vperm.xlu0 %3467, %v3377
    %v3469 = vpop.permute.xlu0 %3468
    %3471 = vset.pattern.permute.xlu0 76
    %3472 = vperm.xlu0 %3471, %v3378
    %v3473 = vpop.permute.xlu0 %3472
    %3475 = vset.pattern.permute.xlu0 76
    %3476 = vperm.xlu0 %3475, %v3379
    %v3477 = vpop.permute.xlu0 %3476
    %v3479 = vmul.f32 %v3469, %v176
    %v3480 = vmul.f32 %v3473, %v176
    %v3481 = vmul.f32 %v3477, %v176
    %v3482 = vadd.f32 %v3464, %v3479
    %v3483 = vadd.f32 %v3465, %v3480
    %v3484 = vadd.f32 %v3466, %v3481
    %3485 = vset.pattern.permute.xlu0 77
    %3486 = vperm.xlu0 %3485, %v3377
    %v3487 = vpop.permute.xlu0 %3486
    %3489 = vset.pattern.permute.xlu0 77
    %3490 = vperm.xlu0 %3489, %v3378
    %v3491 = vpop.permute.xlu0 %3490
    %3493 = vset.pattern.permute.xlu0 77
    %3494 = vperm.xlu0 %3493, %v3379
    %v3495 = vpop.permute.xlu0 %3494
    %v3497 = vmul.f32 %v3487, %v198
    %v3498 = vmul.f32 %v3491, %v198
    %v3499 = vmul.f32 %v3495, %v198
    %v3500 = vadd.f32 %v3482, %v3497
    %v3501 = vadd.f32 %v3483, %v3498
    %v3502 = vadd.f32 %v3484, %v3499
    %v3503 = vlaneseq
    %v3504 = vshrl.u32 %v3503, 7
    %v3505 = vsub.s32 6, %v3504
    %v3506 = vrot.slane %v3500, %v3505
    %3508 = vbcast.lane.b32.xlu0 %v3506, 256
    %v3509 = vpop.permute.xlu0 %3508
    %v3510 = vlaneseq
    %v3511 = vshrl.u32 %v3510, 7
    %v3512 = vsub.s32 7, %v3511
    %v3513 = vrot.slane %v3500, %v3512
    %3515 = vbcast.lane.b32.xlu0 %v3513, 256
    %v3516 = vpop.permute.xlu0 %3515
    %v3517 = vlaneseq
    %v3518 = vshrl.u32 %v3517, 7
    %v3519 = vsub.s32 0, %v3518
    %v3520 = vrot.slane %v3501, %v3519
    %3522 = vbcast.lane.b32.xlu0 %v3520, 256
    %v3523 = vpop.permute.xlu0 %3522
    %v3524 = vlaneseq
    %v3525 = vshrl.u32 %v3524, 7
    %v3526 = vsub.s32 1, %v3525
    %v3527 = vrot.slane %v3501, %v3526
    %3529 = vbcast.lane.b32.xlu0 %v3527, 256
    %v3530 = vpop.permute.xlu0 %3529
    %v3531 = vlaneseq
    %v3532 = vshrl.u32 %v3531, 7
    %v3533 = vsub.s32 2, %v3532
    %v3534 = vrot.slane %v3501, %v3533
    %3536 = vbcast.lane.b32.xlu0 %v3534, 256
    %v3537 = vpop.permute.xlu0 %3536
    %v3538 = vlaneseq
    %v3539 = vshrl.u32 %v3538, 7
    %v3540 = vsub.s32 3, %v3539
    %v3541 = vrot.slane %v3501, %v3540
    %3543 = vbcast.lane.b32.xlu0 %v3541, 256
    %v3544 = vpop.permute.xlu0 %3543
    %v3546 = vcombine.high %v3500, %v3500
    %v3548 = vunpack.c.l.s4 1966171168
    %v3549 = vunpack.c.0.s8 %v3548
    %v3550 = vlaneseq
    %v3551 = vshrl.u32 %v3550, 7
    %v3552 = vsub.s32 %v3549, %v3551
    %v3553 = vrot.slane %v3500, %v3552
    %v3555 = vunpack.c.l.s4 1966171168
    %v3556 = vunpack.c.0.s8 %v3555
    %v3557 = vlaneseq
    %v3558 = vshrl.u32 %v3557, 7
    %v3559 = vsub.s32 %v3556, %v3558
    %v3560 = vrot.slane %v3546, %v3559
    %v3561 = vcombine.high %v3553, %v3553
    %v3562 = vcombine.high %v3560, %v3560
    %v3564 = vunpack.c.l.s4 1966171168
    %v3565 = vunpack.c.0.s8 %v3564
    %v3566 = vlaneseq
    %v3567 = vshrl.u32 %v3566, 7
    %v3568 = vsub.s32 %v3565, %v3567
    %v3569 = vrot.slane %v3553, %v3568
    %v3571 = vunpack.c.l.s4 1966171168
    %v3572 = vunpack.c.0.s8 %v3571
    %v3573 = vlaneseq
    %v3574 = vshrl.u32 %v3573, 7
    %v3575 = vsub.s32 %v3572, %v3574
    %v3576 = vrot.slane %v3560, %v3575
    %v3578 = vunpack.c.l.s4 1966171168
    %v3579 = vunpack.c.0.s8 %v3578
    %v3580 = vlaneseq
    %v3581 = vshrl.u32 %v3580, 7
    %v3582 = vsub.s32 %v3579, %v3581
    %v3583 = vrot.slane %v3561, %v3582
    %v3585 = vunpack.c.l.s4 1966171168
    %v3586 = vunpack.c.0.s8 %v3585
    %v3587 = vlaneseq
    %v3588 = vshrl.u32 %v3587, 7
    %v3589 = vsub.s32 %v3586, %v3588
    %v3590 = vrot.slane %v3562, %v3589
    %v3591 = vcombine.high %v3569, %v3569
    %v3592 = vcombine.high %v3583, %v3583
    %v3593 = vlaneseq
    %v3594 = vshrl.u32 %v3593, 7
    %v3595 = vsub.s32 0, %v3594
    %v3596 = vrot.slane %v3569, %v3595
    %v3597 = vlaneseq
    %v3598 = vshrl.u32 %v3597, 7
    %v3599 = vsub.s32 0, %v3598
    %v3600 = vrot.slane %v3583, %v3599
    %v3601 = vlaneseq
    %v3602 = vshrl.u32 %v3601, 7
    %v3603 = vsub.s32 0, %v3602
    %v3604 = vrot.slane %v3591, %v3603
    %v3605 = vlaneseq
    %v3606 = vshrl.u32 %v3605, 7
    %v3607 = vsub.s32 0, %v3606
    %v3608 = vrot.slane %v3592, %v3607
    %v3609 = vlaneseq
    %v3610 = vshrl.u32 %v3609, 7
    %v3611 = vsub.s32 0, %v3610
    %v3612 = vrot.slane %v3576, %v3611
    %v3613 = vlaneseq
    %v3614 = vshrl.u32 %v3613, 7
    %v3615 = vsub.s32 0, %v3614
    %v3616 = vrot.slane %v3590, %v3615
    %v3623 = vmul.f32 %v3509, %v3596
    %v3624 = vmul.f32 %v3516, %v3600
    %v3625 = vmul.f32 %v3523, %v3604
    %v3626 = vmul.f32 %v3530, %v3608
    %v3627 = vmul.f32 %v3537, %v3612
    %v3628 = vmul.f32 %v3544, %v3616
    %v3629 = vsel %vm331, %v3623, -inf
    %v3630 = vrot.slane %v3629, 4
    %v3631 = vmax.f32 %v3629, %v3630
    %v3632 = vrot.slane %v3631, 2
    %v3633 = vmax.f32 %v3631, %v3632
    %v3634 = vrot.slane %v3633, 1
    %v3635 = vmax.f32 %v3633, %v3634
    %v3636 = vsel %vm331, %v3624, -inf
    %v3637 = vrot.slane %v3636, 4
    %v3638 = vmax.f32 %v3636, %v3637
    %v3639 = vrot.slane %v3638, 2
    %v3640 = vmax.f32 %v3638, %v3639
    %v3641 = vrot.slane %v3640, 1
    %v3642 = vmax.f32 %v3640, %v3641
    %v3643 = vsel %vm331, %v3625, -inf
    %v3644 = vrot.slane %v3643, 4
    %v3645 = vmax.f32 %v3643, %v3644
    %v3646 = vrot.slane %v3645, 2
    %v3647 = vmax.f32 %v3645, %v3646
    %v3648 = vrot.slane %v3647, 1
    %v3649 = vmax.f32 %v3647, %v3648
    %v3650 = vsel %vm331, %v3626, -inf
    %v3651 = vrot.slane %v3650, 4
    %v3652 = vmax.f32 %v3650, %v3651
    %v3653 = vrot.slane %v3652, 2
    %v3654 = vmax.f32 %v3652, %v3653
    %v3655 = vrot.slane %v3654, 1
    %v3656 = vmax.f32 %v3654, %v3655
    %v3657 = vsel %vm331, %v3627, -inf
    %v3658 = vrot.slane %v3657, 4
    %v3659 = vmax.f32 %v3657, %v3658
    %v3660 = vrot.slane %v3659, 2
    %v3661 = vmax.f32 %v3659, %v3660
    %v3662 = vrot.slane %v3661, 1
    %v3663 = vmax.f32 %v3661, %v3662
    %v3664 = vsel %vm331, %v3628, -inf
    %v3665 = vrot.slane %v3664, 4
    %v3666 = vmax.f32 %v3664, %v3665
    %v3667 = vrot.slane %v3666, 2
    %v3668 = vmax.f32 %v3666, %v3667
    %v3669 = vrot.slane %v3668, 1
    %v3670 = vmax.f32 %v3668, %v3669
    %v3671 = vsub.f32 %v3623, %v3635
    %v3672 = vsub.f32 %v3624, %v3642
    %v3673 = vsub.f32 %v3625, %v3649
    %v3674 = vsub.f32 %v3626, %v3656
    %v3675 = vsub.f32 %v3627, %v3663
    %v3676 = vsub.f32 %v3628, %v3670
    %v3677 = vmul.f32 %v3671, 1.442695
    %v3678 = vpow.pop %v3677
    %v3679 = vmul.f32 %v3672, 1.442695
    %v3680 = vpow.pop %v3679
    %v3681 = vmul.f32 %v3673, 1.442695
    %v3682 = vpow.pop %v3681
    %v3683 = vmul.f32 %v3674, 1.442695
    %v3684 = vpow.pop %v3683
    %v3685 = vmul.f32 %v3675, 1.442695
    %v3686 = vpow.pop %v3685
    %v3687 = vmul.f32 %v3676, 1.442695
    %v3688 = vpow.pop %v3687
    %v3689 = vsel %vm331, %v3678, 0.0
    %v3690 = vrot.slane %v3689, 4
    %v3691 = vadd.f32 %v3689, %v3690
    %v3692 = vrot.slane %v3691, 2
    %v3693 = vadd.f32 %v3691, %v3692
    %v3694 = vrot.slane %v3693, 1
    %v3695 = vadd.f32 %v3693, %v3694
    %v3696 = vsel %vm331, %v3680, 0.0
    %v3697 = vrot.slane %v3696, 4
    %v3698 = vadd.f32 %v3696, %v3697
    %v3699 = vrot.slane %v3698, 2
    %v3700 = vadd.f32 %v3698, %v3699
    %v3701 = vrot.slane %v3700, 1
    %v3702 = vadd.f32 %v3700, %v3701
    %v3703 = vsel %vm331, %v3682, 0.0
    %v3704 = vrot.slane %v3703, 4
    %v3705 = vadd.f32 %v3703, %v3704
    %v3706 = vrot.slane %v3705, 2
    %v3707 = vadd.f32 %v3705, %v3706
    %v3708 = vrot.slane %v3707, 1
    %v3709 = vadd.f32 %v3707, %v3708
    %v3710 = vsel %vm331, %v3684, 0.0
    %v3711 = vrot.slane %v3710, 4
    %v3712 = vadd.f32 %v3710, %v3711
    %v3713 = vrot.slane %v3712, 2
    %v3714 = vadd.f32 %v3712, %v3713
    %v3715 = vrot.slane %v3714, 1
    %v3716 = vadd.f32 %v3714, %v3715
    %v3717 = vsel %vm331, %v3686, 0.0
    %v3718 = vrot.slane %v3717, 4
    %v3719 = vadd.f32 %v3717, %v3718
    %v3720 = vrot.slane %v3719, 2
    %v3721 = vadd.f32 %v3719, %v3720
    %v3722 = vrot.slane %v3721, 1
    %v3723 = vadd.f32 %v3721, %v3722
    %v3724 = vsel %vm331, %v3688, 0.0
    %v3725 = vrot.slane %v3724, 4
    %v3726 = vadd.f32 %v3724, %v3725
    %v3727 = vrot.slane %v3726, 2
    %v3728 = vadd.f32 %v3726, %v3727
    %v3729 = vrot.slane %v3728, 1
    %v3730 = vadd.f32 %v3728, %v3729
    %v3731 = vlaneseq
    %v3732 = vshrl.u32 %v3731, 7
    %v3733 = vsub.s32 4, %v3732
    %v3734 = vrot.slane %v3501, %v3733
    %3736 = vbcast.lane.b32.xlu0 %v3734, 256
    %v3737 = vpop.permute.xlu0 %3736
    %v3738 = vlaneseq
    %v3739 = vshrl.u32 %v3738, 7
    %v3740 = vsub.s32 5, %v3739
    %v3741 = vrot.slane %v3501, %v3740
    %3743 = vbcast.lane.b32.xlu0 %v3741, 256
    %v3744 = vpop.permute.xlu0 %3743
    %v3745 = vlaneseq
    %v3746 = vshrl.u32 %v3745, 7
    %v3747 = vsub.s32 6, %v3746
    %v3748 = vrot.slane %v3501, %v3747
    %3750 = vbcast.lane.b32.xlu0 %v3748, 256
    %v3751 = vpop.permute.xlu0 %3750
    %v3752 = vlaneseq
    %v3753 = vshrl.u32 %v3752, 7
    %v3754 = vsub.s32 7, %v3753
    %v3755 = vrot.slane %v3501, %v3754
    %3757 = vbcast.lane.b32.xlu0 %v3755, 256
    %v3758 = vpop.permute.xlu0 %3757
    %v3759 = vlaneseq
    %v3760 = vshrl.u32 %v3759, 7
    %v3761 = vsub.s32 0, %v3760
    %v3762 = vrot.slane %v3502, %v3761
    %3764 = vbcast.lane.b32.xlu0 %v3762, 256
    %v3765 = vpop.permute.xlu0 %3764
    %v3766 = vlaneseq
    %v3767 = vshrl.u32 %v3766, 7
    %v3768 = vsub.s32 1, %v3767
    %v3769 = vrot.slane %v3502, %v3768
    %3771 = vbcast.lane.b32.xlu0 %v3769, 256
    %v3772 = vpop.permute.xlu0 %3771
    %v3773 = vmul.f32 %v3678, %v3737
    %v3774 = vmul.f32 %v3680, %v3744
    %v3775 = vmul.f32 %v3682, %v3751
    %v3776 = vmul.f32 %v3684, %v3758
    %v3777 = vmul.f32 %v3686, %v3765
    %v3778 = vmul.f32 %v3688, %v3772
    %v3779 = vsel %vm331, %v3773, 0.0
    %v3780 = vrot.slane %v3779, 4
    %v3781 = vadd.f32 %v3779, %v3780
    %v3782 = vrot.slane %v3781, 2
    %v3783 = vadd.f32 %v3781, %v3782
    %v3784 = vrot.slane %v3783, 1
    %v3785 = vadd.f32 %v3783, %v3784
    %v3786 = vsel %vm331, %v3774, 0.0
    %v3787 = vrot.slane %v3786, 4
    %v3788 = vadd.f32 %v3786, %v3787
    %v3789 = vrot.slane %v3788, 2
    %v3790 = vadd.f32 %v3788, %v3789
    %v3791 = vrot.slane %v3790, 1
    %v3792 = vadd.f32 %v3790, %v3791
    %v3793 = vsel %vm331, %v3775, 0.0
    %v3794 = vrot.slane %v3793, 4
    %v3795 = vadd.f32 %v3793, %v3794
    %v3796 = vrot.slane %v3795, 2
    %v3797 = vadd.f32 %v3795, %v3796
    %v3798 = vrot.slane %v3797, 1
    %v3799 = vadd.f32 %v3797, %v3798
    %v3800 = vsel %vm331, %v3776, 0.0
    %v3801 = vrot.slane %v3800, 4
    %v3802 = vadd.f32 %v3800, %v3801
    %v3803 = vrot.slane %v3802, 2
    %v3804 = vadd.f32 %v3802, %v3803
    %v3805 = vrot.slane %v3804, 1
    %v3806 = vadd.f32 %v3804, %v3805
    %v3807 = vsel %vm331, %v3777, 0.0
    %v3808 = vrot.slane %v3807, 4
    %v3809 = vadd.f32 %v3807, %v3808
    %v3810 = vrot.slane %v3809, 2
    %v3811 = vadd.f32 %v3809, %v3810
    %v3812 = vrot.slane %v3811, 1
    %v3813 = vadd.f32 %v3811, %v3812
    %v3814 = vsel %vm331, %v3778, 0.0
    %v3815 = vrot.slane %v3814, 4
    %v3816 = vadd.f32 %v3814, %v3815
    %v3817 = vrot.slane %v3816, 2
    %v3818 = vadd.f32 %v3816, %v3817
    %v3819 = vrot.slane %v3818, 1
    %v3820 = vadd.f32 %v3818, %v3819
    %v3821 = vrcp.pop %v3695
    %v3822 = vrcp.pop %v3702
    %v3823 = vrcp.pop %v3709
    %v3824 = vrcp.pop %v3716
    %v3825 = vrcp.pop %v3723
    %v3826 = vrcp.pop %v3730
    %v3827 = vmul.f32 %v3695, %v3821
    %v3828 = vmul.f32 %v3702, %v3822
    %v3829 = vmul.f32 %v3709, %v3823
    %v3830 = vmul.f32 %v3716, %v3824
    %v3831 = vmul.f32 %v3723, %v3825
    %v3832 = vmul.f32 %v3730, %v3826
    %v3833 = vsub.f32 2.0, %v3827
    %v3834 = vsub.f32 2.0, %v3828
    %v3835 = vsub.f32 2.0, %v3829
    %v3836 = vsub.f32 2.0, %v3830
    %v3837 = vsub.f32 2.0, %v3831
    %v3838 = vsub.f32 2.0, %v3832
    %v3839 = vmul.f32 %v3821, %v3833
    %v3840 = vmul.f32 %v3822, %v3834
    %v3841 = vmul.f32 %v3823, %v3835
    %v3842 = vmul.f32 %v3824, %v3836
    %v3843 = vmul.f32 %v3825, %v3837
    %v3844 = vmul.f32 %v3826, %v3838
    %v3845 = vmul.f32 %v3785, %v3839
    %v3846 = vmul.f32 %v3792, %v3840
    %v3847 = vmul.f32 %v3799, %v3841
    %v3848 = vmul.f32 %v3806, %v3842
    %v3849 = vmul.f32 %v3813, %v3843
    %v3850 = vmul.f32 %v3820, %v3844
    %v3851 = vld [vmem:[#allocation5 + $0x18] sm:$0x3f]
    %3853 = vset.pattern.permute.xlu0 96
    %3854 = vperm.xlu0 %3853, %v3851
    %v3855 = vpop.permute.xlu0 %3854
    %v3857 = vmul.f32 %v3855, %v3845
    %3858 = vset.pattern.permute.xlu0 112
    %3859 = vperm.xlu0 %3858, %v3851
    %v3860 = vpop.permute.xlu0 %3859
    %v3862 = vadd.f32 %v3860, %v3857
    %3863 = vset.pattern.permute.xlu0 97
    %3864 = vperm.xlu0 %3863, %v3851
    %v3865 = vpop.permute.xlu0 %3864
    %v3867 = vmul.f32 %v3865, %v3846
    %v3868 = vadd.f32 %v3862, %v3867
    %3869 = vset.pattern.permute.xlu0 98
    %3870 = vperm.xlu0 %3869, %v3851
    %v3871 = vpop.permute.xlu0 %3870
    %v3873 = vmul.f32 %v3871, %v3847
    %v3874 = vadd.f32 %v3868, %v3873
    %3875 = vset.pattern.permute.xlu0 99
    %3876 = vperm.xlu0 %3875, %v3851
    %v3877 = vpop.permute.xlu0 %3876
    %v3879 = vmul.f32 %v3877, %v3848
    %v3880 = vadd.f32 %v3874, %v3879
    %3881 = vset.pattern.permute.xlu0 100
    %3882 = vperm.xlu0 %3881, %v3851
    %v3883 = vpop.permute.xlu0 %3882
    %v3885 = vmul.f32 %v3883, %v3849
    %v3886 = vadd.f32 %v3880, %v3885
    %3887 = vset.pattern.permute.xlu0 101
    %3888 = vperm.xlu0 %3887, %v3851
    %v3889 = vpop.permute.xlu0 %3888
    %v3891 = vmul.f32 %v3889, %v3850
    %v3892 = vadd.f32 %v3886, %v3891
    %v3893 = vadd.f32 %v54, %v3892
    %v3894 = vsel %vm597, %v3893, 0.0
    %v3895 = vrot.slane %v3894, 4
    %v3896 = vadd.f32 %v3894, %v3895
    %v3897 = vrot.slane %v3896, 2
    %v3898 = vadd.f32 %v3896, %v3897
    %v3899 = vrot.slane %v3898, 1
    %v3900 = vadd.f32 %v3898, %v3899
    %v3901 = vmul.f32 %v3900, %v605
    %v3902 = vsub.f32 %v3893, %v3901
    %v3903 = vmul.f32 %v3902, %v3902
    %v3904 = vsel %vm597, %v3903, 0.0
    %v3905 = vrot.slane %v3904, 4
    %v3906 = vadd.f32 %v3904, %v3905
    %v3907 = vrot.slane %v3906, 2
    %v3908 = vadd.f32 %v3906, %v3907
    %v3909 = vrot.slane %v3908, 1
    %v3910 = vadd.f32 %v3908, %v3909
    %v3911 = vmul.f32 %v3910, %v605
    %v3912 = vadd.f32 %v3911, 1e-05
    %v3913 = vrsqrt.pop %v3912
    %v3914 = vmul.f32 %v3902, %v3913
    %v3915 = vld [vmem:[#allocation5 + $0x20] sm:$0x3f]
    %3917 = vset.pattern.permute.xlu0 64
    %3918 = vperm.xlu0 %3917, %v3915
    %v3919 = vpop.permute.xlu0 %3918
    %v3921 = vmul.f32 %v3914, %v3919
    %3922 = vset.pattern.permute.xlu0 80
    %3923 = vperm.xlu0 %3922, %v3915
    %v3924 = vpop.permute.xlu0 %3923
    %v3926 = vadd.f32 %v3921, %v3924
    %v3927 = vld [vmem:[#allocation5 + $0x28] sm:$0x3f]
    %3928 = vset.pattern.permute.xlu0 112
    %3929 = vperm.xlu0 %3928, %v3915
    %v3930 = vpop.permute.xlu0 %3929
    %v3932 = vlaneseq
    %v3933 = vshrl.u32 %v3932, 7
    %v3934 = vsub.s32 0, %v3933
    %v3935 = vrot.slane %v3926, %v3934
    %v3936 = vmul.f32 %v3930, %v3935
    %3938 = vset.pattern.permute.xlu0 24
    %3939 = vperm.xlu0 %3938, %v3927
    %v3940 = vpop.permute.xlu0 %3939
    %v3942 = vadd.f32 %v3940, %v3936
    %3943 = vset.pattern.permute.xlu0 113
    %3944 = vperm.xlu0 %3943, %v3915
    %v3945 = vpop.permute.xlu0 %3944
    %v3947 = vlaneseq
    %v3948 = vshrl.u32 %v3947, 7
    %v3949 = vsub.s32 1, %v3948
    %v3950 = vrot.slane %v3926, %v3949
    %v3951 = vmul.f32 %v3945, %v3950
    %v3952 = vadd.f32 %v3942, %v3951
    %3953 = vset.pattern.permute.xlu0 114
    %3954 = vperm.xlu0 %3953, %v3915
    %v3955 = vpop.permute.xlu0 %3954
    %v3957 = vlaneseq
    %v3958 = vshrl.u32 %v3957, 7
    %v3959 = vsub.s32 2, %v3958
    %v3960 = vrot.slane %v3926, %v3959
    %v3961 = vmul.f32 %v3955, %v3960
    %v3962 = vadd.f32 %v3952, %v3961
    %3963 = vset.pattern.permute.xlu0 115
    %3964 = vperm.xlu0 %3963, %v3915
    %v3965 = vpop.permute.xlu0 %3964
    %v3967 = vlaneseq
    %v3968 = vshrl.u32 %v3967, 7
    %v3969 = vsub.s32 3, %v3968
    %v3970 = vrot.slane %v3926, %v3969
    %v3971 = vmul.f32 %v3965, %v3970
    %v3972 = vadd.f32 %v3962, %v3971
    %3973 = vset.pattern.permute.xlu0 116
    %3974 = vperm.xlu0 %3973, %v3915
    %v3975 = vpop.permute.xlu0 %3974
    %v3977 = vlaneseq
    %v3978 = vshrl.u32 %v3977, 7
    %v3979 = vsub.s32 4, %v3978
    %v3980 = vrot.slane %v3926, %v3979
    %v3981 = vmul.f32 %v3975, %v3980
    %v3982 = vadd.f32 %v3972, %v3981
    %3983 = vset.pattern.permute.xlu0 117
    %3984 = vperm.xlu0 %3983, %v3915
    %v3985 = vpop.permute.xlu0 %3984
    %v3987 = vlaneseq
    %v3988 = vshrl.u32 %v3987, 7
    %v3989 = vsub.s32 5, %v3988
    %v3990 = vrot.slane %v3926, %v3989
    %v3991 = vmul.f32 %v3985, %v3990
    %v3992 = vadd.f32 %v3982, %v3991
    %3993 = vset.pattern.permute.xlu0 64
    %3994 = vperm.xlu0 %3993, %v3927
    %v3995 = vpop.permute.xlu0 %3994
    %v3997 = vlaneseq
    %v3998 = vshrl.u32 %v3997, 7
    %v3999 = vsub.s32 0, %v3998
    %v4000 = vrot.slane %v3376, %v3999
    %v4001 = vmul.f32 %v3995, %v4000
    %4002 = vset.pattern.permute.xlu0 80
    %4003 = vperm.xlu0 %4002, %v3927
    %v4004 = vpop.permute.xlu0 %4003
    %v4006 = vadd.f32 %v4004, %v4001
    %4007 = vset.pattern.permute.xlu0 65
    %4008 = vperm.xlu0 %4007, %v3927
    %v4009 = vpop.permute.xlu0 %4008
    %v4011 = vlaneseq
    %v4012 = vshrl.u32 %v4011, 7
    %v4013 = vsub.s32 1, %v4012
    %v4014 = vrot.slane %v3376, %v4013
    %v4015 = vmul.f32 %v4009, %v4014
    %v4016 = vadd.f32 %v4006, %v4015
    %4017 = vset.pattern.permute.xlu0 66
    %4018 = vperm.xlu0 %4017, %v3927
    %v4019 = vpop.permute.xlu0 %4018
    %v4021 = vlaneseq
    %v4022 = vshrl.u32 %v4021, 7
    %v4023 = vsub.s32 2, %v4022
    %v4024 = vrot.slane %v3376, %v4023
    %v4025 = vmul.f32 %v4019, %v4024
    %v4026 = vadd.f32 %v4016, %v4025
    %4027 = vset.pattern.permute.xlu0 67
    %4028 = vperm.xlu0 %4027, %v3927
    %v4029 = vpop.permute.xlu0 %4028
    %v4031 = vlaneseq
    %v4032 = vshrl.u32 %v4031, 7
    %v4033 = vsub.s32 3, %v4032
    %v4034 = vrot.slane %v3376, %v4033
    %v4035 = vmul.f32 %v4029, %v4034
    %v4036 = vadd.f32 %v4026, %v4035
    %4037 = vset.pattern.permute.xlu0 68
    %4038 = vperm.xlu0 %4037, %v3927
    %v4039 = vpop.permute.xlu0 %4038
    %v4041 = vlaneseq
    %v4042 = vshrl.u32 %v4041, 7
    %v4043 = vsub.s32 4, %v4042
    %v4044 = vrot.slane %v3376, %v4043
    %v4045 = vmul.f32 %v4039, %v4044
    %v4046 = vadd.f32 %v4036, %v4045
    %4047 = vset.pattern.permute.xlu0 69
    %4048 = vperm.xlu0 %4047, %v3927
    %v4049 = vpop.permute.xlu0 %4048
    %v4051 = vlaneseq
    %v4052 = vshrl.u32 %v4051, 7
    %v4053 = vsub.s32 5, %v4052
    %v4054 = vrot.slane %v3376, %v4053
    %v4055 = vmul.f32 %v4049, %v4054
    %v4056 = vadd.f32 %v4046, %v4055
    %4057 = vset.pattern.permute.xlu0 96
    %4058 = vperm.xlu0 %4057, %v3927
    %v4059 = vpop.permute.xlu0 %4058
    %v4061 = vmul.f32 %v4059, %v4000
    %4062 = vset.pattern.permute.xlu0 104
    %4063 = vperm.xlu0 %4062, %v3927
    %v4064 = vpop.permute.xlu0 %4063
    %v4066 = vadd.f32 %v4064, %v4061
    %4067 = vset.pattern.permute.xlu0 97
    %4068 = vperm.xlu0 %4067, %v3927
    %v4069 = vpop.permute.xlu0 %4068
    %v4071 = vmul.f32 %v4069, %v4014
    %v4072 = vadd.f32 %v4066, %v4071
    %4073 = vset.pattern.permute.xlu0 98
    %4074 = vperm.xlu0 %4073, %v3927
    %v4075 = vpop.permute.xlu0 %4074
    %v4077 = vmul.f32 %v4075, %v4024
    %v4078 = vadd.f32 %v4072, %v4077
    %4079 = vset.pattern.permute.xlu0 99
    %4080 = vperm.xlu0 %4079, %v3927
    %v4081 = vpop.permute.xlu0 %4080
    %v4083 = vmul.f32 %v4081, %v4034
    %v4084 = vadd.f32 %v4078, %v4083
    %4085 = vset.pattern.permute.xlu0 100
    %4086 = vperm.xlu0 %4085, %v3927
    %v4087 = vpop.permute.xlu0 %4086
    %v4089 = vmul.f32 %v4087, %v4044
    %v4090 = vadd.f32 %v4084, %v4089
    %4091 = vset.pattern.permute.xlu0 101
    %4092 = vperm.xlu0 %4091, %v3927
    %v4093 = vpop.permute.xlu0 %4092
    %v4095 = vmul.f32 %v4093, %v4054
    %v4096 = vadd.f32 %v4090, %v4095
    %v4097 = vlaneseq
    %v4098 = vshrl.u32 %v4097, 7
    %v4099 = vsub.s32 0, %v4098
    %v4100 = vrot.slane %v4056, %v4099
    %4102 = vbcast.lane.b32.xlu0 %v4100, 256
    %v4103 = vpop.permute.xlu0 %4102
    %v4104 = vlaneseq
    %v4105 = vshrl.u32 %v4104, 7
    %v4106 = vsub.s32 1, %v4105
    %v4107 = vrot.slane %v4056, %v4106
    %4109 = vbcast.lane.b32.xlu0 %v4107, 256
    %v4110 = vpop.permute.xlu0 %4109
    %v4111 = vlaneseq
    %v4112 = vshrl.u32 %v4111, 7
    %v4113 = vsub.s32 2, %v4112
    %v4114 = vrot.slane %v4056, %v4113
    %4116 = vbcast.lane.b32.xlu0 %v4114, 256
    %v4117 = vpop.permute.xlu0 %4116
    %v4118 = vlaneseq
    %v4119 = vshrl.u32 %v4118, 7
    %v4120 = vsub.s32 3, %v4119
    %v4121 = vrot.slane %v4056, %v4120
    %4123 = vbcast.lane.b32.xlu0 %v4121, 256
    %v4124 = vpop.permute.xlu0 %4123
    %v4125 = vlaneseq
    %v4126 = vshrl.u32 %v4125, 7
    %v4127 = vsub.s32 4, %v4126
    %v4128 = vrot.slane %v4056, %v4127
    %4130 = vbcast.lane.b32.xlu0 %v4128, 256
    %v4131 = vpop.permute.xlu0 %4130
    %v4132 = vlaneseq
    %v4133 = vshrl.u32 %v4132, 7
    %v4134 = vsub.s32 5, %v4133
    %v4135 = vrot.slane %v4056, %v4134
    %4137 = vbcast.lane.b32.xlu0 %v4135, 256
    %v4138 = vpop.permute.xlu0 %4137
    %v4140 = vcombine.high %v3992, %v3992
    %v4142 = vunpack.c.l.s4 1966171168
    %v4143 = vunpack.c.0.s8 %v4142
    %v4144 = vlaneseq
    %v4145 = vshrl.u32 %v4144, 7
    %v4146 = vsub.s32 %v4143, %v4145
    %v4147 = vrot.slane %v3992, %v4146
    %v4149 = vunpack.c.l.s4 1966171168
    %v4150 = vunpack.c.0.s8 %v4149
    %v4151 = vlaneseq
    %v4152 = vshrl.u32 %v4151, 7
    %v4153 = vsub.s32 %v4150, %v4152
    %v4154 = vrot.slane %v4140, %v4153
    %v4155 = vcombine.high %v4147, %v4147
    %v4156 = vcombine.high %v4154, %v4154
    %v4158 = vunpack.c.l.s4 1966171168
    %v4159 = vunpack.c.0.s8 %v4158
    %v4160 = vlaneseq
    %v4161 = vshrl.u32 %v4160, 7
    %v4162 = vsub.s32 %v4159, %v4161
    %v4163 = vrot.slane %v4147, %v4162
    %v4165 = vunpack.c.l.s4 1966171168
    %v4166 = vunpack.c.0.s8 %v4165
    %v4167 = vlaneseq
    %v4168 = vshrl.u32 %v4167, 7
    %v4169 = vsub.s32 %v4166, %v4168
    %v4170 = vrot.slane %v4154, %v4169
    %v4172 = vunpack.c.l.s4 1966171168
    %v4173 = vunpack.c.0.s8 %v4172
    %v4174 = vlaneseq
    %v4175 = vshrl.u32 %v4174, 7
    %v4176 = vsub.s32 %v4173, %v4175
    %v4177 = vrot.slane %v4155, %v4176
    %v4179 = vunpack.c.l.s4 1966171168
    %v4180 = vunpack.c.0.s8 %v4179
    %v4181 = vlaneseq
    %v4182 = vshrl.u32 %v4181, 7
    %v4183 = vsub.s32 %v4180, %v4182
    %v4184 = vrot.slane %v4156, %v4183
    %v4185 = vcombine.high %v4163, %v4163
    %v4186 = vcombine.high %v4177, %v4177
    %v4187 = vlaneseq
    %v4188 = vshrl.u32 %v4187, 7
    %v4189 = vsub.s32 0, %v4188
    %v4190 = vrot.slane %v4163, %v4189
    %v4191 = vlaneseq
    %v4192 = vshrl.u32 %v4191, 7
    %v4193 = vsub.s32 0, %v4192
    %v4194 = vrot.slane %v4177, %v4193
    %v4195 = vlaneseq
    %v4196 = vshrl.u32 %v4195, 7
    %v4197 = vsub.s32 0, %v4196
    %v4198 = vrot.slane %v4185, %v4197
    %v4199 = vlaneseq
    %v4200 = vshrl.u32 %v4199, 7
    %v4201 = vsub.s32 0, %v4200
    %v4202 = vrot.slane %v4186, %v4201
    %v4203 = vlaneseq
    %v4204 = vshrl.u32 %v4203, 7
    %v4205 = vsub.s32 0, %v4204
    %v4206 = vrot.slane %v4170, %v4205
    %v4207 = vlaneseq
    %v4208 = vshrl.u32 %v4207, 7
    %v4209 = vsub.s32 0, %v4208
    %v4210 = vrot.slane %v4184, %v4209
    %v4217 = vmul.f32 %v4103, %v4190
    %v4218 = vmul.f32 %v4110, %v4194
    %v4219 = vmul.f32 %v4117, %v4198
    %v4220 = vmul.f32 %v4124, %v4202
    %v4221 = vmul.f32 %v4131, %v4206
    %v4222 = vmul.f32 %v4138, %v4210
    %v4223 = vsel %vm331, %v4217, -inf
    %v4224 = vrot.slane %v4223, 4
    %v4225 = vmax.f32 %v4223, %v4224
    %v4226 = vrot.slane %v4225, 2
    %v4227 = vmax.f32 %v4225, %v4226
    %v4228 = vrot.slane %v4227, 1
    %v4229 = vmax.f32 %v4227, %v4228
    %v4230 = vsel %vm331, %v4218, -inf
    %v4231 = vrot.slane %v4230, 4
    %v4232 = vmax.f32 %v4230, %v4231
    %v4233 = vrot.slane %v4232, 2
    %v4234 = vmax.f32 %v4232, %v4233
    %v4235 = vrot.slane %v4234, 1
    %v4236 = vmax.f32 %v4234, %v4235
    %v4237 = vsel %vm331, %v4219, -inf
    %v4238 = vrot.slane %v4237, 4
    %v4239 = vmax.f32 %v4237, %v4238
    %v4240 = vrot.slane %v4239, 2
    %v4241 = vmax.f32 %v4239, %v4240
    %v4242 = vrot.slane %v4241, 1
    %v4243 = vmax.f32 %v4241, %v4242
    %v4244 = vsel %vm331, %v4220, -inf
    %v4245 = vrot.slane %v4244, 4
    %v4246 = vmax.f32 %v4244, %v4245
    %v4247 = vrot.slane %v4246, 2
    %v4248 = vmax.f32 %v4246, %v4247
    %v4249 = vrot.slane %v4248, 1
    %v4250 = vmax.f32 %v4248, %v4249
    %v4251 = vsel %vm331, %v4221, -inf
    %v4252 = vrot.slane %v4251, 4
    %v4253 = vmax.f32 %v4251, %v4252
    %v4254 = vrot.slane %v4253, 2
    %v4255 = vmax.f32 %v4253, %v4254
    %v4256 = vrot.slane %v4255, 1
    %v4257 = vmax.f32 %v4255, %v4256
    %v4258 = vsel %vm331, %v4222, -inf
    %v4259 = vrot.slane %v4258, 4
    %v4260 = vmax.f32 %v4258, %v4259
    %v4261 = vrot.slane %v4260, 2
    %v4262 = vmax.f32 %v4260, %v4261
    %v4263 = vrot.slane %v4262, 1
    %v4264 = vmax.f32 %v4262, %v4263
    %v4265 = vsub.f32 %v4217, %v4229
    %v4266 = vsub.f32 %v4218, %v4236
    %v4267 = vsub.f32 %v4219, %v4243
    %v4268 = vsub.f32 %v4220, %v4250
    %v4269 = vsub.f32 %v4221, %v4257
    %v4270 = vsub.f32 %v4222, %v4264
    %v4271 = vmul.f32 %v4265, 1.442695
    %v4272 = vpow.pop %v4271
    %v4273 = vmul.f32 %v4266, 1.442695
    %v4274 = vpow.pop %v4273
    %v4275 = vmul.f32 %v4267, 1.442695
    %v4276 = vpow.pop %v4275
    %v4277 = vmul.f32 %v4268, 1.442695
    %v4278 = vpow.pop %v4277
    %v4279 = vmul.f32 %v4269, 1.442695
    %v4280 = vpow.pop %v4279
    %v4281 = vmul.f32 %v4270, 1.442695
    %v4282 = vpow.pop %v4281
    %v4283 = vsel %vm331, %v4272, 0.0
    %v4284 = vrot.slane %v4283, 4
    %v4285 = vadd.f32 %v4283, %v4284
    %v4286 = vrot.slane %v4285, 2
    %v4287 = vadd.f32 %v4285, %v4286
    %v4288 = vrot.slane %v4287, 1
    %v4289 = vadd.f32 %v4287, %v4288
    %v4290 = vsel %vm331, %v4274, 0.0
    %v4291 = vrot.slane %v4290, 4
    %v4292 = vadd.f32 %v4290, %v4291
    %v4293 = vrot.slane %v4292, 2
    %v4294 = vadd.f32 %v4292, %v4293
    %v4295 = vrot.slane %v4294, 1
    %v4296 = vadd.f32 %v4294, %v4295
    %v4297 = vsel %vm331, %v4276, 0.0
    %v4298 = vrot.slane %v4297, 4
    %v4299 = vadd.f32 %v4297, %v4298
    %v4300 = vrot.slane %v4299, 2
    %v4301 = vadd.f32 %v4299, %v4300
    %v4302 = vrot.slane %v4301, 1
    %v4303 = vadd.f32 %v4301, %v4302
    %v4304 = vsel %vm331, %v4278, 0.0
    %v4305 = vrot.slane %v4304, 4
    %v4306 = vadd.f32 %v4304, %v4305
    %v4307 = vrot.slane %v4306, 2
    %v4308 = vadd.f32 %v4306, %v4307
    %v4309 = vrot.slane %v4308, 1
    %v4310 = vadd.f32 %v4308, %v4309
    %v4311 = vsel %vm331, %v4280, 0.0
    %v4312 = vrot.slane %v4311, 4
    %v4313 = vadd.f32 %v4311, %v4312
    %v4314 = vrot.slane %v4313, 2
    %v4315 = vadd.f32 %v4313, %v4314
    %v4316 = vrot.slane %v4315, 1
    %v4317 = vadd.f32 %v4315, %v4316
    %v4318 = vsel %vm331, %v4282, 0.0
    %v4319 = vrot.slane %v4318, 4
    %v4320 = vadd.f32 %v4318, %v4319
    %v4321 = vrot.slane %v4320, 2
    %v4322 = vadd.f32 %v4320, %v4321
    %v4323 = vrot.slane %v4322, 1
    %v4324 = vadd.f32 %v4322, %v4323
    %v4325 = vlaneseq
    %v4326 = vshrl.u32 %v4325, 7
    %v4327 = vsub.s32 0, %v4326
    %v4328 = vrot.slane %v4096, %v4327
    %4330 = vbcast.lane.b32.xlu0 %v4328, 256
    %v4331 = vpop.permute.xlu0 %4330
    %v4332 = vlaneseq
    %v4333 = vshrl.u32 %v4332, 7
    %v4334 = vsub.s32 1, %v4333
    %v4335 = vrot.slane %v4096, %v4334
    %4337 = vbcast.lane.b32.xlu0 %v4335, 256
    %v4338 = vpop.permute.xlu0 %4337
    %v4339 = vlaneseq
    %v4340 = vshrl.u32 %v4339, 7
    %v4341 = vsub.s32 2, %v4340
    %v4342 = vrot.slane %v4096, %v4341
    %4344 = vbcast.lane.b32.xlu0 %v4342, 256
    %v4345 = vpop.permute.xlu0 %4344
    %v4346 = vlaneseq
    %v4347 = vshrl.u32 %v4346, 7
    %v4348 = vsub.s32 3, %v4347
    %v4349 = vrot.slane %v4096, %v4348
    %4351 = vbcast.lane.b32.xlu0 %v4349, 256
    %v4352 = vpop.permute.xlu0 %4351
    %v4353 = vlaneseq
    %v4354 = vshrl.u32 %v4353, 7
    %v4355 = vsub.s32 4, %v4354
    %v4356 = vrot.slane %v4096, %v4355
    %4358 = vbcast.lane.b32.xlu0 %v4356, 256
    %v4359 = vpop.permute.xlu0 %4358
    %v4360 = vlaneseq
    %v4361 = vshrl.u32 %v4360, 7
    %v4362 = vsub.s32 5, %v4361
    %v4363 = vrot.slane %v4096, %v4362
    %4365 = vbcast.lane.b32.xlu0 %v4363, 256
    %v4366 = vpop.permute.xlu0 %4365
    %v4367 = vmul.f32 %v4272, %v4331
    %v4368 = vmul.f32 %v4274, %v4338
    %v4369 = vmul.f32 %v4276, %v4345
    %v4370 = vmul.f32 %v4278, %v4352
    %v4371 = vmul.f32 %v4280, %v4359
    %v4372 = vmul.f32 %v4282, %v4366
    %v4373 = vsel %vm331, %v4367, 0.0
    %v4374 = vrot.slane %v4373, 4
    %v4375 = vadd.f32 %v4373, %v4374
    %v4376 = vrot.slane %v4375, 2
    %v4377 = vadd.f32 %v4375, %v4376
    %v4378 = vrot.slane %v4377, 1
    %v4379 = vadd.f32 %v4377, %v4378
    %v4380 = vsel %vm331, %v4368, 0.0
    %v4381 = vrot.slane %v4380, 4
    %v4382 = vadd.f32 %v4380, %v4381
    %v4383 = vrot.slane %v4382, 2
    %v4384 = vadd.f32 %v4382, %v4383
    %v4385 = vrot.slane %v4384, 1
    %v4386 = vadd.f32 %v4384, %v4385
    %v4387 = vsel %vm331, %v4369, 0.0
    %v4388 = vrot.slane %v4387, 4
    %v4389 = vadd.f32 %v4387, %v4388
    %v4390 = vrot.slane %v4389, 2
    %v4391 = vadd.f32 %v4389, %v4390
    %v4392 = vrot.slane %v4391, 1
    %v4393 = vadd.f32 %v4391, %v4392
    %v4394 = vsel %vm331, %v4370, 0.0
    %v4395 = vrot.slane %v4394, 4
    %v4396 = vadd.f32 %v4394, %v4395
    %v4397 = vrot.slane %v4396, 2
    %v4398 = vadd.f32 %v4396, %v4397
    %v4399 = vrot.slane %v4398, 1
    %v4400 = vadd.f32 %v4398, %v4399
    %v4401 = vsel %vm331, %v4371, 0.0
    %v4402 = vrot.slane %v4401, 4
    %v4403 = vadd.f32 %v4401, %v4402
    %v4404 = vrot.slane %v4403, 2
    %v4405 = vadd.f32 %v4403, %v4404
    %v4406 = vrot.slane %v4405, 1
    %v4407 = vadd.f32 %v4405, %v4406
    %v4408 = vsel %vm331, %v4372, 0.0
    %v4409 = vrot.slane %v4408, 4
    %v4410 = vadd.f32 %v4408, %v4409
    %v4411 = vrot.slane %v4410, 2
    %v4412 = vadd.f32 %v4410, %v4411
    %v4413 = vrot.slane %v4412, 1
    %v4414 = vadd.f32 %v4412, %v4413
    %v4415 = vrcp.pop %v4289
    %v4416 = vrcp.pop %v4296
    %v4417 = vrcp.pop %v4303
    %v4418 = vrcp.pop %v4310
    %v4419 = vrcp.pop %v4317
    %v4420 = vrcp.pop %v4324
    %v4421 = vmul.f32 %v4289, %v4415
    %v4422 = vmul.f32 %v4296, %v4416
    %v4423 = vmul.f32 %v4303, %v4417
    %v4424 = vmul.f32 %v4310, %v4418
    %v4425 = vmul.f32 %v4317, %v4419
    %v4426 = vmul.f32 %v4324, %v4420
    %v4427 = vsub.f32 2.0, %v4421
    %v4428 = vsub.f32 2.0, %v4422
    %v4429 = vsub.f32 2.0, %v4423
    %v4430 = vsub.f32 2.0, %v4424
    %v4431 = vsub.f32 2.0, %v4425
    %v4432 = vsub.f32 2.0, %v4426
    %v4433 = vmul.f32 %v4415, %v4427
    %v4434 = vmul.f32 %v4416, %v4428
    %v4435 = vmul.f32 %v4417, %v4429
    %v4436 = vmul.f32 %v4418, %v4430
    %v4437 = vmul.f32 %v4419, %v4431
    %v4438 = vmul.f32 %v4420, %v4432
    %v4439 = vmul.f32 %v4379, %v4433
    %v4440 = vmul.f32 %v4386, %v4434
    %v4441 = vmul.f32 %v4393, %v4435
    %v4442 = vmul.f32 %v4400, %v4436
    %v4443 = vmul.f32 %v4407, %v4437
    %v4444 = vmul.f32 %v4414, %v4438
    %v4445 = vld [vmem:[#allocation5 + $0x28] sm:$0x3f]
    %v4446 = vld [vmem:[#allocation5 + $0x30] sm:$0x3f]
    %4448 = vset.pattern.permute.xlu0 112
    %4449 = vperm.xlu0 %4448, %v4445
    %v4450 = vpop.permute.xlu0 %4449
    %v4452 = vmul.f32 %v4450, %v4439
    %4454 = vset.pattern.permute.xlu0 24
    %4455 = vperm.xlu0 %4454, %v4446
    %v4456 = vpop.permute.xlu0 %4455
    %v4458 = vadd.f32 %v4456, %v4452
    %4459 = vset.pattern.permute.xlu0 113
    %4460 = vperm.xlu0 %4459, %v4445
    %v4461 = vpop.permute.xlu0 %4460
    %v4463 = vmul.f32 %v4461, %v4440
    %v4464 = vadd.f32 %v4458, %v4463
    %4465 = vset.pattern.permute.xlu0 114
    %4466 = vperm.xlu0 %4465, %v4445
    %v4467 = vpop.permute.xlu0 %4466
    %v4469 = vmul.f32 %v4467, %v4441
    %v4470 = vadd.f32 %v4464, %v4469
    %4471 = vset.pattern.permute.xlu0 115
    %4472 = vperm.xlu0 %4471, %v4445
    %v4473 = vpop.permute.xlu0 %4472
    %v4475 = vmul.f32 %v4473, %v4442
    %v4476 = vadd.f32 %v4470, %v4475
    %4477 = vset.pattern.permute.xlu0 116
    %4478 = vperm.xlu0 %4477, %v4445
    %v4479 = vpop.permute.xlu0 %4478
    %v4481 = vmul.f32 %v4479, %v4443
    %v4482 = vadd.f32 %v4476, %v4481
    %4483 = vset.pattern.permute.xlu0 117
    %4484 = vperm.xlu0 %4483, %v4445
    %v4485 = vpop.permute.xlu0 %4484
    %v4487 = vmul.f32 %v4485, %v4444
    %v4488 = vadd.f32 %v4482, %v4487
    %v4489 = vadd.f32 %v3926, %v4488
    %v4490 = vsel %vm597, %v4489, 0.0
    %v4491 = vrot.slane %v4490, 4
    %v4492 = vadd.f32 %v4490, %v4491
    %v4493 = vrot.slane %v4492, 2
    %v4494 = vadd.f32 %v4492, %v4493
    %v4495 = vrot.slane %v4494, 1
    %v4496 = vadd.f32 %v4494, %v4495
    %v4497 = vmul.f32 %v4496, %v605
    %v4498 = vsub.f32 %v4489, %v4497
    %v4499 = vmul.f32 %v4498, %v4498
    %v4500 = vsel %vm597, %v4499, 0.0
    %v4501 = vrot.slane %v4500, 4
    %v4502 = vadd.f32 %v4500, %v4501
    %v4503 = vrot.slane %v4502, 2
    %v4504 = vadd.f32 %v4502, %v4503
    %v4505 = vrot.slane %v4504, 1
    %v4506 = vadd.f32 %v4504, %v4505
    %v4507 = vmul.f32 %v4506, %v605
    %v4508 = vadd.f32 %v4507, 1e-05
    %v4509 = vrsqrt.pop %v4508
    %v4510 = vmul.f32 %v4498, %v4509
    %v4511 = vld [vmem:[#allocation5 + $0x20] sm:$0x3f]
    %4513 = vset.pattern.permute.xlu0 96
    %4514 = vperm.xlu0 %4513, %v4511
    %v4515 = vpop.permute.xlu0 %4514
    %v4517 = vmul.f32 %v4510, %v4515
    %4518 = vset.pattern.permute.xlu0 104
    %4519 = vperm.xlu0 %4518, %v4511
    %v4520 = vpop.permute.xlu0 %4519
    %v4522 = vadd.f32 %v4517, %v4520
    %v4523 = vld [vmem:[#allocation5 + $0x20] sm:$0xff]
    %v4524 = vld [vmem:[#allocation5 + $0x28] sm:$0xff]
    %v4525 = vld [vmem:[#allocation5 + $0x30] sm:$0xff]
    %v4526 = vld [vmem:[#allocation5 + $0x38] sm:$0xff]
    %v4527 = vld [vmem:[#allocation5 + $0x40] sm:$0xff]
    %v4528 = vld [vmem:[#allocation5 + $0x48] sm:$0xff]
    %v4529 = vld [vmem:[#allocation5 + $0x50] sm:$0xff]
    %v4530 = vld [vmem:[#allocation5 + $0x58] sm:$0xff]
    %v4531 = vld [vmem:[#allocation5 + $0x60] sm:$0xff]
    %4533 = vset.pattern.permute.xlu0 0
    %4534 = vperm.xlu0 %4533, %v4523
    %v4535 = vpop.permute.xlu0 %4534
    %4538 = vset.pattern.permute.xlu0 0
    %4539 = vperm.xlu0 %4538, %v4524
    %v4540 = vpop.permute.xlu0 %4539
    %4543 = vset.pattern.permute.xlu0 0
    %4544 = vperm.xlu0 %4543, %v4525
    %v4545 = vpop.permute.xlu0 %4544
    %4548 = vset.pattern.permute.xlu0 0
    %4549 = vperm.xlu0 %4548, %v4526
    %v4550 = vpop.permute.xlu0 %4549
    %4553 = vset.pattern.permute.xlu0 0
    %4554 = vperm.xlu0 %4553, %v4527
    %v4555 = vpop.permute.xlu0 %4554
    %4558 = vset.pattern.permute.xlu0 0
    %4559 = vperm.xlu0 %4558, %v4528
    %v4560 = vpop.permute.xlu0 %4559
    %4563 = vset.pattern.permute.xlu0 0
    %4564 = vperm.xlu0 %4563, %v4529
    %v4565 = vpop.permute.xlu0 %4564
    %4568 = vset.pattern.permute.xlu0 0
    %4569 = vperm.xlu0 %4568, %v4530
    %v4570 = vpop.permute.xlu0 %4569
    %4573 = vset.pattern.permute.xlu0 0
    %4574 = vperm.xlu0 %4573, %v4531
    %v4575 = vpop.permute.xlu0 %4574
    %v4577 = vlaneseq
    %v4578 = vshrl.u32 %v4577, 7
    %v4579 = vsub.s32 0, %v4578
    %v4580 = vrot.slane %v4522, %v4579
    %v4581 = vmul.f32 %v4535, %v4580
    %v4582 = vmul.f32 %v4540, %v4580
    %v4583 = vmul.f32 %v4545, %v4580
    %v4584 = vmul.f32 %v4550, %v4580
    %v4585 = vmul.f32 %v4555, %v4580
    %v4586 = vmul.f32 %v4560, %v4580
    %v4587 = vmul.f32 %v4565, %v4580
    %v4588 = vmul.f32 %v4570, %v4580
    %v4589 = vmul.f32 %v4575, %v4580
    %4590 = vset.pattern.permute.xlu0 8
    %4591 = vperm.xlu0 %4590, %v4523
    %v4592 = vpop.permute.xlu0 %4591
    %4594 = vset.pattern.permute.xlu0 8
    %4595 = vperm.xlu0 %4594, %v4524
    %v4596 = vpop.permute.xlu0 %4595
    %4598 = vset.pattern.permute.xlu0 8
    %4599 = vperm.xlu0 %4598, %v4525
    %v4600 = vpop.permute.xlu0 %4599
    %4602 = vset.pattern.permute.xlu0 8
    %4603 = vperm.xlu0 %4602, %v4526
    %v4604 = vpop.permute.xlu0 %4603
    %4606 = vset.pattern.permute.xlu0 8
    %4607 = vperm.xlu0 %4606, %v4527
    %v4608 = vpop.permute.xlu0 %4607
    %4610 = vset.pattern.permute.xlu0 8
    %4611 = vperm.xlu0 %4610, %v4528
    %v4612 = vpop.permute.xlu0 %4611
    %4614 = vset.pattern.permute.xlu0 8
    %4615 = vperm.xlu0 %4614, %v4529
    %v4616 = vpop.permute.xlu0 %4615
    %4618 = vset.pattern.permute.xlu0 8
    %4619 = vperm.xlu0 %4618, %v4530
    %v4620 = vpop.permute.xlu0 %4619
    %4622 = vset.pattern.permute.xlu0 8
    %4623 = vperm.xlu0 %4622, %v4531
    %v4624 = vpop.permute.xlu0 %4623
    %v4626 = vadd.f32 %v4592, %v4581
    %v4627 = vadd.f32 %v4596, %v4582
    %v4628 = vadd.f32 %v4600, %v4583
    %v4629 = vadd.f32 %v4604, %v4584
    %v4630 = vadd.f32 %v4608, %v4585
    %v4631 = vadd.f32 %v4612, %v4586
    %v4632 = vadd.f32 %v4616, %v4587
    %v4633 = vadd.f32 %v4620, %v4588
    %v4634 = vadd.f32 %v4624, %v4589
    %4635 = vset.pattern.permute.xlu0 1
    %4636 = vperm.xlu0 %4635, %v4523
    %v4637 = vpop.permute.xlu0 %4636
    %4639 = vset.pattern.permute.xlu0 1
    %4640 = vperm.xlu0 %4639, %v4524
    %v4641 = vpop.permute.xlu0 %4640
    %4643 = vset.pattern.permute.xlu0 1
    %4644 = vperm.xlu0 %4643, %v4525
    %v4645 = vpop.permute.xlu0 %4644
    %4647 = vset.pattern.permute.xlu0 1
    %4648 = vperm.xlu0 %4647, %v4526
    %v4649 = vpop.permute.xlu0 %4648
    %4651 = vset.pattern.permute.xlu0 1
    %4652 = vperm.xlu0 %4651, %v4527
    %v4653 = vpop.permute.xlu0 %4652
    %4655 = vset.pattern.permute.xlu0 1
    %4656 = vperm.xlu0 %4655, %v4528
    %v4657 = vpop.permute.xlu0 %4656
    %4659 = vset.pattern.permute.xlu0 1
    %4660 = vperm.xlu0 %4659, %v4529
    %v4661 = vpop.permute.xlu0 %4660
    %4663 = vset.pattern.permute.xlu0 1
    %4664 = vperm.xlu0 %4663, %v4530
    %v4665 = vpop.permute.xlu0 %4664
    %4667 = vset.pattern.permute.xlu0 1
    %4668 = vperm.xlu0 %4667, %v4531
    %v4669 = vpop.permute.xlu0 %4668
    %v4671 = vlaneseq
    %v4672 = vshrl.u32 %v4671, 7
    %v4673 = vsub.s32 1, %v4672
    %v4674 = vrot.slane %v4522, %v4673
    %v4675 = vmul.f32 %v4637, %v4674
    %v4676 = vmul.f32 %v4641, %v4674
    %v4677 = vmul.f32 %v4645, %v4674
    %v4678 = vmul.f32 %v4649, %v4674
    %v4679 = vmul.f32 %v4653, %v4674
    %v4680 = vmul.f32 %v4657, %v4674
    %v4681 = vmul.f32 %v4661, %v4674
    %v4682 = vmul.f32 %v4665, %v4674
    %v4683 = vmul.f32 %v4669, %v4674
    %v4684 = vadd.f32 %v4626, %v4675
    %v4685 = vadd.f32 %v4627, %v4676
    %v4686 = vadd.f32 %v4628, %v4677
    %v4687 = vadd.f32 %v4629, %v4678
    %v4688 = vadd.f32 %v4630, %v4679
    %v4689 = vadd.f32 %v4631, %v4680
    %v4690 = vadd.f32 %v4632, %v4681
    %v4691 = vadd.f32 %v4633, %v4682
    %v4692 = vadd.f32 %v4634, %v4683
    %4693 = vset.pattern.permute.xlu0 2
    %4694 = vperm.xlu0 %4693, %v4523
    %v4695 = vpop.permute.xlu0 %4694
    %4697 = vset.pattern.permute.xlu0 2
    %4698 = vperm.xlu0 %4697, %v4524
    %v4699 = vpop.permute.xlu0 %4698
    %4701 = vset.pattern.permute.xlu0 2
    %4702 = vperm.xlu0 %4701, %v4525
    %v4703 = vpop.permute.xlu0 %4702
    %4705 = vset.pattern.permute.xlu0 2
    %4706 = vperm.xlu0 %4705, %v4526
    %v4707 = vpop.permute.xlu0 %4706
    %4709 = vset.pattern.permute.xlu0 2
    %4710 = vperm.xlu0 %4709, %v4527
    %v4711 = vpop.permute.xlu0 %4710
    %4713 = vset.pattern.permute.xlu0 2
    %4714 = vperm.xlu0 %4713, %v4528
    %v4715 = vpop.permute.xlu0 %4714
    %4717 = vset.pattern.permute.xlu0 2
    %4718 = vperm.xlu0 %4717, %v4529
    %v4719 = vpop.permute.xlu0 %4718
    %4721 = vset.pattern.permute.xlu0 2
    %4722 = vperm.xlu0 %4721, %v4530
    %v4723 = vpop.permute.xlu0 %4722
    %4725 = vset.pattern.permute.xlu0 2
    %4726 = vperm.xlu0 %4725, %v4531
    %v4727 = vpop.permute.xlu0 %4726
    %v4729 = vlaneseq
    %v4730 = vshrl.u32 %v4729, 7
    %v4731 = vsub.s32 2, %v4730
    %v4732 = vrot.slane %v4522, %v4731
    %v4733 = vmul.f32 %v4695, %v4732
    %v4734 = vmul.f32 %v4699, %v4732
    %v4735 = vmul.f32 %v4703, %v4732
    %v4736 = vmul.f32 %v4707, %v4732
    %v4737 = vmul.f32 %v4711, %v4732
    %v4738 = vmul.f32 %v4715, %v4732
    %v4739 = vmul.f32 %v4719, %v4732
    %v4740 = vmul.f32 %v4723, %v4732
    %v4741 = vmul.f32 %v4727, %v4732
    %v4742 = vadd.f32 %v4684, %v4733
    %v4743 = vadd.f32 %v4685, %v4734
    %v4744 = vadd.f32 %v4686, %v4735
    %v4745 = vadd.f32 %v4687, %v4736
    %v4746 = vadd.f32 %v4688, %v4737
    %v4747 = vadd.f32 %v4689, %v4738
    %v4748 = vadd.f32 %v4690, %v4739
    %v4749 = vadd.f32 %v4691, %v4740
    %v4750 = vadd.f32 %v4692, %v4741
    %4751 = vset.pattern.permute.xlu0 3
    %4752 = vperm.xlu0 %4751, %v4523
    %v4753 = vpop.permute.xlu0 %4752
    %4755 = vset.pattern.permute.xlu0 3
    %4756 = vperm.xlu0 %4755, %v4524
    %v4757 = vpop.permute.xlu0 %4756
    %4759 = vset.pattern.permute.xlu0 3
    %4760 = vperm.xlu0 %4759, %v4525
    %v4761 = vpop.permute.xlu0 %4760
    %4763 = vset.pattern.permute.xlu0 3
    %4764 = vperm.xlu0 %4763, %v4526
    %v4765 = vpop.permute.xlu0 %4764
    %4767 = vset.pattern.permute.xlu0 3
    %4768 = vperm.xlu0 %4767, %v4527
    %v4769 = vpop.permute.xlu0 %4768
    %4771 = vset.pattern.permute.xlu0 3
    %4772 = vperm.xlu0 %4771, %v4528
    %v4773 = vpop.permute.xlu0 %4772
    %4775 = vset.pattern.permute.xlu0 3
    %4776 = vperm.xlu0 %4775, %v4529
    %v4777 = vpop.permute.xlu0 %4776
    %4779 = vset.pattern.permute.xlu0 3
    %4780 = vperm.xlu0 %4779, %v4530
    %v4781 = vpop.permute.xlu0 %4780
    %4783 = vset.pattern.permute.xlu0 3
    %4784 = vperm.xlu0 %4783, %v4531
    %v4785 = vpop.permute.xlu0 %4784
    %v4787 = vlaneseq
    %v4788 = vshrl.u32 %v4787, 7
    %v4789 = vsub.s32 3, %v4788
    %v4790 = vrot.slane %v4522, %v4789
    %v4791 = vmul.f32 %v4753, %v4790
    %v4792 = vmul.f32 %v4757, %v4790
    %v4793 = vmul.f32 %v4761, %v4790
    %v4794 = vmul.f32 %v4765, %v4790
    %v4795 = vmul.f32 %v4769, %v4790
    %v4796 = vmul.f32 %v4773, %v4790
    %v4797 = vmul.f32 %v4777, %v4790
    %v4798 = vmul.f32 %v4781, %v4790
    %v4799 = vmul.f32 %v4785, %v4790
    %v4800 = vadd.f32 %v4742, %v4791
    %v4801 = vadd.f32 %v4743, %v4792
    %v4802 = vadd.f32 %v4744, %v4793
    %v4803 = vadd.f32 %v4745, %v4794
    %v4804 = vadd.f32 %v4746, %v4795
    %v4805 = vadd.f32 %v4747, %v4796
    %v4806 = vadd.f32 %v4748, %v4797
    %v4807 = vadd.f32 %v4749, %v4798
    %v4808 = vadd.f32 %v4750, %v4799
    %4809 = vset.pattern.permute.xlu0 4
    %4810 = vperm.xlu0 %4809, %v4523
    %v4811 = vpop.permute.xlu0 %4810
    %4813 = vset.pattern.permute.xlu0 4
    %4814 = vperm.xlu0 %4813, %v4524
    %v4815 = vpop.permute.xlu0 %4814
    %4817 = vset.pattern.permute.xlu0 4
    %4818 = vperm.xlu0 %4817, %v4525
    %v4819 = vpop.permute.xlu0 %4818
    %4821 = vset.pattern.permute.xlu0 4
    %4822 = vperm.xlu0 %4821, %v4526
    %v4823 = vpop.permute.xlu0 %4822
    %4825 = vset.pattern.permute.xlu0 4
    %4826 = vperm.xlu0 %4825, %v4527
    %v4827 = vpop.permute.xlu0 %4826
    %4829 = vset.pattern.permute.xlu0 4
    %4830 = vperm.xlu0 %4829, %v4528
    %v4831 = vpop.permute.xlu0 %4830
    %4833 = vset.pattern.permute.xlu0 4
    %4834 = vperm.xlu0 %4833, %v4529
    %v4835 = vpop.permute.xlu0 %4834
    %4837 = vset.pattern.permute.xlu0 4
    %4838 = vperm.xlu0 %4837, %v4530
    %v4839 = vpop.permute.xlu0 %4838
    %4841 = vset.pattern.permute.xlu0 4
    %4842 = vperm.xlu0 %4841, %v4531
    %v4843 = vpop.permute.xlu0 %4842
    %v4845 = vlaneseq
    %v4846 = vshrl.u32 %v4845, 7
    %v4847 = vsub.s32 4, %v4846
    %v4848 = vrot.slane %v4522, %v4847
    %v4849 = vmul.f32 %v4811, %v4848
    %v4850 = vmul.f32 %v4815, %v4848
    %v4851 = vmul.f32 %v4819, %v4848
    %v4852 = vmul.f32 %v4823, %v4848
    %v4853 = vmul.f32 %v4827, %v4848
    %v4854 = vmul.f32 %v4831, %v4848
    %v4855 = vmul.f32 %v4835, %v4848
    %v4856 = vmul.f32 %v4839, %v4848
    %v4857 = vmul.f32 %v4843, %v4848
    %v4858 = vadd.f32 %v4800, %v4849
    %v4859 = vadd.f32 %v4801, %v4850
    %v4860 = vadd.f32 %v4802, %v4851
    %v4861 = vadd.f32 %v4803, %v4852
    %v4862 = vadd.f32 %v4804, %v4853
    %v4863 = vadd.f32 %v4805, %v4854
    %v4864 = vadd.f32 %v4806, %v4855
    %v4865 = vadd.f32 %v4807, %v4856
    %v4866 = vadd.f32 %v4808, %v4857
    %4867 = vset.pattern.permute.xlu0 5
    %4868 = vperm.xlu0 %4867, %v4523
    %v4869 = vpop.permute.xlu0 %4868
    %4871 = vset.pattern.permute.xlu0 5
    %4872 = vperm.xlu0 %4871, %v4524
    %v4873 = vpop.permute.xlu0 %4872
    %4875 = vset.pattern.permute.xlu0 5
    %4876 = vperm.xlu0 %4875, %v4525
    %v4877 = vpop.permute.xlu0 %4876
    %4879 = vset.pattern.permute.xlu0 5
    %4880 = vperm.xlu0 %4879, %v4526
    %v4881 = vpop.permute.xlu0 %4880
    %4883 = vset.pattern.permute.xlu0 5
    %4884 = vperm.xlu0 %4883, %v4527
    %v4885 = vpop.permute.xlu0 %4884
    %4887 = vset.pattern.permute.xlu0 5
    %4888 = vperm.xlu0 %4887, %v4528
    %v4889 = vpop.permute.xlu0 %4888
    %4891 = vset.pattern.permute.xlu0 5
    %4892 = vperm.xlu0 %4891, %v4529
    %v4893 = vpop.permute.xlu0 %4892
    %4895 = vset.pattern.permute.xlu0 5
    %4896 = vperm.xlu0 %4895, %v4530
    %v4897 = vpop.permute.xlu0 %4896
    %4899 = vset.pattern.permute.xlu0 5
    %4900 = vperm.xlu0 %4899, %v4531
    %v4901 = vpop.permute.xlu0 %4900
    %v4903 = vlaneseq
    %v4904 = vshrl.u32 %v4903, 7
    %v4905 = vsub.s32 5, %v4904
    %v4906 = vrot.slane %v4522, %v4905
    %v4907 = vmul.f32 %v4869, %v4906
    %v4908 = vmul.f32 %v4873, %v4906
    %v4909 = vmul.f32 %v4877, %v4906
    %v4910 = vmul.f32 %v4881, %v4906
    %v4911 = vmul.f32 %v4885, %v4906
    %v4912 = vmul.f32 %v4889, %v4906
    %v4913 = vmul.f32 %v4893, %v4906
    %v4914 = vmul.f32 %v4897, %v4906
    %v4915 = vmul.f32 %v4901, %v4906
    %v4916 = vadd.f32 %v4858, %v4907
    %v4917 = vadd.f32 %v4859, %v4908
    %v4918 = vadd.f32 %v4860, %v4909
    %v4919 = vadd.f32 %v4861, %v4910
    %v4920 = vadd.f32 %v4862, %v4911
    %v4921 = vadd.f32 %v4863, %v4912
    %v4922 = vadd.f32 %v4864, %v4913
    %v4923 = vadd.f32 %v4865, %v4914
    %v4924 = vadd.f32 %v4866, %v4915
    %v4925 = vmax.f32 %v4916, 0.0
    %v4926 = vmax.f32 %v4917, 0.0
    %v4927 = vmax.f32 %v4918, 0.0
    %v4928 = vmax.f32 %v4919, 0.0
    %v4929 = vmax.f32 %v4920, 0.0
    %v4930 = vmax.f32 %v4921, 0.0
    %v4931 = vmax.f32 %v4922, 0.0
    %v4932 = vmax.f32 %v4923, 0.0
    %v4933 = vmax.f32 %v4924, 0.0
    %v4934 = vld [vmem:[#allocation7 + $0x18] sm:$0x3f]
    %4935 = vset.pattern.permute.xlu0 24
    %4936 = vperm.xlu0 %4935, %v4511
    %v4937 = vpop.permute.xlu0 %4936
    %v4940 = vsel %vm1046, %v4934, 0
    %4942 = vmatprep.subr.mxu0 0.0
    %4943 = vmatpush1.msra.mxu0 %v4925
    %4944 = vmatprep.subr.mxu0 0.0
    %4945 = vmatpush1.msra.mxu0 %v4926
    %4946 = vmatprep.subr.mxu0 0.0
    %4947 = vmatpush1.msra.mxu0 %v4927
    %4948 = vmatprep.subr.mxu0 0.0
    %4949 = vmatpush1.msra.mxu0 %v4928
    %4950 = vmatprep.subr.mxu0 0.0
    %4951 = vmatpush1.msra.mxu0 %v4929
    %4952 = vmatprep.subr.mxu0 0.0
    %4953 = vmatpush1.msra.mxu0 %v4930
    %4954 = vmatprep.subr.mxu0 0.0
    %4955 = vmatpush1.msra.mxu0 %v4931
    %4956 = vmatprep.subr.mxu0 0.0
    %4957 = vmatpush1.msra.mxu0 %v4932
    %4958 = vmatprep.subr.mxu0 0.0
    %4959 = vmatpush1.msra.mxu0 %v4933
    %4960 = vmatprep.subr.mxu0 0.0
    %4961 = vmatpush1.msra.mxu0 0.0
    %4962 = vmatprep.subr.mxu0 0.0
    %4963 = vmatpush1.msra.mxu0 0.0
    %4964 = vmatprep.subr.mxu0 0.0
    %4965 = vmatpush1.msra.mxu0 0.0
    %4966 = vmatprep.subr.mxu0 0.0
    %4967 = vmatpush1.msra.mxu0 0.0
    %4968 = vmatprep.subr.mxu0 0.0
    %4969 = vmatpush1.msra.mxu0 0.0
    %4970 = vmatprep.subr.mxu0 0.0
    %4971 = vmatpush1.msra.mxu0 0.0
    %4972 = vmatprep.subr.mxu0 0.0
    %4973 = vmatpush1.msra.mxu0 0.0
    %4974 = vmatprep.subr.mxu0 0.0
    %4975 = vmatpush1.msra.mxu0 0.0
    %4976 = vmatprep.subr.mxu0 0.0
    %4977 = vmatpush1.msra.mxu0 0.0
    %4978 = vmatprep.subr.mxu0 0.0
    %4979 = vmatpush1.msra.mxu0 0.0
    %4980 = vmatprep.subr.mxu0 0.0
    %4981 = vmatpush1.msra.mxu0 0.0
    %4982 = vmatprep.subr.mxu0 0.0
    %4983 = vmatpush1.msra.mxu0 0.0
    %4984 = vmatprep.subr.mxu0 0.0
    %4985 = vmatpush1.msra.mxu0 0.0
    %4986 = vmatprep.subr.mxu0 0.0
    %4987 = vmatpush1.msra.mxu0 0.0
    %4988 = vmatprep.subr.mxu0 0.0
    %4989 = vmatpush1.msra.mxu0 0.0
    %4990 = vmatprep.subr.mxu0 0.0
    %4991 = vmatpush1.msra.mxu0 0.0
    %4992 = vmatprep.subr.mxu0 0.0
    %4993 = vmatpush1.msra.mxu0 0.0
    %4994 = vmatprep.subr.mxu0 0.0
    %4995 = vmatpush1.msra.mxu0 0.0
    %4996 = vmatprep.subr.mxu0 0.0
    %4997 = vmatpush1.msra.mxu0 0.0
    %4998 = vmatprep.subr.mxu0 0.0
    %4999 = vmatpush1.msra.mxu0 0.0
    %5000 = vmatprep.subr.mxu0 0.0
    %5001 = vmatpush1.msra.mxu0 0.0
    %5002 = vmatprep.subr.mxu0 0.0
    %5003 = vmatpush1.msra.mxu0 0.0
    %5004 = vmatprep.subr.mxu0 0.0
    %5005 = vmatpush1.msra.mxu0 0.0
    %5006 = vmatprep.mubr.f32.mxu0 0.0
    %5007 = vmatmul.mubr.f32.gmra.mrb[0].mxu0 %v4940
    %v5008 = vpop.f32.mrb[0].mxu0
    %v5009 = vadd.f32 %v4937, %v5008
    %v5010 = vpop.f32.mrb[0].mxu0
    %5011 = vdwg.mxu0
    %v5012 = vadd.f32 %v4522, %v5009
    %v5013 = vsel %vm597, %v5012, 0.0
    %v5014 = vrot.slane %v5013, 4
    %v5015 = vadd.f32 %v5013, %v5014
    %v5016 = vrot.slane %v5015, 2
    %v5017 = vadd.f32 %v5015, %v5016
    %v5018 = vrot.slane %v5017, 1
    %v5019 = vadd.f32 %v5017, %v5018
    %v5020 = vmul.f32 %v5019, %v605
    %v5021 = vsub.f32 %v5012, %v5020
    %v5022 = vmul.f32 %v5021, %v5021
    %v5023 = vsel %vm597, %v5022, 0.0
    %v5024 = vrot.slane %v5023, 4
    %v5025 = vadd.f32 %v5023, %v5024
    %v5026 = vrot.slane %v5025, 2
    %v5027 = vadd.f32 %v5025, %v5026
    %v5028 = vrot.slane %v5027, 1
    %v5029 = vadd.f32 %v5027, %v5028
    %v5030 = vmul.f32 %v5029, %v605
    %v5031 = vadd.f32 %v5030, 1e-05
    %v5032 = vrsqrt.pop %v5031
    %v5033 = vmul.f32 %v5021, %v5032
    %5034 = vset.pattern.permute.xlu0 64
    %5035 = vperm.xlu0 %5034, %v4446
    %v5036 = vpop.permute.xlu0 %5035
    %v5038 = vmul.f32 %v5033, %v5036
    %5039 = vset.pattern.permute.xlu0 72
    %5040 = vperm.xlu0 %5039, %v4446
    %v5041 = vpop.permute.xlu0 %5040
    %v5043 = vadd.f32 %v5038, %v5041
    %v5044 = vld [vmem:[#allocation5 + $0x30] sm:$0xff]
    %v5045 = vld [vmem:[#allocation5 + $0x38] sm:$0xff]
    %v5046 = vld [vmem:[#allocation5 + $0x40] sm:$0x3]
    %5048 = vset.pattern.permute.xlu0 80
    %5049 = vperm.xlu0 %5048, %v5044
    %v5050 = vpop.permute.xlu0 %5049
    %5053 = vset.pattern.permute.xlu0 80
    %5054 = vperm.xlu0 %5053, %v5045
    %v5055 = vpop.permute.xlu0 %5054
    %5058 = vset.pattern.permute.xlu0 80
    %5059 = vperm.xlu0 %5058, %v5046
    %v5060 = vpop.permute.xlu0 %5059
    %v5062 = vlaneseq
    %v5063 = vshrl.u32 %v5062, 7
    %v5064 = vsub.s32 0, %v5063
    %v5065 = vrot.slane %v5043, %v5064
    %v5066 = vmul.f32 %v5050, %v5065
    %v5067 = vmul.f32 %v5055, %v5065
    %v5068 = vmul.f32 %v5060, %v5065
    %5069 = vset.pattern.permute.xlu0 88
    %5070 = vperm.xlu0 %5069, %v5044
    %v5071 = vpop.permute.xlu0 %5070
    %5073 = vset.pattern.permute.xlu0 88
    %5074 = vperm.xlu0 %5073, %v5045
    %v5075 = vpop.permute.xlu0 %5074
    %5077 = vset.pattern.permute.xlu0 88
    %5078 = vperm.xlu0 %5077, %v5046
    %v5079 = vpop.permute.xlu0 %5078
    %v5081 = vadd.f32 %v5071, %v5066
    %v5082 = vadd.f32 %v5075, %v5067
    %v5083 = vadd.f32 %v5079, %v5068
    %5084 = vset.pattern.permute.xlu0 81
    %5085 = vperm.xlu0 %5084, %v5044
    %v5086 = vpop.permute.xlu0 %5085
    %5088 = vset.pattern.permute.xlu0 81
    %5089 = vperm.xlu0 %5088, %v5045
    %v5090 = vpop.permute.xlu0 %5089
    %5092 = vset.pattern.permute.xlu0 81
    %5093 = vperm.xlu0 %5092, %v5046
    %v5094 = vpop.permute.xlu0 %5093
    %v5096 = vlaneseq
    %v5097 = vshrl.u32 %v5096, 7
    %v5098 = vsub.s32 1, %v5097
    %v5099 = vrot.slane %v5043, %v5098
    %v5100 = vmul.f32 %v5086, %v5099
    %v5101 = vmul.f32 %v5090, %v5099
    %v5102 = vmul.f32 %v5094, %v5099
    %v5103 = vadd.f32 %v5081, %v5100
    %v5104 = vadd.f32 %v5082, %v5101
    %v5105 = vadd.f32 %v5083, %v5102
    %5106 = vset.pattern.permute.xlu0 82
    %5107 = vperm.xlu0 %5106, %v5044
    %v5108 = vpop.permute.xlu0 %5107
    %5110 = vset.pattern.permute.xlu0 82
    %5111 = vperm.xlu0 %5110, %v5045
    %v5112 = vpop.permute.xlu0 %5111
    %5114 = vset.pattern.permute.xlu0 82
    %5115 = vperm.xlu0 %5114, %v5046
    %v5116 = vpop.permute.xlu0 %5115
    %v5118 = vlaneseq
    %v5119 = vshrl.u32 %v5118, 7
    %v5120 = vsub.s32 2, %v5119
    %v5121 = vrot.slane %v5043, %v5120
    %v5122 = vmul.f32 %v5108, %v5121
    %v5123 = vmul.f32 %v5112, %v5121
    %v5124 = vmul.f32 %v5116, %v5121
    %v5125 = vadd.f32 %v5103, %v5122
    %v5126 = vadd.f32 %v5104, %v5123
    %v5127 = vadd.f32 %v5105, %v5124
    %5128 = vset.pattern.permute.xlu0 83
    %5129 = vperm.xlu0 %5128, %v5044
    %v5130 = vpop.permute.xlu0 %5129
    %5132 = vset.pattern.permute.xlu0 83
    %5133 = vperm.xlu0 %5132, %v5045
    %v5134 = vpop.permute.xlu0 %5133
    %5136 = vset.pattern.permute.xlu0 83
    %5137 = vperm.xlu0 %5136, %v5046
    %v5138 = vpop.permute.xlu0 %5137
    %v5140 = vlaneseq
    %v5141 = vshrl.u32 %v5140, 7
    %v5142 = vsub.s32 3, %v5141
    %v5143 = vrot.slane %v5043, %v5142
    %v5144 = vmul.f32 %v5130, %v5143
    %v5145 = vmul.f32 %v5134, %v5143
    %v5146 = vmul.f32 %v5138, %v5143
    %v5147 = vadd.f32 %v5125, %v5144
    %v5148 = vadd.f32 %v5126, %v5145
    %v5149 = vadd.f32 %v5127, %v5146
    %5150 = vset.pattern.permute.xlu0 84
    %5151 = vperm.xlu0 %5150, %v5044
    %v5152 = vpop.permute.xlu0 %5151
    %5154 = vset.pattern.permute.xlu0 84
    %5155 = vperm.xlu0 %5154, %v5045
    %v5156 = vpop.permute.xlu0 %5155
    %5158 = vset.pattern.permute.xlu0 84
    %5159 = vperm.xlu0 %5158, %v5046
    %v5160 = vpop.permute.xlu0 %5159
    %v5162 = vlaneseq
    %v5163 = vshrl.u32 %v5162, 7
    %v5164 = vsub.s32 4, %v5163
    %v5165 = vrot.slane %v5043, %v5164
    %v5166 = vmul.f32 %v5152, %v5165
    %v5167 = vmul.f32 %v5156, %v5165
    %v5168 = vmul.f32 %v5160, %v5165
    %v5169 = vadd.f32 %v5147, %v5166
    %v5170 = vadd.f32 %v5148, %v5167
    %v5171 = vadd.f32 %v5149, %v5168
    %5172 = vset.pattern.permute.xlu0 85
    %5173 = vperm.xlu0 %5172, %v5044
    %v5174 = vpop.permute.xlu0 %5173
    %5176 = vset.pattern.permute.xlu0 85
    %5177 = vperm.xlu0 %5176, %v5045
    %v5178 = vpop.permute.xlu0 %5177
    %5180 = vset.pattern.permute.xlu0 85
    %5181 = vperm.xlu0 %5180, %v5046
    %v5182 = vpop.permute.xlu0 %5181
    %v5184 = vlaneseq
    %v5185 = vshrl.u32 %v5184, 7
    %v5186 = vsub.s32 5, %v5185
    %v5187 = vrot.slane %v5043, %v5186
    %v5188 = vmul.f32 %v5174, %v5187
    %v5189 = vmul.f32 %v5178, %v5187
    %v5190 = vmul.f32 %v5182, %v5187
    %v5191 = vadd.f32 %v5169, %v5188
    %v5192 = vadd.f32 %v5170, %v5189
    %v5193 = vadd.f32 %v5171, %v5190
    %v5194 = vlaneseq
    %v5195 = vshrl.u32 %v5194, 7
    %v5196 = vsub.s32 6, %v5195
    %v5197 = vrot.slane %v5191, %v5196
    %5199 = vbcast.lane.b32.xlu0 %v5197, 256
    %v5200 = vpop.permute.xlu0 %5199
    %v5201 = vlaneseq
    %v5202 = vshrl.u32 %v5201, 7
    %v5203 = vsub.s32 7, %v5202
    %v5204 = vrot.slane %v5191, %v5203
    %5206 = vbcast.lane.b32.xlu0 %v5204, 256
    %v5207 = vpop.permute.xlu0 %5206
    %v5208 = vlaneseq
    %v5209 = vshrl.u32 %v5208, 7
    %v5210 = vsub.s32 0, %v5209
    %v5211 = vrot.slane %v5192, %v5210
    %5213 = vbcast.lane.b32.xlu0 %v5211, 256
    %v5214 = vpop.permute.xlu0 %5213
    %v5215 = vlaneseq
    %v5216 = vshrl.u32 %v5215, 7
    %v5217 = vsub.s32 1, %v5216
    %v5218 = vrot.slane %v5192, %v5217
    %5220 = vbcast.lane.b32.xlu0 %v5218, 256
    %v5221 = vpop.permute.xlu0 %5220
    %v5222 = vlaneseq
    %v5223 = vshrl.u32 %v5222, 7
    %v5224 = vsub.s32 2, %v5223
    %v5225 = vrot.slane %v5192, %v5224
    %5227 = vbcast.lane.b32.xlu0 %v5225, 256
    %v5228 = vpop.permute.xlu0 %5227
    %v5229 = vlaneseq
    %v5230 = vshrl.u32 %v5229, 7
    %v5231 = vsub.s32 3, %v5230
    %v5232 = vrot.slane %v5192, %v5231
    %5234 = vbcast.lane.b32.xlu0 %v5232, 256
    %v5235 = vpop.permute.xlu0 %5234
    %v5237 = vcombine.high %v5191, %v5191
    %v5239 = vunpack.c.l.s4 1966171168
    %v5240 = vunpack.c.0.s8 %v5239
    %v5241 = vlaneseq
    %v5242 = vshrl.u32 %v5241, 7
    %v5243 = vsub.s32 %v5240, %v5242
    %v5244 = vrot.slane %v5191, %v5243
    %v5246 = vunpack.c.l.s4 1966171168
    %v5247 = vunpack.c.0.s8 %v5246
    %v5248 = vlaneseq
    %v5249 = vshrl.u32 %v5248, 7
    %v5250 = vsub.s32 %v5247, %v5249
    %v5251 = vrot.slane %v5237, %v5250
    %v5252 = vcombine.high %v5244, %v5244
    %v5253 = vcombine.high %v5251, %v5251
    %v5255 = vunpack.c.l.s4 1966171168
    %v5256 = vunpack.c.0.s8 %v5255
    %v5257 = vlaneseq
    %v5258 = vshrl.u32 %v5257, 7
    %v5259 = vsub.s32 %v5256, %v5258
    %v5260 = vrot.slane %v5244, %v5259
    %v5262 = vunpack.c.l.s4 1966171168
    %v5263 = vunpack.c.0.s8 %v5262
    %v5264 = vlaneseq
    %v5265 = vshrl.u32 %v5264, 7
    %v5266 = vsub.s32 %v5263, %v5265
    %v5267 = vrot.slane %v5251, %v5266
    %v5269 = vunpack.c.l.s4 1966171168
    %v5270 = vunpack.c.0.s8 %v5269
    %v5271 = vlaneseq
    %v5272 = vshrl.u32 %v5271, 7
    %v5273 = vsub.s32 %v5270, %v5272
    %v5274 = vrot.slane %v5252, %v5273
    %v5276 = vunpack.c.l.s4 1966171168
    %v5277 = vunpack.c.0.s8 %v5276
    %v5278 = vlaneseq
    %v5279 = vshrl.u32 %v5278, 7
    %v5280 = vsub.s32 %v5277, %v5279
    %v5281 = vrot.slane %v5253, %v5280
    %v5282 = vcombine.high %v5260, %v5260
    %v5283 = vcombine.high %v5274, %v5274
    %v5284 = vlaneseq
    %v5285 = vshrl.u32 %v5284, 7
    %v5286 = vsub.s32 0, %v5285
    %v5287 = vrot.slane %v5260, %v5286
    %v5288 = vlaneseq
    %v5289 = vshrl.u32 %v5288, 7
    %v5290 = vsub.s32 0, %v5289
    %v5291 = vrot.slane %v5274, %v5290
    %v5292 = vlaneseq
    %v5293 = vshrl.u32 %v5292, 7
    %v5294 = vsub.s32 0, %v5293
    %v5295 = vrot.slane %v5282, %v5294
    %v5296 = vlaneseq
    %v5297 = vshrl.u32 %v5296, 7
    %v5298 = vsub.s32 0, %v5297
    %v5299 = vrot.slane %v5283, %v5298
    %v5300 = vlaneseq
    %v5301 = vshrl.u32 %v5300, 7
    %v5302 = vsub.s32 0, %v5301
    %v5303 = vrot.slane %v5267, %v5302
    %v5304 = vlaneseq
    %v5305 = vshrl.u32 %v5304, 7
    %v5306 = vsub.s32 0, %v5305
    %v5307 = vrot.slane %v5281, %v5306
    %v5314 = vmul.f32 %v5200, %v5287
    %v5315 = vmul.f32 %v5207, %v5291
    %v5316 = vmul.f32 %v5214, %v5295
    %v5317 = vmul.f32 %v5221, %v5299
    %v5318 = vmul.f32 %v5228, %v5303
    %v5319 = vmul.f32 %v5235, %v5307
    %v5320 = vsel %vm331, %v5314, -inf
    %v5321 = vrot.slane %v5320, 4
    %v5322 = vmax.f32 %v5320, %v5321
    %v5323 = vrot.slane %v5322, 2
    %v5324 = vmax.f32 %v5322, %v5323
    %v5325 = vrot.slane %v5324, 1
    %v5326 = vmax.f32 %v5324, %v5325
    %v5327 = vsel %vm331, %v5315, -inf
    %v5328 = vrot.slane %v5327, 4
    %v5329 = vmax.f32 %v5327, %v5328
    %v5330 = vrot.slane %v5329, 2
    %v5331 = vmax.f32 %v5329, %v5330
    %v5332 = vrot.slane %v5331, 1
    %v5333 = vmax.f32 %v5331, %v5332
    %v5334 = vsel %vm331, %v5316, -inf
    %v5335 = vrot.slane %v5334, 4
    %v5336 = vmax.f32 %v5334, %v5335
    %v5337 = vrot.slane %v5336, 2
    %v5338 = vmax.f32 %v5336, %v5337
    %v5339 = vrot.slane %v5338, 1
    %v5340 = vmax.f32 %v5338, %v5339
    %v5341 = vsel %vm331, %v5317, -inf
    %v5342 = vrot.slane %v5341, 4
    %v5343 = vmax.f32 %v5341, %v5342
    %v5344 = vrot.slane %v5343, 2
    %v5345 = vmax.f32 %v5343, %v5344
    %v5346 = vrot.slane %v5345, 1
    %v5347 = vmax.f32 %v5345, %v5346
    %v5348 = vsel %vm331, %v5318, -inf
    %v5349 = vrot.slane %v5348, 4
    %v5350 = vmax.f32 %v5348, %v5349
    %v5351 = vrot.slane %v5350, 2
    %v5352 = vmax.f32 %v5350, %v5351
    %v5353 = vrot.slane %v5352, 1
    %v5354 = vmax.f32 %v5352, %v5353
    %v5355 = vsel %vm331, %v5319, -inf
    %v5356 = vrot.slane %v5355, 4
    %v5357 = vmax.f32 %v5355, %v5356
    %v5358 = vrot.slane %v5357, 2
    %v5359 = vmax.f32 %v5357, %v5358
    %v5360 = vrot.slane %v5359, 1
    %v5361 = vmax.f32 %v5359, %v5360
    %v5362 = vsub.f32 %v5314, %v5326
    %v5363 = vsub.f32 %v5315, %v5333
    %v5364 = vsub.f32 %v5316, %v5340
    %v5365 = vsub.f32 %v5317, %v5347
    %v5366 = vsub.f32 %v5318, %v5354
    %v5367 = vsub.f32 %v5319, %v5361
    %v5368 = vmul.f32 %v5362, 1.442695
    %v5369 = vpow.pop %v5368
    %v5370 = vmul.f32 %v5363, 1.442695
    %v5371 = vpow.pop %v5370
    %v5372 = vmul.f32 %v5364, 1.442695
    %v5373 = vpow.pop %v5372
    %v5374 = vmul.f32 %v5365, 1.442695
    %v5375 = vpow.pop %v5374
    %v5376 = vmul.f32 %v5366, 1.442695
    %v5377 = vpow.pop %v5376
    %v5378 = vmul.f32 %v5367, 1.442695
    %v5379 = vpow.pop %v5378
    %v5380 = vsel %vm331, %v5369, 0.0
    %v5381 = vrot.slane %v5380, 4
    %v5382 = vadd.f32 %v5380, %v5381
    %v5383 = vrot.slane %v5382, 2
    %v5384 = vadd.f32 %v5382, %v5383
    %v5385 = vrot.slane %v5384, 1
    %v5386 = vadd.f32 %v5384, %v5385
    %v5387 = vsel %vm331, %v5371, 0.0
    %v5388 = vrot.slane %v5387, 4
    %v5389 = vadd.f32 %v5387, %v5388
    %v5390 = vrot.slane %v5389, 2
    %v5391 = vadd.f32 %v5389, %v5390
    %v5392 = vrot.slane %v5391, 1
    %v5393 = vadd.f32 %v5391, %v5392
    %v5394 = vsel %vm331, %v5373, 0.0
    %v5395 = vrot.slane %v5394, 4
    %v5396 = vadd.f32 %v5394, %v5395
    %v5397 = vrot.slane %v5396, 2
    %v5398 = vadd.f32 %v5396, %v5397
    %v5399 = vrot.slane %v5398, 1
    %v5400 = vadd.f32 %v5398, %v5399
    %v5401 = vsel %vm331, %v5375, 0.0
    %v5402 = vrot.slane %v5401, 4
    %v5403 = vadd.f32 %v5401, %v5402
    %v5404 = vrot.slane %v5403, 2
    %v5405 = vadd.f32 %v5403, %v5404
    %v5406 = vrot.slane %v5405, 1
    %v5407 = vadd.f32 %v5405, %v5406
    %v5408 = vsel %vm331, %v5377, 0.0
    %v5409 = vrot.slane %v5408, 4
    %v5410 = vadd.f32 %v5408, %v5409
    %v5411 = vrot.slane %v5410, 2
    %v5412 = vadd.f32 %v5410, %v5411
    %v5413 = vrot.slane %v5412, 1
    %v5414 = vadd.f32 %v5412, %v5413
    %v5415 = vsel %vm331, %v5379, 0.0
    %v5416 = vrot.slane %v5415, 4
    %v5417 = vadd.f32 %v5415, %v5416
    %v5418 = vrot.slane %v5417, 2
    %v5419 = vadd.f32 %v5417, %v5418
    %v5420 = vrot.slane %v5419, 1
    %v5421 = vadd.f32 %v5419, %v5420
    %v5422 = vlaneseq
    %v5423 = vshrl.u32 %v5422, 7
    %v5424 = vsub.s32 4, %v5423
    %v5425 = vrot.slane %v5192, %v5424
    %5427 = vbcast.lane.b32.xlu0 %v5425, 256
    %v5428 = vpop.permute.xlu0 %5427
    %v5429 = vlaneseq
    %v5430 = vshrl.u32 %v5429, 7
    %v5431 = vsub.s32 5, %v5430
    %v5432 = vrot.slane %v5192, %v5431
    %5434 = vbcast.lane.b32.xlu0 %v5432, 256
    %v5435 = vpop.permute.xlu0 %5434
    %v5436 = vlaneseq
    %v5437 = vshrl.u32 %v5436, 7
    %v5438 = vsub.s32 6, %v5437
    %v5439 = vrot.slane %v5192, %v5438
    %5441 = vbcast.lane.b32.xlu0 %v5439, 256
    %v5442 = vpop.permute.xlu0 %5441
    %v5443 = vlaneseq
    %v5444 = vshrl.u32 %v5443, 7
    %v5445 = vsub.s32 7, %v5444
    %v5446 = vrot.slane %v5192, %v5445
    %5448 = vbcast.lane.b32.xlu0 %v5446, 256
    %v5449 = vpop.permute.xlu0 %5448
    %v5450 = vlaneseq
    %v5451 = vshrl.u32 %v5450, 7
    %v5452 = vsub.s32 0, %v5451
    %v5453 = vrot.slane %v5193, %v5452
    %5455 = vbcast.lane.b32.xlu0 %v5453, 256
    %v5456 = vpop.permute.xlu0 %5455
    %v5457 = vlaneseq
    %v5458 = vshrl.u32 %v5457, 7
    %v5459 = vsub.s32 1, %v5458
    %v5460 = vrot.slane %v5193, %v5459
    %5462 = vbcast.lane.b32.xlu0 %v5460, 256
    %v5463 = vpop.permute.xlu0 %5462
    %v5464 = vmul.f32 %v5369, %v5428
    %v5465 = vmul.f32 %v5371, %v5435
    %v5466 = vmul.f32 %v5373, %v5442
    %v5467 = vmul.f32 %v5375, %v5449
    %v5468 = vmul.f32 %v5377, %v5456
    %v5469 = vmul.f32 %v5379, %v5463
    %v5470 = vsel %vm331, %v5464, 0.0
    %v5471 = vrot.slane %v5470, 4
    %v5472 = vadd.f32 %v5470, %v5471
    %v5473 = vrot.slane %v5472, 2
    %v5474 = vadd.f32 %v5472, %v5473
    %v5475 = vrot.slane %v5474, 1
    %v5476 = vadd.f32 %v5474, %v5475
    %v5477 = vsel %vm331, %v5465, 0.0
    %v5478 = vrot.slane %v5477, 4
    %v5479 = vadd.f32 %v5477, %v5478
    %v5480 = vrot.slane %v5479, 2
    %v5481 = vadd.f32 %v5479, %v5480
    %v5482 = vrot.slane %v5481, 1
    %v5483 = vadd.f32 %v5481, %v5482
    %v5484 = vsel %vm331, %v5466, 0.0
    %v5485 = vrot.slane %v5484, 4
    %v5486 = vadd.f32 %v5484, %v5485
    %v5487 = vrot.slane %v5486, 2
    %v5488 = vadd.f32 %v5486, %v5487
    %v5489 = vrot.slane %v5488, 1
    %v5490 = vadd.f32 %v5488, %v5489
    %v5491 = vsel %vm331, %v5467, 0.0
    %v5492 = vrot.slane %v5491, 4
    %v5493 = vadd.f32 %v5491, %v5492
    %v5494 = vrot.slane %v5493, 2
    %v5495 = vadd.f32 %v5493, %v5494
    %v5496 = vrot.slane %v5495, 1
    %v5497 = vadd.f32 %v5495, %v5496
    %v5498 = vsel %vm331, %v5468, 0.0
    %v5499 = vrot.slane %v5498, 4
    %v5500 = vadd.f32 %v5498, %v5499
    %v5501 = vrot.slane %v5500, 2
    %v5502 = vadd.f32 %v5500, %v5501
    %v5503 = vrot.slane %v5502, 1
    %v5504 = vadd.f32 %v5502, %v5503
    %v5505 = vsel %vm331, %v5469, 0.0
    %v5506 = vrot.slane %v5505, 4
    %v5507 = vadd.f32 %v5505, %v5506
    %v5508 = vrot.slane %v5507, 2
    %v5509 = vadd.f32 %v5507, %v5508
    %v5510 = vrot.slane %v5509, 1
    %v5511 = vadd.f32 %v5509, %v5510
    %v5512 = vrcp.pop %v5386
    %v5513 = vrcp.pop %v5393
    %v5514 = vrcp.pop %v5400
    %v5515 = vrcp.pop %v5407
    %v5516 = vrcp.pop %v5414
    %v5517 = vrcp.pop %v5421
    %v5518 = vmul.f32 %v5386, %v5512
    %v5519 = vmul.f32 %v5393, %v5513
    %v5520 = vmul.f32 %v5400, %v5514
    %v5521 = vmul.f32 %v5407, %v5515
    %v5522 = vmul.f32 %v5414, %v5516
    %v5523 = vmul.f32 %v5421, %v5517
    %v5524 = vsub.f32 2.0, %v5518
    %v5525 = vsub.f32 2.0, %v5519
    %v5526 = vsub.f32 2.0, %v5520
    %v5527 = vsub.f32 2.0, %v5521
    %v5528 = vsub.f32 2.0, %v5522
    %v5529 = vsub.f32 2.0, %v5523
    %v5530 = vmul.f32 %v5512, %v5524
    %v5531 = vmul.f32 %v5513, %v5525
    %v5532 = vmul.f32 %v5514, %v5526
    %v5533 = vmul.f32 %v5515, %v5527
    %v5534 = vmul.f32 %v5516, %v5528
    %v5535 = vmul.f32 %v5517, %v5529
    %v5536 = vmul.f32 %v5476, %v5530
    %v5537 = vmul.f32 %v5483, %v5531
    %v5538 = vmul.f32 %v5490, %v5532
    %v5539 = vmul.f32 %v5497, %v5533
    %v5540 = vmul.f32 %v5504, %v5534
    %v5541 = vmul.f32 %v5511, %v5535
    %v5542 = vld [vmem:[#allocation5 + $0x30] sm:$0x3f]
    %5544 = vset.pattern.permute.xlu0 96
    %5545 = vperm.xlu0 %5544, %v5542
    %v5546 = vpop.permute.xlu0 %5545
    %v5548 = vmul.f32 %v5546, %v5536
    %5549 = vset.pattern.permute.xlu0 104
    %5550 = vperm.xlu0 %5549, %v5542
    %v5551 = vpop.permute.xlu0 %5550
    %v5553 = vadd.f32 %v5551, %v5548
    %5554 = vset.pattern.permute.xlu0 97
    %5555 = vperm.xlu0 %5554, %v5542
    %v5556 = vpop.permute.xlu0 %5555
    %v5558 = vmul.f32 %v5556, %v5537
    %v5559 = vadd.f32 %v5553, %v5558
    %5560 = vset.pattern.permute.xlu0 98
    %5561 = vperm.xlu0 %5560, %v5542
    %v5562 = vpop.permute.xlu0 %5561
    %v5564 = vmul.f32 %v5562, %v5538
    %v5565 = vadd.f32 %v5559, %v5564
    %5566 = vset.pattern.permute.xlu0 99
    %5567 = vperm.xlu0 %5566, %v5542
    %v5568 = vpop.permute.xlu0 %5567
    %v5570 = vmul.f32 %v5568, %v5539
    %v5571 = vadd.f32 %v5565, %v5570
    %5572 = vset.pattern.permute.xlu0 100
    %5573 = vperm.xlu0 %5572, %v5542
    %v5574 = vpop.permute.xlu0 %5573
    %v5576 = vmul.f32 %v5574, %v5540
    %v5577 = vadd.f32 %v5571, %v5576
    %5578 = vset.pattern.permute.xlu0 101
    %5579 = vperm.xlu0 %5578, %v5542
    %v5580 = vpop.permute.xlu0 %5579
    %v5582 = vmul.f32 %v5580, %v5541
    %v5583 = vadd.f32 %v5577, %v5582
    %v5584 = vadd.f32 %v5043, %v5583
    %v5585 = vsel %vm597, %v5584, 0.0
    %v5586 = vrot.slane %v5585, 4
    %v5587 = vadd.f32 %v5585, %v5586
    %v5588 = vrot.slane %v5587, 2
    %v5589 = vadd.f32 %v5587, %v5588
    %v5590 = vrot.slane %v5589, 1
    %v5591 = vadd.f32 %v5589, %v5590
    %v5592 = vmul.f32 %v5591, %v605
    %v5593 = vsub.f32 %v5584, %v5592
    %v5594 = vmul.f32 %v5593, %v5593
    %v5595 = vsel %vm597, %v5594, 0.0
    %v5596 = vrot.slane %v5595, 4
    %v5597 = vadd.f32 %v5595, %v5596
    %v5598 = vrot.slane %v5597, 2
    %v5599 = vadd.f32 %v5597, %v5598
    %v5600 = vrot.slane %v5599, 1
    %v5601 = vadd.f32 %v5599, %v5600
    %v5602 = vmul.f32 %v5601, %v605
    %v5603 = vadd.f32 %v5602, 1e-05
    %v5604 = vrsqrt.pop %v5603
    %v5605 = vmul.f32 %v5593, %v5604
    %v5606 = vld [vmem:[#allocation5 + $0x38] sm:$0x3f]
    %5608 = vset.pattern.permute.xlu0 72
    %5609 = vperm.xlu0 %5608, %v5606
    %v5610 = vpop.permute.xlu0 %5609
    %v5612 = vmul.f32 %v5605, %v5610
    %5613 = vset.pattern.permute.xlu0 96
    %5614 = vperm.xlu0 %5613, %v5606
    %v5615 = vpop.permute.xlu0 %5614
    %v5617 = vadd.f32 %v5612, %v5615
    %v5618 = vld [vmem:[#allocation5 + $0x40] sm:$0x3f]
    %5620 = vset.pattern.permute.xlu0 72
    %5621 = vperm.xlu0 %5620, %v5618
    %v5622 = vpop.permute.xlu0 %5621
    %v5624 = vlaneseq
    %v5625 = vshrl.u32 %v5624, 7
    %v5626 = vsub.s32 0, %v5625
    %v5627 = vrot.slane %v5617, %v5626
    %v5628 = vmul.f32 %v5622, %v5627
    %5629 = vset.pattern.permute.xlu0 96
    %5630 = vperm.xlu0 %5629, %v5618
    %v5631 = vpop.permute.xlu0 %5630
    %v5633 = vadd.f32 %v5631, %v5628
    %5634 = vset.pattern.permute.xlu0 73
    %5635 = vperm.xlu0 %5634, %v5618
    %v5636 = vpop.permute.xlu0 %5635
    %v5638 = vlaneseq
    %v5639 = vshrl.u32 %v5638, 7
    %v5640 = vsub.s32 1, %v5639
    %v5641 = vrot.slane %v5617, %v5640
    %v5642 = vmul.f32 %v5636, %v5641
    %v5643 = vadd.f32 %v5633, %v5642
    %5644 = vset.pattern.permute.xlu0 74
    %5645 = vperm.xlu0 %5644, %v5618
    %v5646 = vpop.permute.xlu0 %5645
    %v5648 = vlaneseq
    %v5649 = vshrl.u32 %v5648, 7
    %v5650 = vsub.s32 2, %v5649
    %v5651 = vrot.slane %v5617, %v5650
    %v5652 = vmul.f32 %v5646, %v5651
    %v5653 = vadd.f32 %v5643, %v5652
    %5654 = vset.pattern.permute.xlu0 75
    %5655 = vperm.xlu0 %5654, %v5618
    %v5656 = vpop.permute.xlu0 %5655
    %v5658 = vlaneseq
    %v5659 = vshrl.u32 %v5658, 7
    %v5660 = vsub.s32 3, %v5659
    %v5661 = vrot.slane %v5617, %v5660
    %v5662 = vmul.f32 %v5656, %v5661
    %v5663 = vadd.f32 %v5653, %v5662
    %5664 = vset.pattern.permute.xlu0 76
    %5665 = vperm.xlu0 %5664, %v5618
    %v5666 = vpop.permute.xlu0 %5665
    %v5668 = vlaneseq
    %v5669 = vshrl.u32 %v5668, 7
    %v5670 = vsub.s32 4, %v5669
    %v5671 = vrot.slane %v5617, %v5670
    %v5672 = vmul.f32 %v5666, %v5671
    %v5673 = vadd.f32 %v5663, %v5672
    %5674 = vset.pattern.permute.xlu0 77
    %5675 = vperm.xlu0 %5674, %v5618
    %v5676 = vpop.permute.xlu0 %5675
    %v5678 = vlaneseq
    %v5679 = vshrl.u32 %v5678, 7
    %v5680 = vsub.s32 5, %v5679
    %v5681 = vrot.slane %v5617, %v5680
    %v5682 = vmul.f32 %v5676, %v5681
    %v5683 = vadd.f32 %v5673, %v5682
    %v5684 = vld [vmem:[#allocation5 + $0x48] sm:$0x3f]
    %5685 = vset.pattern.permute.xlu0 104
    %5686 = vperm.xlu0 %5685, %v5618
    %v5687 = vpop.permute.xlu0 %5686
    %v5689 = vmul.f32 %v5687, %v4000
    %5691 = vset.pattern.permute.xlu0 32
    %5692 = vperm.xlu0 %5691, %v5684
    %v5693 = vpop.permute.xlu0 %5692
    %v5695 = vadd.f32 %v5693, %v5689
    %5696 = vset.pattern.permute.xlu0 105
    %5697 = vperm.xlu0 %5696, %v5618
    %v5698 = vpop.permute.xlu0 %5697
    %v5700 = vmul.f32 %v5698, %v4014
    %v5701 = vadd.f32 %v5695, %v5700
    %5702 = vset.pattern.permute.xlu0 106
    %5703 = vperm.xlu0 %5702, %v5618
    %v5704 = vpop.permute.xlu0 %5703
    %v5706 = vmul.f32 %v5704, %v4024
    %v5707 = vadd.f32 %v5701, %v5706
    %5708 = vset.pattern.permute.xlu0 107
    %5709 = vperm.xlu0 %5708, %v5618
    %v5710 = vpop.permute.xlu0 %5709
    %v5712 = vmul.f32 %v5710, %v4034
    %v5713 = vadd.f32 %v5707, %v5712
    %5714 = vset.pattern.permute.xlu0 108
    %5715 = vperm.xlu0 %5714, %v5618
    %v5716 = vpop.permute.xlu0 %5715
    %v5718 = vmul.f32 %v5716, %v4044
    %v5719 = vadd.f32 %v5713, %v5718
    %5720 = vset.pattern.permute.xlu0 109
    %5721 = vperm.xlu0 %5720, %v5618
    %v5722 = vpop.permute.xlu0 %5721
    %v5724 = vmul.f32 %v5722, %v4054
    %v5725 = vadd.f32 %v5719, %v5724
    %5726 = vset.pattern.permute.xlu0 40
    %5727 = vperm.xlu0 %5726, %v5684
    %v5728 = vpop.permute.xlu0 %5727
    %v5730 = vmul.f32 %v5728, %v4000
    %5731 = vset.pattern.permute.xlu0 64
    %5732 = vperm.xlu0 %5731, %v5684
    %v5733 = vpop.permute.xlu0 %5732
    %v5735 = vadd.f32 %v5733, %v5730
    %5736 = vset.pattern.permute.xlu0 41
    %5737 = vperm.xlu0 %5736, %v5684
    %v5738 = vpop.permute.xlu0 %5737
    %v5740 = vmul.f32 %v5738, %v4014
    %v5741 = vadd.f32 %v5735, %v5740
    %5742 = vset.pattern.permute.xlu0 42
    %5743 = vperm.xlu0 %5742, %v5684
    %v5744 = vpop.permute.xlu0 %5743
    %v5746 = vmul.f32 %v5744, %v4024
    %v5747 = vadd.f32 %v5741, %v5746
    %5748 = vset.pattern.permute.xlu0 43
    %5749 = vperm.xlu0 %5748, %v5684
    %v5750 = vpop.permute.xlu0 %5749
    %v5752 = vmul.f32 %v5750, %v4034
    %v5753 = vadd.f32 %v5747, %v5752
    %5754 = vset.pattern.permute.xlu0 44
    %5755 = vperm.xlu0 %5754, %v5684
    %v5756 = vpop.permute.xlu0 %5755
    %v5758 = vmul.f32 %v5756, %v4044
    %v5759 = vadd.f32 %v5753, %v5758
    %5760 = vset.pattern.permute.xlu0 45
    %5761 = vperm.xlu0 %5760, %v5684
    %v5762 = vpop.permute.xlu0 %5761
    %v5764 = vmul.f32 %v5762, %v4054
    %v5765 = vadd.f32 %v5759, %v5764
    %v5766 = vlaneseq
    %v5767 = vshrl.u32 %v5766, 7
    %v5768 = vsub.s32 0, %v5767
    %v5769 = vrot.slane %v5725, %v5768
    %5771 = vbcast.lane.b32.xlu0 %v5769, 256
    %v5772 = vpop.permute.xlu0 %5771
    %v5773 = vlaneseq
    %v5774 = vshrl.u32 %v5773, 7
    %v5775 = vsub.s32 1, %v5774
    %v5776 = vrot.slane %v5725, %v5775
    %5778 = vbcast.lane.b32.xlu0 %v5776, 256
    %v5779 = vpop.permute.xlu0 %5778
    %v5780 = vlaneseq
    %v5781 = vshrl.u32 %v5780, 7
    %v5782 = vsub.s32 2, %v5781
    %v5783 = vrot.slane %v5725, %v5782
    %5785 = vbcast.lane.b32.xlu0 %v5783, 256
    %v5786 = vpop.permute.xlu0 %5785
    %v5787 = vlaneseq
    %v5788 = vshrl.u32 %v5787, 7
    %v5789 = vsub.s32 3, %v5788
    %v5790 = vrot.slane %v5725, %v5789
    %5792 = vbcast.lane.b32.xlu0 %v5790, 256
    %v5793 = vpop.permute.xlu0 %5792
    %v5794 = vlaneseq
    %v5795 = vshrl.u32 %v5794, 7
    %v5796 = vsub.s32 4, %v5795
    %v5797 = vrot.slane %v5725, %v5796
    %5799 = vbcast.lane.b32.xlu0 %v5797, 256
    %v5800 = vpop.permute.xlu0 %5799
    %v5801 = vlaneseq
    %v5802 = vshrl.u32 %v5801, 7
    %v5803 = vsub.s32 5, %v5802
    %v5804 = vrot.slane %v5725, %v5803
    %5806 = vbcast.lane.b32.xlu0 %v5804, 256
    %v5807 = vpop.permute.xlu0 %5806
    %v5809 = vcombine.high %v5683, %v5683
    %v5811 = vunpack.c.l.s4 1966171168
    %v5812 = vunpack.c.0.s8 %v5811
    %v5813 = vlaneseq
    %v5814 = vshrl.u32 %v5813, 7
    %v5815 = vsub.s32 %v5812, %v5814
    %v5816 = vrot.slane %v5683, %v5815
    %v5818 = vunpack.c.l.s4 1966171168
    %v5819 = vunpack.c.0.s8 %v5818
    %v5820 = vlaneseq
    %v5821 = vshrl.u32 %v5820, 7
    %v5822 = vsub.s32 %v5819, %v5821
    %v5823 = vrot.slane %v5809, %v5822
    %v5824 = vcombine.high %v5816, %v5816
    %v5825 = vcombine.high %v5823, %v5823
    %v5827 = vunpack.c.l.s4 1966171168
    %v5828 = vunpack.c.0.s8 %v5827
    %v5829 = vlaneseq
    %v5830 = vshrl.u32 %v5829, 7
    %v5831 = vsub.s32 %v5828, %v5830
    %v5832 = vrot.slane %v5816, %v5831
    %v5834 = vunpack.c.l.s4 1966171168
    %v5835 = vunpack.c.0.s8 %v5834
    %v5836 = vlaneseq
    %v5837 = vshrl.u32 %v5836, 7
    %v5838 = vsub.s32 %v5835, %v5837
    %v5839 = vrot.slane %v5823, %v5838
    %v5841 = vunpack.c.l.s4 1966171168
    %v5842 = vunpack.c.0.s8 %v5841
    %v5843 = vlaneseq
    %v5844 = vshrl.u32 %v5843, 7
    %v5845 = vsub.s32 %v5842, %v5844
    %v5846 = vrot.slane %v5824, %v5845
    %v5848 = vunpack.c.l.s4 1966171168
    %v5849 = vunpack.c.0.s8 %v5848
    %v5850 = vlaneseq
    %v5851 = vshrl.u32 %v5850, 7
    %v5852 = vsub.s32 %v5849, %v5851
    %v5853 = vrot.slane %v5825, %v5852
    %v5854 = vcombine.high %v5832, %v5832
    %v5855 = vcombine.high %v5846, %v5846
    %v5856 = vlaneseq
    %v5857 = vshrl.u32 %v5856, 7
    %v5858 = vsub.s32 0, %v5857
    %v5859 = vrot.slane %v5832, %v5858
    %v5860 = vlaneseq
    %v5861 = vshrl.u32 %v5860, 7
    %v5862 = vsub.s32 0, %v5861
    %v5863 = vrot.slane %v5846, %v5862
    %v5864 = vlaneseq
    %v5865 = vshrl.u32 %v5864, 7
    %v5866 = vsub.s32 0, %v5865
    %v5867 = vrot.slane %v5854, %v5866
    %v5868 = vlaneseq
    %v5869 = vshrl.u32 %v5868, 7
    %v5870 = vsub.s32 0, %v5869
    %v5871 = vrot.slane %v5855, %v5870
    %v5872 = vlaneseq
    %v5873 = vshrl.u32 %v5872, 7
    %v5874 = vsub.s32 0, %v5873
    %v5875 = vrot.slane %v5839, %v5874
    %v5876 = vlaneseq
    %v5877 = vshrl.u32 %v5876, 7
    %v5878 = vsub.s32 0, %v5877
    %v5879 = vrot.slane %v5853, %v5878
    %v5886 = vmul.f32 %v5772, %v5859
    %v5887 = vmul.f32 %v5779, %v5863
    %v5888 = vmul.f32 %v5786, %v5867
    %v5889 = vmul.f32 %v5793, %v5871
    %v5890 = vmul.f32 %v5800, %v5875
    %v5891 = vmul.f32 %v5807, %v5879
    %v5892 = vsel %vm331, %v5886, -inf
    %v5893 = vrot.slane %v5892, 4
    %v5894 = vmax.f32 %v5892, %v5893
    %v5895 = vrot.slane %v5894, 2
    %v5896 = vmax.f32 %v5894, %v5895
    %v5897 = vrot.slane %v5896, 1
    %v5898 = vmax.f32 %v5896, %v5897
    %v5899 = vsel %vm331, %v5887, -inf
    %v5900 = vrot.slane %v5899, 4
    %v5901 = vmax.f32 %v5899, %v5900
    %v5902 = vrot.slane %v5901, 2
    %v5903 = vmax.f32 %v5901, %v5902
    %v5904 = vrot.slane %v5903, 1
    %v5905 = vmax.f32 %v5903, %v5904
    %v5906 = vsel %vm331, %v5888, -inf
    %v5907 = vrot.slane %v5906, 4
    %v5908 = vmax.f32 %v5906, %v5907
    %v5909 = vrot.slane %v5908, 2
    %v5910 = vmax.f32 %v5908, %v5909
    %v5911 = vrot.slane %v5910, 1
    %v5912 = vmax.f32 %v5910, %v5911
    %v5913 = vsel %vm331, %v5889, -inf
    %v5914 = vrot.slane %v5913, 4
    %v5915 = vmax.f32 %v5913, %v5914
    %v5916 = vrot.slane %v5915, 2
    %v5917 = vmax.f32 %v5915, %v5916
    %v5918 = vrot.slane %v5917, 1
    %v5919 = vmax.f32 %v5917, %v5918
    %v5920 = vsel %vm331, %v5890, -inf
    %v5921 = vrot.slane %v5920, 4
    %v5922 = vmax.f32 %v5920, %v5921
    %v5923 = vrot.slane %v5922, 2
    %v5924 = vmax.f32 %v5922, %v5923
    %v5925 = vrot.slane %v5924, 1
    %v5926 = vmax.f32 %v5924, %v5925
    %v5927 = vsel %vm331, %v5891, -inf
    %v5928 = vrot.slane %v5927, 4
    %v5929 = vmax.f32 %v5927, %v5928
    %v5930 = vrot.slane %v5929, 2
    %v5931 = vmax.f32 %v5929, %v5930
    %v5932 = vrot.slane %v5931, 1
    %v5933 = vmax.f32 %v5931, %v5932
    %v5934 = vsub.f32 %v5886, %v5898
    %v5935 = vsub.f32 %v5887, %v5905
    %v5936 = vsub.f32 %v5888, %v5912
    %v5937 = vsub.f32 %v5889, %v5919
    %v5938 = vsub.f32 %v5890, %v5926
    %v5939 = vsub.f32 %v5891, %v5933
    %v5940 = vmul.f32 %v5934, 1.442695
    %v5941 = vpow.pop %v5940
    %v5942 = vmul.f32 %v5935, 1.442695
    %v5943 = vpow.pop %v5942
    %v5944 = vmul.f32 %v5936, 1.442695
    %v5945 = vpow.pop %v5944
    %v5946 = vmul.f32 %v5937, 1.442695
    %v5947 = vpow.pop %v5946
    %v5948 = vmul.f32 %v5938, 1.442695
    %v5949 = vpow.pop %v5948
    %v5950 = vmul.f32 %v5939, 1.442695
    %v5951 = vpow.pop %v5950
    %v5952 = vsel %vm331, %v5941, 0.0
    %v5953 = vrot.slane %v5952, 4
    %v5954 = vadd.f32 %v5952, %v5953
    %v5955 = vrot.slane %v5954, 2
    %v5956 = vadd.f32 %v5954, %v5955
    %v5957 = vrot.slane %v5956, 1
    %v5958 = vadd.f32 %v5956, %v5957
    %v5959 = vsel %vm331, %v5943, 0.0
    %v5960 = vrot.slane %v5959, 4
    %v5961 = vadd.f32 %v5959, %v5960
    %v5962 = vrot.slane %v5961, 2
    %v5963 = vadd.f32 %v5961, %v5962
    %v5964 = vrot.slane %v5963, 1
    %v5965 = vadd.f32 %v5963, %v5964
    %v5966 = vsel %vm331, %v5945, 0.0
    %v5967 = vrot.slane %v5966, 4
    %v5968 = vadd.f32 %v5966, %v5967
    %v5969 = vrot.slane %v5968, 2
    %v5970 = vadd.f32 %v5968, %v5969
    %v5971 = vrot.slane %v5970, 1
    %v5972 = vadd.f32 %v5970, %v5971
    %v5973 = vsel %vm331, %v5947, 0.0
    %v5974 = vrot.slane %v5973, 4
    %v5975 = vadd.f32 %v5973, %v5974
    %v5976 = vrot.slane %v5975, 2
    %v5977 = vadd.f32 %v5975, %v5976
    %v5978 = vrot.slane %v5977, 1
    %v5979 = vadd.f32 %v5977, %v5978
    %v5980 = vsel %vm331, %v5949, 0.0
    %v5981 = vrot.slane %v5980, 4
    %v5982 = vadd.f32 %v5980, %v5981
    %v5983 = vrot.slane %v5982, 2
    %v5984 = vadd.f32 %v5982, %v5983
    %v5985 = vrot.slane %v5984, 1
    %v5986 = vadd.f32 %v5984, %v5985
    %v5987 = vsel %vm331, %v5951, 0.0
    %v5988 = vrot.slane %v5987, 4
    %v5989 = vadd.f32 %v5987, %v5988
    %v5990 = vrot.slane %v5989, 2
    %v5991 = vadd.f32 %v5989, %v5990
    %v5992 = vrot.slane %v5991, 1
    %v5993 = vadd.f32 %v5991, %v5992
    %v5994 = vlaneseq
    %v5995 = vshrl.u32 %v5994, 7
    %v5996 = vsub.s32 0, %v5995
    %v5997 = vrot.slane %v5765, %v5996
    %5999 = vbcast.lane.b32.xlu0 %v5997, 256
    %v6000 = vpop.permute.xlu0 %5999
    %v6001 = vlaneseq
    %v6002 = vshrl.u32 %v6001, 7
    %v6003 = vsub.s32 1, %v6002
    %v6004 = vrot.slane %v5765, %v6003
    %6006 = vbcast.lane.b32.xlu0 %v6004, 256
    %v6007 = vpop.permute.xlu0 %6006
    %v6008 = vlaneseq
    %v6009 = vshrl.u32 %v6008, 7
    %v6010 = vsub.s32 2, %v6009
    %v6011 = vrot.slane %v5765, %v6010
    %6013 = vbcast.lane.b32.xlu0 %v6011, 256
    %v6014 = vpop.permute.xlu0 %6013
    %v6015 = vlaneseq
    %v6016 = vshrl.u32 %v6015, 7
    %v6017 = vsub.s32 3, %v6016
    %v6018 = vrot.slane %v5765, %v6017
    %6020 = vbcast.lane.b32.xlu0 %v6018, 256
    %v6021 = vpop.permute.xlu0 %6020
    %v6022 = vlaneseq
    %v6023 = vshrl.u32 %v6022, 7
    %v6024 = vsub.s32 4, %v6023
    %v6025 = vrot.slane %v5765, %v6024
    %6027 = vbcast.lane.b32.xlu0 %v6025, 256
    %v6028 = vpop.permute.xlu0 %6027
    %v6029 = vlaneseq
    %v6030 = vshrl.u32 %v6029, 7
    %v6031 = vsub.s32 5, %v6030
    %v6032 = vrot.slane %v5765, %v6031
    %6034 = vbcast.lane.b32.xlu0 %v6032, 256
    %v6035 = vpop.permute.xlu0 %6034
    %v6036 = vmul.f32 %v5941, %v6000
    %v6037 = vmul.f32 %v5943, %v6007
    %v6038 = vmul.f32 %v5945, %v6014
    %v6039 = vmul.f32 %v5947, %v6021
    %v6040 = vmul.f32 %v5949, %v6028
    %v6041 = vmul.f32 %v5951, %v6035
    %v6042 = vsel %vm331, %v6036, 0.0
    %v6043 = vrot.slane %v6042, 4
    %v6044 = vadd.f32 %v6042, %v6043
    %v6045 = vrot.slane %v6044, 2
    %v6046 = vadd.f32 %v6044, %v6045
    %v6047 = vrot.slane %v6046, 1
    %v6048 = vadd.f32 %v6046, %v6047
    %v6049 = vsel %vm331, %v6037, 0.0
    %v6050 = vrot.slane %v6049, 4
    %v6051 = vadd.f32 %v6049, %v6050
    %v6052 = vrot.slane %v6051, 2
    %v6053 = vadd.f32 %v6051, %v6052
    %v6054 = vrot.slane %v6053, 1
    %v6055 = vadd.f32 %v6053, %v6054
    %v6056 = vsel %vm331, %v6038, 0.0
    %v6057 = vrot.slane %v6056, 4
    %v6058 = vadd.f32 %v6056, %v6057
    %v6059 = vrot.slane %v6058, 2
    %v6060 = vadd.f32 %v6058, %v6059
    %v6061 = vrot.slane %v6060, 1
    %v6062 = vadd.f32 %v6060, %v6061
    %v6063 = vsel %vm331, %v6039, 0.0
    %v6064 = vrot.slane %v6063, 4
    %v6065 = vadd.f32 %v6063, %v6064
    %v6066 = vrot.slane %v6065, 2
    %v6067 = vadd.f32 %v6065, %v6066
    %v6068 = vrot.slane %v6067, 1
    %v6069 = vadd.f32 %v6067, %v6068
    %v6070 = vsel %vm331, %v6040, 0.0
    %v6071 = vrot.slane %v6070, 4
    %v6072 = vadd.f32 %v6070, %v6071
    %v6073 = vrot.slane %v6072, 2
    %v6074 = vadd.f32 %v6072, %v6073
    %v6075 = vrot.slane %v6074, 1
    %v6076 = vadd.f32 %v6074, %v6075
    %v6077 = vsel %vm331, %v6041, 0.0
    %v6078 = vrot.slane %v6077, 4
    %v6079 = vadd.f32 %v6077, %v6078
    %v6080 = vrot.slane %v6079, 2
    %v6081 = vadd.f32 %v6079, %v6080
    %v6082 = vrot.slane %v6081, 1
    %v6083 = vadd.f32 %v6081, %v6082
    %v6084 = vrcp.pop %v5958
    %v6085 = vrcp.pop %v5965
    %v6086 = vrcp.pop %v5972
    %v6087 = vrcp.pop %v5979
    %v6088 = vrcp.pop %v5986
    %v6089 = vrcp.pop %v5993
    %v6090 = vmul.f32 %v5958, %v6084
    %v6091 = vmul.f32 %v5965, %v6085
    %v6092 = vmul.f32 %v5972, %v6086
    %v6093 = vmul.f32 %v5979, %v6087
    %v6094 = vmul.f32 %v5986, %v6088
    %v6095 = vmul.f32 %v5993, %v6089
    %v6096 = vsub.f32 2.0, %v6090
    %v6097 = vsub.f32 2.0, %v6091
    %v6098 = vsub.f32 2.0, %v6092
    %v6099 = vsub.f32 2.0, %v6093
    %v6100 = vsub.f32 2.0, %v6094
    %v6101 = vsub.f32 2.0, %v6095
    %v6102 = vmul.f32 %v6084, %v6096
    %v6103 = vmul.f32 %v6085, %v6097
    %v6104 = vmul.f32 %v6086, %v6098
    %v6105 = vmul.f32 %v6087, %v6099
    %v6106 = vmul.f32 %v6088, %v6100
    %v6107 = vmul.f32 %v6089, %v6101
    %v6108 = vmul.f32 %v6048, %v6102
    %v6109 = vmul.f32 %v6055, %v6103
    %v6110 = vmul.f32 %v6062, %v6104
    %v6111 = vmul.f32 %v6069, %v6105
    %v6112 = vmul.f32 %v6076, %v6106
    %v6113 = vmul.f32 %v6083, %v6107
    %v6114 = vld [vmem:[#allocation5 + $0x48] sm:$0x3f]
    %6116 = vset.pattern.permute.xlu0 72
    %6117 = vperm.xlu0 %6116, %v6114
    %v6118 = vpop.permute.xlu0 %6117
    %v6120 = vmul.f32 %v6118, %v6108
    %6121 = vset.pattern.permute.xlu0 80
    %6122 = vperm.xlu0 %6121, %v6114
    %v6123 = vpop.permute.xlu0 %6122
    %v6125 = vadd.f32 %v6123, %v6120
    %6126 = vset.pattern.permute.xlu0 73
    %6127 = vperm.xlu0 %6126, %v6114
    %v6128 = vpop.permute.xlu0 %6127
    %v6130 = vmul.f32 %v6128, %v6109
    %v6131 = vadd.f32 %v6125, %v6130
    %6132 = vset.pattern.permute.xlu0 74
    %6133 = vperm.xlu0 %6132, %v6114
    %v6134 = vpop.permute.xlu0 %6133
    %v6136 = vmul.f32 %v6134, %v6110
    %v6137 = vadd.f32 %v6131, %v6136
    %6138 = vset.pattern.permute.xlu0 75
    %6139 = vperm.xlu0 %6138, %v6114
    %v6140 = vpop.permute.xlu0 %6139
    %v6142 = vmul.f32 %v6140, %v6111
    %v6143 = vadd.f32 %v6137, %v6142
    %6144 = vset.pattern.permute.xlu0 76
    %6145 = vperm.xlu0 %6144, %v6114
    %v6146 = vpop.permute.xlu0 %6145
    %v6148 = vmul.f32 %v6146, %v6112
    %v6149 = vadd.f32 %v6143, %v6148
    %6150 = vset.pattern.permute.xlu0 77
    %6151 = vperm.xlu0 %6150, %v6114
    %v6152 = vpop.permute.xlu0 %6151
    %v6154 = vmul.f32 %v6152, %v6113
    %v6155 = vadd.f32 %v6149, %v6154
    %v6156 = vadd.f32 %v5617, %v6155
    %v6157 = vsel %vm597, %v6156, 0.0
    %v6158 = vrot.slane %v6157, 4
    %v6159 = vadd.f32 %v6157, %v6158
    %v6160 = vrot.slane %v6159, 2
    %v6161 = vadd.f32 %v6159, %v6160
    %v6162 = vrot.slane %v6161, 1
    %v6163 = vadd.f32 %v6161, %v6162
    %v6164 = vmul.f32 %v6163, %v605
    %v6165 = vsub.f32 %v6156, %v6164
    %v6166 = vmul.f32 %v6165, %v6165
    %v6167 = vsel %vm597, %v6166, 0.0
    %v6168 = vrot.slane %v6167, 4
    %v6169 = vadd.f32 %v6167, %v6168
    %v6170 = vrot.slane %v6169, 2
    %v6171 = vadd.f32 %v6169, %v6170
    %v6172 = vrot.slane %v6171, 1
    %v6173 = vadd.f32 %v6171, %v6172
    %v6174 = vmul.f32 %v6173, %v605
    %v6175 = vadd.f32 %v6174, 1e-05
    %v6176 = vrsqrt.pop %v6175
    %v6177 = vmul.f32 %v6165, %v6176
    %v6178 = vld [vmem:[#allocation5 + $0x38] sm:$0x3f]
    %6180 = vset.pattern.permute.xlu0 104
    %6181 = vperm.xlu0 %6180, %v6178
    %v6182 = vpop.permute.xlu0 %6181
    %v6184 = vmul.f32 %v6177, %v6182
    %v6185 = vld [vmem:[#allocation5 + $0x40] sm:$0x3f]
    %6187 = vset.pattern.permute.xlu0 64
    %6188 = vperm.xlu0 %6187, %v6185
    %v6189 = vpop.permute.xlu0 %6188
    %v6191 = vadd.f32 %v6184, %v6189
    %v6192 = vld [vmem:[#allocation5 + $0x30] sm:$0xff]
    %v6193 = vld [vmem:[#allocation5 + $0x38] sm:$0xff]
    %v6194 = vld [vmem:[#allocation5 + $0x40] sm:$0xff]
    %v6195 = vld [vmem:[#allocation5 + $0x48] sm:$0xff]
    %v6196 = vld [vmem:[#allocation5 + $0x50] sm:$0xff]
    %v6197 = vld [vmem:[#allocation5 + $0x58] sm:$0xff]
    %v6198 = vld [vmem:[#allocation5 + $0x60] sm:$0xff]
    %v6199 = vld [vmem:[#allocation5 + $0x68] sm:$0xff]
    %v6200 = vld [vmem:[#allocation5 + $0x70] sm:$0xff]
    %v6201 = vld [vmem:[#allocation5 + $0x78] sm:$0xff]
    %6203 = vset.pattern.permute.xlu0 112
    %6204 = vperm.xlu0 %6203, %v6192
    %v6205 = vpop.permute.xlu0 %6204
    %6208 = vset.pattern.permute.xlu0 112
    %6209 = vperm.xlu0 %6208, %v6193
    %v6210 = vpop.permute.xlu0 %6209
    %6213 = vset.pattern.permute.xlu0 112
    %6214 = vperm.xlu0 %6213, %v6194
    %v6215 = vpop.permute.xlu0 %6214
    %6218 = vset.pattern.permute.xlu0 112
    %6219 = vperm.xlu0 %6218, %v6195
    %v6220 = vpop.permute.xlu0 %6219
    %6223 = vset.pattern.permute.xlu0 112
    %6224 = vperm.xlu0 %6223, %v6196
    %v6225 = vpop.permute.xlu0 %6224
    %6228 = vset.pattern.permute.xlu0 112
    %6229 = vperm.xlu0 %6228, %v6197
    %v6230 = vpop.permute.xlu0 %6229
    %6233 = vset.pattern.permute.xlu0 112
    %6234 = vperm.xlu0 %6233, %v6198
    %v6235 = vpop.permute.xlu0 %6234
    %6238 = vset.pattern.permute.xlu0 112
    %6239 = vperm.xlu0 %6238, %v6199
    %v6240 = vpop.permute.xlu0 %6239
    %6243 = vset.pattern.permute.xlu0 112
    %6244 = vperm.xlu0 %6243, %v6200
    %v6245 = vpop.permute.xlu0 %6244
    %v6247 = vlaneseq
    %v6248 = vshrl.u32 %v6247, 7
    %v6249 = vsub.s32 0, %v6248
    %v6250 = vrot.slane %v6191, %v6249
    %v6251 = vmul.f32 %v6205, %v6250
    %v6252 = vmul.f32 %v6210, %v6250
    %v6253 = vmul.f32 %v6215, %v6250
    %v6254 = vmul.f32 %v6220, %v6250
    %v6255 = vmul.f32 %v6225, %v6250
    %v6256 = vmul.f32 %v6230, %v6250
    %v6257 = vmul.f32 %v6235, %v6250
    %v6258 = vmul.f32 %v6240, %v6250
    %v6259 = vmul.f32 %v6245, %v6250
    %6260 = vset.pattern.permute.xlu0 24
    %6261 = vperm.xlu0 %6260, %v6193
    %v6262 = vpop.permute.xlu0 %6261
    %6264 = vset.pattern.permute.xlu0 24
    %6265 = vperm.xlu0 %6264, %v6194
    %v6266 = vpop.permute.xlu0 %6265
    %6268 = vset.pattern.permute.xlu0 24
    %6269 = vperm.xlu0 %6268, %v6195
    %v6270 = vpop.permute.xlu0 %6269
    %6272 = vset.pattern.permute.xlu0 24
    %6273 = vperm.xlu0 %6272, %v6196
    %v6274 = vpop.permute.xlu0 %6273
    %6276 = vset.pattern.permute.xlu0 24
    %6277 = vperm.xlu0 %6276, %v6197
    %v6278 = vpop.permute.xlu0 %6277
    %6280 = vset.pattern.permute.xlu0 24
    %6281 = vperm.xlu0 %6280, %v6198
    %v6282 = vpop.permute.xlu0 %6281
    %6284 = vset.pattern.permute.xlu0 24
    %6285 = vperm.xlu0 %6284, %v6199
    %v6286 = vpop.permute.xlu0 %6285
    %6288 = vset.pattern.permute.xlu0 24
    %6289 = vperm.xlu0 %6288, %v6200
    %v6290 = vpop.permute.xlu0 %6289
    %6293 = vset.pattern.permute.xlu0 24
    %6294 = vperm.xlu0 %6293, %v6201
    %v6295 = vpop.permute.xlu0 %6294
    %v6297 = vadd.f32 %v6262, %v6251
    %v6298 = vadd.f32 %v6266, %v6252
    %v6299 = vadd.f32 %v6270, %v6253
    %v6300 = vadd.f32 %v6274, %v6254
    %v6301 = vadd.f32 %v6278, %v6255
    %v6302 = vadd.f32 %v6282, %v6256
    %v6303 = vadd.f32 %v6286, %v6257
    %v6304 = vadd.f32 %v6290, %v6258
    %v6305 = vadd.f32 %v6295, %v6259
    %6306 = vset.pattern.permute.xlu0 113
    %6307 = vperm.xlu0 %6306, %v6192
    %v6308 = vpop.permute.xlu0 %6307
    %6310 = vset.pattern.permute.xlu0 113
    %6311 = vperm.xlu0 %6310, %v6193
    %v6312 = vpop.permute.xlu0 %6311
    %6314 = vset.pattern.permute.xlu0 113
    %6315 = vperm.xlu0 %6314, %v6194
    %v6316 = vpop.permute.xlu0 %6315
    %6318 = vset.pattern.permute.xlu0 113
    %6319 = vperm.xlu0 %6318, %v6195
    %v6320 = vpop.permute.xlu0 %6319
    %6322 = vset.pattern.permute.xlu0 113
    %6323 = vperm.xlu0 %6322, %v6196
    %v6324 = vpop.permute.xlu0 %6323
    %6326 = vset.pattern.permute.xlu0 113
    %6327 = vperm.xlu0 %6326, %v6197
    %v6328 = vpop.permute.xlu0 %6327
    %6330 = vset.pattern.permute.xlu0 113
    %6331 = vperm.xlu0 %6330, %v6198
    %v6332 = vpop.permute.xlu0 %6331
    %6334 = vset.pattern.permute.xlu0 113
    %6335 = vperm.xlu0 %6334, %v6199
    %v6336 = vpop.permute.xlu0 %6335
    %6338 = vset.pattern.permute.xlu0 113
    %6339 = vperm.xlu0 %6338, %v6200
    %v6340 = vpop.permute.xlu0 %6339
    %v6342 = vlaneseq
    %v6343 = vshrl.u32 %v6342, 7
    %v6344 = vsub.s32 1, %v6343
    %v6345 = vrot.slane %v6191, %v6344
    %v6346 = vmul.f32 %v6308, %v6345
    %v6347 = vmul.f32 %v6312, %v6345
    %v6348 = vmul.f32 %v6316, %v6345
    %v6349 = vmul.f32 %v6320, %v6345
    %v6350 = vmul.f32 %v6324, %v6345
    %v6351 = vmul.f32 %v6328, %v6345
    %v6352 = vmul.f32 %v6332, %v6345
    %v6353 = vmul.f32 %v6336, %v6345
    %v6354 = vmul.f32 %v6340, %v6345
    %v6355 = vadd.f32 %v6297, %v6346
    %v6356 = vadd.f32 %v6298, %v6347
    %v6357 = vadd.f32 %v6299, %v6348
    %v6358 = vadd.f32 %v6300, %v6349
    %v6359 = vadd.f32 %v6301, %v6350
    %v6360 = vadd.f32 %v6302, %v6351
    %v6361 = vadd.f32 %v6303, %v6352
    %v6362 = vadd.f32 %v6304, %v6353
    %v6363 = vadd.f32 %v6305, %v6354
    %6364 = vset.pattern.permute.xlu0 114
    %6365 = vperm.xlu0 %6364, %v6192
    %v6366 = vpop.permute.xlu0 %6365
    %6368 = vset.pattern.permute.xlu0 114
    %6369 = vperm.xlu0 %6368, %v6193
    %v6370 = vpop.permute.xlu0 %6369
    %6372 = vset.pattern.permute.xlu0 114
    %6373 = vperm.xlu0 %6372, %v6194
    %v6374 = vpop.permute.xlu0 %6373
    %6376 = vset.pattern.permute.xlu0 114
    %6377 = vperm.xlu0 %6376, %v6195
    %v6378 = vpop.permute.xlu0 %6377
    %6380 = vset.pattern.permute.xlu0 114
    %6381 = vperm.xlu0 %6380, %v6196
    %v6382 = vpop.permute.xlu0 %6381
    %6384 = vset.pattern.permute.xlu0 114
    %6385 = vperm.xlu0 %6384, %v6197
    %v6386 = vpop.permute.xlu0 %6385
    %6388 = vset.pattern.permute.xlu0 114
    %6389 = vperm.xlu0 %6388, %v6198
    %v6390 = vpop.permute.xlu0 %6389
    %6392 = vset.pattern.permute.xlu0 114
    %6393 = vperm.xlu0 %6392, %v6199
    %v6394 = vpop.permute.xlu0 %6393
    %6396 = vset.pattern.permute.xlu0 114
    %6397 = vperm.xlu0 %6396, %v6200
    %v6398 = vpop.permute.xlu0 %6397
    %v6400 = vlaneseq
    %v6401 = vshrl.u32 %v6400, 7
    %v6402 = vsub.s32 2, %v6401
    %v6403 = vrot.slane %v6191, %v6402
    %v6404 = vmul.f32 %v6366, %v6403
    %v6405 = vmul.f32 %v6370, %v6403
    %v6406 = vmul.f32 %v6374, %v6403
    %v6407 = vmul.f32 %v6378, %v6403
    %v6408 = vmul.f32 %v6382, %v6403
    %v6409 = vmul.f32 %v6386, %v6403
    %v6410 = vmul.f32 %v6390, %v6403
    %v6411 = vmul.f32 %v6394, %v6403
    %v6412 = vmul.f32 %v6398, %v6403
    %v6413 = vadd.f32 %v6355, %v6404
    %v6414 = vadd.f32 %v6356, %v6405
    %v6415 = vadd.f32 %v6357, %v6406
    %v6416 = vadd.f32 %v6358, %v6407
    %v6417 = vadd.f32 %v6359, %v6408
    %v6418 = vadd.f32 %v6360, %v6409
    %v6419 = vadd.f32 %v6361, %v6410
    %v6420 = vadd.f32 %v6362, %v6411
    %v6421 = vadd.f32 %v6363, %v6412
    %6422 = vset.pattern.permute.xlu0 115
    %6423 = vperm.xlu0 %6422, %v6192
    %v6424 = vpop.permute.xlu0 %6423
    %6426 = vset.pattern.permute.xlu0 115
    %6427 = vperm.xlu0 %6426, %v6193
    %v6428 = vpop.permute.xlu0 %6427
    %6430 = vset.pattern.permute.xlu0 115
    %6431 = vperm.xlu0 %6430, %v6194
    %v6432 = vpop.permute.xlu0 %6431
    %6434 = vset.pattern.permute.xlu0 115
    %6435 = vperm.xlu0 %6434, %v6195
    %v6436 = vpop.permute.xlu0 %6435
    %6438 = vset.pattern.permute.xlu0 115
    %6439 = vperm.xlu0 %6438, %v6196
    %v6440 = vpop.permute.xlu0 %6439
    %6442 = vset.pattern.permute.xlu0 115
    %6443 = vperm.xlu0 %6442, %v6197
    %v6444 = vpop.permute.xlu0 %6443
    %6446 = vset.pattern.permute.xlu0 115
    %6447 = vperm.xlu0 %6446, %v6198
    %v6448 = vpop.permute.xlu0 %6447
    %6450 = vset.pattern.permute.xlu0 115
    %6451 = vperm.xlu0 %6450, %v6199
    %v6452 = vpop.permute.xlu0 %6451
    %6454 = vset.pattern.permute.xlu0 115
    %6455 = vperm.xlu0 %6454, %v6200
    %v6456 = vpop.permute.xlu0 %6455
    %v6458 = vlaneseq
    %v6459 = vshrl.u32 %v6458, 7
    %v6460 = vsub.s32 3, %v6459
    %v6461 = vrot.slane %v6191, %v6460
    %v6462 = vmul.f32 %v6424, %v6461
    %v6463 = vmul.f32 %v6428, %v6461
    %v6464 = vmul.f32 %v6432, %v6461
    %v6465 = vmul.f32 %v6436, %v6461
    %v6466 = vmul.f32 %v6440, %v6461
    %v6467 = vmul.f32 %v6444, %v6461
    %v6468 = vmul.f32 %v6448, %v6461
    %v6469 = vmul.f32 %v6452, %v6461
    %v6470 = vmul.f32 %v6456, %v6461
    %v6471 = vadd.f32 %v6413, %v6462
    %v6472 = vadd.f32 %v6414, %v6463
    %v6473 = vadd.f32 %v6415, %v6464
    %v6474 = vadd.f32 %v6416, %v6465
    %v6475 = vadd.f32 %v6417, %v6466
    %v6476 = vadd.f32 %v6418, %v6467
    %v6477 = vadd.f32 %v6419, %v6468
    %v6478 = vadd.f32 %v6420, %v6469
    %v6479 = vadd.f32 %v6421, %v6470
    %6480 = vset.pattern.permute.xlu0 116
    %6481 = vperm.xlu0 %6480, %v6192
    %v6482 = vpop.permute.xlu0 %6481
    %6484 = vset.pattern.permute.xlu0 116
    %6485 = vperm.xlu0 %6484, %v6193
    %v6486 = vpop.permute.xlu0 %6485
    %6488 = vset.pattern.permute.xlu0 116
    %6489 = vperm.xlu0 %6488, %v6194
    %v6490 = vpop.permute.xlu0 %6489
    %6492 = vset.pattern.permute.xlu0 116
    %6493 = vperm.xlu0 %6492, %v6195
    %v6494 = vpop.permute.xlu0 %6493
    %6496 = vset.pattern.permute.xlu0 116
    %6497 = vperm.xlu0 %6496, %v6196
    %v6498 = vpop.permute.xlu0 %6497
    %6500 = vset.pattern.permute.xlu0 116
    %6501 = vperm.xlu0 %6500, %v6197
    %v6502 = vpop.permute.xlu0 %6501
    %6504 = vset.pattern.permute.xlu0 116
    %6505 = vperm.xlu0 %6504, %v6198
    %v6506 = vpop.permute.xlu0 %6505
    %6508 = vset.pattern.permute.xlu0 116
    %6509 = vperm.xlu0 %6508, %v6199
    %v6510 = vpop.permute.xlu0 %6509
    %6512 = vset.pattern.permute.xlu0 116
    %6513 = vperm.xlu0 %6512, %v6200
    %v6514 = vpop.permute.xlu0 %6513
    %v6516 = vlaneseq
    %v6517 = vshrl.u32 %v6516, 7
    %v6518 = vsub.s32 4, %v6517
    %v6519 = vrot.slane %v6191, %v6518
    %v6520 = vmul.f32 %v6482, %v6519
    %v6521 = vmul.f32 %v6486, %v6519
    %v6522 = vmul.f32 %v6490, %v6519
    %v6523 = vmul.f32 %v6494, %v6519
    %v6524 = vmul.f32 %v6498, %v6519
    %v6525 = vmul.f32 %v6502, %v6519
    %v6526 = vmul.f32 %v6506, %v6519
    %v6527 = vmul.f32 %v6510, %v6519
    %v6528 = vmul.f32 %v6514, %v6519
    %v6529 = vadd.f32 %v6471, %v6520
    %v6530 = vadd.f32 %v6472, %v6521
    %v6531 = vadd.f32 %v6473, %v6522
    %v6532 = vadd.f32 %v6474, %v6523
    %v6533 = vadd.f32 %v6475, %v6524
    %v6534 = vadd.f32 %v6476, %v6525
    %v6535 = vadd.f32 %v6477, %v6526
    %v6536 = vadd.f32 %v6478, %v6527
    %v6537 = vadd.f32 %v6479, %v6528
    %6538 = vset.pattern.permute.xlu0 117
    %6539 = vperm.xlu0 %6538, %v6192
    %v6540 = vpop.permute.xlu0 %6539
    %6542 = vset.pattern.permute.xlu0 117
    %6543 = vperm.xlu0 %6542, %v6193
    %v6544 = vpop.permute.xlu0 %6543
    %6546 = vset.pattern.permute.xlu0 117
    %6547 = vperm.xlu0 %6546, %v6194
    %v6548 = vpop.permute.xlu0 %6547
    %6550 = vset.pattern.permute.xlu0 117
    %6551 = vperm.xlu0 %6550, %v6195
    %v6552 = vpop.permute.xlu0 %6551
    %6554 = vset.pattern.permute.xlu0 117
    %6555 = vperm.xlu0 %6554, %v6196
    %v6556 = vpop.permute.xlu0 %6555
    %6558 = vset.pattern.permute.xlu0 117
    %6559 = vperm.xlu0 %6558, %v6197
    %v6560 = vpop.permute.xlu0 %6559
    %6562 = vset.pattern.permute.xlu0 117
    %6563 = vperm.xlu0 %6562, %v6198
    %v6564 = vpop.permute.xlu0 %6563
    %6566 = vset.pattern.permute.xlu0 117
    %6567 = vperm.xlu0 %6566, %v6199
    %v6568 = vpop.permute.xlu0 %6567
    %6570 = vset.pattern.permute.xlu0 117
    %6571 = vperm.xlu0 %6570, %v6200
    %v6572 = vpop.permute.xlu0 %6571
    %v6574 = vlaneseq
    %v6575 = vshrl.u32 %v6574, 7
    %v6576 = vsub.s32 5, %v6575
    %v6577 = vrot.slane %v6191, %v6576
    %v6578 = vmul.f32 %v6540, %v6577
    %v6579 = vmul.f32 %v6544, %v6577
    %v6580 = vmul.f32 %v6548, %v6577
    %v6581 = vmul.f32 %v6552, %v6577
    %v6582 = vmul.f32 %v6556, %v6577
    %v6583 = vmul.f32 %v6560, %v6577
    %v6584 = vmul.f32 %v6564, %v6577
    %v6585 = vmul.f32 %v6568, %v6577
    %v6586 = vmul.f32 %v6572, %v6577
    %v6587 = vadd.f32 %v6529, %v6578
    %v6588 = vadd.f32 %v6530, %v6579
    %v6589 = vadd.f32 %v6531, %v6580
    %v6590 = vadd.f32 %v6532, %v6581
    %v6591 = vadd.f32 %v6533, %v6582
    %v6592 = vadd.f32 %v6534, %v6583
    %v6593 = vadd.f32 %v6535, %v6584
    %v6594 = vadd.f32 %v6536, %v6585
    %v6595 = vadd.f32 %v6537, %v6586
    %v6596 = vmax.f32 %v6587, 0.0
    %v6597 = vmax.f32 %v6588, 0.0
    %v6598 = vmax.f32 %v6589, 0.0
    %v6599 = vmax.f32 %v6590, 0.0
    %v6600 = vmax.f32 %v6591, 0.0
    %v6601 = vmax.f32 %v6592, 0.0
    %v6602 = vmax.f32 %v6593, 0.0
    %v6603 = vmax.f32 %v6594, 0.0
    %v6604 = vmax.f32 %v6595, 0.0
    %v6605 = vld [vmem:[#allocation7 + $0x20] sm:$0x3f]
    %6606 = vset.pattern.permute.xlu0 64
    %6607 = vperm.xlu0 %6606, %v6178
    %v6608 = vpop.permute.xlu0 %6607
    %v6611 = vsel %vm1046, %v6605, 0
    %6613 = vmatprep.subr.mxu0 0.0
    %6614 = vmatpush1.msra.mxu0 %v6596
    %6615 = vmatprep.subr.mxu0 0.0
    %6616 = vmatpush1.msra.mxu0 %v6597
    %6617 = vmatprep.subr.mxu0 0.0
    %6618 = vmatpush1.msra.mxu0 %v6598
    %6619 = vmatprep.subr.mxu0 0.0
    %6620 = vmatpush1.msra.mxu0 %v6599
    %6621 = vmatprep.subr.mxu0 0.0
    %6622 = vmatpush1.msra.mxu0 %v6600
    %6623 = vmatprep.subr.mxu0 0.0
    %6624 = vmatpush1.msra.mxu0 %v6601
    %6625 = vmatprep.subr.mxu0 0.0
    %6626 = vmatpush1.msra.mxu0 %v6602
    %6627 = vmatprep.subr.mxu0 0.0
    %6628 = vmatpush1.msra.mxu0 %v6603
    %6629 = vmatprep.subr.mxu0 0.0
    %6630 = vmatpush1.msra.mxu0 %v6604
    %6631 = vmatprep.subr.mxu0 0.0
    %6632 = vmatpush1.msra.mxu0 0.0
    %6633 = vmatprep.subr.mxu0 0.0
    %6634 = vmatpush1.msra.mxu0 0.0
    %6635 = vmatprep.subr.mxu0 0.0
    %6636 = vmatpush1.msra.mxu0 0.0
    %6637 = vmatprep.subr.mxu0 0.0
    %6638 = vmatpush1.msra.mxu0 0.0
    %6639 = vmatprep.subr.mxu0 0.0
    %6640 = vmatpush1.msra.mxu0 0.0
    %6641 = vmatprep.subr.mxu0 0.0
    %6642 = vmatpush1.msra.mxu0 0.0
    %6643 = vmatprep.subr.mxu0 0.0
    %6644 = vmatpush1.msra.mxu0 0.0
    %6645 = vmatprep.subr.mxu0 0.0
    %6646 = vmatpush1.msra.mxu0 0.0
    %6647 = vmatprep.subr.mxu0 0.0
    %6648 = vmatpush1.msra.mxu0 0.0
    %6649 = vmatprep.subr.mxu0 0.0
    %6650 = vmatpush1.msra.mxu0 0.0
    %6651 = vmatprep.subr.mxu0 0.0
    %6652 = vmatpush1.msra.mxu0 0.0
    %6653 = vmatprep.subr.mxu0 0.0
    %6654 = vmatpush1.msra.mxu0 0.0
    %6655 = vmatprep.subr.mxu0 0.0
    %6656 = vmatpush1.msra.mxu0 0.0
    %6657 = vmatprep.subr.mxu0 0.0
    %6658 = vmatpush1.msra.mxu0 0.0
    %6659 = vmatprep.subr.mxu0 0.0
    %6660 = vmatpush1.msra.mxu0 0.0
    %6661 = vmatprep.subr.mxu0 0.0
    %6662 = vmatpush1.msra.mxu0 0.0
    %6663 = vmatprep.subr.mxu0 0.0
    %6664 = vmatpush1.msra.mxu0 0.0
    %6665 = vmatprep.subr.mxu0 0.0
    %6666 = vmatpush1.msra.mxu0 0.0
    %6667 = vmatprep.subr.mxu0 0.0
    %6668 = vmatpush1.msra.mxu0 0.0
    %6669 = vmatprep.subr.mxu0 0.0
    %6670 = vmatpush1.msra.mxu0 0.0
    %6671 = vmatprep.subr.mxu0 0.0
    %6672 = vmatpush1.msra.mxu0 0.0
    %6673 = vmatprep.subr.mxu0 0.0
    %6674 = vmatpush1.msra.mxu0 0.0
    %6675 = vmatprep.subr.mxu0 0.0
    %6676 = vmatpush1.msra.mxu0 0.0
    %6677 = vmatprep.mubr.f32.mxu0 0.0
    %6678 = vmatmul.mubr.f32.gmra.mrb[0].mxu0 %v6611
    %v6679 = vpop.f32.mrb[0].mxu0
    %v6680 = vadd.f32 %v6608, %v6679
    %v6681 = vpop.f32.mrb[0].mxu0
    %6682 = vdwg.mxu0
    %v6683 = vadd.f32 %v6191, %v6680
    %v6684 = vsel %vm597, %v6683, 0.0
    %v6685 = vrot.slane %v6684, 4
    %v6686 = vadd.f32 %v6684, %v6685
    %v6687 = vrot.slane %v6686, 2
    %v6688 = vadd.f32 %v6686, %v6687
    %v6689 = vrot.slane %v6688, 1
    %v6690 = vadd.f32 %v6688, %v6689
    %v6691 = vmul.f32 %v6690, %v605
    %v6692 = vsub.f32 %v6683, %v6691
    %v6693 = vmul.f32 %v6692, %v6692
    %v6694 = vsel %vm597, %v6693, 0.0
    %v6695 = vrot.slane %v6694, 4
    %v6696 = vadd.f32 %v6694, %v6695
    %v6697 = vrot.slane %v6696, 2
    %v6698 = vadd.f32 %v6696, %v6697
    %v6699 = vrot.slane %v6698, 1
    %v6700 = vadd.f32 %v6698, %v6699
    %v6701 = vmul.f32 %v6700, %v605
    %v6702 = vadd.f32 %v6701, 1e-05
    %v6703 = vrsqrt.pop %v6702
    %v6704 = vmul.f32 %v6692, %v6703
    %6705 = vset.pattern.permute.xlu0 88
    %6706 = vperm.xlu0 %6705, %v6114
    %v6707 = vpop.permute.xlu0 %6706
    %v6709 = vmul.f32 %v6704, %v6707
    %6710 = vset.pattern.permute.xlu0 96
    %6711 = vperm.xlu0 %6710, %v6114
    %v6712 = vpop.permute.xlu0 %6711
    %v6714 = vadd.f32 %v6709, %v6712
    %v6715 = vld [vmem:[#allocation5 + $0x48] sm:$0xff]
    %v6716 = vld [vmem:[#allocation5 + $0x50] sm:$0xff]
    %v6717 = vld [vmem:[#allocation5 + $0x58] sm:$0x3]
    %6719 = vset.pattern.permute.xlu0 104
    %6720 = vperm.xlu0 %6719, %v6715
    %v6721 = vpop.permute.xlu0 %6720
    %6724 = vset.pattern.permute.xlu0 104
    %6725 = vperm.xlu0 %6724, %v6716
    %v6726 = vpop.permute.xlu0 %6725
    %6729 = vset.pattern.permute.xlu0 104
    %6730 = vperm.xlu0 %6729, %v6717
    %v6731 = vpop.permute.xlu0 %6730
    %v6733 = vlaneseq
    %v6734 = vshrl.u32 %v6733, 7
    %v6735 = vsub.s32 0, %v6734
    %v6736 = vrot.slane %v6714, %v6735
    %v6737 = vmul.f32 %v6721, %v6736
    %v6738 = vmul.f32 %v6726, %v6736
    %v6739 = vmul.f32 %v6731, %v6736
    %6740 = vset.pattern.permute.xlu0 120
    %6741 = vperm.xlu0 %6740, %v6715
    %v6742 = vpop.permute.xlu0 %6741
    %6744 = vset.pattern.permute.xlu0 120
    %6745 = vperm.xlu0 %6744, %v6716
    %v6746 = vpop.permute.xlu0 %6745
    %6748 = vset.pattern.permute.xlu0 120
    %6749 = vperm.xlu0 %6748, %v6717
    %v6750 = vpop.permute.xlu0 %6749
    %v6752 = vadd.f32 %v6742, %v6737
    %v6753 = vadd.f32 %v6746, %v6738
    %v6754 = vadd.f32 %v6750, %v6739
    %6755 = vset.pattern.permute.xlu0 105
    %6756 = vperm.xlu0 %6755, %v6715
    %v6757 = vpop.permute.xlu0 %6756
    %6759 = vset.pattern.permute.xlu0 105
    %6760 = vperm.xlu0 %6759, %v6716
    %v6761 = vpop.permute.xlu0 %6760
    %6763 = vset.pattern.permute.xlu0 105
    %6764 = vperm.xlu0 %6763, %v6717
    %v6765 = vpop.permute.xlu0 %6764
    %v6767 = vlaneseq
    %v6768 = vshrl.u32 %v6767, 7
    %v6769 = vsub.s32 1, %v6768
    %v6770 = vrot.slane %v6714, %v6769
    %v6771 = vmul.f32 %v6757, %v6770
    %v6772 = vmul.f32 %v6761, %v6770
    %v6773 = vmul.f32 %v6765, %v6770
    %v6774 = vadd.f32 %v6752, %v6771
    %v6775 = vadd.f32 %v6753, %v6772
    %v6776 = vadd.f32 %v6754, %v6773
    %6777 = vset.pattern.permute.xlu0 106
    %6778 = vperm.xlu0 %6777, %v6715
    %v6779 = vpop.permute.xlu0 %6778
    %6781 = vset.pattern.permute.xlu0 106
    %6782 = vperm.xlu0 %6781, %v6716
    %v6783 = vpop.permute.xlu0 %6782
    %6785 = vset.pattern.permute.xlu0 106
    %6786 = vperm.xlu0 %6785, %v6717
    %v6787 = vpop.permute.xlu0 %6786
    %v6789 = vlaneseq
    %v6790 = vshrl.u32 %v6789, 7
    %v6791 = vsub.s32 2, %v6790
    %v6792 = vrot.slane %v6714, %v6791
    %v6793 = vmul.f32 %v6779, %v6792
    %v6794 = vmul.f32 %v6783, %v6792
    %v6795 = vmul.f32 %v6787, %v6792
    %v6796 = vadd.f32 %v6774, %v6793
    %v6797 = vadd.f32 %v6775, %v6794
    %v6798 = vadd.f32 %v6776, %v6795
    %6799 = vset.pattern.permute.xlu0 107
    %6800 = vperm.xlu0 %6799, %v6715
    %v6801 = vpop.permute.xlu0 %6800
    %6803 = vset.pattern.permute.xlu0 107
    %6804 = vperm.xlu0 %6803, %v6716
    %v6805 = vpop.permute.xlu0 %6804
    %6807 = vset.pattern.permute.xlu0 107
    %6808 = vperm.xlu0 %6807, %v6717
    %v6809 = vpop.permute.xlu0 %6808
    %v6811 = vlaneseq
    %v6812 = vshrl.u32 %v6811, 7
    %v6813 = vsub.s32 3, %v6812
    %v6814 = vrot.slane %v6714, %v6813
    %v6815 = vmul.f32 %v6801, %v6814
    %v6816 = vmul.f32 %v6805, %v6814
    %v6817 = vmul.f32 %v6809, %v6814
    %v6818 = vadd.f32 %v6796, %v6815
    %v6819 = vadd.f32 %v6797, %v6816
    %v6820 = vadd.f32 %v6798, %v6817
    %6821 = vset.pattern.permute.xlu0 108
    %6822 = vperm.xlu0 %6821, %v6715
    %v6823 = vpop.permute.xlu0 %6822
    %6825 = vset.pattern.permute.xlu0 108
    %6826 = vperm.xlu0 %6825, %v6716
    %v6827 = vpop.permute.xlu0 %6826
    %6829 = vset.pattern.permute.xlu0 108
    %6830 = vperm.xlu0 %6829, %v6717
    %v6831 = vpop.permute.xlu0 %6830
    %v6833 = vlaneseq
    %v6834 = vshrl.u32 %v6833, 7
    %v6835 = vsub.s32 4, %v6834
    %v6836 = vrot.slane %v6714, %v6835
    %v6837 = vmul.f32 %v6823, %v6836
    %v6838 = vmul.f32 %v6827, %v6836
    %v6839 = vmul.f32 %v6831, %v6836
    %v6840 = vadd.f32 %v6818, %v6837
    %v6841 = vadd.f32 %v6819, %v6838
    %v6842 = vadd.f32 %v6820, %v6839
    %6843 = vset.pattern.permute.xlu0 109
    %6844 = vperm.xlu0 %6843, %v6715
    %v6845 = vpop.permute.xlu0 %6844
    %6847 = vset.pattern.permute.xlu0 109
    %6848 = vperm.xlu0 %6847, %v6716
    %v6849 = vpop.permute.xlu0 %6848
    %6851 = vset.pattern.permute.xlu0 109
    %6852 = vperm.xlu0 %6851, %v6717
    %v6853 = vpop.permute.xlu0 %6852
    %v6855 = vlaneseq
    %v6856 = vshrl.u32 %v6855, 7
    %v6857 = vsub.s32 5, %v6856
    %v6858 = vrot.slane %v6714, %v6857
    %v6859 = vmul.f32 %v6845, %v6858
    %v6860 = vmul.f32 %v6849, %v6858
    %v6861 = vmul.f32 %v6853, %v6858
    %v6862 = vadd.f32 %v6840, %v6859
    %v6863 = vadd.f32 %v6841, %v6860
    %v6864 = vadd.f32 %v6842, %v6861
    %v6865 = vlaneseq
    %v6866 = vshrl.u32 %v6865, 7
    %v6867 = vsub.s32 6, %v6866
    %v6868 = vrot.slane %v6862, %v6867
    %6870 = vbcast.lane.b32.xlu0 %v6868, 256
    %v6871 = vpop.permute.xlu0 %6870
    %v6872 = vlaneseq
    %v6873 = vshrl.u32 %v6872, 7
    %v6874 = vsub.s32 7, %v6873
    %v6875 = vrot.slane %v6862, %v6874
    %6877 = vbcast.lane.b32.xlu0 %v6875, 256
    %v6878 = vpop.permute.xlu0 %6877
    %v6879 = vlaneseq
    %v6880 = vshrl.u32 %v6879, 7
    %v6881 = vsub.s32 0, %v6880
    %v6882 = vrot.slane %v6863, %v6881
    %6884 = vbcast.lane.b32.xlu0 %v6882, 256
    %v6885 = vpop.permute.xlu0 %6884
    %v6886 = vlaneseq
    %v6887 = vshrl.u32 %v6886, 7
    %v6888 = vsub.s32 1, %v6887
    %v6889 = vrot.slane %v6863, %v6888
    %6891 = vbcast.lane.b32.xlu0 %v6889, 256
    %v6892 = vpop.permute.xlu0 %6891
    %v6893 = vlaneseq
    %v6894 = vshrl.u32 %v6893, 7
    %v6895 = vsub.s32 2, %v6894
    %v6896 = vrot.slane %v6863, %v6895
    %6898 = vbcast.lane.b32.xlu0 %v6896, 256
    %v6899 = vpop.permute.xlu0 %6898
    %v6900 = vlaneseq
    %v6901 = vshrl.u32 %v6900, 7
    %v6902 = vsub.s32 3, %v6901
    %v6903 = vrot.slane %v6863, %v6902
    %6905 = vbcast.lane.b32.xlu0 %v6903, 256
    %v6906 = vpop.permute.xlu0 %6905
    %v6908 = vcombine.high %v6862, %v6862
    %v6910 = vunpack.c.l.s4 1966171168
    %v6911 = vunpack.c.0.s8 %v6910
    %v6912 = vlaneseq
    %v6913 = vshrl.u32 %v6912, 7
    %v6914 = vsub.s32 %v6911, %v6913
    %v6915 = vrot.slane %v6862, %v6914
    %v6917 = vunpack.c.l.s4 1966171168
    %v6918 = vunpack.c.0.s8 %v6917
    %v6919 = vlaneseq
    %v6920 = vshrl.u32 %v6919, 7
    %v6921 = vsub.s32 %v6918, %v6920
    %v6922 = vrot.slane %v6908, %v6921
    %v6923 = vcombine.high %v6915, %v6915
    %v6924 = vcombine.high %v6922, %v6922
    %v6926 = vunpack.c.l.s4 1966171168
    %v6927 = vunpack.c.0.s8 %v6926
    %v6928 = vlaneseq
    %v6929 = vshrl.u32 %v6928, 7
    %v6930 = vsub.s32 %v6927, %v6929
    %v6931 = vrot.slane %v6915, %v6930
    %v6933 = vunpack.c.l.s4 1966171168
    %v6934 = vunpack.c.0.s8 %v6933
    %v6935 = vlaneseq
    %v6936 = vshrl.u32 %v6935, 7
    %v6937 = vsub.s32 %v6934, %v6936
    %v6938 = vrot.slane %v6922, %v6937
    %v6940 = vunpack.c.l.s4 1966171168
    %v6941 = vunpack.c.0.s8 %v6940
    %v6942 = vlaneseq
    %v6943 = vshrl.u32 %v6942, 7
    %v6944 = vsub.s32 %v6941, %v6943
    %v6945 = vrot.slane %v6923, %v6944
    %v6947 = vunpack.c.l.s4 1966171168
    %v6948 = vunpack.c.0.s8 %v6947
    %v6949 = vlaneseq
    %v6950 = vshrl.u32 %v6949, 7
    %v6951 = vsub.s32 %v6948, %v6950
    %v6952 = vrot.slane %v6924, %v6951
    %v6953 = vcombine.high %v6931, %v6931
    %v6954 = vcombine.high %v6945, %v6945
    %v6955 = vlaneseq
    %v6956 = vshrl.u32 %v6955, 7
    %v6957 = vsub.s32 0, %v6956
    %v6958 = vrot.slane %v6931, %v6957
    %v6959 = vlaneseq
    %v6960 = vshrl.u32 %v6959, 7
    %v6961 = vsub.s32 0, %v6960
    %v6962 = vrot.slane %v6945, %v6961
    %v6963 = vlaneseq
    %v6964 = vshrl.u32 %v6963, 7
    %v6965 = vsub.s32 0, %v6964
    %v6966 = vrot.slane %v6953, %v6965
    %v6967 = vlaneseq
    %v6968 = vshrl.u32 %v6967, 7
    %v6969 = vsub.s32 0, %v6968
    %v6970 = vrot.slane %v6954, %v6969
    %v6971 = vlaneseq
    %v6972 = vshrl.u32 %v6971, 7
    %v6973 = vsub.s32 0, %v6972
    %v6974 = vrot.slane %v6938, %v6973
    %v6975 = vlaneseq
    %v6976 = vshrl.u32 %v6975, 7
    %v6977 = vsub.s32 0, %v6976
    %v6978 = vrot.slane %v6952, %v6977
    %v6985 = vmul.f32 %v6871, %v6958
    %v6986 = vmul.f32 %v6878, %v6962
    %v6987 = vmul.f32 %v6885, %v6966
    %v6988 = vmul.f32 %v6892, %v6970
    %v6989 = vmul.f32 %v6899, %v6974
    %v6990 = vmul.f32 %v6906, %v6978
    %v6991 = vsel %vm331, %v6985, -inf
    %v6992 = vrot.slane %v6991, 4
    %v6993 = vmax.f32 %v6991, %v6992
    %v6994 = vrot.slane %v6993, 2
    %v6995 = vmax.f32 %v6993, %v6994
    %v6996 = vrot.slane %v6995, 1
    %v6997 = vmax.f32 %v6995, %v6996
    %v6998 = vsel %vm331, %v6986, -inf
    %v6999 = vrot.slane %v6998, 4
    %v7000 = vmax.f32 %v6998, %v6999
    %v7001 = vrot.slane %v7000, 2
    %v7002 = vmax.f32 %v7000, %v7001
    %v7003 = vrot.slane %v7002, 1
    %v7004 = vmax.f32 %v7002, %v7003
    %v7005 = vsel %vm331, %v6987, -inf
    %v7006 = vrot.slane %v7005, 4
    %v7007 = vmax.f32 %v7005, %v7006
    %v7008 = vrot.slane %v7007, 2
    %v7009 = vmax.f32 %v7007, %v7008
    %v7010 = vrot.slane %v7009, 1
    %v7011 = vmax.f32 %v7009, %v7010
    %v7012 = vsel %vm331, %v6988, -inf
    %v7013 = vrot.slane %v7012, 4
    %v7014 = vmax.f32 %v7012, %v7013
    %v7015 = vrot.slane %v7014, 2
    %v7016 = vmax.f32 %v7014, %v7015
    %v7017 = vrot.slane %v7016, 1
    %v7018 = vmax.f32 %v7016, %v7017
    %v7019 = vsel %vm331, %v6989, -inf
    %v7020 = vrot.slane %v7019, 4
    %v7021 = vmax.f32 %v7019, %v7020
    %v7022 = vrot.slane %v7021, 2
    %v7023 = vmax.f32 %v7021, %v7022
    %v7024 = vrot.slane %v7023, 1
    %v7025 = vmax.f32 %v7023, %v7024
    %v7026 = vsel %vm331, %v6990, -inf
    %v7027 = vrot.slane %v7026, 4
    %v7028 = vmax.f32 %v7026, %v7027
    %v7029 = vrot.slane %v7028, 2
    %v7030 = vmax.f32 %v7028, %v7029
    %v7031 = vrot.slane %v7030, 1
    %v7032 = vmax.f32 %v7030, %v7031
    %v7033 = vsub.f32 %v6985, %v6997
    %v7034 = vsub.f32 %v6986, %v7004
    %v7035 = vsub.f32 %v6987, %v7011
    %v7036 = vsub.f32 %v6988, %v7018
    %v7037 = vsub.f32 %v6989, %v7025
    %v7038 = vsub.f32 %v6990, %v7032
    %v7039 = vmul.f32 %v7033, 1.442695
    %v7040 = vpow.pop %v7039
    %v7041 = vmul.f32 %v7034, 1.442695
    %v7042 = vpow.pop %v7041
    %v7043 = vmul.f32 %v7035, 1.442695
    %v7044 = vpow.pop %v7043
    %v7045 = vmul.f32 %v7036, 1.442695
    %v7046 = vpow.pop %v7045
    %v7047 = vmul.f32 %v7037, 1.442695
    %v7048 = vpow.pop %v7047
    %v7049 = vmul.f32 %v7038, 1.442695
    %v7050 = vpow.pop %v7049
    %v7051 = vsel %vm331, %v7040, 0.0
    %v7052 = vrot.slane %v7051, 4
    %v7053 = vadd.f32 %v7051, %v7052
    %v7054 = vrot.slane %v7053, 2
    %v7055 = vadd.f32 %v7053, %v7054
    %v7056 = vrot.slane %v7055, 1
    %v7057 = vadd.f32 %v7055, %v7056
    %v7058 = vsel %vm331, %v7042, 0.0
    %v7059 = vrot.slane %v7058, 4
    %v7060 = vadd.f32 %v7058, %v7059
    %v7061 = vrot.slane %v7060, 2
    %v7062 = vadd.f32 %v7060, %v7061
    %v7063 = vrot.slane %v7062, 1
    %v7064 = vadd.f32 %v7062, %v7063
    %v7065 = vsel %vm331, %v7044, 0.0
    %v7066 = vrot.slane %v7065, 4
    %v7067 = vadd.f32 %v7065, %v7066
    %v7068 = vrot.slane %v7067, 2
    %v7069 = vadd.f32 %v7067, %v7068
    %v7070 = vrot.slane %v7069, 1
    %v7071 = vadd.f32 %v7069, %v7070
    %v7072 = vsel %vm331, %v7046, 0.0
    %v7073 = vrot.slane %v7072, 4
    %v7074 = vadd.f32 %v7072, %v7073
    %v7075 = vrot.slane %v7074, 2
    %v7076 = vadd.f32 %v7074, %v7075
    %v7077 = vrot.slane %v7076, 1
    %v7078 = vadd.f32 %v7076, %v7077
    %v7079 = vsel %vm331, %v7048, 0.0
    %v7080 = vrot.slane %v7079, 4
    %v7081 = vadd.f32 %v7079, %v7080
    %v7082 = vrot.slane %v7081, 2
    %v7083 = vadd.f32 %v7081, %v7082
    %v7084 = vrot.slane %v7083, 1
    %v7085 = vadd.f32 %v7083, %v7084
    %v7086 = vsel %vm331, %v7050, 0.0
    %v7087 = vrot.slane %v7086, 4
    %v7088 = vadd.f32 %v7086, %v7087
    %v7089 = vrot.slane %v7088, 2
    %v7090 = vadd.f32 %v7088, %v7089
    %v7091 = vrot.slane %v7090, 1
    %v7092 = vadd.f32 %v7090, %v7091
    %v7093 = vlaneseq
    %v7094 = vshrl.u32 %v7093, 7
    %v7095 = vsub.s32 4, %v7094
    %v7096 = vrot.slane %v6863, %v7095
    %7098 = vbcast.lane.b32.xlu0 %v7096, 256
    %v7099 = vpop.permute.xlu0 %7098
    %v7100 = vlaneseq
    %v7101 = vshrl.u32 %v7100, 7
    %v7102 = vsub.s32 5, %v7101
    %v7103 = vrot.slane %v6863, %v7102
    %7105 = vbcast.lane.b32.xlu0 %v7103, 256
    %v7106 = vpop.permute.xlu0 %7105
    %v7107 = vlaneseq
    %v7108 = vshrl.u32 %v7107, 7
    %v7109 = vsub.s32 6, %v7108
    %v7110 = vrot.slane %v6863, %v7109
    %7112 = vbcast.lane.b32.xlu0 %v7110, 256
    %v7113 = vpop.permute.xlu0 %7112
    %v7114 = vlaneseq
    %v7115 = vshrl.u32 %v7114, 7
    %v7116 = vsub.s32 7, %v7115
    %v7117 = vrot.slane %v6863, %v7116
    %7119 = vbcast.lane.b32.xlu0 %v7117, 256
    %v7120 = vpop.permute.xlu0 %7119
    %v7121 = vlaneseq
    %v7122 = vshrl.u32 %v7121, 7
    %v7123 = vsub.s32 0, %v7122
    %v7124 = vrot.slane %v6864, %v7123
    %7126 = vbcast.lane.b32.xlu0 %v7124, 256
    %v7127 = vpop.permute.xlu0 %7126
    %v7128 = vlaneseq
    %v7129 = vshrl.u32 %v7128, 7
    %v7130 = vsub.s32 1, %v7129
    %v7131 = vrot.slane %v6864, %v7130
    %7133 = vbcast.lane.b32.xlu0 %v7131, 256
    %v7134 = vpop.permute.xlu0 %7133
    %v7135 = vmul.f32 %v7040, %v7099
    %v7136 = vmul.f32 %v7042, %v7106
    %v7137 = vmul.f32 %v7044, %v7113
    %v7138 = vmul.f32 %v7046, %v7120
    %v7139 = vmul.f32 %v7048, %v7127
    %v7140 = vmul.f32 %v7050, %v7134
    %v7141 = vsel %vm331, %v7135, 0.0
    %v7142 = vrot.slane %v7141, 4
    %v7143 = vadd.f32 %v7141, %v7142
    %v7144 = vrot.slane %v7143, 2
    %v7145 = vadd.f32 %v7143, %v7144
    %v7146 = vrot.slane %v7145, 1
    %v7147 = vadd.f32 %v7145, %v7146
    %v7148 = vsel %vm331, %v7136, 0.0
    %v7149 = vrot.slane %v7148, 4
    %v7150 = vadd.f32 %v7148, %v7149
    %v7151 = vrot.slane %v7150, 2
    %v7152 = vadd.f32 %v7150, %v7151
    %v7153 = vrot.slane %v7152, 1
    %v7154 = vadd.f32 %v7152, %v7153
    %v7155 = vsel %vm331, %v7137, 0.0
    %v7156 = vrot.slane %v7155, 4
    %v7157 = vadd.f32 %v7155, %v7156
    %v7158 = vrot.slane %v7157, 2
    %v7159 = vadd.f32 %v7157, %v7158
    %v7160 = vrot.slane %v7159, 1
    %v7161 = vadd.f32 %v7159, %v7160
    %v7162 = vsel %vm331, %v7138, 0.0
    %v7163 = vrot.slane %v7162, 4
    %v7164 = vadd.f32 %v7162, %v7163
    %v7165 = vrot.slane %v7164, 2
    %v7166 = vadd.f32 %v7164, %v7165
    %v7167 = vrot.slane %v7166, 1
    %v7168 = vadd.f32 %v7166, %v7167
    %v7169 = vsel %vm331, %v7139, 0.0
    %v7170 = vrot.slane %v7169, 4
    %v7171 = vadd.f32 %v7169, %v7170
    %v7172 = vrot.slane %v7171, 2
    %v7173 = vadd.f32 %v7171, %v7172
    %v7174 = vrot.slane %v7173, 1
    %v7175 = vadd.f32 %v7173, %v7174
    %v7176 = vsel %vm331, %v7140, 0.0
    %v7177 = vrot.slane %v7176, 4
    %v7178 = vadd.f32 %v7176, %v7177
    %v7179 = vrot.slane %v7178, 2
    %v7180 = vadd.f32 %v7178, %v7179
    %v7181 = vrot.slane %v7180, 1
    %v7182 = vadd.f32 %v7180, %v7181
    %v7183 = vrcp.pop %v7057
    %v7184 = vrcp.pop %v7064
    %v7185 = vrcp.pop %v7071
    %v7186 = vrcp.pop %v7078
    %v7187 = vrcp.pop %v7085
    %v7188 = vrcp.pop %v7092
    %v7189 = vmul.f32 %v7057, %v7183
    %v7190 = vmul.f32 %v7064, %v7184
    %v7191 = vmul.f32 %v7071, %v7185
    %v7192 = vmul.f32 %v7078, %v7186
    %v7193 = vmul.f32 %v7085, %v7187
    %v7194 = vmul.f32 %v7092, %v7188
    %v7195 = vsub.f32 2.0, %v7189
    %v7196 = vsub.f32 2.0, %v7190
    %v7197 = vsub.f32 2.0, %v7191
    %v7198 = vsub.f32 2.0, %v7192
    %v7199 = vsub.f32 2.0, %v7193
    %v7200 = vsub.f32 2.0, %v7194
    %v7201 = vmul.f32 %v7183, %v7195
    %v7202 = vmul.f32 %v7184, %v7196
    %v7203 = vmul.f32 %v7185, %v7197
    %v7204 = vmul.f32 %v7186, %v7198
    %v7205 = vmul.f32 %v7187, %v7199
    %v7206 = vmul.f32 %v7188, %v7200
    %v7207 = vmul.f32 %v7147, %v7201
    %v7208 = vmul.f32 %v7154, %v7202
    %v7209 = vmul.f32 %v7161, %v7203
    %v7210 = vmul.f32 %v7168, %v7204
    %v7211 = vmul.f32 %v7175, %v7205
    %v7212 = vmul.f32 %v7182, %v7206
    %v7213 = vld [vmem:[#allocation5 + $0x50] sm:$0x3f]
    %7215 = vset.pattern.permute.xlu0 16
    %7216 = vperm.xlu0 %7215, %v7213
    %v7217 = vpop.permute.xlu0 %7216
    %v7219 = vmul.f32 %v7217, %v7207
    %7220 = vset.pattern.permute.xlu0 32
    %7221 = vperm.xlu0 %7220, %v7213
    %v7222 = vpop.permute.xlu0 %7221
    %v7224 = vadd.f32 %v7222, %v7219
    %7225 = vset.pattern.permute.xlu0 17
    %7226 = vperm.xlu0 %7225, %v7213
    %v7227 = vpop.permute.xlu0 %7226
    %v7229 = vmul.f32 %v7227, %v7208
    %v7230 = vadd.f32 %v7224, %v7229
    %7231 = vset.pattern.permute.xlu0 18
    %7232 = vperm.xlu0 %7231, %v7213
    %v7233 = vpop.permute.xlu0 %7232
    %v7235 = vmul.f32 %v7233, %v7209
    %v7236 = vadd.f32 %v7230, %v7235
    %7237 = vset.pattern.permute.xlu0 19
    %7238 = vperm.xlu0 %7237, %v7213
    %v7239 = vpop.permute.xlu0 %7238
    %v7241 = vmul.f32 %v7239, %v7210
    %v7242 = vadd.f32 %v7236, %v7241
    %7243 = vset.pattern.permute.xlu0 20
    %7244 = vperm.xlu0 %7243, %v7213
    %v7245 = vpop.permute.xlu0 %7244
    %v7247 = vmul.f32 %v7245, %v7211
    %v7248 = vadd.f32 %v7242, %v7247
    %7249 = vset.pattern.permute.xlu0 21
    %7250 = vperm.xlu0 %7249, %v7213
    %v7251 = vpop.permute.xlu0 %7250
    %v7253 = vmul.f32 %v7251, %v7212
    %v7254 = vadd.f32 %v7248, %v7253
    %v7255 = vadd.f32 %v6714, %v7254
    %v7256 = vsel %vm597, %v7255, 0.0
    %v7257 = vrot.slane %v7256, 4
    %v7258 = vadd.f32 %v7256, %v7257
    %v7259 = vrot.slane %v7258, 2
    %v7260 = vadd.f32 %v7258, %v7259
    %v7261 = vrot.slane %v7260, 1
    %v7262 = vadd.f32 %v7260, %v7261
    %v7263 = vmul.f32 %v7262, %v605
    %v7264 = vsub.f32 %v7255, %v7263
    %v7265 = vmul.f32 %v7264, %v7264
    %v7266 = vsel %vm597, %v7265, 0.0
    %v7267 = vrot.slane %v7266, 4
    %v7268 = vadd.f32 %v7266, %v7267
    %v7269 = vrot.slane %v7268, 2
    %v7270 = vadd.f32 %v7268, %v7269
    %v7271 = vrot.slane %v7270, 1
    %v7272 = vadd.f32 %v7270, %v7271
    %v7273 = vmul.f32 %v7272, %v605
    %v7274 = vadd.f32 %v7273, 1e-05
    %v7275 = vrsqrt.pop %v7274
    %v7276 = vmul.f32 %v7264, %v7275
    %7277 = vset.pattern.permute.xlu0 80
    %7278 = vperm.xlu0 %7277, %v7213
    %v7279 = vpop.permute.xlu0 %7278
    %v7281 = vmul.f32 %v7276, %v7279
    %7282 = vset.pattern.permute.xlu0 88
    %7283 = vperm.xlu0 %7282, %v7213
    %v7284 = vpop.permute.xlu0 %7283
    %v7286 = vadd.f32 %v7281, %v7284
    %v7287 = vld [vmem:[#allocation5 + $0x58] sm:$0x3f]
    %7289 = vset.pattern.permute.xlu0 32
    %7290 = vperm.xlu0 %7289, %v7287
    %v7291 = vpop.permute.xlu0 %7290
    %v7293 = vlaneseq
    %v7294 = vshrl.u32 %v7293, 7
    %v7295 = vsub.s32 0, %v7294
    %v7296 = vrot.slane %v7286, %v7295
    %v7297 = vmul.f32 %v7291, %v7296
    %7298 = vset.pattern.permute.xlu0 48
    %7299 = vperm.xlu0 %7298, %v7287
    %v7300 = vpop.permute.xlu0 %7299
    %v7302 = vadd.f32 %v7300, %v7297
    %7303 = vset.pattern.permute.xlu0 33
    %7304 = vperm.xlu0 %7303, %v7287
    %v7305 = vpop.permute.xlu0 %7304
    %v7307 = vlaneseq
    %v7308 = vshrl.u32 %v7307, 7
    %v7309 = vsub.s32 1, %v7308
    %v7310 = vrot.slane %v7286, %v7309
    %v7311 = vmul.f32 %v7305, %v7310
    %v7312 = vadd.f32 %v7302, %v7311
    %7313 = vset.pattern.permute.xlu0 34
    %7314 = vperm.xlu0 %7313, %v7287
    %v7315 = vpop.permute.xlu0 %7314
    %v7317 = vlaneseq
    %v7318 = vshrl.u32 %v7317, 7
    %v7319 = vsub.s32 2, %v7318
    %v7320 = vrot.slane %v7286, %v7319
    %v7321 = vmul.f32 %v7315, %v7320
    %v7322 = vadd.f32 %v7312, %v7321
    %7323 = vset.pattern.permute.xlu0 35
    %7324 = vperm.xlu0 %7323, %v7287
    %v7325 = vpop.permute.xlu0 %7324
    %v7327 = vlaneseq
    %v7328 = vshrl.u32 %v7327, 7
    %v7329 = vsub.s32 3, %v7328
    %v7330 = vrot.slane %v7286, %v7329
    %v7331 = vmul.f32 %v7325, %v7330
    %v7332 = vadd.f32 %v7322, %v7331
    %7333 = vset.pattern.permute.xlu0 36
    %7334 = vperm.xlu0 %7333, %v7287
    %v7335 = vpop.permute.xlu0 %7334
    %v7337 = vlaneseq
    %v7338 = vshrl.u32 %v7337, 7
    %v7339 = vsub.s32 4, %v7338
    %v7340 = vrot.slane %v7286, %v7339
    %v7341 = vmul.f32 %v7335, %v7340
    %v7342 = vadd.f32 %v7332, %v7341
    %7343 = vset.pattern.permute.xlu0 37
    %7344 = vperm.xlu0 %7343, %v7287
    %v7345 = vpop.permute.xlu0 %7344
    %v7347 = vlaneseq
    %v7348 = vshrl.u32 %v7347, 7
    %v7349 = vsub.s32 5, %v7348
    %v7350 = vrot.slane %v7286, %v7349
    %v7351 = vmul.f32 %v7345, %v7350
    %v7352 = vadd.f32 %v7342, %v7351
    %7353 = vset.pattern.permute.xlu0 56
    %7354 = vperm.xlu0 %7353, %v7287
    %v7355 = vpop.permute.xlu0 %7354
    %v7357 = vmul.f32 %v7355, %v4000
    %7358 = vset.pattern.permute.xlu0 72
    %7359 = vperm.xlu0 %7358, %v7287
    %v7360 = vpop.permute.xlu0 %7359
    %v7362 = vadd.f32 %v7360, %v7357
    %7363 = vset.pattern.permute.xlu0 57
    %7364 = vperm.xlu0 %7363, %v7287
    %v7365 = vpop.permute.xlu0 %7364
    %v7367 = vmul.f32 %v7365, %v4014
    %v7368 = vadd.f32 %v7362, %v7367
    %7369 = vset.pattern.permute.xlu0 58
    %7370 = vperm.xlu0 %7369, %v7287
    %v7371 = vpop.permute.xlu0 %7370
    %v7373 = vmul.f32 %v7371, %v4024
    %v7374 = vadd.f32 %v7368, %v7373
    %7375 = vset.pattern.permute.xlu0 59
    %7376 = vperm.xlu0 %7375, %v7287
    %v7377 = vpop.permute.xlu0 %7376
    %v7379 = vmul.f32 %v7377, %v4034
    %v7380 = vadd.f32 %v7374, %v7379
    %7381 = vset.pattern.permute.xlu0 60
    %7382 = vperm.xlu0 %7381, %v7287
    %v7383 = vpop.permute.xlu0 %7382
    %v7385 = vmul.f32 %v7383, %v4044
    %v7386 = vadd.f32 %v7380, %v7385
    %7387 = vset.pattern.permute.xlu0 61
    %7388 = vperm.xlu0 %7387, %v7287
    %v7389 = vpop.permute.xlu0 %7388
    %v7391 = vmul.f32 %v7389, %v4054
    %v7392 = vadd.f32 %v7386, %v7391
    %7393 = vset.pattern.permute.xlu0 80
    %7394 = vperm.xlu0 %7393, %v7287
    %v7395 = vpop.permute.xlu0 %7394
    %v7397 = vmul.f32 %v7395, %v4000
    %7398 = vset.pattern.permute.xlu0 88
    %7399 = vperm.xlu0 %7398, %v7287
    %v7400 = vpop.permute.xlu0 %7399
    %v7402 = vadd.f32 %v7400, %v7397
    %7403 = vset.pattern.permute.xlu0 81
    %7404 = vperm.xlu0 %7403, %v7287
    %v7405 = vpop.permute.xlu0 %7404
    %v7407 = vmul.f32 %v7405, %v4014
    %v7408 = vadd.f32 %v7402, %v7407
    %7409 = vset.pattern.permute.xlu0 82
    %7410 = vperm.xlu0 %7409, %v7287
    %v7411 = vpop.permute.xlu0 %7410
    %v7413 = vmul.f32 %v7411, %v4024
    %v7414 = vadd.f32 %v7408, %v7413
    %7415 = vset.pattern.permute.xlu0 83
    %7416 = vperm.xlu0 %7415, %v7287
    %v7417 = vpop.permute.xlu0 %7416
    %v7419 = vmul.f32 %v7417, %v4034
    %v7420 = vadd.f32 %v7414, %v7419
    %7421 = vset.pattern.permute.xlu0 84
    %7422 = vperm.xlu0 %7421, %v7287
    %v7423 = vpop.permute.xlu0 %7422
    %v7425 = vmul.f32 %v7423, %v4044
    %v7426 = vadd.f32 %v7420, %v7425
    %7427 = vset.pattern.permute.xlu0 85
    %7428 = vperm.xlu0 %7427, %v7287
    %v7429 = vpop.permute.xlu0 %7428
    %v7431 = vmul.f32 %v7429, %v4054
    %v7432 = vadd.f32 %v7426, %v7431
    %v7433 = vlaneseq
    %v7434 = vshrl.u32 %v7433, 7
    %v7435 = vsub.s32 0, %v7434
    %v7436 = vrot.slane %v7392, %v7435
    %7438 = vbcast.lane.b32.xlu0 %v7436, 256
    %v7439 = vpop.permute.xlu0 %7438
    %v7440 = vlaneseq
    %v7441 = vshrl.u32 %v7440, 7
    %v7442 = vsub.s32 1, %v7441
    %v7443 = vrot.slane %v7392, %v7442
    %7445 = vbcast.lane.b32.xlu0 %v7443, 256
    %v7446 = vpop.permute.xlu0 %7445
    %v7447 = vlaneseq
    %v7448 = vshrl.u32 %v7447, 7
    %v7449 = vsub.s32 2, %v7448
    %v7450 = vrot.slane %v7392, %v7449
    %7452 = vbcast.lane.b32.xlu0 %v7450, 256
    %v7453 = vpop.permute.xlu0 %7452
    %v7454 = vlaneseq
    %v7455 = vshrl.u32 %v7454, 7
    %v7456 = vsub.s32 3, %v7455
    %v7457 = vrot.slane %v7392, %v7456
    %7459 = vbcast.lane.b32.xlu0 %v7457, 256
    %v7460 = vpop.permute.xlu0 %7459
    %v7461 = vlaneseq
    %v7462 = vshrl.u32 %v7461, 7
    %v7463 = vsub.s32 4, %v7462
    %v7464 = vrot.slane %v7392, %v7463
    %7466 = vbcast.lane.b32.xlu0 %v7464, 256
    %v7467 = vpop.permute.xlu0 %7466
    %v7468 = vlaneseq
    %v7469 = vshrl.u32 %v7468, 7
    %v7470 = vsub.s32 5, %v7469
    %v7471 = vrot.slane %v7392, %v7470
    %7473 = vbcast.lane.b32.xlu0 %v7471, 256
    %v7474 = vpop.permute.xlu0 %7473
    %v7476 = vcombine.high %v7352, %v7352
    %v7478 = vunpack.c.l.s4 1966171168
    %v7479 = vunpack.c.0.s8 %v7478
    %v7480 = vlaneseq
    %v7481 = vshrl.u32 %v7480, 7
    %v7482 = vsub.s32 %v7479, %v7481
    %v7483 = vrot.slane %v7352, %v7482
    %v7485 = vunpack.c.l.s4 1966171168
    %v7486 = vunpack.c.0.s8 %v7485
    %v7487 = vlaneseq
    %v7488 = vshrl.u32 %v7487, 7
    %v7489 = vsub.s32 %v7486, %v7488
    %v7490 = vrot.slane %v7476, %v7489
    %v7491 = vcombine.high %v7483, %v7483
    %v7492 = vcombine.high %v7490, %v7490
    %v7494 = vunpack.c.l.s4 1966171168
    %v7495 = vunpack.c.0.s8 %v7494
    %v7496 = vlaneseq
    %v7497 = vshrl.u32 %v7496, 7
    %v7498 = vsub.s32 %v7495, %v7497
    %v7499 = vrot.slane %v7483, %v7498
    %v7501 = vunpack.c.l.s4 1966171168
    %v7502 = vunpack.c.0.s8 %v7501
    %v7503 = vlaneseq
    %v7504 = vshrl.u32 %v7503, 7
    %v7505 = vsub.s32 %v7502, %v7504
    %v7506 = vrot.slane %v7490, %v7505
    %v7508 = vunpack.c.l.s4 1966171168
    %v7509 = vunpack.c.0.s8 %v7508
    %v7510 = vlaneseq
    %v7511 = vshrl.u32 %v7510, 7
    %v7512 = vsub.s32 %v7509, %v7511
    %v7513 = vrot.slane %v7491, %v7512
    %v7515 = vunpack.c.l.s4 1966171168
    %v7516 = vunpack.c.0.s8 %v7515
    %v7517 = vlaneseq
    %v7518 = vshrl.u32 %v7517, 7
    %v7519 = vsub.s32 %v7516, %v7518
    %v7520 = vrot.slane %v7492, %v7519
    %v7521 = vcombine.high %v7499, %v7499
    %v7522 = vcombine.high %v7513, %v7513
    %v7523 = vlaneseq
    %v7524 = vshrl.u32 %v7523, 7
    %v7525 = vsub.s32 0, %v7524
    %v7526 = vrot.slane %v7499, %v7525
    %v7527 = vlaneseq
    %v7528 = vshrl.u32 %v7527, 7
    %v7529 = vsub.s32 0, %v7528
    %v7530 = vrot.slane %v7513, %v7529
    %v7531 = vlaneseq
    %v7532 = vshrl.u32 %v7531, 7
    %v7533 = vsub.s32 0, %v7532
    %v7534 = vrot.slane %v7521, %v7533
    %v7535 = vlaneseq
    %v7536 = vshrl.u32 %v7535, 7
    %v7537 = vsub.s32 0, %v7536
    %v7538 = vrot.slane %v7522, %v7537
    %v7539 = vlaneseq
    %v7540 = vshrl.u32 %v7539, 7
    %v7541 = vsub.s32 0, %v7540
    %v7542 = vrot.slane %v7506, %v7541
    %v7543 = vlaneseq
    %v7544 = vshrl.u32 %v7543, 7
    %v7545 = vsub.s32 0, %v7544
    %v7546 = vrot.slane %v7520, %v7545
    %v7553 = vmul.f32 %v7439, %v7526
    %v7554 = vmul.f32 %v7446, %v7530
    %v7555 = vmul.f32 %v7453, %v7534
    %v7556 = vmul.f32 %v7460, %v7538
    %v7557 = vmul.f32 %v7467, %v7542
    %v7558 = vmul.f32 %v7474, %v7546
    %v7559 = vsel %vm331, %v7553, -inf
    %v7560 = vrot.slane %v7559, 4
    %v7561 = vmax.f32 %v7559, %v7560
    %v7562 = vrot.slane %v7561, 2
    %v7563 = vmax.f32 %v7561, %v7562
    %v7564 = vrot.slane %v7563, 1
    %v7565 = vmax.f32 %v7563, %v7564
    %v7566 = vsel %vm331, %v7554, -inf
    %v7567 = vrot.slane %v7566, 4
    %v7568 = vmax.f32 %v7566, %v7567
    %v7569 = vrot.slane %v7568, 2
    %v7570 = vmax.f32 %v7568, %v7569
    %v7571 = vrot.slane %v7570, 1
    %v7572 = vmax.f32 %v7570, %v7571
    %v7573 = vsel %vm331, %v7555, -inf
    %v7574 = vrot.slane %v7573, 4
    %v7575 = vmax.f32 %v7573, %v7574
    %v7576 = vrot.slane %v7575, 2
    %v7577 = vmax.f32 %v7575, %v7576
    %v7578 = vrot.slane %v7577, 1
    %v7579 = vmax.f32 %v7577, %v7578
    %v7580 = vsel %vm331, %v7556, -inf
    %v7581 = vrot.slane %v7580, 4
    %v7582 = vmax.f32 %v7580, %v7581
    %v7583 = vrot.slane %v7582, 2
    %v7584 = vmax.f32 %v7582, %v7583
    %v7585 = vrot.slane %v7584, 1
    %v7586 = vmax.f32 %v7584, %v7585
    %v7587 = vsel %vm331, %v7557, -inf
    %v7588 = vrot.slane %v7587, 4
    %v7589 = vmax.f32 %v7587, %v7588
    %v7590 = vrot.slane %v7589, 2
    %v7591 = vmax.f32 %v7589, %v7590
    %v7592 = vrot.slane %v7591, 1
    %v7593 = vmax.f32 %v7591, %v7592
    %v7594 = vsel %vm331, %v7558, -inf
    %v7595 = vrot.slane %v7594, 4
    %v7596 = vmax.f32 %v7594, %v7595
    %v7597 = vrot.slane %v7596, 2
    %v7598 = vmax.f32 %v7596, %v7597
    %v7599 = vrot.slane %v7598, 1
    %v7600 = vmax.f32 %v7598, %v7599
    %v7601 = vsub.f32 %v7553, %v7565
    %v7602 = vsub.f32 %v7554, %v7572
    %v7603 = vsub.f32 %v7555, %v7579
    %v7604 = vsub.f32 %v7556, %v7586
    %v7605 = vsub.f32 %v7557, %v7593
    %v7606 = vsub.f32 %v7558, %v7600
    %v7607 = vmul.f32 %v7601, 1.442695
    %v7608 = vpow.pop %v7607
    %v7609 = vmul.f32 %v7602, 1.442695
    %v7610 = vpow.pop %v7609
    %v7611 = vmul.f32 %v7603, 1.442695
    %v7612 = vpow.pop %v7611
    %v7613 = vmul.f32 %v7604, 1.442695
    %v7614 = vpow.pop %v7613
    %v7615 = vmul.f32 %v7605, 1.442695
    %v7616 = vpow.pop %v7615
    %v7617 = vmul.f32 %v7606, 1.442695
    %v7618 = vpow.pop %v7617
    %v7619 = vsel %vm331, %v7608, 0.0
    %v7620 = vrot.slane %v7619, 4
    %v7621 = vadd.f32 %v7619, %v7620
    %v7622 = vrot.slane %v7621, 2
    %v7623 = vadd.f32 %v7621, %v7622
    %v7624 = vrot.slane %v7623, 1
    %v7625 = vadd.f32 %v7623, %v7624
    %v7626 = vsel %vm331, %v7610, 0.0
    %v7627 = vrot.slane %v7626, 4
    %v7628 = vadd.f32 %v7626, %v7627
    %v7629 = vrot.slane %v7628, 2
    %v7630 = vadd.f32 %v7628, %v7629
    %v7631 = vrot.slane %v7630, 1
    %v7632 = vadd.f32 %v7630, %v7631
    %v7633 = vsel %vm331, %v7612, 0.0
    %v7634 = vrot.slane %v7633, 4
    %v7635 = vadd.f32 %v7633, %v7634
    %v7636 = vrot.slane %v7635, 2
    %v7637 = vadd.f32 %v7635, %v7636
    %v7638 = vrot.slane %v7637, 1
    %v7639 = vadd.f32 %v7637, %v7638
    %v7640 = vsel %vm331, %v7614, 0.0
    %v7641 = vrot.slane %v7640, 4
    %v7642 = vadd.f32 %v7640, %v7641
    %v7643 = vrot.slane %v7642, 2
    %v7644 = vadd.f32 %v7642, %v7643
    %v7645 = vrot.slane %v7644, 1
    %v7646 = vadd.f32 %v7644, %v7645
    %v7647 = vsel %vm331, %v7616, 0.0
    %v7648 = vrot.slane %v7647, 4
    %v7649 = vadd.f32 %v7647, %v7648
    %v7650 = vrot.slane %v7649, 2
    %v7651 = vadd.f32 %v7649, %v7650
    %v7652 = vrot.slane %v7651, 1
    %v7653 = vadd.f32 %v7651, %v7652
    %v7654 = vsel %vm331, %v7618, 0.0
    %v7655 = vrot.slane %v7654, 4
    %v7656 = vadd.f32 %v7654, %v7655
    %v7657 = vrot.slane %v7656, 2
    %v7658 = vadd.f32 %v7656, %v7657
    %v7659 = vrot.slane %v7658, 1
    %v7660 = vadd.f32 %v7658, %v7659
    %v7661 = vlaneseq
    %v7662 = vshrl.u32 %v7661, 7
    %v7663 = vsub.s32 0, %v7662
    %v7664 = vrot.slane %v7432, %v7663
    %7666 = vbcast.lane.b32.xlu0 %v7664, 256
    %v7667 = vpop.permute.xlu0 %7666
    %v7668 = vlaneseq
    %v7669 = vshrl.u32 %v7668, 7
    %v7670 = vsub.s32 1, %v7669
    %v7671 = vrot.slane %v7432, %v7670
    %7673 = vbcast.lane.b32.xlu0 %v7671, 256
    %v7674 = vpop.permute.xlu0 %7673
    %v7675 = vlaneseq
    %v7676 = vshrl.u32 %v7675, 7
    %v7677 = vsub.s32 2, %v7676
    %v7678 = vrot.slane %v7432, %v7677
    %7680 = vbcast.lane.b32.xlu0 %v7678, 256
    %v7681 = vpop.permute.xlu0 %7680
    %v7682 = vlaneseq
    %v7683 = vshrl.u32 %v7682, 7
    %v7684 = vsub.s32 3, %v7683
    %v7685 = vrot.slane %v7432, %v7684
    %7687 = vbcast.lane.b32.xlu0 %v7685, 256
    %v7688 = vpop.permute.xlu0 %7687
    %v7689 = vlaneseq
    %v7690 = vshrl.u32 %v7689, 7
    %v7691 = vsub.s32 4, %v7690
    %v7692 = vrot.slane %v7432, %v7691
    %7694 = vbcast.lane.b32.xlu0 %v7692, 256
    %v7695 = vpop.permute.xlu0 %7694
    %v7696 = vlaneseq
    %v7697 = vshrl.u32 %v7696, 7
    %v7698 = vsub.s32 5, %v7697
    %v7699 = vrot.slane %v7432, %v7698
    %7701 = vbcast.lane.b32.xlu0 %v7699, 256
    %v7702 = vpop.permute.xlu0 %7701
    %v7703 = vmul.f32 %v7608, %v7667
    %v7704 = vmul.f32 %v7610, %v7674
    %v7705 = vmul.f32 %v7612, %v7681
    %v7706 = vmul.f32 %v7614, %v7688
    %v7707 = vmul.f32 %v7616, %v7695
    %v7708 = vmul.f32 %v7618, %v7702
    %v7709 = vsel %vm331, %v7703, 0.0
    %v7710 = vrot.slane %v7709, 4
    %v7711 = vadd.f32 %v7709, %v7710
    %v7712 = vrot.slane %v7711, 2
    %v7713 = vadd.f32 %v7711, %v7712
    %v7714 = vrot.slane %v7713, 1
    %v7715 = vadd.f32 %v7713, %v7714
    %v7716 = vsel %vm331, %v7704, 0.0
    %v7717 = vrot.slane %v7716, 4
    %v7718 = vadd.f32 %v7716, %v7717
    %v7719 = vrot.slane %v7718, 2
    %v7720 = vadd.f32 %v7718, %v7719
    %v7721 = vrot.slane %v7720, 1
    %v7722 = vadd.f32 %v7720, %v7721
    %v7723 = vsel %vm331, %v7705, 0.0
    %v7724 = vrot.slane %v7723, 4
    %v7725 = vadd.f32 %v7723, %v7724
    %v7726 = vrot.slane %v7725, 2
    %v7727 = vadd.f32 %v7725, %v7726
    %v7728 = vrot.slane %v7727, 1
    %v7729 = vadd.f32 %v7727, %v7728
    %v7730 = vsel %vm331, %v7706, 0.0
    %v7731 = vrot.slane %v7730, 4
    %v7732 = vadd.f32 %v7730, %v7731
    %v7733 = vrot.slane %v7732, 2
    %v7734 = vadd.f32 %v7732, %v7733
    %v7735 = vrot.slane %v7734, 1
    %v7736 = vadd.f32 %v7734, %v7735
    %v7737 = vsel %vm331, %v7707, 0.0
    %v7738 = vrot.slane %v7737, 4
    %v7739 = vadd.f32 %v7737, %v7738
    %v7740 = vrot.slane %v7739, 2
    %v7741 = vadd.f32 %v7739, %v7740
    %v7742 = vrot.slane %v7741, 1
    %v7743 = vadd.f32 %v7741, %v7742
    %v7744 = vsel %vm331, %v7708, 0.0
    %v7745 = vrot.slane %v7744, 4
    %v7746 = vadd.f32 %v7744, %v7745
    %v7747 = vrot.slane %v7746, 2
    %v7748 = vadd.f32 %v7746, %v7747
    %v7749 = vrot.slane %v7748, 1
    %v7750 = vadd.f32 %v7748, %v7749
    %v7751 = vrcp.pop %v7625
    %v7752 = vrcp.pop %v7632
    %v7753 = vrcp.pop %v7639
    %v7754 = vrcp.pop %v7646
    %v7755 = vrcp.pop %v7653
    %v7756 = vrcp.pop %v7660
    %v7757 = vmul.f32 %v7625, %v7751
    %v7758 = vmul.f32 %v7632, %v7752
    %v7759 = vmul.f32 %v7639, %v7753
    %v7760 = vmul.f32 %v7646, %v7754
    %v7761 = vmul.f32 %v7653, %v7755
    %v7762 = vmul.f32 %v7660, %v7756
    %v7763 = vsub.f32 2.0, %v7757
    %v7764 = vsub.f32 2.0, %v7758
    %v7765 = vsub.f32 2.0, %v7759
    %v7766 = vsub.f32 2.0, %v7760
    %v7767 = vsub.f32 2.0, %v7761
    %v7768 = vsub.f32 2.0, %v7762
    %v7769 = vmul.f32 %v7751, %v7763
    %v7770 = vmul.f32 %v7752, %v7764
    %v7771 = vmul.f32 %v7753, %v7765
    %v7772 = vmul.f32 %v7754, %v7766
    %v7773 = vmul.f32 %v7755, %v7767
    %v7774 = vmul.f32 %v7756, %v7768
    %v7775 = vmul.f32 %v7715, %v7769
    %v7776 = vmul.f32 %v7722, %v7770
    %v7777 = vmul.f32 %v7729, %v7771
    %v7778 = vmul.f32 %v7736, %v7772
    %v7779 = vmul.f32 %v7743, %v7773
    %v7780 = vmul.f32 %v7750, %v7774
    %v7781 = vld [vmem:[#allocation5 + $0x58] sm:$0x3f]
    %v7782 = vld [vmem:[#allocation5 + $0x60] sm:$0x3f]
    %7784 = vset.pattern.permute.xlu0 96
    %7785 = vperm.xlu0 %7784, %v7781
    %v7786 = vpop.permute.xlu0 %7785
    %v7788 = vmul.f32 %v7786, %v7775
    %7790 = vset.pattern.permute.xlu0 16
    %7791 = vperm.xlu0 %7790, %v7782
    %v7792 = vpop.permute.xlu0 %7791
    %v7794 = vadd.f32 %v7792, %v7788
    %7795 = vset.pattern.permute.xlu0 97
    %7796 = vperm.xlu0 %7795, %v7781
    %v7797 = vpop.permute.xlu0 %7796
    %v7799 = vmul.f32 %v7797, %v7776
    %v7800 = vadd.f32 %v7794, %v7799
    %7801 = vset.pattern.permute.xlu0 98
    %7802 = vperm.xlu0 %7801, %v7781
    %v7803 = vpop.permute.xlu0 %7802
    %v7805 = vmul.f32 %v7803, %v7777
    %v7806 = vadd.f32 %v7800, %v7805
    %7807 = vset.pattern.permute.xlu0 99
    %7808 = vperm.xlu0 %7807, %v7781
    %v7809 = vpop.permute.xlu0 %7808
    %v7811 = vmul.f32 %v7809, %v7778
    %v7812 = vadd.f32 %v7806, %v7811
    %7813 = vset.pattern.permute.xlu0 100
    %7814 = vperm.xlu0 %7813, %v7781
    %v7815 = vpop.permute.xlu0 %7814
    %v7817 = vmul.f32 %v7815, %v7779
    %v7818 = vadd.f32 %v7812, %v7817
    %7819 = vset.pattern.permute.xlu0 101
    %7820 = vperm.xlu0 %7819, %v7781
    %v7821 = vpop.permute.xlu0 %7820
    %v7823 = vmul.f32 %v7821, %v7780
    %v7824 = vadd.f32 %v7818, %v7823
    %v7825 = vadd.f32 %v7286, %v7824
    %v7826 = vsel %vm597, %v7825, 0.0
    %v7827 = vrot.slane %v7826, 4
    %v7828 = vadd.f32 %v7826, %v7827
    %v7829 = vrot.slane %v7828, 2
    %v7830 = vadd.f32 %v7828, %v7829
    %v7831 = vrot.slane %v7830, 1
    %v7832 = vadd.f32 %v7830, %v7831
    %v7833 = vmul.f32 %v7832, %v605
    %v7834 = vsub.f32 %v7825, %v7833
    %v7835 = vmul.f32 %v7834, %v7834
    %v7836 = vsel %vm597, %v7835, 0.0
    %v7837 = vrot.slane %v7836, 4
    %v7838 = vadd.f32 %v7836, %v7837
    %v7839 = vrot.slane %v7838, 2
    %v7840 = vadd.f32 %v7838, %v7839
    %v7841 = vrot.slane %v7840, 1
    %v7842 = vadd.f32 %v7840, %v7841
    %v7843 = vmul.f32 %v7842, %v605
    %v7844 = vadd.f32 %v7843, 1e-05
    %v7845 = vrsqrt.pop %v7844
    %v7846 = vmul.f32 %v7834, %v7845
    %v7847 = vld [vmem:[#allocation5 + $0x50] sm:$0x3f]
    %7849 = vset.pattern.permute.xlu0 96
    %7850 = vperm.xlu0 %7849, %v7847
    %v7851 = vpop.permute.xlu0 %7850
    %v7853 = vmul.f32 %v7846, %v7851
    %7854 = vset.pattern.permute.xlu0 16
    %7855 = vperm.xlu0 %7854, %v7781
    %v7856 = vpop.permute.xlu0 %7855
    %v7858 = vadd.f32 %v7853, %v7856
    %v7859 = vld [vmem:[#allocation5 + $0x50] sm:$0xff]
    %v7860 = vld [vmem:[#allocation5 + $0x58] sm:$0xff]
    %v7861 = vld [vmem:[#allocation5 + $0x60] sm:$0xff]
    %v7862 = vld [vmem:[#allocation5 + $0x68] sm:$0xff]
    %v7863 = vld [vmem:[#allocation5 + $0x70] sm:$0xff]
    %v7864 = vld [vmem:[#allocation5 + $0x78] sm:$0xff]
    %v7865 = vld [vmem:[#allocation5 + $0x80] sm:$0xff]
    %v7866 = vld [vmem:[#allocation5 + $0x88] sm:$0xff]
    %v7867 = vld [vmem:[#allocation5 + $0x90] sm:$0xff]
    %7869 = vset.pattern.permute.xlu0 40
    %7870 = vperm.xlu0 %7869, %v7859
    %v7871 = vpop.permute.xlu0 %7870
    %7874 = vset.pattern.permute.xlu0 40
    %7875 = vperm.xlu0 %7874, %v7860
    %v7876 = vpop.permute.xlu0 %7875
    %7879 = vset.pattern.permute.xlu0 40
    %7880 = vperm.xlu0 %7879, %v7861
    %v7881 = vpop.permute.xlu0 %7880
    %7884 = vset.pattern.permute.xlu0 40
    %7885 = vperm.xlu0 %7884, %v7862
    %v7886 = vpop.permute.xlu0 %7885
    %7889 = vset.pattern.permute.xlu0 40
    %7890 = vperm.xlu0 %7889, %v7863
    %v7891 = vpop.permute.xlu0 %7890
    %7894 = vset.pattern.permute.xlu0 40
    %7895 = vperm.xlu0 %7894, %v7864
    %v7896 = vpop.permute.xlu0 %7895
    %7899 = vset.pattern.permute.xlu0 40
    %7900 = vperm.xlu0 %7899, %v7865
    %v7901 = vpop.permute.xlu0 %7900
    %7904 = vset.pattern.permute.xlu0 40
    %7905 = vperm.xlu0 %7904, %v7866
    %v7906 = vpop.permute.xlu0 %7905
    %7909 = vset.pattern.permute.xlu0 40
    %7910 = vperm.xlu0 %7909, %v7867
    %v7911 = vpop.permute.xlu0 %7910
    %v7913 = vlaneseq
    %v7914 = vshrl.u32 %v7913, 7
    %v7915 = vsub.s32 0, %v7914
    %v7916 = vrot.slane %v7858, %v7915
    %v7917 = vmul.f32 %v7871, %v7916
    %v7918 = vmul.f32 %v7876, %v7916
    %v7919 = vmul.f32 %v7881, %v7916
    %v7920 = vmul.f32 %v7886, %v7916
    %v7921 = vmul.f32 %v7891, %v7916
    %v7922 = vmul.f32 %v7896, %v7916
    %v7923 = vmul.f32 %v7901, %v7916
    %v7924 = vmul.f32 %v7906, %v7916
    %v7925 = vmul.f32 %v7911, %v7916
    %7926 = vset.pattern.permute.xlu0 64
    %7927 = vperm.xlu0 %7926, %v7859
    %v7928 = vpop.permute.xlu0 %7927
    %7930 = vset.pattern.permute.xlu0 64
    %7931 = vperm.xlu0 %7930, %v7860
    %v7932 = vpop.permute.xlu0 %7931
    %7934 = vset.pattern.permute.xlu0 64
    %7935 = vperm.xlu0 %7934, %v7861
    %v7936 = vpop.permute.xlu0 %7935
    %7938 = vset.pattern.permute.xlu0 64
    %7939 = vperm.xlu0 %7938, %v7862
    %v7940 = vpop.permute.xlu0 %7939
    %7942 = vset.pattern.permute.xlu0 64
    %7943 = vperm.xlu0 %7942, %v7863
    %v7944 = vpop.permute.xlu0 %7943
    %7946 = vset.pattern.permute.xlu0 64
    %7947 = vperm.xlu0 %7946, %v7864
    %v7948 = vpop.permute.xlu0 %7947
    %7950 = vset.pattern.permute.xlu0 64
    %7951 = vperm.xlu0 %7950, %v7865
    %v7952 = vpop.permute.xlu0 %7951
    %7954 = vset.pattern.permute.xlu0 64
    %7955 = vperm.xlu0 %7954, %v7866
    %v7956 = vpop.permute.xlu0 %7955
    %7958 = vset.pattern.permute.xlu0 64
    %7959 = vperm.xlu0 %7958, %v7867
    %v7960 = vpop.permute.xlu0 %7959
    %v7962 = vadd.f32 %v7928, %v7917
    %v7963 = vadd.f32 %v7932, %v7918
    %v7964 = vadd.f32 %v7936, %v7919
    %v7965 = vadd.f32 %v7940, %v7920
    %v7966 = vadd.f32 %v7944, %v7921
    %v7967 = vadd.f32 %v7948, %v7922
    %v7968 = vadd.f32 %v7952, %v7923
    %v7969 = vadd.f32 %v7956, %v7924
    %v7970 = vadd.f32 %v7960, %v7925
    %7971 = vset.pattern.permute.xlu0 41
    %7972 = vperm.xlu0 %7971, %v7859
    %v7973 = vpop.permute.xlu0 %7972
    %7975 = vset.pattern.permute.xlu0 41
    %7976 = vperm.xlu0 %7975, %v7860
    %v7977 = vpop.permute.xlu0 %7976
    %7979 = vset.pattern.permute.xlu0 41
    %7980 = vperm.xlu0 %7979, %v7861
    %v7981 = vpop.permute.xlu0 %7980
    %7983 = vset.pattern.permute.xlu0 41
    %7984 = vperm.xlu0 %7983, %v7862
    %v7985 = vpop.permute.xlu0 %7984
    %7987 = vset.pattern.permute.xlu0 41
    %7988 = vperm.xlu0 %7987, %v7863
    %v7989 = vpop.permute.xlu0 %7988
    %7991 = vset.pattern.permute.xlu0 41
    %7992 = vperm.xlu0 %7991, %v7864
    %v7993 = vpop.permute.xlu0 %7992
    %7995 = vset.pattern.permute.xlu0 41
    %7996 = vperm.xlu0 %7995, %v7865
    %v7997 = vpop.permute.xlu0 %7996
    %7999 = vset.pattern.permute.xlu0 41
    %8000 = vperm.xlu0 %7999, %v7866
    %v8001 = vpop.permute.xlu0 %8000
    %8003 = vset.pattern.permute.xlu0 41
    %8004 = vperm.xlu0 %8003, %v7867
    %v8005 = vpop.permute.xlu0 %8004
    %v8007 = vlaneseq
    %v8008 = vshrl.u32 %v8007, 7
    %v8009 = vsub.s32 1, %v8008
    %v8010 = vrot.slane %v7858, %v8009
    %v8011 = vmul.f32 %v7973, %v8010
    %v8012 = vmul.f32 %v7977, %v8010
    %v8013 = vmul.f32 %v7981, %v8010
    %v8014 = vmul.f32 %v7985, %v8010
    %v8015 = vmul.f32 %v7989, %v8010
    %v8016 = vmul.f32 %v7993, %v8010
    %v8017 = vmul.f32 %v7997, %v8010
    %v8018 = vmul.f32 %v8001, %v8010
    %v8019 = vmul.f32 %v8005, %v8010
    %v8020 = vadd.f32 %v7962, %v8011
    %v8021 = vadd.f32 %v7963, %v8012
    %v8022 = vadd.f32 %v7964, %v8013
    %v8023 = vadd.f32 %v7965, %v8014
    %v8024 = vadd.f32 %v7966, %v8015
    %v8025 = vadd.f32 %v7967, %v8016
    %v8026 = vadd.f32 %v7968, %v8017
    %v8027 = vadd.f32 %v7969, %v8018
    %v8028 = vadd.f32 %v7970, %v8019
    %8029 = vset.pattern.permute.xlu0 42
    %8030 = vperm.xlu0 %8029, %v7859
    %v8031 = vpop.permute.xlu0 %8030
    %8033 = vset.pattern.permute.xlu0 42
    %8034 = vperm.xlu0 %8033, %v7860
    %v8035 = vpop.permute.xlu0 %8034
    %8037 = vset.pattern.permute.xlu0 42
    %8038 = vperm.xlu0 %8037, %v7861
    %v8039 = vpop.permute.xlu0 %8038
    %8041 = vset.pattern.permute.xlu0 42
    %8042 = vperm.xlu0 %8041, %v7862
    %v8043 = vpop.permute.xlu0 %8042
    %8045 = vset.pattern.permute.xlu0 42
    %8046 = vperm.xlu0 %8045, %v7863
    %v8047 = vpop.permute.xlu0 %8046
    %8049 = vset.pattern.permute.xlu0 42
    %8050 = vperm.xlu0 %8049, %v7864
    %v8051 = vpop.permute.xlu0 %8050
    %8053 = vset.pattern.permute.xlu0 42
    %8054 = vperm.xlu0 %8053, %v7865
    %v8055 = vpop.permute.xlu0 %8054
    %8057 = vset.pattern.permute.xlu0 42
    %8058 = vperm.xlu0 %8057, %v7866
    %v8059 = vpop.permute.xlu0 %8058
    %8061 = vset.pattern.permute.xlu0 42
    %8062 = vperm.xlu0 %8061, %v7867
    %v8063 = vpop.permute.xlu0 %8062
    %v8065 = vlaneseq
    %v8066 = vshrl.u32 %v8065, 7
    %v8067 = vsub.s32 2, %v8066
    %v8068 = vrot.slane %v7858, %v8067
    %v8069 = vmul.f32 %v8031, %v8068
    %v8070 = vmul.f32 %v8035, %v8068
    %v8071 = vmul.f32 %v8039, %v8068
    %v8072 = vmul.f32 %v8043, %v8068
    %v8073 = vmul.f32 %v8047, %v8068
    %v8074 = vmul.f32 %v8051, %v8068
    %v8075 = vmul.f32 %v8055, %v8068
    %v8076 = vmul.f32 %v8059, %v8068
    %v8077 = vmul.f32 %v8063, %v8068
    %v8078 = vadd.f32 %v8020, %v8069
    %v8079 = vadd.f32 %v8021, %v8070
    %v8080 = vadd.f32 %v8022, %v8071
    %v8081 = vadd.f32 %v8023, %v8072
    %v8082 = vadd.f32 %v8024, %v8073
    %v8083 = vadd.f32 %v8025, %v8074
    %v8084 = vadd.f32 %v8026, %v8075
    %v8085 = vadd.f32 %v8027, %v8076
    %v8086 = vadd.f32 %v8028, %v8077
    %8087 = vset.pattern.permute.xlu0 43
    %8088 = vperm.xlu0 %8087, %v7859
    %v8089 = vpop.permute.xlu0 %8088
    %8091 = vset.pattern.permute.xlu0 43
    %8092 = vperm.xlu0 %8091, %v7860
    %v8093 = vpop.permute.xlu0 %8092
    %8095 = vset.pattern.permute.xlu0 43
    %8096 = vperm.xlu0 %8095, %v7861
    %v8097 = vpop.permute.xlu0 %8096
    %8099 = vset.pattern.permute.xlu0 43
    %8100 = vperm.xlu0 %8099, %v7862
    %v8101 = vpop.permute.xlu0 %8100
    %8103 = vset.pattern.permute.xlu0 43
    %8104 = vperm.xlu0 %8103, %v7863
    %v8105 = vpop.permute.xlu0 %8104
    %8107 = vset.pattern.permute.xlu0 43
    %8108 = vperm.xlu0 %8107, %v7864
    %v8109 = vpop.permute.xlu0 %8108
    %8111 = vset.pattern.permute.xlu0 43
    %8112 = vperm.xlu0 %8111, %v7865
    %v8113 = vpop.permute.xlu0 %8112
    %8115 = vset.pattern.permute.xlu0 43
    %8116 = vperm.xlu0 %8115, %v7866
    %v8117 = vpop.permute.xlu0 %8116
    %8119 = vset.pattern.permute.xlu0 43
    %8120 = vperm.xlu0 %8119, %v7867
    %v8121 = vpop.permute.xlu0 %8120
    %v8123 = vlaneseq
    %v8124 = vshrl.u32 %v8123, 7
    %v8125 = vsub.s32 3, %v8124
    %v8126 = vrot.slane %v7858, %v8125
    %v8127 = vmul.f32 %v8089, %v8126
    %v8128 = vmul.f32 %v8093, %v8126
    %v8129 = vmul.f32 %v8097, %v8126
    %v8130 = vmul.f32 %v8101, %v8126
    %v8131 = vmul.f32 %v8105, %v8126
    %v8132 = vmul.f32 %v8109, %v8126
    %v8133 = vmul.f32 %v8113, %v8126
    %v8134 = vmul.f32 %v8117, %v8126
    %v8135 = vmul.f32 %v8121, %v8126
    %v8136 = vadd.f32 %v8078, %v8127
    %v8137 = vadd.f32 %v8079, %v8128
    %v8138 = vadd.f32 %v8080, %v8129
    %v8139 = vadd.f32 %v8081, %v8130
    %v8140 = vadd.f32 %v8082, %v8131
    %v8141 = vadd.f32 %v8083, %v8132
    %v8142 = vadd.f32 %v8084, %v8133
    %v8143 = vadd.f32 %v8085, %v8134
    %v8144 = vadd.f32 %v8086, %v8135
    %8145 = vset.pattern.permute.xlu0 44
    %8146 = vperm.xlu0 %8145, %v7859
    %v8147 = vpop.permute.xlu0 %8146
    %8149 = vset.pattern.permute.xlu0 44
    %8150 = vperm.xlu0 %8149, %v7860
    %v8151 = vpop.permute.xlu0 %8150
    %8153 = vset.pattern.permute.xlu0 44
    %8154 = vperm.xlu0 %8153, %v7861
    %v8155 = vpop.permute.xlu0 %8154
    %8157 = vset.pattern.permute.xlu0 44
    %8158 = vperm.xlu0 %8157, %v7862
    %v8159 = vpop.permute.xlu0 %8158
    %8161 = vset.pattern.permute.xlu0 44
    %8162 = vperm.xlu0 %8161, %v7863
    %v8163 = vpop.permute.xlu0 %8162
    %8165 = vset.pattern.permute.xlu0 44
    %8166 = vperm.xlu0 %8165, %v7864
    %v8167 = vpop.permute.xlu0 %8166
    %8169 = vset.pattern.permute.xlu0 44
    %8170 = vperm.xlu0 %8169, %v7865
    %v8171 = vpop.permute.xlu0 %8170
    %8173 = vset.pattern.permute.xlu0 44
    %8174 = vperm.xlu0 %8173, %v7866
    %v8175 = vpop.permute.xlu0 %8174
    %8177 = vset.pattern.permute.xlu0 44
    %8178 = vperm.xlu0 %8177, %v7867
    %v8179 = vpop.permute.xlu0 %8178
    %v8181 = vlaneseq
    %v8182 = vshrl.u32 %v8181, 7
    %v8183 = vsub.s32 4, %v8182
    %v8184 = vrot.slane %v7858, %v8183
    %v8185 = vmul.f32 %v8147, %v8184
    %v8186 = vmul.f32 %v8151, %v8184
    %v8187 = vmul.f32 %v8155, %v8184
    %v8188 = vmul.f32 %v8159, %v8184
    %v8189 = vmul.f32 %v8163, %v8184
    %v8190 = vmul.f32 %v8167, %v8184
    %v8191 = vmul.f32 %v8171, %v8184
    %v8192 = vmul.f32 %v8175, %v8184
    %v8193 = vmul.f32 %v8179, %v8184
    %v8194 = vadd.f32 %v8136, %v8185
    %v8195 = vadd.f32 %v8137, %v8186
    %v8196 = vadd.f32 %v8138, %v8187
    %v8197 = vadd.f32 %v8139, %v8188
    %v8198 = vadd.f32 %v8140, %v8189
    %v8199 = vadd.f32 %v8141, %v8190
    %v8200 = vadd.f32 %v8142, %v8191
    %v8201 = vadd.f32 %v8143, %v8192
    %v8202 = vadd.f32 %v8144, %v8193
    %8203 = vset.pattern.permute.xlu0 45
    %8204 = vperm.xlu0 %8203, %v7859
    %v8205 = vpop.permute.xlu0 %8204
    %8207 = vset.pattern.permute.xlu0 45
    %8208 = vperm.xlu0 %8207, %v7860
    %v8209 = vpop.permute.xlu0 %8208
    %8211 = vset.pattern.permute.xlu0 45
    %8212 = vperm.xlu0 %8211, %v7861
    %v8213 = vpop.permute.xlu0 %8212
    %8215 = vset.pattern.permute.xlu0 45
    %8216 = vperm.xlu0 %8215, %v7862
    %v8217 = vpop.permute.xlu0 %8216
    %8219 = vset.pattern.permute.xlu0 45
    %8220 = vperm.xlu0 %8219, %v7863
    %v8221 = vpop.permute.xlu0 %8220
    %8223 = vset.pattern.permute.xlu0 45
    %8224 = vperm.xlu0 %8223, %v7864
    %v8225 = vpop.permute.xlu0 %8224
    %8227 = vset.pattern.permute.xlu0 45
    %8228 = vperm.xlu0 %8227, %v7865
    %v8229 = vpop.permute.xlu0 %8228
    %8231 = vset.pattern.permute.xlu0 45
    %8232 = vperm.xlu0 %8231, %v7866
    %v8233 = vpop.permute.xlu0 %8232
    %8235 = vset.pattern.permute.xlu0 45
    %8236 = vperm.xlu0 %8235, %v7867
    %v8237 = vpop.permute.xlu0 %8236
    %v8239 = vlaneseq
    %v8240 = vshrl.u32 %v8239, 7
    %v8241 = vsub.s32 5, %v8240
    %v8242 = vrot.slane %v7858, %v8241
    %v8243 = vmul.f32 %v8205, %v8242
    %v8244 = vmul.f32 %v8209, %v8242
    %v8245 = vmul.f32 %v8213, %v8242
    %v8246 = vmul.f32 %v8217, %v8242
    %v8247 = vmul.f32 %v8221, %v8242
    %v8248 = vmul.f32 %v8225, %v8242
    %v8249 = vmul.f32 %v8229, %v8242
    %v8250 = vmul.f32 %v8233, %v8242
    %v8251 = vmul.f32 %v8237, %v8242
    %v8252 = vadd.f32 %v8194, %v8243
    %v8253 = vadd.f32 %v8195, %v8244
    %v8254 = vadd.f32 %v8196, %v8245
    %v8255 = vadd.f32 %v8197, %v8246
    %v8256 = vadd.f32 %v8198, %v8247
    %v8257 = vadd.f32 %v8199, %v8248
    %v8258 = vadd.f32 %v8200, %v8249
    %v8259 = vadd.f32 %v8201, %v8250
    %v8260 = vadd.f32 %v8202, %v8251
    %v8261 = vmax.f32 %v8252, 0.0
    %v8262 = vmax.f32 %v8253, 0.0
    %v8263 = vmax.f32 %v8254, 0.0
    %v8264 = vmax.f32 %v8255, 0.0
    %v8265 = vmax.f32 %v8256, 0.0
    %v8266 = vmax.f32 %v8257, 0.0
    %v8267 = vmax.f32 %v8258, 0.0
    %v8268 = vmax.f32 %v8259, 0.0
    %v8269 = vmax.f32 %v8260, 0.0
    %v8270 = vld [vmem:[#allocation7 + $0x28] sm:$0x3f]
    %8271 = vset.pattern.permute.xlu0 72
    %8272 = vperm.xlu0 %8271, %v7847
    %v8273 = vpop.permute.xlu0 %8272
    %v8276 = vsel %vm1046, %v8270, 0
    %8278 = vmatprep.subr.mxu0 0.0
    %8279 = vmatpush1.msra.mxu0 %v8261
    %8280 = vmatprep.subr.mxu0 0.0
    %8281 = vmatpush1.msra.mxu0 %v8262
    %8282 = vmatprep.subr.mxu0 0.0
    %8283 = vmatpush1.msra.mxu0 %v8263
    %8284 = vmatprep.subr.mxu0 0.0
    %8285 = vmatpush1.msra.mxu0 %v8264
    %8286 = vmatprep.subr.mxu0 0.0
    %8287 = vmatpush1.msra.mxu0 %v8265
    %8288 = vmatprep.subr.mxu0 0.0
    %8289 = vmatpush1.msra.mxu0 %v8266
    %8290 = vmatprep.subr.mxu0 0.0
    %8291 = vmatpush1.msra.mxu0 %v8267
    %8292 = vmatprep.subr.mxu0 0.0
    %8293 = vmatpush1.msra.mxu0 %v8268
    %8294 = vmatprep.subr.mxu0 0.0
    %8295 = vmatpush1.msra.mxu0 %v8269
    %8296 = vmatprep.subr.mxu0 0.0
    %8297 = vmatpush1.msra.mxu0 0.0
    %8298 = vmatprep.subr.mxu0 0.0
    %8299 = vmatpush1.msra.mxu0 0.0
    %8300 = vmatprep.subr.mxu0 0.0
    %8301 = vmatpush1.msra.mxu0 0.0
    %8302 = vmatprep.subr.mxu0 0.0
    %8303 = vmatpush1.msra.mxu0 0.0
    %8304 = vmatprep.subr.mxu0 0.0
    %8305 = vmatpush1.msra.mxu0 0.0
    %8306 = vmatprep.subr.mxu0 0.0
    %8307 = vmatpush1.msra.mxu0 0.0
    %8308 = vmatprep.subr.mxu0 0.0
    %8309 = vmatpush1.msra.mxu0 0.0
    %8310 = vmatprep.subr.mxu0 0.0
    %8311 = vmatpush1.msra.mxu0 0.0
    %8312 = vmatprep.subr.mxu0 0.0
    %8313 = vmatpush1.msra.mxu0 0.0
    %8314 = vmatprep.subr.mxu0 0.0
    %8315 = vmatpush1.msra.mxu0 0.0
    %8316 = vmatprep.subr.mxu0 0.0
    %8317 = vmatpush1.msra.mxu0 0.0
    %8318 = vmatprep.subr.mxu0 0.0
    %8319 = vmatpush1.msra.mxu0 0.0
    %8320 = vmatprep.subr.mxu0 0.0
    %8321 = vmatpush1.msra.mxu0 0.0
    %8322 = vmatprep.subr.mxu0 0.0
    %8323 = vmatpush1.msra.mxu0 0.0
    %8324 = vmatprep.subr.mxu0 0.0
    %8325 = vmatpush1.msra.mxu0 0.0
    %8326 = vmatprep.subr.mxu0 0.0
    %8327 = vmatpush1.msra.mxu0 0.0
    %8328 = vmatprep.subr.mxu0 0.0
    %8329 = vmatpush1.msra.mxu0 0.0
    %8330 = vmatprep.subr.mxu0 0.0
    %8331 = vmatpush1.msra.mxu0 0.0
    %8332 = vmatprep.subr.mxu0 0.0
    %8333 = vmatpush1.msra.mxu0 0.0
    %8334 = vmatprep.subr.mxu0 0.0
    %8335 = vmatpush1.msra.mxu0 0.0
    %8336 = vmatprep.subr.mxu0 0.0
    %8337 = vmatpush1.msra.mxu0 0.0
    %8338 = vmatprep.subr.mxu0 0.0
    %8339 = vmatpush1.msra.mxu0 0.0
    %8340 = vmatprep.subr.mxu0 0.0
    %8341 = vmatpush1.msra.mxu0 0.0
    %8342 = vmatprep.mubr.f32.mxu0 0.0
    %8343 = vmatmul.mubr.f32.gmra.mrb[0].mxu0 %v8276
    %v8344 = vpop.f32.mrb[0].mxu0
    %v8345 = vadd.f32 %v8273, %v8344
    %v8346 = vpop.f32.mrb[0].mxu0
    %8347 = vdwg.mxu0
    %v8348 = vadd.f32 %v7858, %v8345
    %v8349 = vsel %vm597, %v8348, 0.0
    %v8350 = vrot.slane %v8349, 4
    %v8351 = vadd.f32 %v8349, %v8350
    %v8352 = vrot.slane %v8351, 2
    %v8353 = vadd.f32 %v8351, %v8352
    %v8354 = vrot.slane %v8353, 1
    %v8355 = vadd.f32 %v8353, %v8354
    %v8356 = vmul.f32 %v8355, %v605
    %v8357 = vsub.f32 %v8348, %v8356
    %v8358 = vmul.f32 %v8357, %v8357
    %v8359 = vsel %vm597, %v8358, 0.0
    %v8360 = vrot.slane %v8359, 4
    %v8361 = vadd.f32 %v8359, %v8360
    %v8362 = vrot.slane %v8361, 2
    %v8363 = vadd.f32 %v8361, %v8362
    %v8364 = vrot.slane %v8363, 1
    %v8365 = vadd.f32 %v8363, %v8364
    %v8366 = vmul.f32 %v8365, %v605
    %v8367 = vadd.f32 %v8366, 1e-05
    %v8368 = vrsqrt.pop %v8367
    %v8369 = vmul.f32 %v8357, %v8368
    %8370 = vset.pattern.permute.xlu0 32
    %8371 = vperm.xlu0 %8370, %v7782
    %v8372 = vpop.permute.xlu0 %8371
    %v8374 = vmul.f32 %v8369, %v8372
    %8375 = vset.pattern.permute.xlu0 48
    %8376 = vperm.xlu0 %8375, %v7782
    %v8377 = vpop.permute.xlu0 %8376
    %v8379 = vadd.f32 %v8374, %v8377
    %v8380 = vsel %vm597, %v8379, 0.0
    %v8381 = vrot.slane %v8380, 4
    %v8382 = vadd.f32 %v8380, %v8381
    %v8383 = vrot.slane %v8382, 2
    %v8384 = vadd.f32 %v8382, %v8383
    %v8385 = vrot.slane %v8384, 1
    %v8386 = vadd.f32 %v8384, %v8385
    %v8387 = vmul.f32 %v8386, %v605
    %v8388 = vsub.f32 %v8379, %v8387
    %v8389 = vmul.f32 %v8388, %v8388
    %v8390 = vsel %vm597, %v8389, 0.0
    %v8391 = vrot.slane %v8390, 4
    %v8392 = vadd.f32 %v8390, %v8391
    %v8393 = vrot.slane %v8392, 2
    %v8394 = vadd.f32 %v8392, %v8393
    %v8395 = vrot.slane %v8394, 1
    %v8396 = vadd.f32 %v8394, %v8395
    %v8397 = vmul.f32 %v8396, %v605
    %v8398 = vadd.f32 %v8397, 1e-05
    %v8399 = vrsqrt.pop %v8398
    %v8400 = vmul.f32 %v8388, %v8399
    %8401 = vset.pattern.permute.xlu0 56
    %8402 = vperm.xlu0 %8401, %v7782
    %v8403 = vpop.permute.xlu0 %8402
    %v8405 = vmul.f32 %v8400, %v8403
    %8406 = vset.pattern.permute.xlu0 72
    %8407 = vperm.xlu0 %8406, %v7782
    %v8408 = vpop.permute.xlu0 %8407
    %v8410 = vadd.f32 %v8405, %v8408
    %v8411 = vld [vmem:[#allocation5 + $0x60] sm:$0xff]
    %v8412 = vld [vmem:[#allocation5 + $0x68] sm:$0xf]
    %8414 = vset.pattern.permute.xlu0 80
    %8415 = vperm.xlu0 %8414, %v8411
    %v8416 = vpop.permute.xlu0 %8415
    %8419 = vset.pattern.permute.xlu0 80
    %8420 = vperm.xlu0 %8419, %v8412
    %v8421 = vpop.permute.xlu0 %8420
    %v8423 = vlaneseq
    %v8424 = vshrl.u32 %v8423, 7
    %v8425 = vsub.s32 0, %v8424
    %v8426 = vrot.slane %v8410, %v8425
    %v8427 = vmul.f32 %v8416, %v8426
    %v8428 = vmul.f32 %v8421, %v8426
    %8429 = vset.pattern.permute.xlu0 88
    %8430 = vperm.xlu0 %8429, %v8411
    %v8431 = vpop.permute.xlu0 %8430
    %8433 = vset.pattern.permute.xlu0 88
    %8434 = vperm.xlu0 %8433, %v8412
    %v8435 = vpop.permute.xlu0 %8434
    %v8437 = vadd.f32 %v8431, %v8427
    %v8438 = vadd.f32 %v8435, %v8428
    %8439 = vset.pattern.permute.xlu0 81
    %8440 = vperm.xlu0 %8439, %v8411
    %v8441 = vpop.permute.xlu0 %8440
    %8443 = vset.pattern.permute.xlu0 81
    %8444 = vperm.xlu0 %8443, %v8412
    %v8445 = vpop.permute.xlu0 %8444
    %v8447 = vlaneseq
    %v8448 = vshrl.u32 %v8447, 7
    %v8449 = vsub.s32 1, %v8448
    %v8450 = vrot.slane %v8410, %v8449
    %v8451 = vmul.f32 %v8441, %v8450
    %v8452 = vmul.f32 %v8445, %v8450
    %v8453 = vadd.f32 %v8437, %v8451
    %v8454 = vadd.f32 %v8438, %v8452
    %8455 = vset.pattern.permute.xlu0 82
    %8456 = vperm.xlu0 %8455, %v8411
    %v8457 = vpop.permute.xlu0 %8456
    %8459 = vset.pattern.permute.xlu0 82
    %8460 = vperm.xlu0 %8459, %v8412
    %v8461 = vpop.permute.xlu0 %8460
    %v8463 = vlaneseq
    %v8464 = vshrl.u32 %v8463, 7
    %v8465 = vsub.s32 2, %v8464
    %v8466 = vrot.slane %v8410, %v8465
    %v8467 = vmul.f32 %v8457, %v8466
    %v8468 = vmul.f32 %v8461, %v8466
    %v8469 = vadd.f32 %v8453, %v8467
    %v8470 = vadd.f32 %v8454, %v8468
    %8471 = vset.pattern.permute.xlu0 83
    %8472 = vperm.xlu0 %8471, %v8411
    %v8473 = vpop.permute.xlu0 %8472
    %8475 = vset.pattern.permute.xlu0 83
    %8476 = vperm.xlu0 %8475, %v8412
    %v8477 = vpop.permute.xlu0 %8476
    %v8479 = vlaneseq
    %v8480 = vshrl.u32 %v8479, 7
    %v8481 = vsub.s32 3, %v8480
    %v8482 = vrot.slane %v8410, %v8481
    %v8483 = vmul.f32 %v8473, %v8482
    %v8484 = vmul.f32 %v8477, %v8482
    %v8485 = vadd.f32 %v8469, %v8483
    %v8486 = vadd.f32 %v8470, %v8484
    %8487 = vset.pattern.permute.xlu0 84
    %8488 = vperm.xlu0 %8487, %v8411
    %v8489 = vpop.permute.xlu0 %8488
    %8491 = vset.pattern.permute.xlu0 84
    %8492 = vperm.xlu0 %8491, %v8412
    %v8493 = vpop.permute.xlu0 %8492
    %v8495 = vlaneseq
    %v8496 = vshrl.u32 %v8495, 7
    %v8497 = vsub.s32 4, %v8496
    %v8498 = vrot.slane %v8410, %v8497
    %v8499 = vmul.f32 %v8489, %v8498
    %v8500 = vmul.f32 %v8493, %v8498
    %v8501 = vadd.f32 %v8485, %v8499
    %v8502 = vadd.f32 %v8486, %v8500
    %8503 = vset.pattern.permute.xlu0 85
    %8504 = vperm.xlu0 %8503, %v8411
    %v8505 = vpop.permute.xlu0 %8504
    %8507 = vset.pattern.permute.xlu0 85
    %8508 = vperm.xlu0 %8507, %v8412
    %v8509 = vpop.permute.xlu0 %8508
    %v8511 = vlaneseq
    %v8512 = vshrl.u32 %v8511, 7
    %v8513 = vsub.s32 5, %v8512
    %v8514 = vrot.slane %v8410, %v8513
    %v8515 = vmul.f32 %v8505, %v8514
    %v8516 = vmul.f32 %v8509, %v8514
    %v8517 = vadd.f32 %v8501, %v8515
    %v8518 = vadd.f32 %v8502, %v8516
    %8519 = vst [vmem:[#allocation8] sm:$0xff] %v8517
    %8520 = vst [vmem:[#allocation8 + $0x8] sm:$0xf] %v8518
    // Predicated region
    $region26: #{tpu_custom_call.1} parent=1 // pred_check
      _
    $region27: #{tpu_custom_call.1} parent=1 // pred_check_branch
      %8522 = sbr.rel (0) target = $region29
    $region28: #{tpu_custom_call.1} parent=1 // pred_region
      %s8524 = ssub.s32 256, 256
      %8525 = vsyncadd [#allocation4], %s8524
      %s8526 = sshll.u32 [#allocation8], 4
      %s8527 = int_to_ptr.vmem [resolvable:$true] %s8526
      %8532 = dma.vmem_to_hbm [thread:$0]  %s8527, 256, %s3, [#allocation4], 128, 128, 8
    $region29: #{tpu_custom_call.1} parent=1 // pred_fallthru
      _
    // Predicated region
    $region30: #{tpu_custom_call.1} parent=1 // pred_check
      _
    $region31: #{tpu_custom_call.1} parent=1 // pred_check_branch
      %8534 = sbr.rel (0) target = $region33
    $region32: #{tpu_custom_call.1} parent=1 // pred_region
      %8535 = dma.done [#allocation4], 256
    $region33: #{tpu_custom_call.1} parent=1 // pred_fallthru
      _
    %8536 = vsyncpa [#allocation3], 1
    %8537 = vsyncpa [#allocation6], 1
    %8538 = vsyncpa [#allocation4], 1

</llo_original>
